<compile_context>
chip_gen: v5e
topology: v5e:2x2
jax: 0.10.0
libtpu: 0.0.40
codegen_flags: <defaults>
</compile_context>

<pallas_src>
import functools

import jax
import jax.numpy as jnp
from jax.experimental import pallas as pl
from jax.experimental.pallas import tpu as pltpu

EPS = 1e-5
NEG_SLOPE = 0.1


def _vmem_limit_bytes():
    """Generation-aware scoped-VMEM limit (~3/4 of physical), safe fallback."""
    try:
        cap = int(pltpu.get_tpu_info().vmem_capacity_bytes)
        if cap > 0:
            return min(cap * 3 // 4, 100 * 1024 * 1024)
    except Exception:
        pass
    return 48 * 1024 * 1024


# ---------------------------------------------------------------------------
# wrapper-side constant builders (one-time XLA ops, outside the kernel)
# ---------------------------------------------------------------------------
def _banded_weights(w_hwio, W):
    """(3, 3, C, Cout) HWIO conv weight -> (3*(W+2)*C, W*Cout) block-Toeplitz.

    In the lane-folded layout (rows = image rows, lanes = x*C + c) a 3x3 'SAME'
    conv is    out_folded[y] = bias + sum_dy  xpad_folded[y+dy] @ B[dy]
    with       B[dy][(x+dx)*C + c, x*Cout + o] = w[dy, dx, c, o].
    """
    kh, kw, C, Cout = w_hwio.shape
    Kb = (W + 2) * C
    mats = []
    for dy in range(kh):
        wk = w_hwio[dy].reshape(kw * C, Cout)          # rows ordered dx*C + c
        cols = []
        for x in range(W):
            top = x * C
            cols.append(jnp.pad(wk, ((top, Kb - top - kw * C), (0, 0))))
        mats.append(jnp.concatenate(cols, axis=1))     # (Kb, W*Cout)
    return jnp.concatenate(mats, axis=0)               # (3*Kb, W*Cout)


def _channel_sum_matrix(W, Cout):
    """(W*Cout, W*Cout) 0/1 matrix: (row_vec @ P) sums each channel across the
    W lane groups and replicates it back: P[x*Cout+o, x'*Cout+o'] = (o == o')."""
    return jnp.tile(jnp.eye(Cout, dtype=jnp.float32), (W, W))


# ---------------------------------------------------------------------------
# fused kernel
# ---------------------------------------------------------------------------
def _bn_lrelu(y, gamma_t, beta_t, p_mat, inv_count):
    """Training-mode BatchNorm (full-batch stats, two-pass variance) + LeakyReLU.

    y: (R, W*Cout) f32; gamma_t/beta_t pre-tiled (1, W*Cout); p_mat f32 (exact)."""
    mean_t = jnp.dot(jnp.sum(y, axis=0, keepdims=True), p_mat,
                     preferred_element_type=jnp.float32) * inv_count
    c = y - mean_t
    var_t = jnp.dot(jnp.sum(c * c, axis=0, keepdims=True), p_mat,
                    preferred_element_type=jnp.float32) * inv_count
    z = c * (gamma_t * jax.lax.rsqrt(var_t + EPS)) + beta_t
    return jnp.where(z > 0, z, NEG_SLOPE * z)


def _double_conv_kernel(xp_ref, w1b_ref, bias1_ref, g1_ref, be1_ref,
                        w2b_ref, bias2_ref, g2_ref, be2_ref, p_ref,
                        o_ref, pad_ref,
                        *, N, H, W, Cin, Cout, mxu_dtype):
    K1 = (W + 2) * Cin           # banded K of conv1 (multiple of 8 when Cin>=4)
    K2 = (W + 2) * Cout          # banded K of conv2
    WCo = W * Cout
    inv_count = 1.0 / float(N * H * W)
    p_mat = p_ref[...]

    # ---- conv1: 3 banded matmuls over dy-shifted row slices (whole batch) ----
    acc1 = jnp.zeros((N * H, WCo), jnp.float32)
    for dy in range(3):
        lhs = jnp.concatenate(
            [xp_ref[n * (H + 2) + dy:n * (H + 2) + dy + H, :] for n in range(N)],
            axis=0).astype(mxu_dtype)                       # (N*H, K1)
        acc1 = acc1 + jnp.dot(lhs, w1b_ref[dy * K1:(dy + 1) * K1, :],
                              preferred_element_type=jnp.float32)
    y1 = acc1 + bias1_ref[...]

    # ---- BN1 (full-batch statistics) + LeakyReLU, lane-dense ----
    h1 = _bn_lrelu(y1, g1_ref[...], be1_ref[...], p_mat, inv_count)

    # ---- zero-pad h1 into the lane-folded scratch: halo ring only ----
    zrow = jnp.zeros((1, K2), jnp.float32)
    zcol = jnp.zeros((H, Cout), jnp.float32)
    for n in range(N):
        r0 = n * (H + 2)
        pad_ref[r0:r0 + 1, :] = zrow
        pad_ref[r0 + H + 1:r0 + H + 2, :] = zrow
        pad_ref[r0 + 1:r0 + H + 1, 0:Cout] = zcol
        pad_ref[r0 + 1:r0 + H + 1, (W + 1) * Cout:K2] = zcol
        pad_ref[r0 + 1:r0 + H + 1, Cout:(W + 1) * Cout] = h1[n * H:(n + 1) * H, :]

    # ---- conv2: same banded-matmul scheme on the padded activations ----
    acc2 = jnp.zeros((N * H, WCo), jnp.float32)
    for dy in range(3):
        lhs = jnp.concatenate(
            [pad_ref[n * (H + 2) + dy:n * (H + 2) + dy + H, :] for n in range(N)],
            axis=0).astype(mxu_dtype)                       # (N*H, K2)
        acc2 = acc2 + jnp.dot(lhs, w2b_ref[dy * K2:(dy + 1) * K2, :],
                              preferred_element_type=jnp.float32)
    y2 = acc2 + bias2_ref[...]

    # ---- BN2 + LeakyReLU, lane-dense store ----
    o_ref[...] = _bn_lrelu(y2, g2_ref[...], be2_ref[...], p_mat, inv_count)


# ---------------------------------------------------------------------------
# wrapper
# ---------------------------------------------------------------------------
def double_conv_pallas(x_nchw, params, *, use_bf16_mxu=True):
    """x_nchw: (N, Cin, H, W) float32 -> (N, Cout, H, W) float32."""
    w1, b1, g1, be1, w2, b2, g2, be2 = params
    N, Cin, H, W = x_nchw.shape
    Cout = w1.shape[-1]
    mxu_dtype = jnp.bfloat16 if use_bf16_mxu else jnp.float32

    # crude working-set estimate (bytes, x2 slack for Pallas buffering / temps)
    ws = 4 * 2 * (N * (H + 2) * (W + 2) * (Cin + Cout)
                  + 3 * (W + 2) * (Cin + Cout) * W * Cout
                  + 4 * N * H * W * Cout
                  + (W * Cout) ** 2)
    vmem_limit = _vmem_limit_bytes()
    assert ws < vmem_limit, (
        f"fused DoubleConv working set ~{ws} B exceeds VMEM limit {vmem_limit} B")

    # glue: NCHW -> NHWC, zero-pad once ("padding=1"), lane-fold
    x = jnp.transpose(x_nchw, (0, 2, 3, 1)).astype(jnp.float32)
    xp = jnp.pad(x, ((0, 0), (1, 1), (1, 1), (0, 0)))
    xp = xp.reshape(N * (H + 2), (W + 2) * Cin)

    # one-time constants (banded weights, channel-sum matrix, W-tiled vectors)
    w1b = _banded_weights(w1, W).astype(mxu_dtype)      # (3*(W+2)*Cin,  W*Cout)
    w2b = _banded_weights(w2, W).astype(mxu_dtype)      # (3*(W+2)*Cout, W*Cout)
    p_mat = _channel_sum_matrix(W, Cout)                # (W*Cout, W*Cout) f32

    def tile_w(v):
        return jnp.tile(jnp.asarray(v, jnp.float32).reshape(1, Cout), (1, W))

    bias1_t, g1_t, be1_t = tile_w(b1), tile_w(g1), tile_w(be1)
    bias2_t, g2_t, be2_t = tile_w(b2), tile_w(g2), tile_w(be2)

    def full(shape):
        return pl.BlockSpec(shape, lambda i: (0,) * len(shape))

    out_dense = pl.pallas_call(
        functools.partial(_double_conv_kernel, N=N, H=H, W=W,
                          Cin=Cin, Cout=Cout, mxu_dtype=mxu_dtype),
        out_shape=jax.ShapeDtypeStruct((N * H, W * Cout), jnp.float32),
        grid=(1,),
        in_specs=[
            full((N * (H + 2), (W + 2) * Cin)),
            full((3 * (W + 2) * Cin, W * Cout)), full((1, W * Cout)),
            full((1, W * Cout)), full((1, W * Cout)),
            full((3 * (W + 2) * Cout, W * Cout)), full((1, W * Cout)),
            full((1, W * Cout)), full((1, W * Cout)),
            full((W * Cout, W * Cout)),
        ],
        out_specs=full((N * H, W * Cout)),
        scratch_shapes=[pltpu.VMEM((N * (H + 2), (W + 2) * Cout), jnp.float32)],
        compiler_params=pltpu.CompilerParams(
            dimension_semantics=("arbitrary",),
            vmem_limit_bytes=vmem_limit),
    )(xp, w1b, bias1_t, g1_t, be1_t, w2b, bias2_t, g2_t, be2_t, p_mat)

    out = out_dense.reshape(N, H, W, Cout)
    return jnp.transpose(out, (0, 3, 1, 2))


# ---------------------------------------------------------------------------
# pure-JAX reference (same semantics) for verification
# ---------------------------------------------------------------------------
def double_conv_ref(x_nchw, params):
    w1, b1, g1, be1, w2, b2, g2, be2 = params
    x = jnp.transpose(x_nchw, (0, 2, 3, 1)).astype(jnp.float32)

    def conv(h, w, b):
        y = jax.lax.conv_general_dilated(
            h, w, window_strides=(1, 1), padding="SAME",
            dimension_numbers=("NHWC", "HWIO", "NHWC"))
        return y + b.reshape(1, 1, 1, -1)

    def bn_lrelu(y, g, beta):
        mean = jnp.mean(y, axis=(0, 1, 2), keepdims=True)
        var = jnp.mean((y - mean) ** 2, axis=(0, 1, 2), keepdims=True)
        z = (y - mean) * jax.lax.rsqrt(var + EPS) * g.reshape(1, 1, 1, -1) \
            + beta.reshape(1, 1, 1, -1)
        return jnp.where(z > 0, z, NEG_SLOPE * z)

    h = bn_lrelu(conv(x, w1, b1), g1, be1)
    h = bn_lrelu(conv(h, w2, b2), g2, be2)
    return jnp.transpose(h, (0, 3, 1, 2))


def make_params(key, in_channels, out_channels):
    """Deterministic parameters.  Conv weights/bias random; BN gamma=1, beta=0
    (PyTorch __init__ defaults).  Conv weights stored HWIO."""
    k1, k2, k3, k4 = jax.random.split(key, 4)
    w1_t = jax.random.normal(k1, (out_channels, in_channels, 3, 3), jnp.float32) * 0.1
    w2_t = jax.random.normal(k2, (out_channels, out_channels, 3, 3), jnp.float32) * 0.1
    w1 = jnp.transpose(w1_t, (2, 3, 1, 0))          # (3,3,Cin,Cout)
    w2 = jnp.transpose(w2_t, (2, 3, 1, 0))          # (3,3,Cout,Cout)
    b1 = jax.random.normal(k3, (out_channels,), jnp.float32) * 0.05
    b2 = jax.random.normal(k4, (out_channels,), jnp.float32) * 0.05
    g1 = jnp.ones((out_channels,), jnp.float32)
    be1 = jnp.zeros((out_channels,), jnp.float32)
    g2 = jnp.ones((out_channels,), jnp.float32)
    be2 = jnp.zeros((out_channels,), jnp.float32)
    return (w1, b1, g1, be1, w2, b2, g2, be2)


if __name__ == "__main__":
    key = jax.random.PRNGKey(0)
    kx, kp = jax.random.split(key)

    N, Cin, Cout, H, W = 2, 4, 8, 16, 16
    x = jax.random.normal(kx, (N, Cin, H, W), jnp.float32)
    params = make_params(kp, Cin, Cout)

    ref = jax.block_until_ready(double_conv_ref(x, params))

    # f32 MXU path: strict check against the pure-JAX reference
    run_f32 = jax.jit(functools.partial(double_conv_pallas, use_bf16_mxu=False))
    out_f32 = jax.block_until_ready(run_f32(x, params))
    assert out_f32.shape == (N, Cout, H, W), out_f32.shape
    err = float(jnp.max(jnp.abs(out_f32 - ref)))
    assert err < 1e-4, f"f32 path: max abs error vs reference: {err}"

    # default bf16-MXU path (perf default on v5e/v6e/v7x): loose sanity check
    run_bf16 = jax.jit(double_conv_pallas)
    out_bf16 = jax.block_until_ready(run_bf16(x, params))
    err_bf16 = float(jnp.max(jnp.abs(out_bf16 - ref)))
    assert err_bf16 < 0.25, f"bf16 path: max abs error vs reference: {err_bf16}"

    print("KERNEL_OK")
</pallas_src>

<mosaic_0001>
module attributes {stable_mosaic.version = 11 : i64} {
  func.func @_double_conv_kernel(%arg0: i32, %arg1: memref<36x72xf32, #tpu.memory_space<vmem>>, %arg2: memref<216x128xf32, #tpu.memory_space<vmem>>, %arg3: memref<1x128xf32, #tpu.memory_space<vmem>>, %arg4: memref<1x128xf32, #tpu.memory_space<vmem>>, %arg5: memref<1x128xf32, #tpu.memory_space<vmem>>, %arg6: memref<432x128xf32, #tpu.memory_space<vmem>>, %arg7: memref<1x128xf32, #tpu.memory_space<vmem>>, %arg8: memref<1x128xf32, #tpu.memory_space<vmem>>, %arg9: memref<1x128xf32, #tpu.memory_space<vmem>>, %arg10: memref<128x128xf32, #tpu.memory_space<vmem>>, %arg11: memref<32x128xf32, #tpu.memory_space<vmem>>, %arg12: memref<36x144xf32, #tpu.memory_space<vmem>>) attributes {dimension_semantics = [#tpu.dimension_semantics<arbitrary>], iteration_bounds = array<i64: 1>, scalar_prefetch = 0 : i64, scratch_operands = 1 : i64, tpu.core_type = #tpu.core_type<tc>, window_params = [{pipeline_mode = #tpu.pipeline_mode<synchronous>, transform_indices = @transform_0, window_bounds = array<i64: 36, 72>}, {pipeline_mode = #tpu.pipeline_mode<synchronous>, transform_indices = @transform_1, window_bounds = array<i64: 216, 128>}, {pipeline_mode = #tpu.pipeline_mode<synchronous>, transform_indices = @transform_2, window_bounds = array<i64: 1, 128>}, {pipeline_mode = #tpu.pipeline_mode<synchronous>, transform_indices = @transform_3, window_bounds = array<i64: 1, 128>}, {pipeline_mode = #tpu.pipeline_mode<synchronous>, transform_indices = @transform_4, window_bounds = array<i64: 1, 128>}, {pipeline_mode = #tpu.pipeline_mode<synchronous>, transform_indices = @transform_5, window_bounds = array<i64: 432, 128>}, {pipeline_mode = #tpu.pipeline_mode<synchronous>, transform_indices = @transform_6, window_bounds = array<i64: 1, 128>}, {pipeline_mode = #tpu.pipeline_mode<synchronous>, transform_indices = @transform_7, window_bounds = array<i64: 1, 128>}, {pipeline_mode = #tpu.pipeline_mode<synchronous>, transform_indices = @transform_8, window_bounds = array<i64: 1, 128>}, {pipeline_mode = #tpu.pipeline_mode<synchronous>, transform_indices = @transform_9, window_bounds = array<i64: 128, 128>}, {pipeline_mode = #tpu.pipeline_mode<synchronous>, transform_indices = @transform_10, window_bounds = array<i64: 32, 128>}]} {
    %c0 = arith.constant 0 : index
    %c0_0 = arith.constant 0 : index
    %0 = vector.load %arg10[%c0, %c0_0] : memref<128x128xf32, #tpu.memory_space<vmem>>, vector<128x128xf32>
    %cst = arith.constant 0.000000e+00 : f32
    %1 = vector.broadcast %cst : f32 to vector<32x128xf32>
    %c0_1 = arith.constant 0 : index
    %c0_2 = arith.constant 0 : index
    %2 = vector.load %arg1[%c0_1, %c0_2] : memref<36x72xf32, #tpu.memory_space<vmem>>, vector<16x72xf32>
    %c18 = arith.constant 18 : index
    %c0_3 = arith.constant 0 : index
    %3 = vector.load %arg1[%c18, %c0_3] : memref<36x72xf32, #tpu.memory_space<vmem>>, vector<16x72xf32>
    %4 = tpu.concatenate %2, %3 in 0 : vector<16x72xf32>, vector<16x72xf32> -> vector<32x72xf32>
    %c0_4 = arith.constant 0 : index
    %c0_5 = arith.constant 0 : index
    %5 = vector.load %arg2[%c0_4, %c0_5] : memref<216x128xf32, #tpu.memory_space<vmem>>, vector<72x128xf32>
    %cst_6 = arith.constant dense<0.000000e+00> : vector<32x128xf32>
    %6 = tpu.matmul %4, %5, %cst_6 {dimension_numbers = #tpu.dot_dimension_numbers<[1], [0], [0], [1], [0, 0, 1, 1], [], []>} : vector<32x72xf32>, vector<72x128xf32>, vector<32x128xf32> -> vector<32x128xf32>
    %7 = arith.addf %1, %6 : vector<32x128xf32>
    %c1 = arith.constant 1 : index
    %c0_7 = arith.constant 0 : index
    %8 = vector.load %arg1[%c1, %c0_7] : memref<36x72xf32, #tpu.memory_space<vmem>>, vector<16x72xf32>
    %c19 = arith.constant 19 : index
    %c0_8 = arith.constant 0 : index
    %9 = vector.load %arg1[%c19, %c0_8] : memref<36x72xf32, #tpu.memory_space<vmem>>, vector<16x72xf32>
    %10 = tpu.concatenate %8, %9 in 0 : vector<16x72xf32>, vector<16x72xf32> -> vector<32x72xf32>
    %c72 = arith.constant 72 : index
    %c0_9 = arith.constant 0 : index
    %11 = vector.load %arg2[%c72, %c0_9] : memref<216x128xf32, #tpu.memory_space<vmem>>, vector<72x128xf32>
    %cst_10 = arith.constant dense<0.000000e+00> : vector<32x128xf32>
    %12 = tpu.matmul %10, %11, %cst_10 {dimension_numbers = #tpu.dot_dimension_numbers<[1], [0], [0], [1], [0, 0, 1, 1], [], []>} : vector<32x72xf32>, vector<72x128xf32>, vector<32x128xf32> -> vector<32x128xf32>
    %13 = arith.addf %7, %12 : vector<32x128xf32>
    %c2 = arith.constant 2 : index
    %c0_11 = arith.constant 0 : index
    %14 = vector.load %arg1[%c2, %c0_11] : memref<36x72xf32, #tpu.memory_space<vmem>>, vector<16x72xf32>
    %c20 = arith.constant 20 : index
    %c0_12 = arith.constant 0 : index
    %15 = vector.load %arg1[%c20, %c0_12] : memref<36x72xf32, #tpu.memory_space<vmem>>, vector<16x72xf32>
    %16 = tpu.concatenate %14, %15 in 0 : vector<16x72xf32>, vector<16x72xf32> -> vector<32x72xf32>
    %c144 = arith.constant 144 : index
    %c0_13 = arith.constant 0 : index
    %17 = vector.load %arg2[%c144, %c0_13] : memref<216x128xf32, #tpu.memory_space<vmem>>, vector<72x128xf32>
    %cst_14 = arith.constant dense<0.000000e+00> : vector<32x128xf32>
    %18 = tpu.matmul %16, %17, %cst_14 {dimension_numbers = #tpu.dot_dimension_numbers<[1], [0], [0], [1], [0, 0, 1, 1], [], []>} : vector<32x72xf32>, vector<72x128xf32>, vector<32x128xf32> -> vector<32x128xf32>
    %19 = arith.addf %13, %18 : vector<32x128xf32>
    %c0_15 = arith.constant 0 : index
    %c0_16 = arith.constant 0 : index
    %20 = vector.load %arg3[%c0_15, %c0_16] : memref<1x128xf32, #tpu.memory_space<vmem>>, vector<1x128xf32>
    %21 = vector.broadcast %20 : vector<1x128xf32> to vector<32x128xf32>
    %22 = arith.addf %19, %21 : vector<32x128xf32>
    %c0_17 = arith.constant 0 : index
    %c0_18 = arith.constant 0 : index
    %23 = vector.load %arg4[%c0_17, %c0_18] : memref<1x128xf32, #tpu.memory_space<vmem>>, vector<1x128xf32>
    %c0_19 = arith.constant 0 : index
    %c0_20 = arith.constant 0 : index
    %24 = vector.load %arg5[%c0_19, %c0_20] : memref<1x128xf32, #tpu.memory_space<vmem>>, vector<1x128xf32>
    %cst_21 = arith.constant dense<0.000000e+00> : vector<128xf32>
    %25 = vector.multi_reduction <add>, %22, %cst_21 [0] : vector<32x128xf32> to vector<128xf32>
    %26 = vector.shape_cast %25 : vector<128xf32> to vector<1x128xf32>
    %cst_22 = arith.constant dense<0.000000e+00> : vector<1x128xf32>
    %27 = tpu.matmul %26, %0, %cst_22 {dimension_numbers = #tpu.dot_dimension_numbers<[1], [0], [0], [1], [0, 0, 1, 1], [], []>} : vector<1x128xf32>, vector<128x128xf32>, vector<1x128xf32> -> vector<1x128xf32>
    %cst_23 = arith.constant 0.001953125 : f32
    %28 = vector.broadcast %cst_23 : f32 to vector<1x128xf32>
    %29 = arith.mulf %27, %28 : vector<1x128xf32>
    %30 = vector.broadcast %29 : vector<1x128xf32> to vector<32x128xf32>
    %31 = arith.subf %22, %30 : vector<32x128xf32>
    %32 = arith.mulf %31, %31 : vector<32x128xf32>
    %cst_24 = arith.constant dense<0.000000e+00> : vector<128xf32>
    %33 = vector.multi_reduction <add>, %32, %cst_24 [0] : vector<32x128xf32> to vector<128xf32>
    %34 = vector.shape_cast %33 : vector<128xf32> to vector<1x128xf32>
    %cst_25 = arith.constant dense<0.000000e+00> : vector<1x128xf32>
    %35 = tpu.matmul %34, %0, %cst_25 {dimension_numbers = #tpu.dot_dimension_numbers<[1], [0], [0], [1], [0, 0, 1, 1], [], []>} : vector<1x128xf32>, vector<128x128xf32>, vector<1x128xf32> -> vector<1x128xf32>
    %cst_26 = arith.constant 0.001953125 : f32
    %36 = vector.broadcast %cst_26 : f32 to vector<1x128xf32>
    %37 = arith.mulf %35, %36 : vector<1x128xf32>
    %cst_27 = arith.constant 9.99999974E-6 : f32
    %38 = vector.broadcast %cst_27 : f32 to vector<1x128xf32>
    %39 = arith.addf %37, %38 : vector<1x128xf32>
    %40 = math.rsqrt %39 : vector<1x128xf32>
    %41 = arith.mulf %23, %40 : vector<1x128xf32>
    %42 = vector.broadcast %41 : vector<1x128xf32> to vector<32x128xf32>
    %43 = arith.mulf %31, %42 : vector<32x128xf32>
    %44 = vector.broadcast %24 : vector<1x128xf32> to vector<32x128xf32>
    %45 = arith.addf %43, %44 : vector<32x128xf32>
    %cst_28 = arith.constant 0.000000e+00 : f32
    %46 = vector.broadcast %cst_28 : f32 to vector<32x128xf32>
    %47 = arith.cmpf ogt, %45, %46 : vector<32x128xf32>
    %cst_29 = arith.constant 1.000000e-01 : f32
    %48 = vector.broadcast %cst_29 : f32 to vector<32x128xf32>
    %49 = arith.mulf %48, %45 : vector<32x128xf32>
    %50 = arith.select %47, %45, %49 : vector<32x128xi1>, vector<32x128xf32>
    %cst_30 = arith.constant 0.000000e+00 : f32
    %51 = vector.broadcast %cst_30 : f32 to vector<1x144xf32>
    %cst_31 = arith.constant 0.000000e+00 : f32
    %52 = vector.broadcast %cst_31 : f32 to vector<16x8xf32>
    %c0_32 = arith.constant 0 : index
    %c0_33 = arith.constant 0 : index
    %53 = vector.load %arg12[%c0_32, %c0_33] : memref<36x144xf32, #tpu.memory_space<vmem>>, vector<1x144xf32>
    tpu.vector_store %arg12[%c0_32, %c0_33], %51 {strides = array<i32>} : memref<36x144xf32, #tpu.memory_space<vmem>>, vector<1x144xf32>,
    %c17 = arith.constant 17 : index
    %c0_34 = arith.constant 0 : index
    %54 = vector.load %arg12[%c17, %c0_34] : memref<36x144xf32, #tpu.memory_space<vmem>>, vector<1x144xf32>
    tpu.vector_store %arg12[%c17, %c0_34], %51 {strides = array<i32>} : memref<36x144xf32, #tpu.memory_space<vmem>>, vector<1x144xf32>,
    %c1_35 = arith.constant 1 : index
    %c0_36 = arith.constant 0 : index
    %55 = vector.load %arg12[%c1_35, %c0_36] : memref<36x144xf32, #tpu.memory_space<vmem>>, vector<16x8xf32>
    tpu.vector_store %arg12[%c1_35, %c0_36], %52 {strides = array<i32>} : memref<36x144xf32, #tpu.memory_space<vmem>>, vector<16x8xf32>,
    %c1_37 = arith.constant 1 : index
    %c136 = arith.constant 136 : index
    %56 = vector.load %arg12[%c1_37, %c136] : memref<36x144xf32, #tpu.memory_space<vmem>>, vector<16x8xf32>
    tpu.vector_store %arg12[%c1_37, %c136], %52 {strides = array<i32>} : memref<36x144xf32, #tpu.memory_space<vmem>>, vector<16x8xf32>,
    %57 = vector.extract_strided_slice %50 {offsets = [0, 0], sizes = [16, 128], strides = [1, 1]} : vector<32x128xf32> to vector<16x128xf32>
    %c1_38 = arith.constant 1 : index
    %c8 = arith.constant 8 : index
    %58 = vector.load %arg12[%c1_38, %c8] : memref<36x144xf32, #tpu.memory_space<vmem>>, vector<16x128xf32>
    tpu.vector_store %arg12[%c1_38, %c8], %57 {strides = array<i32>} : memref<36x144xf32, #tpu.memory_space<vmem>>, vector<16x128xf32>,
    %c18_39 = arith.constant 18 : index
    %c0_40 = arith.constant 0 : index
    %59 = vector.load %arg12[%c18_39, %c0_40] : memref<36x144xf32, #tpu.memory_space<vmem>>, vector<1x144xf32>
    tpu.vector_store %arg12[%c18_39, %c0_40], %51 {strides = array<i32>} : memref<36x144xf32, #tpu.memory_space<vmem>>, vector<1x144xf32>,
    %c35 = arith.constant 35 : index
    %c0_41 = arith.constant 0 : index
    %60 = vector.load %arg12[%c35, %c0_41] : memref<36x144xf32, #tpu.memory_space<vmem>>, vector<1x144xf32>
    tpu.vector_store %arg12[%c35, %c0_41], %51 {strides = array<i32>} : memref<36x144xf32, #tpu.memory_space<vmem>>, vector<1x144xf32>,
    %c19_42 = arith.constant 19 : index
    %c0_43 = arith.constant 0 : index
    %61 = vector.load %arg12[%c19_42, %c0_43] : memref<36x144xf32, #tpu.memory_space<vmem>>, vector<16x8xf32>
    tpu.vector_store %arg12[%c19_42, %c0_43], %52 {strides = array<i32>} : memref<36x144xf32, #tpu.memory_space<vmem>>, vector<16x8xf32>,
    %c19_44 = arith.constant 19 : index
    %c136_45 = arith.constant 136 : index
    %62 = vector.load %arg12[%c19_44, %c136_45] : memref<36x144xf32, #tpu.memory_space<vmem>>, vector<16x8xf32>
    tpu.vector_store %arg12[%c19_44, %c136_45], %52 {strides = array<i32>} : memref<36x144xf32, #tpu.memory_space<vmem>>, vector<16x8xf32>,
    %63 = vector.extract_strided_slice %50 {offsets = [16, 0], sizes = [16, 128], strides = [1, 1]} : vector<32x128xf32> to vector<16x128xf32>
    %c19_46 = arith.constant 19 : index
    %c8_47 = arith.constant 8 : index
    %64 = vector.load %arg12[%c19_46, %c8_47] : memref<36x144xf32, #tpu.memory_space<vmem>>, vector<16x128xf32>
    tpu.vector_store %arg12[%c19_46, %c8_47], %63 {strides = array<i32>} : memref<36x144xf32, #tpu.memory_space<vmem>>, vector<16x128xf32>,
    %cst_48 = arith.constant 0.000000e+00 : f32
    %65 = vector.broadcast %cst_48 : f32 to vector<32x128xf32>
    %c0_49 = arith.constant 0 : index
    %c0_50 = arith.constant 0 : index
    %66 = vector.load %arg12[%c0_49, %c0_50] : memref<36x144xf32, #tpu.memory_space<vmem>>, vector<16x144xf32>
    %c18_51 = arith.constant 18 : index
    %c0_52 = arith.constant 0 : index
    %67 = vector.load %arg12[%c18_51, %c0_52] : memref<36x144xf32, #tpu.memory_space<vmem>>, vector<16x144xf32>
    %68 = tpu.concatenate %66, %67 in 0 : vector<16x144xf32>, vector<16x144xf32> -> vector<32x144xf32>
    %c0_53 = arith.constant 0 : index
    %c0_54 = arith.constant 0 : index
    %69 = vector.load %arg6[%c0_53, %c0_54] : memref<432x128xf32, #tpu.memory_space<vmem>>, vector<144x128xf32>
    %cst_55 = arith.constant dense<0.000000e+00> : vector<32x128xf32>
    %70 = tpu.matmul %68, %69, %cst_55 {dimension_numbers = #tpu.dot_dimension_numbers<[1], [0], [0], [1], [0, 0, 1, 1], [], []>} : vector<32x144xf32>, vector<144x128xf32>, vector<32x128xf32> -> vector<32x128xf32>
    %71 = arith.addf %65, %70 : vector<32x128xf32>
    %c1_56 = arith.constant 1 : index
    %c0_57 = arith.constant 0 : index
    %72 = vector.load %arg12[%c1_56, %c0_57] : memref<36x144xf32, #tpu.memory_space<vmem>>, vector<16x144xf32>
    %c19_58 = arith.constant 19 : index
    %c0_59 = arith.constant 0 : index
    %73 = vector.load %arg12[%c19_58, %c0_59] : memref<36x144xf32, #tpu.memory_space<vmem>>, vector<16x144xf32>
    %74 = tpu.concatenate %72, %73 in 0 : vector<16x144xf32>, vector<16x144xf32> -> vector<32x144xf32>
    %c144_60 = arith.constant 144 : index
    %c0_61 = arith.constant 0 : index
    %75 = vector.load %arg6[%c144_60, %c0_61] : memref<432x128xf32, #tpu.memory_space<vmem>>, vector<144x128xf32>
    %cst_62 = arith.constant dense<0.000000e+00> : vector<32x128xf32>
    %76 = tpu.matmul %74, %75, %cst_62 {dimension_numbers = #tpu.dot_dimension_numbers<[1], [0], [0], [1], [0, 0, 1, 1], [], []>} : vector<32x144xf32>, vector<144x128xf32>, vector<32x128xf32> -> vector<32x128xf32>
    %77 = arith.addf %71, %76 : vector<32x128xf32>
    %c2_63 = arith.constant 2 : index
    %c0_64 = arith.constant 0 : index
    %78 = vector.load %arg12[%c2_63, %c0_64] : memref<36x144xf32, #tpu.memory_space<vmem>>, vector<16x144xf32>
    %c20_65 = arith.constant 20 : index
    %c0_66 = arith.constant 0 : index
    %79 = vector.load %arg12[%c20_65, %c0_66] : memref<36x144xf32, #tpu.memory_space<vmem>>, vector<16x144xf32>
    %80 = tpu.concatenate %78, %79 in 0 : vector<16x144xf32>, vector<16x144xf32> -> vector<32x144xf32>
    %c288 = arith.constant 288 : index
    %c0_67 = arith.constant 0 : index
    %81 = vector.load %arg6[%c288, %c0_67] : memref<432x128xf32, #tpu.memory_space<vmem>>, vector<144x128xf32>
    %cst_68 = arith.constant dense<0.000000e+00> : vector<32x128xf32>
    %82 = tpu.matmul %80, %81, %cst_68 {dimension_numbers = #tpu.dot_dimension_numbers<[1], [0], [0], [1], [0, 0, 1, 1], [], []>} : vector<32x144xf32>, vector<144x128xf32>, vector<32x128xf32> -> vector<32x128xf32>
    %83 = arith.addf %77, %82 : vector<32x128xf32>
    %c0_69 = arith.constant 0 : index
    %c0_70 = arith.constant 0 : index
    %84 = vector.load %arg7[%c0_69, %c0_70] : memref<1x128xf32, #tpu.memory_space<vmem>>, vector<1x128xf32>
    %85 = vector.broadcast %84 : vector<1x128xf32> to vector<32x128xf32>
    %86 = arith.addf %83, %85 : vector<32x128xf32>
    %c0_71 = arith.constant 0 : index
    %c0_72 = arith.constant 0 : index
    %87 = vector.load %arg8[%c0_71, %c0_72] : memref<1x128xf32, #tpu.memory_space<vmem>>, vector<1x128xf32>
    %c0_73 = arith.constant 0 : index
    %c0_74 = arith.constant 0 : index
    %88 = vector.load %arg9[%c0_73, %c0_74] : memref<1x128xf32, #tpu.memory_space<vmem>>, vector<1x128xf32>
    %cst_75 = arith.constant dense<0.000000e+00> : vector<128xf32>
    %89 = vector.multi_reduction <add>, %86, %cst_75 [0] : vector<32x128xf32> to vector<128xf32>
    %90 = vector.shape_cast %89 : vector<128xf32> to vector<1x128xf32>
    %cst_76 = arith.constant dense<0.000000e+00> : vector<1x128xf32>
    %91 = tpu.matmul %90, %0, %cst_76 {dimension_numbers = #tpu.dot_dimension_numbers<[1], [0], [0], [1], [0, 0, 1, 1], [], []>} : vector<1x128xf32>, vector<128x128xf32>, vector<1x128xf32> -> vector<1x128xf32>
    %cst_77 = arith.constant 0.001953125 : f32
    %92 = vector.broadcast %cst_77 : f32 to vector<1x128xf32>
    %93 = arith.mulf %91, %92 : vector<1x128xf32>
    %94 = vector.broadcast %93 : vector<1x128xf32> to vector<32x128xf32>
    %95 = arith.subf %86, %94 : vector<32x128xf32>
    %96 = arith.mulf %95, %95 : vector<32x128xf32>
    %cst_78 = arith.constant dense<0.000000e+00> : vector<128xf32>
    %97 = vector.multi_reduction <add>, %96, %cst_78 [0] : vector<32x128xf32> to vector<128xf32>
    %98 = vector.shape_cast %97 : vector<128xf32> to vector<1x128xf32>
    %cst_79 = arith.constant dense<0.000000e+00> : vector<1x128xf32>
    %99 = tpu.matmul %98, %0, %cst_79 {dimension_numbers = #tpu.dot_dimension_numbers<[1], [0], [0], [1], [0, 0, 1, 1], [], []>} : vector<1x128xf32>, vector<128x128xf32>, vector<1x128xf32> -> vector<1x128xf32>
    %cst_80 = arith.constant 0.001953125 : f32
    %100 = vector.broadcast %cst_80 : f32 to vector<1x128xf32>
    %101 = arith.mulf %99, %100 : vector<1x128xf32>
    %cst_81 = arith.constant 9.99999974E-6 : f32
    %102 = vector.broadcast %cst_81 : f32 to vector<1x128xf32>
    %103 = arith.addf %101, %102 : vector<1x128xf32>
    %104 = math.rsqrt %103 : vector<1x128xf32>
    %105 = arith.mulf %87, %104 : vector<1x128xf32>
    %106 = vector.broadcast %105 : vector<1x128xf32> to vector<32x128xf32>
    %107 = arith.mulf %95, %106 : vector<32x128xf32>
    %108 = vector.broadcast %88 : vector<1x128xf32> to vector<32x128xf32>
    %109 = arith.addf %107, %108 : vector<32x128xf32>
    %cst_82 = arith.constant 0.000000e+00 : f32
    %110 = vector.broadcast %cst_82 : f32 to vector<32x128xf32>
    %111 = arith.cmpf ogt, %109, %110 : vector<32x128xf32>
    %cst_83 = arith.constant 1.000000e-01 : f32
    %112 = vector.broadcast %cst_83 : f32 to vector<32x128xf32>
    %113 = arith.mulf %112, %109 : vector<32x128xf32>
    %114 = arith.select %111, %109, %113 : vector<32x128xi1>, vector<32x128xf32>
    %c0_84 = arith.constant 0 : index
    %c0_85 = arith.constant 0 : index
    %115 = vector.load %arg11[%c0_84, %c0_85] : memref<32x128xf32, #tpu.memory_space<vmem>>, vector<32x128xf32>
    tpu.vector_store %arg11[%c0_84, %c0_85], %114 {strides = array<i32>} : memref<32x128xf32, #tpu.memory_space<vmem>>, vector<32x128xf32>,
    return
  }
  func.func @transform_0(%arg0: i32) -> (i32, i32) {
    %c0_i32 = arith.constant 0 : i32
    %c0_i32_0 = arith.constant 0 : i32
    %c0_i32_1 = arith.constant 0 : i32
    return %c0_i32, %c0_i32_0 : i32, i32
  }
  func.func @transform_1(%arg0: i32) -> (i32, i32) {
    %c0_i32 = arith.constant 0 : i32
    %c0_i32_0 = arith.constant 0 : i32
    %c0_i32_1 = arith.constant 0 : i32
    return %c0_i32, %c0_i32_0 : i32, i32
  }
  func.func @transform_2(%arg0: i32) -> (i32, i32) {
    %c0_i32 = arith.constant 0 : i32
    %c0_i32_0 = arith.constant 0 : i32
    %c0_i32_1 = arith.constant 0 : i32
    return %c0_i32, %c0_i32_0 : i32, i32
  }
  func.func @transform_3(%arg0: i32) -> (i32, i32) {
    %c0_i32 = arith.constant 0 : i32
    %c0_i32_0 = arith.constant 0 : i32
    %c0_i32_1 = arith.constant 0 : i32
    return %c0_i32, %c0_i32_0 : i32, i32
  }
  func.func @transform_4(%arg0: i32) -> (i32, i32) {
    %c0_i32 = arith.constant 0 : i32
    %c0_i32_0 = arith.constant 0 : i32
    %c0_i32_1 = arith.constant 0 : i32
    return %c0_i32, %c0_i32_0 : i32, i32
  }
  func.func @transform_5(%arg0: i32) -> (i32, i32) {
    %c0_i32 = arith.constant 0 : i32
    %c0_i32_0 = arith.constant 0 : i32
    %c0_i32_1 = arith.constant 0 : i32
    return %c0_i32, %c0_i32_0 : i32, i32
  }
  func.func @transform_6(%arg0: i32) -> (i32, i32) {
    %c0_i32 = arith.constant 0 : i32
    %c0_i32_0 = arith.constant 0 : i32
    %c0_i32_1 = arith.constant 0 : i32
    return %c0_i32, %c0_i32_0 : i32, i32
  }
  func.func @transform_7(%arg0: i32) -> (i32, i32) {
    %c0_i32 = arith.constant 0 : i32
    %c0_i32_0 = arith.constant 0 : i32
    %c0_i32_1 = arith.constant 0 : i32
    return %c0_i32, %c0_i32_0 : i32, i32
  }
  func.func @transform_8(%arg0: i32) -> (i32, i32) {
    %c0_i32 = arith.constant 0 : i32
    %c0_i32_0 = arith.constant 0 : i32
    %c0_i32_1 = arith.constant 0 : i32
    return %c0_i32, %c0_i32_0 : i32, i32
  }
  func.func @transform_9(%arg0: i32) -> (i32, i32) {
    %c0_i32 = arith.constant 0 : i32
    %c0_i32_0 = arith.constant 0 : i32
    %c0_i32_1 = arith.constant 0 : i32
    return %c0_i32, %c0_i32_0 : i32, i32
  }
  func.func @transform_10(%arg0: i32) -> (i32, i32) {
    %c0_i32 = arith.constant 0 : i32
    %c0_i32_0 = arith.constant 0 : i32
    %c0_i32_1 = arith.constant 0 : i32
    return %c0_i32, %c0_i32_0 : i32, i32
  }
}

</mosaic_0001>

<llo_original>
// kernel: squeeze.6
$region0: #{squeeze.6}
  %s0 = inlined_call_operand.vmem [shape: f32[1,3,4,8], index: 0, kind: input, shape index: {}]
  %s1 = inlined_call_operand.vmem [shape: f32[12,8], index: 1, kind: output, shape index: {}]
  $region1: #{squeeze.6} parent=0
    #allocation0 [shape = 'u8[12288]{0}', space=vmem, size = 0x3000, scoped, tag = 'scoped mem for input reshape']
    %s3 = ssub.s32 16, 1
    %s4 = scalar_lea.vmem %s0, 8
    %v5 = vld [vmem:[%s4] sm:%s3]
    %s6 = scalar_lea.vmem [#allocation0], 16
    %7 = vst [vmem:[%s6] sm:%s3] %v5
    %s8 = scalar_lea.vmem %s0, 4
    %v9 = vld [vmem:[%s8] sm:%s3]
    %s10 = scalar_lea.vmem [#allocation0], 8
    %11 = vst [vmem:[%s10] sm:%s3] %v9
    %v12 = vld [vmem:[%s0] sm:%s3]
    %13 = vst [vmem:[#allocation0] sm:%s3] %v12
    %v14 = vld [vmem:[#allocation0] sm:$0xf]
    %vm15 = vcmask 64512
    %16 = vst.msk [vmem:[%s1] sm:$0xf] %vm15, %v14
    %s17 = scalar_lea.vmem [#allocation0], 8
    %v18 = vld [vmem:[%s17] sm:$0xf]
    %vm19 = vcmask 64512
    %s20 = scalar_lea.vmem %s1, 4
    %21 = vst.msk [vmem:[%s20] sm:$0xf] %vm19, %v18
    %s22 = scalar_lea.vmem [#allocation0], 16
    %v23 = vld [vmem:[%s22] sm:$0xf]
    %vm24 = vcmask 64512
    %s25 = scalar_lea.vmem %s1, 8
    %26 = vst.msk [vmem:[%s25] sm:$0xf] %vm24, %v23

// kernel: tile.32
$region0: #{tile.32}
  #allocation0 [shape = 's32[1]{0}', space=sflag, size = 0x4, scoped, tag = 'scoped memory for tile.32']
  %s0 = inlined_call_operand.vmem [shape: f32[8,8], index: 0, kind: input, shape index: {}]
  %s1 = inlined_call_operand.vmem [shape: f32[16,8,16,8], index: 1, kind: output, shape index: {}]
  // Predicated region
  $region2: #{tile.32} parent=0 // pred_check
    _
  $region3: #{tile.32} parent=0 // pred_check_branch
    %3 = sbr.rel (0) target = $region5
  $region4: #{tile.32} parent=0 // pred_region
    _
  $region5: #{tile.32} parent=0 // pred_fallthru
    _
  %v4 = vld [vmem:[%s0] ss:$0 sm:$0xff]
  %5 = vst [vmem:[%s1] sm:$0xff] %v4
  %s6 = scalar_lea.vmem %s1, 128
  %7 = vst [vmem:[%s6] sm:$0xff] %v4
  %s8 = scalar_lea.vmem %s1, 256
  %9 = vst [vmem:[%s8] sm:$0xff] %v4
  %s10 = scalar_lea.vmem %s1, 384
  %11 = vst [vmem:[%s10] sm:$0xff] %v4
  %s12 = scalar_lea.vmem %s1, 512
  %13 = vst [vmem:[%s12] sm:$0xff] %v4
  %s14 = scalar_lea.vmem %s1, 640
  %15 = vst [vmem:[%s14] sm:$0xff] %v4
  %s16 = scalar_lea.vmem %s1, 768
  %17 = vst [vmem:[%s16] sm:$0xff] %v4
  %s18 = scalar_lea.vmem %s1, 896
  %19 = vst [vmem:[%s18] sm:$0xff] %v4
  %s20 = scalar_lea.vmem %s1, 1024
  %21 = vst [vmem:[%s20] sm:$0xff] %v4
  %s22 = scalar_lea.vmem %s1, 1152
  %23 = vst [vmem:[%s22] sm:$0xff] %v4
  %s24 = scalar_lea.vmem %s1, 1280
  %25 = vst [vmem:[%s24] sm:$0xff] %v4
  %s26 = scalar_lea.vmem %s1, 1408
  %27 = vst [vmem:[%s26] sm:$0xff] %v4
  %s28 = scalar_lea.vmem %s1, 1536
  %29 = vst [vmem:[%s28] sm:$0xff] %v4
  %s30 = scalar_lea.vmem %s1, 1664
  %31 = vst [vmem:[%s30] sm:$0xff] %v4
  %s32 = scalar_lea.vmem %s1, 1792
  %33 = vst [vmem:[%s32] sm:$0xff] %v4
  %s34 = scalar_lea.vmem %s1, 1920
  %35 = vst [vmem:[%s34] sm:$0xff] %v4
  %s36 = scalar_lea.vmem %s0, 1
  %v37 = vld [vmem:[%s36] ss:$0 sm:$0xff]
  %s38 = scalar_lea.vmem %s1, 16
  %39 = vst [vmem:[%s38] sm:$0xff] %v37
  %s40 = scalar_lea.vmem %s1, 144
  %41 = vst [vmem:[%s40] sm:$0xff] %v37
  %s42 = scalar_lea.vmem %s1, 272
  %43 = vst [vmem:[%s42] sm:$0xff] %v37
  %s44 = scalar_lea.vmem %s1, 400
  %45 = vst [vmem:[%s44] sm:$0xff] %v37
  %s46 = scalar_lea.vmem %s1, 528
  %47 = vst [vmem:[%s46] sm:$0xff] %v37
  %s48 = scalar_lea.vmem %s1, 656
  %49 = vst [vmem:[%s48] sm:$0xff] %v37
  %s50 = scalar_lea.vmem %s1, 784
  %51 = vst [vmem:[%s50] sm:$0xff] %v37
  %s52 = scalar_lea.vmem %s1, 912
  %53 = vst [vmem:[%s52] sm:$0xff] %v37
  %s54 = scalar_lea.vmem %s1, 1040
  %55 = vst [vmem:[%s54] sm:$0xff] %v37
  %s56 = scalar_lea.vmem %s1, 1168
  %57 = vst [vmem:[%s56] sm:$0xff] %v37
  %s58 = scalar_lea.vmem %s1, 1296
  %59 = vst [vmem:[%s58] sm:$0xff] %v37
  %s60 = scalar_lea.vmem %s1, 1424
  %61 = vst [vmem:[%s60] sm:$0xff] %v37
  %s62 = scalar_lea.vmem %s1, 1552
  %63 = vst [vmem:[%s62] sm:$0xff] %v37
  %s64 = scalar_lea.vmem %s1, 1680
  %65 = vst [vmem:[%s64] sm:$0xff] %v37
  %s66 = scalar_lea.vmem %s1, 1808
  %67 = vst [vmem:[%s66] sm:$0xff] %v37
  %s68 = scalar_lea.vmem %s1, 1936
  %69 = vst [vmem:[%s68] sm:$0xff] %v37
  %s70 = scalar_lea.vmem %s0, 2
  %v71 = vld [vmem:[%s70] ss:$0 sm:$0xff]
  %s72 = scalar_lea.vmem %s1, 32
  %73 = vst [vmem:[%s72] sm:$0xff] %v71
  %s74 = scalar_lea.vmem %s1, 160
  %75 = vst [vmem:[%s74] sm:$0xff] %v71
  %s76 = scalar_lea.vmem %s1, 288
  %77 = vst [vmem:[%s76] sm:$0xff] %v71
  %s78 = scalar_lea.vmem %s1, 416
  %79 = vst [vmem:[%s78] sm:$0xff] %v71
  %s80 = scalar_lea.vmem %s1, 544
  %81 = vst [vmem:[%s80] sm:$0xff] %v71
  %s82 = scalar_lea.vmem %s1, 672
  %83 = vst [vmem:[%s82] sm:$0xff] %v71
  %s84 = scalar_lea.vmem %s1, 800
  %85 = vst [vmem:[%s84] sm:$0xff] %v71
  %s86 = scalar_lea.vmem %s1, 928
  %87 = vst [vmem:[%s86] sm:$0xff] %v71
  %s88 = scalar_lea.vmem %s1, 1056
  %89 = vst [vmem:[%s88] sm:$0xff] %v71
  %s90 = scalar_lea.vmem %s1, 1184
  %91 = vst [vmem:[%s90] sm:$0xff] %v71
  %s92 = scalar_lea.vmem %s1, 1312
  %93 = vst [vmem:[%s92] sm:$0xff] %v71
  %s94 = scalar_lea.vmem %s1, 1440
  %95 = vst [vmem:[%s94] sm:$0xff] %v71
  %s96 = scalar_lea.vmem %s1, 1568
  %97 = vst [vmem:[%s96] sm:$0xff] %v71
  %s98 = scalar_lea.vmem %s1, 1696
  %99 = vst [vmem:[%s98] sm:$0xff] %v71
  %s100 = scalar_lea.vmem %s1, 1824
  %101 = vst [vmem:[%s100] sm:$0xff] %v71
  %s102 = scalar_lea.vmem %s1, 1952
  %103 = vst [vmem:[%s102] sm:$0xff] %v71
  %s104 = scalar_lea.vmem %s0, 3
  %v105 = vld [vmem:[%s104] ss:$0 sm:$0xff]
  %s106 = scalar_lea.vmem %s1, 48
  %107 = vst [vmem:[%s106] sm:$0xff] %v105
  %s108 = scalar_lea.vmem %s1, 176
  %109 = vst [vmem:[%s108] sm:$0xff] %v105
  %s110 = scalar_lea.vmem %s1, 304
  %111 = vst [vmem:[%s110] sm:$0xff] %v105
  %s112 = scalar_lea.vmem %s1, 432
  %113 = vst [vmem:[%s112] sm:$0xff] %v105
  %s114 = scalar_lea.vmem %s1, 560
  %115 = vst [vmem:[%s114] sm:$0xff] %v105
  %s116 = scalar_lea.vmem %s1, 688
  %117 = vst [vmem:[%s116] sm:$0xff] %v105
  %s118 = scalar_lea.vmem %s1, 816
  %119 = vst [vmem:[%s118] sm:$0xff] %v105
  %s120 = scalar_lea.vmem %s1, 944
  %121 = vst [vmem:[%s120] sm:$0xff] %v105
  %s122 = scalar_lea.vmem %s1, 1072
  %123 = vst [vmem:[%s122] sm:$0xff] %v105
  %s124 = scalar_lea.vmem %s1, 1200
  %125 = vst [vmem:[%s124] sm:$0xff] %v105
  %s126 = scalar_lea.vmem %s1, 1328
  %127 = vst [vmem:[%s126] sm:$0xff] %v105
  %s128 = scalar_lea.vmem %s1, 1456
  %129 = vst [vmem:[%s128] sm:$0xff] %v105
  %s130 = scalar_lea.vmem %s1, 1584
  %131 = vst [vmem:[%s130] sm:$0xff] %v105
  %s132 = scalar_lea.vmem %s1, 1712
  %133 = vst [vmem:[%s132] sm:$0xff] %v105
  %s134 = scalar_lea.vmem %s1, 1840
  %135 = vst [vmem:[%s134] sm:$0xff] %v105
  %s136 = scalar_lea.vmem %s1, 1968
  %137 = vst [vmem:[%s136] sm:$0xff] %v105
  %s138 = scalar_lea.vmem %s0, 4
  %v139 = vld [vmem:[%s138] ss:$0 sm:$0xff]
  %s140 = scalar_lea.vmem %s1, 64
  %141 = vst [vmem:[%s140] sm:$0xff] %v139
  %s142 = scalar_lea.vmem %s1, 192
  %143 = vst [vmem:[%s142] sm:$0xff] %v139
  %s144 = scalar_lea.vmem %s1, 320
  %145 = vst [vmem:[%s144] sm:$0xff] %v139
  %s146 = scalar_lea.vmem %s1, 448
  %147 = vst [vmem:[%s146] sm:$0xff] %v139
  %s148 = scalar_lea.vmem %s1, 576
  %149 = vst [vmem:[%s148] sm:$0xff] %v139
  %s150 = scalar_lea.vmem %s1, 704
  %151 = vst [vmem:[%s150] sm:$0xff] %v139
  %s152 = scalar_lea.vmem %s1, 832
  %153 = vst [vmem:[%s152] sm:$0xff] %v139
  %s154 = scalar_lea.vmem %s1, 960
  %155 = vst [vmem:[%s154] sm:$0xff] %v139
  %s156 = scalar_lea.vmem %s1, 1088
  %157 = vst [vmem:[%s156] sm:$0xff] %v139
  %s158 = scalar_lea.vmem %s1, 1216
  %159 = vst [vmem:[%s158] sm:$0xff] %v139
  %s160 = scalar_lea.vmem %s1, 1344
  %161 = vst [vmem:[%s160] sm:$0xff] %v139
  %s162 = scalar_lea.vmem %s1, 1472
  %163 = vst [vmem:[%s162] sm:$0xff] %v139
  %s164 = scalar_lea.vmem %s1, 1600
  %165 = vst [vmem:[%s164] sm:$0xff] %v139
  %s166 = scalar_lea.vmem %s1, 1728
  %167 = vst [vmem:[%s166] sm:$0xff] %v139
  %s168 = scalar_lea.vmem %s1, 1856
  %169 = vst [vmem:[%s168] sm:$0xff] %v139
  %s170 = scalar_lea.vmem %s1, 1984
  %171 = vst [vmem:[%s170] sm:$0xff] %v139
  %s172 = scalar_lea.vmem %s0, 5
  %v173 = vld [vmem:[%s172] ss:$0 sm:$0xff]
  %s174 = scalar_lea.vmem %s1, 80
  %175 = vst [vmem:[%s174] sm:$0xff] %v173
  %s176 = scalar_lea.vmem %s1, 208
  %177 = vst [vmem:[%s176] sm:$0xff] %v173
  %s178 = scalar_lea.vmem %s1, 336
  %179 = vst [vmem:[%s178] sm:$0xff] %v173
  %s180 = scalar_lea.vmem %s1, 464
  %181 = vst [vmem:[%s180] sm:$0xff] %v173
  %s182 = scalar_lea.vmem %s1, 592
  %183 = vst [vmem:[%s182] sm:$0xff] %v173
  %s184 = scalar_lea.vmem %s1, 720
  %185 = vst [vmem:[%s184] sm:$0xff] %v173
  %s186 = scalar_lea.vmem %s1, 848
  %187 = vst [vmem:[%s186] sm:$0xff] %v173
  %s188 = scalar_lea.vmem %s1, 976
  %189 = vst [vmem:[%s188] sm:$0xff] %v173
  %s190 = scalar_lea.vmem %s1, 1104
  %191 = vst [vmem:[%s190] sm:$0xff] %v173
  %s192 = scalar_lea.vmem %s1, 1232
  %193 = vst [vmem:[%s192] sm:$0xff] %v173
  %s194 = scalar_lea.vmem %s1, 1360
  %195 = vst [vmem:[%s194] sm:$0xff] %v173
  %s196 = scalar_lea.vmem %s1, 1488
  %197 = vst [vmem:[%s196] sm:$0xff] %v173
  %s198 = scalar_lea.vmem %s1, 1616
  %199 = vst [vmem:[%s198] sm:$0xff] %v173
  %s200 = scalar_lea.vmem %s1, 1744
  %201 = vst [vmem:[%s200] sm:$0xff] %v173
  %s202 = scalar_lea.vmem %s1, 1872
  %203 = vst [vmem:[%s202] sm:$0xff] %v173
  %s204 = scalar_lea.vmem %s1, 2000
  %205 = vst [vmem:[%s204] sm:$0xff] %v173
  %s206 = scalar_lea.vmem %s0, 6
  %v207 = vld [vmem:[%s206] ss:$0 sm:$0xff]
  %s208 = scalar_lea.vmem %s1, 96
  %209 = vst [vmem:[%s208] sm:$0xff] %v207
  %s210 = scalar_lea.vmem %s1, 224
  %211 = vst [vmem:[%s210] sm:$0xff] %v207
  %s212 = scalar_lea.vmem %s1, 352
  %213 = vst [vmem:[%s212] sm:$0xff] %v207
  %s214 = scalar_lea.vmem %s1, 480
  %215 = vst [vmem:[%s214] sm:$0xff] %v207
  %s216 = scalar_lea.vmem %s1, 608
  %217 = vst [vmem:[%s216] sm:$0xff] %v207
  %s218 = scalar_lea.vmem %s1, 736
  %219 = vst [vmem:[%s218] sm:$0xff] %v207
  %s220 = scalar_lea.vmem %s1, 864
  %221 = vst [vmem:[%s220] sm:$0xff] %v207
  %s222 = scalar_lea.vmem %s1, 992
  %223 = vst [vmem:[%s222] sm:$0xff] %v207
  %s224 = scalar_lea.vmem %s1, 1120
  %225 = vst [vmem:[%s224] sm:$0xff] %v207
  %s226 = scalar_lea.vmem %s1, 1248
  %227 = vst [vmem:[%s226] sm:$0xff] %v207
  %s228 = scalar_lea.vmem %s1, 1376
  %229 = vst [vmem:[%s228] sm:$0xff] %v207
  %s230 = scalar_lea.vmem %s1, 1504
  %231 = vst [vmem:[%s230] sm:$0xff] %v207
  %s232 = scalar_lea.vmem %s1, 1632
  %233 = vst [vmem:[%s232] sm:$0xff] %v207
  %s234 = scalar_lea.vmem %s1, 1760
  %235 = vst [vmem:[%s234] sm:$0xff] %v207
  %s236 = scalar_lea.vmem %s1, 1888
  %237 = vst [vmem:[%s236] sm:$0xff] %v207
  %s238 = scalar_lea.vmem %s1, 2016
  %239 = vst [vmem:[%s238] sm:$0xff] %v207
  %s240 = scalar_lea.vmem %s0, 7
  %v241 = vld [vmem:[%s240] ss:$0 sm:$0xff]
  %s242 = scalar_lea.vmem %s1, 112
  %243 = vst [vmem:[%s242] sm:$0xff] %v241
  %s244 = scalar_lea.vmem %s1, 240
  %245 = vst [vmem:[%s244] sm:$0xff] %v241
  %s246 = scalar_lea.vmem %s1, 368
  %247 = vst [vmem:[%s246] sm:$0xff] %v241
  %s248 = scalar_lea.vmem %s1, 496
  %249 = vst [vmem:[%s248] sm:$0xff] %v241
  %s250 = scalar_lea.vmem %s1, 624
  %251 = vst [vmem:[%s250] sm:$0xff] %v241
  %s252 = scalar_lea.vmem %s1, 752
  %253 = vst [vmem:[%s252] sm:$0xff] %v241
  %s254 = scalar_lea.vmem %s1, 880
  %255 = vst [vmem:[%s254] sm:$0xff] %v241
  %s256 = scalar_lea.vmem %s1, 1008
  %257 = vst [vmem:[%s256] sm:$0xff] %v241
  %s258 = scalar_lea.vmem %s1, 1136
  %259 = vst [vmem:[%s258] sm:$0xff] %v241
  %s260 = scalar_lea.vmem %s1, 1264
  %261 = vst [vmem:[%s260] sm:$0xff] %v241
  %s262 = scalar_lea.vmem %s1, 1392
  %263 = vst [vmem:[%s262] sm:$0xff] %v241
  %s264 = scalar_lea.vmem %s1, 1520
  %265 = vst [vmem:[%s264] sm:$0xff] %v241
  %s266 = scalar_lea.vmem %s1, 1648
  %267 = vst [vmem:[%s266] sm:$0xff] %v241
  %s268 = scalar_lea.vmem %s1, 1776
  %269 = vst [vmem:[%s268] sm:$0xff] %v241
  %s270 = scalar_lea.vmem %s1, 1904
  %271 = vst [vmem:[%s270] sm:$0xff] %v241
  %s272 = scalar_lea.vmem %s1, 2032
  %273 = vst [vmem:[%s272] sm:$0xff] %v241
  %s274 = scalar_lea.vmem %s1, 8
  %275 = vst [vmem:[%s274] sm:$0xff] %v4
  %s276 = scalar_lea.vmem %s1, 136
  %277 = vst [vmem:[%s276] sm:$0xff] %v4
  %s278 = scalar_lea.vmem %s1, 264
  %279 = vst [vmem:[%s278] sm:$0xff] %v4
  %s280 = scalar_lea.vmem %s1, 392
  %281 = vst [vmem:[%s280] sm:$0xff] %v4
  %s282 = scalar_lea.vmem %s1, 520
  %283 = vst [vmem:[%s282] sm:$0xff] %v4
  %s284 = scalar_lea.vmem %s1, 648
  %285 = vst [vmem:[%s284] sm:$0xff] %v4
  %s286 = scalar_lea.vmem %s1, 776
  %287 = vst [vmem:[%s286] sm:$0xff] %v4
  %s288 = scalar_lea.vmem %s1, 904
  %289 = vst [vmem:[%s288] sm:$0xff] %v4
  %s290 = scalar_lea.vmem %s1, 1032
  %291 = vst [vmem:[%s290] sm:$0xff] %v4
  %s292 = scalar_lea.vmem %s1, 1160
  %293 = vst [vmem:[%s292] sm:$0xff] %v4
  %s294 = scalar_lea.vmem %s1, 1288
  %295 = vst [vmem:[%s294] sm:$0xff] %v4
  %s296 = scalar_lea.vmem %s1, 1416
  %297 = vst [vmem:[%s296] sm:$0xff] %v4
  %s298 = scalar_lea.vmem %s1, 1544
  %299 = vst [vmem:[%s298] sm:$0xff] %v4
  %s300 = scalar_lea.vmem %s1, 1672
  %301 = vst [vmem:[%s300] sm:$0xff] %v4
  %s302 = scalar_lea.vmem %s1, 1800
  %303 = vst [vmem:[%s302] sm:$0xff] %v4
  %s304 = scalar_lea.vmem %s1, 1928
  %305 = vst [vmem:[%s304] sm:$0xff] %v4
  %s306 = scalar_lea.vmem %s1, 24
  %307 = vst [vmem:[%s306] sm:$0xff] %v37
  %s308 = scalar_lea.vmem %s1, 152
  %309 = vst [vmem:[%s308] sm:$0xff] %v37
  %s310 = scalar_lea.vmem %s1, 280
  %311 = vst [vmem:[%s310] sm:$0xff] %v37
  %s312 = scalar_lea.vmem %s1, 408
  %313 = vst [vmem:[%s312] sm:$0xff] %v37
  %s314 = scalar_lea.vmem %s1, 536
  %315 = vst [vmem:[%s314] sm:$0xff] %v37
  %s316 = scalar_lea.vmem %s1, 664
  %317 = vst [vmem:[%s316] sm:$0xff] %v37
  %s318 = scalar_lea.vmem %s1, 792
  %319 = vst [vmem:[%s318] sm:$0xff] %v37
  %s320 = scalar_lea.vmem %s1, 920
  %321 = vst [vmem:[%s320] sm:$0xff] %v37
  %s322 = scalar_lea.vmem %s1, 1048
  %323 = vst [vmem:[%s322] sm:$0xff] %v37
  %s324 = scalar_lea.vmem %s1, 1176
  %325 = vst [vmem:[%s324] sm:$0xff] %v37
  %s326 = scalar_lea.vmem %s1, 1304
  %327 = vst [vmem:[%s326] sm:$0xff] %v37
  %s328 = scalar_lea.vmem %s1, 1432
  %329 = vst [vmem:[%s328] sm:$0xff] %v37
  %s330 = scalar_lea.vmem %s1, 1560
  %331 = vst [vmem:[%s330] sm:$0xff] %v37
  %s332 = scalar_lea.vmem %s1, 1688
  %333 = vst [vmem:[%s332] sm:$0xff] %v37
  %s334 = scalar_lea.vmem %s1, 1816
  %335 = vst [vmem:[%s334] sm:$0xff] %v37
  %s336 = scalar_lea.vmem %s1, 1944
  %337 = vst [vmem:[%s336] sm:$0xff] %v37
  %s338 = scalar_lea.vmem %s1, 40
  %339 = vst [vmem:[%s338] sm:$0xff] %v71
  %s340 = scalar_lea.vmem %s1, 168
  %341 = vst [vmem:[%s340] sm:$0xff] %v71
  %s342 = scalar_lea.vmem %s1, 296
  %343 = vst [vmem:[%s342] sm:$0xff] %v71
  %s344 = scalar_lea.vmem %s1, 424
  %345 = vst [vmem:[%s344] sm:$0xff] %v71
  %s346 = scalar_lea.vmem %s1, 552
  %347 = vst [vmem:[%s346] sm:$0xff] %v71
  %s348 = scalar_lea.vmem %s1, 680
  %349 = vst [vmem:[%s348] sm:$0xff] %v71
  %s350 = scalar_lea.vmem %s1, 808
  %351 = vst [vmem:[%s350] sm:$0xff] %v71
  %s352 = scalar_lea.vmem %s1, 936
  %353 = vst [vmem:[%s352] sm:$0xff] %v71
  %s354 = scalar_lea.vmem %s1, 1064
  %355 = vst [vmem:[%s354] sm:$0xff] %v71
  %s356 = scalar_lea.vmem %s1, 1192
  %357 = vst [vmem:[%s356] sm:$0xff] %v71
  %s358 = scalar_lea.vmem %s1, 1320
  %359 = vst [vmem:[%s358] sm:$0xff] %v71
  %s360 = scalar_lea.vmem %s1, 1448
  %361 = vst [vmem:[%s360] sm:$0xff] %v71
  %s362 = scalar_lea.vmem %s1, 1576
  %363 = vst [vmem:[%s362] sm:$0xff] %v71
  %s364 = scalar_lea.vmem %s1, 1704
  %365 = vst [vmem:[%s364] sm:$0xff] %v71
  %s366 = scalar_lea.vmem %s1, 1832
  %367 = vst [vmem:[%s366] sm:$0xff] %v71
  %s368 = scalar_lea.vmem %s1, 1960
  %369 = vst [vmem:[%s368] sm:$0xff] %v71
  %s370 = scalar_lea.vmem %s1, 56
  %371 = vst [vmem:[%s370] sm:$0xff] %v105
  %s372 = scalar_lea.vmem %s1, 184
  %373 = vst [vmem:[%s372] sm:$0xff] %v105
  %s374 = scalar_lea.vmem %s1, 312
  %375 = vst [vmem:[%s374] sm:$0xff] %v105
  %s376 = scalar_lea.vmem %s1, 440
  %377 = vst [vmem:[%s376] sm:$0xff] %v105
  %s378 = scalar_lea.vmem %s1, 568
  %379 = vst [vmem:[%s378] sm:$0xff] %v105
  %s380 = scalar_lea.vmem %s1, 696
  %381 = vst [vmem:[%s380] sm:$0xff] %v105
  %s382 = scalar_lea.vmem %s1, 824
  %383 = vst [vmem:[%s382] sm:$0xff] %v105
  %s384 = scalar_lea.vmem %s1, 952
  %385 = vst [vmem:[%s384] sm:$0xff] %v105
  %s386 = scalar_lea.vmem %s1, 1080
  %387 = vst [vmem:[%s386] sm:$0xff] %v105
  %s388 = scalar_lea.vmem %s1, 1208
  %389 = vst [vmem:[%s388] sm:$0xff] %v105
  %s390 = scalar_lea.vmem %s1, 1336
  %391 = vst [vmem:[%s390] sm:$0xff] %v105
  %s392 = scalar_lea.vmem %s1, 1464
  %393 = vst [vmem:[%s392] sm:$0xff] %v105
  %s394 = scalar_lea.vmem %s1, 1592
  %395 = vst [vmem:[%s394] sm:$0xff] %v105
  %s396 = scalar_lea.vmem %s1, 1720
  %397 = vst [vmem:[%s396] sm:$0xff] %v105
  %s398 = scalar_lea.vmem %s1, 1848
  %399 = vst [vmem:[%s398] sm:$0xff] %v105
  %s400 = scalar_lea.vmem %s1, 1976
  %401 = vst [vmem:[%s400] sm:$0xff] %v105
  %s402 = scalar_lea.vmem %s1, 72
  %403 = vst [vmem:[%s402] sm:$0xff] %v139
  %s404 = scalar_lea.vmem %s1, 200
  %405 = vst [vmem:[%s404] sm:$0xff] %v139
  %s406 = scalar_lea.vmem %s1, 328
  %407 = vst [vmem:[%s406] sm:$0xff] %v139
  %s408 = scalar_lea.vmem %s1, 456
  %409 = vst [vmem:[%s408] sm:$0xff] %v139
  %s410 = scalar_lea.vmem %s1, 584
  %411 = vst [vmem:[%s410] sm:$0xff] %v139
  %s412 = scalar_lea.vmem %s1, 712
  %413 = vst [vmem:[%s412] sm:$0xff] %v139
  %s414 = scalar_lea.vmem %s1, 840
  %415 = vst [vmem:[%s414] sm:$0xff] %v139
  %s416 = scalar_lea.vmem %s1, 968
  %417 = vst [vmem:[%s416] sm:$0xff] %v139
  %s418 = scalar_lea.vmem %s1, 1096
  %419 = vst [vmem:[%s418] sm:$0xff] %v139
  %s420 = scalar_lea.vmem %s1, 1224
  %421 = vst [vmem:[%s420] sm:$0xff] %v139
  %s422 = scalar_lea.vmem %s1, 1352
  %423 = vst [vmem:[%s422] sm:$0xff] %v139
  %s424 = scalar_lea.vmem %s1, 1480
  %425 = vst [vmem:[%s424] sm:$0xff] %v139
  %s426 = scalar_lea.vmem %s1, 1608
  %427 = vst [vmem:[%s426] sm:$0xff] %v139
  %s428 = scalar_lea.vmem %s1, 1736
  %429 = vst [vmem:[%s428] sm:$0xff] %v139
  %s430 = scalar_lea.vmem %s1, 1864
  %431 = vst [vmem:[%s430] sm:$0xff] %v139
  %s432 = scalar_lea.vmem %s1, 1992
  %433 = vst [vmem:[%s432] sm:$0xff] %v139
  %s434 = scalar_lea.vmem %s1, 88
  %435 = vst [vmem:[%s434] sm:$0xff] %v173
  %s436 = scalar_lea.vmem %s1, 216
  %437 = vst [vmem:[%s436] sm:$0xff] %v173
  %s438 = scalar_lea.vmem %s1, 344
  %439 = vst [vmem:[%s438] sm:$0xff] %v173
  %s440 = scalar_lea.vmem %s1, 472
  %441 = vst [vmem:[%s440] sm:$0xff] %v173
  %s442 = scalar_lea.vmem %s1, 600
  %443 = vst [vmem:[%s442] sm:$0xff] %v173
  %s444 = scalar_lea.vmem %s1, 728
  %445 = vst [vmem:[%s444] sm:$0xff] %v173
  %s446 = scalar_lea.vmem %s1, 856
  %447 = vst [vmem:[%s446] sm:$0xff] %v173
  %s448 = scalar_lea.vmem %s1, 984
  %449 = vst [vmem:[%s448] sm:$0xff] %v173
  %s450 = scalar_lea.vmem %s1, 1112
  %451 = vst [vmem:[%s450] sm:$0xff] %v173
  %s452 = scalar_lea.vmem %s1, 1240
  %453 = vst [vmem:[%s452] sm:$0xff] %v173
  %s454 = scalar_lea.vmem %s1, 1368
  %455 = vst [vmem:[%s454] sm:$0xff] %v173
  %s456 = scalar_lea.vmem %s1, 1496
  %457 = vst [vmem:[%s456] sm:$0xff] %v173
  %s458 = scalar_lea.vmem %s1, 1624
  %459 = vst [vmem:[%s458] sm:$0xff] %v173
  %s460 = scalar_lea.vmem %s1, 1752
  %461 = vst [vmem:[%s460] sm:$0xff] %v173
  %s462 = scalar_lea.vmem %s1, 1880
  %463 = vst [vmem:[%s462] sm:$0xff] %v173
  %s464 = scalar_lea.vmem %s1, 2008
  %465 = vst [vmem:[%s464] sm:$0xff] %v173
  %s466 = scalar_lea.vmem %s1, 104
  %467 = vst [vmem:[%s466] sm:$0xff] %v207
  %s468 = scalar_lea.vmem %s1, 232
  %469 = vst [vmem:[%s468] sm:$0xff] %v207
  %s470 = scalar_lea.vmem %s1, 360
  %471 = vst [vmem:[%s470] sm:$0xff] %v207
  %s472 = scalar_lea.vmem %s1, 488
  %473 = vst [vmem:[%s472] sm:$0xff] %v207
  %s474 = scalar_lea.vmem %s1, 616
  %475 = vst [vmem:[%s474] sm:$0xff] %v207
  %s476 = scalar_lea.vmem %s1, 744
  %477 = vst [vmem:[%s476] sm:$0xff] %v207
  %s478 = scalar_lea.vmem %s1, 872
  %479 = vst [vmem:[%s478] sm:$0xff] %v207
  %s480 = scalar_lea.vmem %s1, 1000
  %481 = vst [vmem:[%s480] sm:$0xff] %v207
  %s482 = scalar_lea.vmem %s1, 1128
  %483 = vst [vmem:[%s482] sm:$0xff] %v207
  %s484 = scalar_lea.vmem %s1, 1256
  %485 = vst [vmem:[%s484] sm:$0xff] %v207
  %s486 = scalar_lea.vmem %s1, 1384
  %487 = vst [vmem:[%s486] sm:$0xff] %v207
  %s488 = scalar_lea.vmem %s1, 1512
  %489 = vst [vmem:[%s488] sm:$0xff] %v207
  %s490 = scalar_lea.vmem %s1, 1640
  %491 = vst [vmem:[%s490] sm:$0xff] %v207
  %s492 = scalar_lea.vmem %s1, 1768
  %493 = vst [vmem:[%s492] sm:$0xff] %v207
  %s494 = scalar_lea.vmem %s1, 1896
  %495 = vst [vmem:[%s494] sm:$0xff] %v207
  %s496 = scalar_lea.vmem %s1, 2024
  %497 = vst [vmem:[%s496] sm:$0xff] %v207
  %s498 = scalar_lea.vmem %s1, 120
  %499 = vst [vmem:[%s498] sm:$0xff] %v241
  %s500 = scalar_lea.vmem %s1, 248
  %501 = vst [vmem:[%s500] sm:$0xff] %v241
  %s502 = scalar_lea.vmem %s1, 376
  %503 = vst [vmem:[%s502] sm:$0xff] %v241
  %s504 = scalar_lea.vmem %s1, 504
  %505 = vst [vmem:[%s504] sm:$0xff] %v241
  %s506 = scalar_lea.vmem %s1, 632
  %507 = vst [vmem:[%s506] sm:$0xff] %v241
  %s508 = scalar_lea.vmem %s1, 760
  %509 = vst [vmem:[%s508] sm:$0xff] %v241
  %s510 = scalar_lea.vmem %s1, 888
  %511 = vst [vmem:[%s510] sm:$0xff] %v241
  %s512 = scalar_lea.vmem %s1, 1016
  %513 = vst [vmem:[%s512] sm:$0xff] %v241
  %s514 = scalar_lea.vmem %s1, 1144
  %515 = vst [vmem:[%s514] sm:$0xff] %v241
  %s516 = scalar_lea.vmem %s1, 1272
  %517 = vst [vmem:[%s516] sm:$0xff] %v241
  %s518 = scalar_lea.vmem %s1, 1400
  %519 = vst [vmem:[%s518] sm:$0xff] %v241
  %s520 = scalar_lea.vmem %s1, 1528
  %521 = vst [vmem:[%s520] sm:$0xff] %v241
  %s522 = scalar_lea.vmem %s1, 1656
  %523 = vst [vmem:[%s522] sm:$0xff] %v241
  %s524 = scalar_lea.vmem %s1, 1784
  %525 = vst [vmem:[%s524] sm:$0xff] %v241
  %s526 = scalar_lea.vmem %s1, 1912
  %527 = vst [vmem:[%s526] sm:$0xff] %v241
  %s528 = scalar_lea.vmem %s1, 2040
  %529 = vst [vmem:[%s528] sm:$0xff] %v241

// kernel: tile.33
$region0: #{tile.33}
  %s0 = inlined_call_operand.vmem [shape: f32[16,8,16,8], index: 0, kind: input, shape index: {}]
  %s1 = inlined_call_operand.vmem [shape: f32[128,128], index: 1, kind: output, shape index: {}]
  %s2 = smov 3
  %v3 = vld [vmem:[%s0] ss:$16 sm:%s2]
  %s4 = smov 12
  %v5 = vld [vmem:[%s0] ss:$16 sm:%s4]
  %vm6 = vcmask 1043458
  %v7 = vsel %vm6, %v5, %v3
  %s8 = smov 48
  %v9 = vld [vmem:[%s0] ss:$16 sm:%s8]
  %vm10 = vcmask 1045508
  %v11 = vsel %vm10, %v9, %v7
  %s12 = smov 192
  %v13 = vld [vmem:[%s0] ss:$16 sm:%s12]
  %vm14 = vcmask 1047558
  %v15 = vsel %vm14, %v13, %v11
  %vm16 = vcmask 64512
  %17 = vst.msk [vmem:[%s1] sm:$0xff] %vm16, %v15
  %s18 = scalar_lea.vmem %s0, 128
  %s19 = smov 3
  %v20 = vld [vmem:[%s18] ss:$16 sm:%s19]
  %s21 = scalar_lea.vmem %s0, 128
  %s22 = smov 12
  %v23 = vld [vmem:[%s21] ss:$16 sm:%s22]
  %vm24 = vcmask 1043458
  %v25 = vsel %vm24, %v23, %v20
  %s26 = scalar_lea.vmem %s0, 128
  %s27 = smov 48
  %v28 = vld [vmem:[%s26] ss:$16 sm:%s27]
  %vm29 = vcmask 1045508
  %v30 = vsel %vm29, %v28, %v25
  %s31 = scalar_lea.vmem %s0, 128
  %s32 = smov 192
  %v33 = vld [vmem:[%s31] ss:$16 sm:%s32]
  %vm34 = vcmask 1047558
  %v35 = vsel %vm34, %v33, %v30
  %vm36 = vcmask 64512
  %s37 = scalar_lea.vmem %s1, 8
  %38 = vst.msk [vmem:[%s37] sm:$0xff] %vm36, %v35
  %s39 = scalar_lea.vmem %s0, 256
  %s40 = smov 3
  %v41 = vld [vmem:[%s39] ss:$16 sm:%s40]
  %s42 = scalar_lea.vmem %s0, 256
  %s43 = smov 12
  %v44 = vld [vmem:[%s42] ss:$16 sm:%s43]
  %vm45 = vcmask 1043458
  %v46 = vsel %vm45, %v44, %v41
  %s47 = scalar_lea.vmem %s0, 256
  %s48 = smov 48
  %v49 = vld [vmem:[%s47] ss:$16 sm:%s48]
  %vm50 = vcmask 1045508
  %v51 = vsel %vm50, %v49, %v46
  %s52 = scalar_lea.vmem %s0, 256
  %s53 = smov 192
  %v54 = vld [vmem:[%s52] ss:$16 sm:%s53]
  %vm55 = vcmask 1047558
  %v56 = vsel %vm55, %v54, %v51
  %vm57 = vcmask 64512
  %s58 = scalar_lea.vmem %s1, 16
  %59 = vst.msk [vmem:[%s58] sm:$0xff] %vm57, %v56
  %s60 = scalar_lea.vmem %s0, 384
  %s61 = smov 3
  %v62 = vld [vmem:[%s60] ss:$16 sm:%s61]
  %s63 = scalar_lea.vmem %s0, 384
  %s64 = smov 12
  %v65 = vld [vmem:[%s63] ss:$16 sm:%s64]
  %vm66 = vcmask 1043458
  %v67 = vsel %vm66, %v65, %v62
  %s68 = scalar_lea.vmem %s0, 384
  %s69 = smov 48
  %v70 = vld [vmem:[%s68] ss:$16 sm:%s69]
  %vm71 = vcmask 1045508
  %v72 = vsel %vm71, %v70, %v67
  %s73 = scalar_lea.vmem %s0, 384
  %s74 = smov 192
  %v75 = vld [vmem:[%s73] ss:$16 sm:%s74]
  %vm76 = vcmask 1047558
  %v77 = vsel %vm76, %v75, %v72
  %vm78 = vcmask 64512
  %s79 = scalar_lea.vmem %s1, 24
  %80 = vst.msk [vmem:[%s79] sm:$0xff] %vm78, %v77
  %s81 = scalar_lea.vmem %s0, 512
  %s82 = smov 3
  %v83 = vld [vmem:[%s81] ss:$16 sm:%s82]
  %s84 = scalar_lea.vmem %s0, 512
  %s85 = smov 12
  %v86 = vld [vmem:[%s84] ss:$16 sm:%s85]
  %vm87 = vcmask 1043458
  %v88 = vsel %vm87, %v86, %v83
  %s89 = scalar_lea.vmem %s0, 512
  %s90 = smov 48
  %v91 = vld [vmem:[%s89] ss:$16 sm:%s90]
  %vm92 = vcmask 1045508
  %v93 = vsel %vm92, %v91, %v88
  %s94 = scalar_lea.vmem %s0, 512
  %s95 = smov 192
  %v96 = vld [vmem:[%s94] ss:$16 sm:%s95]
  %vm97 = vcmask 1047558
  %v98 = vsel %vm97, %v96, %v93
  %vm99 = vcmask 64512
  %s100 = scalar_lea.vmem %s1, 32
  %101 = vst.msk [vmem:[%s100] sm:$0xff] %vm99, %v98
  %s102 = scalar_lea.vmem %s0, 640
  %s103 = smov 3
  %v104 = vld [vmem:[%s102] ss:$16 sm:%s103]
  %s105 = scalar_lea.vmem %s0, 640
  %s106 = smov 12
  %v107 = vld [vmem:[%s105] ss:$16 sm:%s106]
  %vm108 = vcmask 1043458
  %v109 = vsel %vm108, %v107, %v104
  %s110 = scalar_lea.vmem %s0, 640
  %s111 = smov 48
  %v112 = vld [vmem:[%s110] ss:$16 sm:%s111]
  %vm113 = vcmask 1045508
  %v114 = vsel %vm113, %v112, %v109
  %s115 = scalar_lea.vmem %s0, 640
  %s116 = smov 192
  %v117 = vld [vmem:[%s115] ss:$16 sm:%s116]
  %vm118 = vcmask 1047558
  %v119 = vsel %vm118, %v117, %v114
  %vm120 = vcmask 64512
  %s121 = scalar_lea.vmem %s1, 40
  %122 = vst.msk [vmem:[%s121] sm:$0xff] %vm120, %v119
  %s123 = scalar_lea.vmem %s0, 768
  %s124 = smov 3
  %v125 = vld [vmem:[%s123] ss:$16 sm:%s124]
  %s126 = scalar_lea.vmem %s0, 768
  %s127 = smov 12
  %v128 = vld [vmem:[%s126] ss:$16 sm:%s127]
  %vm129 = vcmask 1043458
  %v130 = vsel %vm129, %v128, %v125
  %s131 = scalar_lea.vmem %s0, 768
  %s132 = smov 48
  %v133 = vld [vmem:[%s131] ss:$16 sm:%s132]
  %vm134 = vcmask 1045508
  %v135 = vsel %vm134, %v133, %v130
  %s136 = scalar_lea.vmem %s0, 768
  %s137 = smov 192
  %v138 = vld [vmem:[%s136] ss:$16 sm:%s137]
  %vm139 = vcmask 1047558
  %v140 = vsel %vm139, %v138, %v135
  %vm141 = vcmask 64512
  %s142 = scalar_lea.vmem %s1, 48
  %143 = vst.msk [vmem:[%s142] sm:$0xff] %vm141, %v140
  %s144 = scalar_lea.vmem %s0, 896
  %s145 = smov 3
  %v146 = vld [vmem:[%s144] ss:$16 sm:%s145]
  %s147 = scalar_lea.vmem %s0, 896
  %s148 = smov 12
  %v149 = vld [vmem:[%s147] ss:$16 sm:%s148]
  %vm150 = vcmask 1043458
  %v151 = vsel %vm150, %v149, %v146
  %s152 = scalar_lea.vmem %s0, 896
  %s153 = smov 48
  %v154 = vld [vmem:[%s152] ss:$16 sm:%s153]
  %vm155 = vcmask 1045508
  %v156 = vsel %vm155, %v154, %v151
  %s157 = scalar_lea.vmem %s0, 896
  %s158 = smov 192
  %v159 = vld [vmem:[%s157] ss:$16 sm:%s158]
  %vm160 = vcmask 1047558
  %v161 = vsel %vm160, %v159, %v156
  %vm162 = vcmask 64512
  %s163 = scalar_lea.vmem %s1, 56
  %164 = vst.msk [vmem:[%s163] sm:$0xff] %vm162, %v161
  %s165 = scalar_lea.vmem %s0, 1024
  %s166 = smov 3
  %v167 = vld [vmem:[%s165] ss:$16 sm:%s166]
  %s168 = scalar_lea.vmem %s0, 1024
  %s169 = smov 12
  %v170 = vld [vmem:[%s168] ss:$16 sm:%s169]
  %vm171 = vcmask 1043458
  %v172 = vsel %vm171, %v170, %v167
  %s173 = scalar_lea.vmem %s0, 1024
  %s174 = smov 48
  %v175 = vld [vmem:[%s173] ss:$16 sm:%s174]
  %vm176 = vcmask 1045508
  %v177 = vsel %vm176, %v175, %v172
  %s178 = scalar_lea.vmem %s0, 1024
  %s179 = smov 192
  %v180 = vld [vmem:[%s178] ss:$16 sm:%s179]
  %vm181 = vcmask 1047558
  %v182 = vsel %vm181, %v180, %v177
  %vm183 = vcmask 64512
  %s184 = scalar_lea.vmem %s1, 64
  %185 = vst.msk [vmem:[%s184] sm:$0xff] %vm183, %v182
  %s186 = scalar_lea.vmem %s0, 1152
  %s187 = smov 3
  %v188 = vld [vmem:[%s186] ss:$16 sm:%s187]
  %s189 = scalar_lea.vmem %s0, 1152
  %s190 = smov 12
  %v191 = vld [vmem:[%s189] ss:$16 sm:%s190]
  %vm192 = vcmask 1043458
  %v193 = vsel %vm192, %v191, %v188
  %s194 = scalar_lea.vmem %s0, 1152
  %s195 = smov 48
  %v196 = vld [vmem:[%s194] ss:$16 sm:%s195]
  %vm197 = vcmask 1045508
  %v198 = vsel %vm197, %v196, %v193
  %s199 = scalar_lea.vmem %s0, 1152
  %s200 = smov 192
  %v201 = vld [vmem:[%s199] ss:$16 sm:%s200]
  %vm202 = vcmask 1047558
  %v203 = vsel %vm202, %v201, %v198
  %vm204 = vcmask 64512
  %s205 = scalar_lea.vmem %s1, 72
  %206 = vst.msk [vmem:[%s205] sm:$0xff] %vm204, %v203
  %s207 = scalar_lea.vmem %s0, 1280
  %s208 = smov 3
  %v209 = vld [vmem:[%s207] ss:$16 sm:%s208]
  %s210 = scalar_lea.vmem %s0, 1280
  %s211 = smov 12
  %v212 = vld [vmem:[%s210] ss:$16 sm:%s211]
  %vm213 = vcmask 1043458
  %v214 = vsel %vm213, %v212, %v209
  %s215 = scalar_lea.vmem %s0, 1280
  %s216 = smov 48
  %v217 = vld [vmem:[%s215] ss:$16 sm:%s216]
  %vm218 = vcmask 1045508
  %v219 = vsel %vm218, %v217, %v214
  %s220 = scalar_lea.vmem %s0, 1280
  %s221 = smov 192
  %v222 = vld [vmem:[%s220] ss:$16 sm:%s221]
  %vm223 = vcmask 1047558
  %v224 = vsel %vm223, %v222, %v219
  %vm225 = vcmask 64512
  %s226 = scalar_lea.vmem %s1, 80
  %227 = vst.msk [vmem:[%s226] sm:$0xff] %vm225, %v224
  %s228 = scalar_lea.vmem %s0, 1408
  %s229 = smov 3
  %v230 = vld [vmem:[%s228] ss:$16 sm:%s229]
  %s231 = scalar_lea.vmem %s0, 1408
  %s232 = smov 12
  %v233 = vld [vmem:[%s231] ss:$16 sm:%s232]
  %vm234 = vcmask 1043458
  %v235 = vsel %vm234, %v233, %v230
  %s236 = scalar_lea.vmem %s0, 1408
  %s237 = smov 48
  %v238 = vld [vmem:[%s236] ss:$16 sm:%s237]
  %vm239 = vcmask 1045508
  %v240 = vsel %vm239, %v238, %v235
  %s241 = scalar_lea.vmem %s0, 1408
  %s242 = smov 192
  %v243 = vld [vmem:[%s241] ss:$16 sm:%s242]
  %vm244 = vcmask 1047558
  %v245 = vsel %vm244, %v243, %v240
  %vm246 = vcmask 64512
  %s247 = scalar_lea.vmem %s1, 88
  %248 = vst.msk [vmem:[%s247] sm:$0xff] %vm246, %v245
  %s249 = scalar_lea.vmem %s0, 1536
  %s250 = smov 3
  %v251 = vld [vmem:[%s249] ss:$16 sm:%s250]
  %s252 = scalar_lea.vmem %s0, 1536
  %s253 = smov 12
  %v254 = vld [vmem:[%s252] ss:$16 sm:%s253]
  %vm255 = vcmask 1043458
  %v256 = vsel %vm255, %v254, %v251
  %s257 = scalar_lea.vmem %s0, 1536
  %s258 = smov 48
  %v259 = vld [vmem:[%s257] ss:$16 sm:%s258]
  %vm260 = vcmask 1045508
  %v261 = vsel %vm260, %v259, %v256
  %s262 = scalar_lea.vmem %s0, 1536
  %s263 = smov 192
  %v264 = vld [vmem:[%s262] ss:$16 sm:%s263]
  %vm265 = vcmask 1047558
  %v266 = vsel %vm265, %v264, %v261
  %vm267 = vcmask 64512
  %s268 = scalar_lea.vmem %s1, 96
  %269 = vst.msk [vmem:[%s268] sm:$0xff] %vm267, %v266
  %s270 = scalar_lea.vmem %s0, 1664
  %s271 = smov 3
  %v272 = vld [vmem:[%s270] ss:$16 sm:%s271]
  %s273 = scalar_lea.vmem %s0, 1664
  %s274 = smov 12
  %v275 = vld [vmem:[%s273] ss:$16 sm:%s274]
  %vm276 = vcmask 1043458
  %v277 = vsel %vm276, %v275, %v272
  %s278 = scalar_lea.vmem %s0, 1664
  %s279 = smov 48
  %v280 = vld [vmem:[%s278] ss:$16 sm:%s279]
  %vm281 = vcmask 1045508
  %v282 = vsel %vm281, %v280, %v277
  %s283 = scalar_lea.vmem %s0, 1664
  %s284 = smov 192
  %v285 = vld [vmem:[%s283] ss:$16 sm:%s284]
  %vm286 = vcmask 1047558
  %v287 = vsel %vm286, %v285, %v282
  %vm288 = vcmask 64512
  %s289 = scalar_lea.vmem %s1, 104
  %290 = vst.msk [vmem:[%s289] sm:$0xff] %vm288, %v287
  %s291 = scalar_lea.vmem %s0, 1792
  %s292 = smov 3
  %v293 = vld [vmem:[%s291] ss:$16 sm:%s292]
  %s294 = scalar_lea.vmem %s0, 1792
  %s295 = smov 12
  %v296 = vld [vmem:[%s294] ss:$16 sm:%s295]
  %vm297 = vcmask 1043458
  %v298 = vsel %vm297, %v296, %v293
  %s299 = scalar_lea.vmem %s0, 1792
  %s300 = smov 48
  %v301 = vld [vmem:[%s299] ss:$16 sm:%s300]
  %vm302 = vcmask 1045508
  %v303 = vsel %vm302, %v301, %v298
  %s304 = scalar_lea.vmem %s0, 1792
  %s305 = smov 192
  %v306 = vld [vmem:[%s304] ss:$16 sm:%s305]
  %vm307 = vcmask 1047558
  %v308 = vsel %vm307, %v306, %v303
  %vm309 = vcmask 64512
  %s310 = scalar_lea.vmem %s1, 112
  %311 = vst.msk [vmem:[%s310] sm:$0xff] %vm309, %v308
  %s312 = scalar_lea.vmem %s0, 1920
  %s313 = smov 3
  %v314 = vld [vmem:[%s312] ss:$16 sm:%s313]
  %s315 = scalar_lea.vmem %s0, 1920
  %s316 = smov 12
  %v317 = vld [vmem:[%s315] ss:$16 sm:%s316]
  %vm318 = vcmask 1043458
  %v319 = vsel %vm318, %v317, %v314
  %s320 = scalar_lea.vmem %s0, 1920
  %s321 = smov 48
  %v322 = vld [vmem:[%s320] ss:$16 sm:%s321]
  %vm323 = vcmask 1045508
  %v324 = vsel %vm323, %v322, %v319
  %s325 = scalar_lea.vmem %s0, 1920
  %s326 = smov 192
  %v327 = vld [vmem:[%s325] ss:$16 sm:%s326]
  %vm328 = vcmask 1047558
  %v329 = vsel %vm328, %v327, %v324
  %vm330 = vcmask 64512
  %s331 = scalar_lea.vmem %s1, 120
  %332 = vst.msk [vmem:[%s331] sm:$0xff] %vm330, %v329
  %s333 = scalar_lea.vmem %s0, 15
  %s334 = smov 3
  %v335 = vld [vmem:[%s333] ss:$16 sm:%s334]
  %s336 = scalar_lea.vmem %s0, 15
  %s337 = smov 12
  %v338 = vld [vmem:[%s336] ss:$16 sm:%s337]
  %vm339 = vcmask 1043458
  %v340 = vsel %vm339, %v338, %v335
  %s341 = scalar_lea.vmem %s0, 15
  %s342 = smov 48
  %v343 = vld [vmem:[%s341] ss:$16 sm:%s342]
  %vm344 = vcmask 1045508
  %v345 = vsel %vm344, %v343, %v340
  %s346 = scalar_lea.vmem %s0, 15
  %s347 = smov 192
  %v348 = vld [vmem:[%s346] ss:$16 sm:%s347]
  %vm349 = vcmask 1047558
  %v350 = vsel %vm349, %v348, %v345
  %351 = vrot.lane.b32.xlu0 %v350, 120
  %v352 = vpop.permute.xlu0 %351
  %vm353 = vcmask 1048512
  %354 = vst.msk [vmem:[%s1] sm:$0xff] %vm353, %v352
  %s355 = scalar_lea.vmem %s0, 527
  %s356 = smov 3
  %v357 = vld [vmem:[%s355] ss:$16 sm:%s356]
  %s358 = scalar_lea.vmem %s0, 527
  %s359 = smov 12
  %v360 = vld [vmem:[%s358] ss:$16 sm:%s359]
  %vm361 = vcmask 1043458
  %v362 = vsel %vm361, %v360, %v357
  %s363 = scalar_lea.vmem %s0, 527
  %s364 = smov 48
  %v365 = vld [vmem:[%s363] ss:$16 sm:%s364]
  %vm366 = vcmask 1045508
  %v367 = vsel %vm366, %v365, %v362
  %s368 = scalar_lea.vmem %s0, 527
  %s369 = smov 192
  %v370 = vld [vmem:[%s368] ss:$16 sm:%s369]
  %vm371 = vcmask 1047558
  %v372 = vsel %vm371, %v370, %v367
  %373 = vrot.lane.b32.xlu0 %v372, 120
  %v374 = vpop.permute.xlu0 %373
  %vm375 = vcmask 1048512
  %s376 = scalar_lea.vmem %s1, 32
  %377 = vst.msk [vmem:[%s376] sm:$0xff] %vm375, %v374
  %s378 = scalar_lea.vmem %s0, 1039
  %s379 = smov 3
  %v380 = vld [vmem:[%s378] ss:$16 sm:%s379]
  %s381 = scalar_lea.vmem %s0, 1039
  %s382 = smov 12
  %v383 = vld [vmem:[%s381] ss:$16 sm:%s382]
  %vm384 = vcmask 1043458
  %v385 = vsel %vm384, %v383, %v380
  %s386 = scalar_lea.vmem %s0, 1039
  %s387 = smov 48
  %v388 = vld [vmem:[%s386] ss:$16 sm:%s387]
  %vm389 = vcmask 1045508
  %v390 = vsel %vm389, %v388, %v385
  %s391 = scalar_lea.vmem %s0, 1039
  %s392 = smov 192
  %v393 = vld [vmem:[%s391] ss:$16 sm:%s392]
  %vm394 = vcmask 1047558
  %v395 = vsel %vm394, %v393, %v390
  %396 = vrot.lane.b32.xlu0 %v395, 120
  %v397 = vpop.permute.xlu0 %396
  %vm398 = vcmask 1048512
  %s399 = scalar_lea.vmem %s1, 64
  %400 = vst.msk [vmem:[%s399] sm:$0xff] %vm398, %v397
  %s401 = scalar_lea.vmem %s0, 1551
  %s402 = smov 3
  %v403 = vld [vmem:[%s401] ss:$16 sm:%s402]
  %s404 = scalar_lea.vmem %s0, 1551
  %s405 = smov 12
  %v406 = vld [vmem:[%s404] ss:$16 sm:%s405]
  %vm407 = vcmask 1043458
  %v408 = vsel %vm407, %v406, %v403
  %s409 = scalar_lea.vmem %s0, 1551
  %s410 = smov 48
  %v411 = vld [vmem:[%s409] ss:$16 sm:%s410]
  %vm412 = vcmask 1045508
  %v413 = vsel %vm412, %v411, %v408
  %s414 = scalar_lea.vmem %s0, 1551
  %s415 = smov 192
  %v416 = vld [vmem:[%s414] ss:$16 sm:%s415]
  %vm417 = vcmask 1047558
  %v418 = vsel %vm417, %v416, %v413
  %419 = vrot.lane.b32.xlu0 %v418, 120
  %v420 = vpop.permute.xlu0 %419
  %vm421 = vcmask 1048512
  %s422 = scalar_lea.vmem %s1, 96
  %423 = vst.msk [vmem:[%s422] sm:$0xff] %vm421, %v420
  %s424 = scalar_lea.vmem %s0, 143
  %s425 = smov 3
  %v426 = vld [vmem:[%s424] ss:$16 sm:%s425]
  %s427 = scalar_lea.vmem %s0, 143
  %s428 = smov 12
  %v429 = vld [vmem:[%s427] ss:$16 sm:%s428]
  %vm430 = vcmask 1043458
  %v431 = vsel %vm430, %v429, %v426
  %s432 = scalar_lea.vmem %s0, 143
  %s433 = smov 48
  %v434 = vld [vmem:[%s432] ss:$16 sm:%s433]
  %vm435 = vcmask 1045508
  %v436 = vsel %vm435, %v434, %v431
  %s437 = scalar_lea.vmem %s0, 143
  %s438 = smov 192
  %v439 = vld [vmem:[%s437] ss:$16 sm:%s438]
  %vm440 = vcmask 1047558
  %v441 = vsel %vm440, %v439, %v436
  %442 = vrot.lane.b32.xlu0 %v441, 120
  %v443 = vpop.permute.xlu0 %442
  %vm444 = vcmask 1048512
  %s445 = scalar_lea.vmem %s1, 8
  %446 = vst.msk [vmem:[%s445] sm:$0xff] %vm444, %v443
  %s447 = scalar_lea.vmem %s0, 655
  %s448 = smov 3
  %v449 = vld [vmem:[%s447] ss:$16 sm:%s448]
  %s450 = scalar_lea.vmem %s0, 655
  %s451 = smov 12
  %v452 = vld [vmem:[%s450] ss:$16 sm:%s451]
  %vm453 = vcmask 1043458
  %v454 = vsel %vm453, %v452, %v449
  %s455 = scalar_lea.vmem %s0, 655
  %s456 = smov 48
  %v457 = vld [vmem:[%s455] ss:$16 sm:%s456]
  %vm458 = vcmask 1045508
  %v459 = vsel %vm458, %v457, %v454
  %s460 = scalar_lea.vmem %s0, 655
  %s461 = smov 192
  %v462 = vld [vmem:[%s460] ss:$16 sm:%s461]
  %vm463 = vcmask 1047558
  %v464 = vsel %vm463, %v462, %v459
  %465 = vrot.lane.b32.xlu0 %v464, 120
  %v466 = vpop.permute.xlu0 %465
  %vm467 = vcmask 1048512
  %s468 = scalar_lea.vmem %s1, 40
  %469 = vst.msk [vmem:[%s468] sm:$0xff] %vm467, %v466
  %s470 = scalar_lea.vmem %s0, 1167
  %s471 = smov 3
  %v472 = vld [vmem:[%s470] ss:$16 sm:%s471]
  %s473 = scalar_lea.vmem %s0, 1167
  %s474 = smov 12
  %v475 = vld [vmem:[%s473] ss:$16 sm:%s474]
  %vm476 = vcmask 1043458
  %v477 = vsel %vm476, %v475, %v472
  %s478 = scalar_lea.vmem %s0, 1167
  %s479 = smov 48
  %v480 = vld [vmem:[%s478] ss:$16 sm:%s479]
  %vm481 = vcmask 1045508
  %v482 = vsel %vm481, %v480, %v477
  %s483 = scalar_lea.vmem %s0, 1167
  %s484 = smov 192
  %v485 = vld [vmem:[%s483] ss:$16 sm:%s484]
  %vm486 = vcmask 1047558
  %v487 = vsel %vm486, %v485, %v482
  %488 = vrot.lane.b32.xlu0 %v487, 120
  %v489 = vpop.permute.xlu0 %488
  %vm490 = vcmask 1048512
  %s491 = scalar_lea.vmem %s1, 72
  %492 = vst.msk [vmem:[%s491] sm:$0xff] %vm490, %v489
  %s493 = scalar_lea.vmem %s0, 1679
  %s494 = smov 3
  %v495 = vld [vmem:[%s493] ss:$16 sm:%s494]
  %s496 = scalar_lea.vmem %s0, 1679
  %s497 = smov 12
  %v498 = vld [vmem:[%s496] ss:$16 sm:%s497]
  %vm499 = vcmask 1043458
  %v500 = vsel %vm499, %v498, %v495
  %s501 = scalar_lea.vmem %s0, 1679
  %s502 = smov 48
  %v503 = vld [vmem:[%s501] ss:$16 sm:%s502]
  %vm504 = vcmask 1045508
  %v505 = vsel %vm504, %v503, %v500
  %s506 = scalar_lea.vmem %s0, 1679
  %s507 = smov 192
  %v508 = vld [vmem:[%s506] ss:$16 sm:%s507]
  %vm509 = vcmask 1047558
  %v510 = vsel %vm509, %v508, %v505
  %511 = vrot.lane.b32.xlu0 %v510, 120
  %v512 = vpop.permute.xlu0 %511
  %vm513 = vcmask 1048512
  %s514 = scalar_lea.vmem %s1, 104
  %515 = vst.msk [vmem:[%s514] sm:$0xff] %vm513, %v512
  %s516 = scalar_lea.vmem %s0, 271
  %s517 = smov 3
  %v518 = vld [vmem:[%s516] ss:$16 sm:%s517]
  %s519 = scalar_lea.vmem %s0, 271
  %s520 = smov 12
  %v521 = vld [vmem:[%s519] ss:$16 sm:%s520]
  %vm522 = vcmask 1043458
  %v523 = vsel %vm522, %v521, %v518
  %s524 = scalar_lea.vmem %s0, 271
  %s525 = smov 48
  %v526 = vld [vmem:[%s524] ss:$16 sm:%s525]
  %vm527 = vcmask 1045508
  %v528 = vsel %vm527, %v526, %v523
  %s529 = scalar_lea.vmem %s0, 271
  %s530 = smov 192
  %v531 = vld [vmem:[%s529] ss:$16 sm:%s530]
  %vm532 = vcmask 1047558
  %v533 = vsel %vm532, %v531, %v528
  %534 = vrot.lane.b32.xlu0 %v533, 120
  %v535 = vpop.permute.xlu0 %534
  %vm536 = vcmask 1048512
  %s537 = scalar_lea.vmem %s1, 16
  %538 = vst.msk [vmem:[%s537] sm:$0xff] %vm536, %v535
  %s539 = scalar_lea.vmem %s0, 783
  %s540 = smov 3
  %v541 = vld [vmem:[%s539] ss:$16 sm:%s540]
  %s542 = scalar_lea.vmem %s0, 783
  %s543 = smov 12
  %v544 = vld [vmem:[%s542] ss:$16 sm:%s543]
  %vm545 = vcmask 1043458
  %v546 = vsel %vm545, %v544, %v541
  %s547 = scalar_lea.vmem %s0, 783
  %s548 = smov 48
  %v549 = vld [vmem:[%s547] ss:$16 sm:%s548]
  %vm550 = vcmask 1045508
  %v551 = vsel %vm550, %v549, %v546
  %s552 = scalar_lea.vmem %s0, 783
  %s553 = smov 192
  %v554 = vld [vmem:[%s552] ss:$16 sm:%s553]
  %vm555 = vcmask 1047558
  %v556 = vsel %vm555, %v554, %v551
  %557 = vrot.lane.b32.xlu0 %v556, 120
  %v558 = vpop.permute.xlu0 %557
  %vm559 = vcmask 1048512
  %s560 = scalar_lea.vmem %s1, 48
  %561 = vst.msk [vmem:[%s560] sm:$0xff] %vm559, %v558
  %s562 = scalar_lea.vmem %s0, 1295
  %s563 = smov 3
  %v564 = vld [vmem:[%s562] ss:$16 sm:%s563]
  %s565 = scalar_lea.vmem %s0, 1295
  %s566 = smov 12
  %v567 = vld [vmem:[%s565] ss:$16 sm:%s566]
  %vm568 = vcmask 1043458
  %v569 = vsel %vm568, %v567, %v564
  %s570 = scalar_lea.vmem %s0, 1295
  %s571 = smov 48
  %v572 = vld [vmem:[%s570] ss:$16 sm:%s571]
  %vm573 = vcmask 1045508
  %v574 = vsel %vm573, %v572, %v569
  %s575 = scalar_lea.vmem %s0, 1295
  %s576 = smov 192
  %v577 = vld [vmem:[%s575] ss:$16 sm:%s576]
  %vm578 = vcmask 1047558
  %v579 = vsel %vm578, %v577, %v574
  %580 = vrot.lane.b32.xlu0 %v579, 120
  %v581 = vpop.permute.xlu0 %580
  %vm582 = vcmask 1048512
  %s583 = scalar_lea.vmem %s1, 80
  %584 = vst.msk [vmem:[%s583] sm:$0xff] %vm582, %v581
  %s585 = scalar_lea.vmem %s0, 1807
  %s586 = smov 3
  %v587 = vld [vmem:[%s585] ss:$16 sm:%s586]
  %s588 = scalar_lea.vmem %s0, 1807
  %s589 = smov 12
  %v590 = vld [vmem:[%s588] ss:$16 sm:%s589]
  %vm591 = vcmask 1043458
  %v592 = vsel %vm591, %v590, %v587
  %s593 = scalar_lea.vmem %s0, 1807
  %s594 = smov 48
  %v595 = vld [vmem:[%s593] ss:$16 sm:%s594]
  %vm596 = vcmask 1045508
  %v597 = vsel %vm596, %v595, %v592
  %s598 = scalar_lea.vmem %s0, 1807
  %s599 = smov 192
  %v600 = vld [vmem:[%s598] ss:$16 sm:%s599]
  %vm601 = vcmask 1047558
  %v602 = vsel %vm601, %v600, %v597
  %603 = vrot.lane.b32.xlu0 %v602, 120
  %v604 = vpop.permute.xlu0 %603
  %vm605 = vcmask 1048512
  %s606 = scalar_lea.vmem %s1, 112
  %607 = vst.msk [vmem:[%s606] sm:$0xff] %vm605, %v604
  %s608 = scalar_lea.vmem %s0, 399
  %s609 = smov 3
  %v610 = vld [vmem:[%s608] ss:$16 sm:%s609]
  %s611 = scalar_lea.vmem %s0, 399
  %s612 = smov 12
  %v613 = vld [vmem:[%s611] ss:$16 sm:%s612]
  %vm614 = vcmask 1043458
  %v615 = vsel %vm614, %v613, %v610
  %s616 = scalar_lea.vmem %s0, 399
  %s617 = smov 48
  %v618 = vld [vmem:[%s616] ss:$16 sm:%s617]
  %vm619 = vcmask 1045508
  %v620 = vsel %vm619, %v618, %v615
  %s621 = scalar_lea.vmem %s0, 399
  %s622 = smov 192
  %v623 = vld [vmem:[%s621] ss:$16 sm:%s622]
  %vm624 = vcmask 1047558
  %v625 = vsel %vm624, %v623, %v620
  %626 = vrot.lane.b32.xlu0 %v625, 120
  %v627 = vpop.permute.xlu0 %626
  %vm628 = vcmask 1048512
  %s629 = scalar_lea.vmem %s1, 24
  %630 = vst.msk [vmem:[%s629] sm:$0xff] %vm628, %v627
  %s631 = scalar_lea.vmem %s0, 911
  %s632 = smov 3
  %v633 = vld [vmem:[%s631] ss:$16 sm:%s632]
  %s634 = scalar_lea.vmem %s0, 911
  %s635 = smov 12
  %v636 = vld [vmem:[%s634] ss:$16 sm:%s635]
  %vm637 = vcmask 1043458
  %v638 = vsel %vm637, %v636, %v633
  %s639 = scalar_lea.vmem %s0, 911
  %s640 = smov 48
  %v641 = vld [vmem:[%s639] ss:$16 sm:%s640]
  %vm642 = vcmask 1045508
  %v643 = vsel %vm642, %v641, %v638
  %s644 = scalar_lea.vmem %s0, 911
  %s645 = smov 192
  %v646 = vld [vmem:[%s644] ss:$16 sm:%s645]
  %vm647 = vcmask 1047558
  %v648 = vsel %vm647, %v646, %v643
  %649 = vrot.lane.b32.xlu0 %v648, 120
  %v650 = vpop.permute.xlu0 %649
  %vm651 = vcmask 1048512
  %s652 = scalar_lea.vmem %s1, 56
  %653 = vst.msk [vmem:[%s652] sm:$0xff] %vm651, %v650
  %s654 = scalar_lea.vmem %s0, 1423
  %s655 = smov 3
  %v656 = vld [vmem:[%s654] ss:$16 sm:%s655]
  %s657 = scalar_lea.vmem %s0, 1423
  %s658 = smov 12
  %v659 = vld [vmem:[%s657] ss:$16 sm:%s658]
  %vm660 = vcmask 1043458
  %v661 = vsel %vm660, %v659, %v656
  %s662 = scalar_lea.vmem %s0, 1423
  %s663 = smov 48
  %v664 = vld [vmem:[%s662] ss:$16 sm:%s663]
  %vm665 = vcmask 1045508
  %v666 = vsel %vm665, %v664, %v661
  %s667 = scalar_lea.vmem %s0, 1423
  %s668 = smov 192
  %v669 = vld [vmem:[%s667] ss:$16 sm:%s668]
  %vm670 = vcmask 1047558
  %v671 = vsel %vm670, %v669, %v666
  %672 = vrot.lane.b32.xlu0 %v671, 120
  %v673 = vpop.permute.xlu0 %672
  %vm674 = vcmask 1048512
  %s675 = scalar_lea.vmem %s1, 88
  %676 = vst.msk [vmem:[%s675] sm:$0xff] %vm674, %v673
  %s677 = scalar_lea.vmem %s0, 1935
  %s678 = smov 3
  %v679 = vld [vmem:[%s677] ss:$16 sm:%s678]
  %s680 = scalar_lea.vmem %s0, 1935
  %s681 = smov 12
  %v682 = vld [vmem:[%s680] ss:$16 sm:%s681]
  %vm683 = vcmask 1043458
  %v684 = vsel %vm683, %v682, %v679
  %s685 = scalar_lea.vmem %s0, 1935
  %s686 = smov 48
  %v687 = vld [vmem:[%s685] ss:$16 sm:%s686]
  %vm688 = vcmask 1045508
  %v689 = vsel %vm688, %v687, %v684
  %s690 = scalar_lea.vmem %s0, 1935
  %s691 = smov 192
  %v692 = vld [vmem:[%s690] ss:$16 sm:%s691]
  %vm693 = vcmask 1047558
  %v694 = vsel %vm693, %v692, %v689
  %695 = vrot.lane.b32.xlu0 %v694, 120
  %v696 = vpop.permute.xlu0 %695
  %vm697 = vcmask 1048512
  %s698 = scalar_lea.vmem %s1, 120
  %699 = vst.msk [vmem:[%s698] sm:$0xff] %vm697, %v696
  %s700 = scalar_lea.vmem %s0, 14
  %s701 = smov 3
  %v702 = vld [vmem:[%s700] ss:$16 sm:%s701]
  %s703 = scalar_lea.vmem %s0, 14
  %s704 = smov 12
  %v705 = vld [vmem:[%s703] ss:$16 sm:%s704]
  %vm706 = vcmask 1043458
  %v707 = vsel %vm706, %v705, %v702
  %s708 = scalar_lea.vmem %s0, 14
  %s709 = smov 48
  %v710 = vld [vmem:[%s708] ss:$16 sm:%s709]
  %vm711 = vcmask 1045508
  %v712 = vsel %vm711, %v710, %v707
  %s713 = scalar_lea.vmem %s0, 14
  %s714 = smov 192
  %v715 = vld [vmem:[%s713] ss:$16 sm:%s714]
  %vm716 = vcmask 1047558
  %v717 = vsel %vm716, %v715, %v712
  %718 = vrot.lane.b32.xlu0 %v717, 112
  %v719 = vpop.permute.xlu0 %718
  %vm720 = vcmask 982912
  %721 = vst.msk [vmem:[%s1] sm:$0xff] %vm720, %v719
  %s722 = scalar_lea.vmem %s0, 526
  %s723 = smov 3
  %v724 = vld [vmem:[%s722] ss:$16 sm:%s723]
  %s725 = scalar_lea.vmem %s0, 526
  %s726 = smov 12
  %v727 = vld [vmem:[%s725] ss:$16 sm:%s726]
  %vm728 = vcmask 1043458
  %v729 = vsel %vm728, %v727, %v724
  %s730 = scalar_lea.vmem %s0, 526
  %s731 = smov 48
  %v732 = vld [vmem:[%s730] ss:$16 sm:%s731]
  %vm733 = vcmask 1045508
  %v734 = vsel %vm733, %v732, %v729
  %s735 = scalar_lea.vmem %s0, 526
  %s736 = smov 192
  %v737 = vld [vmem:[%s735] ss:$16 sm:%s736]
  %vm738 = vcmask 1047558
  %v739 = vsel %vm738, %v737, %v734
  %740 = vrot.lane.b32.xlu0 %v739, 112
  %v741 = vpop.permute.xlu0 %740
  %vm742 = vcmask 982912
  %s743 = scalar_lea.vmem %s1, 32
  %744 = vst.msk [vmem:[%s743] sm:$0xff] %vm742, %v741
  %s745 = scalar_lea.vmem %s0, 1038
  %s746 = smov 3
  %v747 = vld [vmem:[%s745] ss:$16 sm:%s746]
  %s748 = scalar_lea.vmem %s0, 1038
  %s749 = smov 12
  %v750 = vld [vmem:[%s748] ss:$16 sm:%s749]
  %vm751 = vcmask 1043458
  %v752 = vsel %vm751, %v750, %v747
  %s753 = scalar_lea.vmem %s0, 1038
  %s754 = smov 48
  %v755 = vld [vmem:[%s753] ss:$16 sm:%s754]
  %vm756 = vcmask 1045508
  %v757 = vsel %vm756, %v755, %v752
  %s758 = scalar_lea.vmem %s0, 1038
  %s759 = smov 192
  %v760 = vld [vmem:[%s758] ss:$16 sm:%s759]
  %vm761 = vcmask 1047558
  %v762 = vsel %vm761, %v760, %v757
  %763 = vrot.lane.b32.xlu0 %v762, 112
  %v764 = vpop.permute.xlu0 %763
  %vm765 = vcmask 982912
  %s766 = scalar_lea.vmem %s1, 64
  %767 = vst.msk [vmem:[%s766] sm:$0xff] %vm765, %v764
  %s768 = scalar_lea.vmem %s0, 1550
  %s769 = smov 3
  %v770 = vld [vmem:[%s768] ss:$16 sm:%s769]
  %s771 = scalar_lea.vmem %s0, 1550
  %s772 = smov 12
  %v773 = vld [vmem:[%s771] ss:$16 sm:%s772]
  %vm774 = vcmask 1043458
  %v775 = vsel %vm774, %v773, %v770
  %s776 = scalar_lea.vmem %s0, 1550
  %s777 = smov 48
  %v778 = vld [vmem:[%s776] ss:$16 sm:%s777]
  %vm779 = vcmask 1045508
  %v780 = vsel %vm779, %v778, %v775
  %s781 = scalar_lea.vmem %s0, 1550
  %s782 = smov 192
  %v783 = vld [vmem:[%s781] ss:$16 sm:%s782]
  %vm784 = vcmask 1047558
  %v785 = vsel %vm784, %v783, %v780
  %786 = vrot.lane.b32.xlu0 %v785, 112
  %v787 = vpop.permute.xlu0 %786
  %vm788 = vcmask 982912
  %s789 = scalar_lea.vmem %s1, 96
  %790 = vst.msk [vmem:[%s789] sm:$0xff] %vm788, %v787
  %s791 = scalar_lea.vmem %s0, 142
  %s792 = smov 3
  %v793 = vld [vmem:[%s791] ss:$16 sm:%s792]
  %s794 = scalar_lea.vmem %s0, 142
  %s795 = smov 12
  %v796 = vld [vmem:[%s794] ss:$16 sm:%s795]
  %vm797 = vcmask 1043458
  %v798 = vsel %vm797, %v796, %v793
  %s799 = scalar_lea.vmem %s0, 142
  %s800 = smov 48
  %v801 = vld [vmem:[%s799] ss:$16 sm:%s800]
  %vm802 = vcmask 1045508
  %v803 = vsel %vm802, %v801, %v798
  %s804 = scalar_lea.vmem %s0, 142
  %s805 = smov 192
  %v806 = vld [vmem:[%s804] ss:$16 sm:%s805]
  %vm807 = vcmask 1047558
  %v808 = vsel %vm807, %v806, %v803
  %809 = vrot.lane.b32.xlu0 %v808, 112
  %v810 = vpop.permute.xlu0 %809
  %vm811 = vcmask 982912
  %s812 = scalar_lea.vmem %s1, 8
  %813 = vst.msk [vmem:[%s812] sm:$0xff] %vm811, %v810
  %s814 = scalar_lea.vmem %s0, 654
  %s815 = smov 3
  %v816 = vld [vmem:[%s814] ss:$16 sm:%s815]
  %s817 = scalar_lea.vmem %s0, 654
  %s818 = smov 12
  %v819 = vld [vmem:[%s817] ss:$16 sm:%s818]
  %vm820 = vcmask 1043458
  %v821 = vsel %vm820, %v819, %v816
  %s822 = scalar_lea.vmem %s0, 654
  %s823 = smov 48
  %v824 = vld [vmem:[%s822] ss:$16 sm:%s823]
  %vm825 = vcmask 1045508
  %v826 = vsel %vm825, %v824, %v821
  %s827 = scalar_lea.vmem %s0, 654
  %s828 = smov 192
  %v829 = vld [vmem:[%s827] ss:$16 sm:%s828]
  %vm830 = vcmask 1047558
  %v831 = vsel %vm830, %v829, %v826
  %832 = vrot.lane.b32.xlu0 %v831, 112
  %v833 = vpop.permute.xlu0 %832
  %vm834 = vcmask 982912
  %s835 = scalar_lea.vmem %s1, 40
  %836 = vst.msk [vmem:[%s835] sm:$0xff] %vm834, %v833
  %s837 = scalar_lea.vmem %s0, 1166
  %s838 = smov 3
  %v839 = vld [vmem:[%s837] ss:$16 sm:%s838]
  %s840 = scalar_lea.vmem %s0, 1166
  %s841 = smov 12
  %v842 = vld [vmem:[%s840] ss:$16 sm:%s841]
  %vm843 = vcmask 1043458
  %v844 = vsel %vm843, %v842, %v839
  %s845 = scalar_lea.vmem %s0, 1166
  %s846 = smov 48
  %v847 = vld [vmem:[%s845] ss:$16 sm:%s846]
  %vm848 = vcmask 1045508
  %v849 = vsel %vm848, %v847, %v844
  %s850 = scalar_lea.vmem %s0, 1166
  %s851 = smov 192
  %v852 = vld [vmem:[%s850] ss:$16 sm:%s851]
  %vm853 = vcmask 1047558
  %v854 = vsel %vm853, %v852, %v849
  %855 = vrot.lane.b32.xlu0 %v854, 112
  %v856 = vpop.permute.xlu0 %855
  %vm857 = vcmask 982912
  %s858 = scalar_lea.vmem %s1, 72
  %859 = vst.msk [vmem:[%s858] sm:$0xff] %vm857, %v856
  %s860 = scalar_lea.vmem %s0, 1678
  %s861 = smov 3
  %v862 = vld [vmem:[%s860] ss:$16 sm:%s861]
  %s863 = scalar_lea.vmem %s0, 1678
  %s864 = smov 12
  %v865 = vld [vmem:[%s863] ss:$16 sm:%s864]
  %vm866 = vcmask 1043458
  %v867 = vsel %vm866, %v865, %v862
  %s868 = scalar_lea.vmem %s0, 1678
  %s869 = smov 48
  %v870 = vld [vmem:[%s868] ss:$16 sm:%s869]
  %vm871 = vcmask 1045508
  %v872 = vsel %vm871, %v870, %v867
  %s873 = scalar_lea.vmem %s0, 1678
  %s874 = smov 192
  %v875 = vld [vmem:[%s873] ss:$16 sm:%s874]
  %vm876 = vcmask 1047558
  %v877 = vsel %vm876, %v875, %v872
  %878 = vrot.lane.b32.xlu0 %v877, 112
  %v879 = vpop.permute.xlu0 %878
  %vm880 = vcmask 982912
  %s881 = scalar_lea.vmem %s1, 104
  %882 = vst.msk [vmem:[%s881] sm:$0xff] %vm880, %v879
  %s883 = scalar_lea.vmem %s0, 270
  %s884 = smov 3
  %v885 = vld [vmem:[%s883] ss:$16 sm:%s884]
  %s886 = scalar_lea.vmem %s0, 270
  %s887 = smov 12
  %v888 = vld [vmem:[%s886] ss:$16 sm:%s887]
  %vm889 = vcmask 1043458
  %v890 = vsel %vm889, %v888, %v885
  %s891 = scalar_lea.vmem %s0, 270
  %s892 = smov 48
  %v893 = vld [vmem:[%s891] ss:$16 sm:%s892]
  %vm894 = vcmask 1045508
  %v895 = vsel %vm894, %v893, %v890
  %s896 = scalar_lea.vmem %s0, 270
  %s897 = smov 192
  %v898 = vld [vmem:[%s896] ss:$16 sm:%s897]
  %vm899 = vcmask 1047558
  %v900 = vsel %vm899, %v898, %v895
  %901 = vrot.lane.b32.xlu0 %v900, 112
  %v902 = vpop.permute.xlu0 %901
  %vm903 = vcmask 982912
  %s904 = scalar_lea.vmem %s1, 16
  %905 = vst.msk [vmem:[%s904] sm:$0xff] %vm903, %v902
  %s906 = scalar_lea.vmem %s0, 782
  %s907 = smov 3
  %v908 = vld [vmem:[%s906] ss:$16 sm:%s907]
  %s909 = scalar_lea.vmem %s0, 782
  %s910 = smov 12
  %v911 = vld [vmem:[%s909] ss:$16 sm:%s910]
  %vm912 = vcmask 1043458
  %v913 = vsel %vm912, %v911, %v908
  %s914 = scalar_lea.vmem %s0, 782
  %s915 = smov 48
  %v916 = vld [vmem:[%s914] ss:$16 sm:%s915]
  %vm917 = vcmask 1045508
  %v918 = vsel %vm917, %v916, %v913
  %s919 = scalar_lea.vmem %s0, 782
  %s920 = smov 192
  %v921 = vld [vmem:[%s919] ss:$16 sm:%s920]
  %vm922 = vcmask 1047558
  %v923 = vsel %vm922, %v921, %v918
  %924 = vrot.lane.b32.xlu0 %v923, 112
  %v925 = vpop.permute.xlu0 %924
  %vm926 = vcmask 982912
  %s927 = scalar_lea.vmem %s1, 48
  %928 = vst.msk [vmem:[%s927] sm:$0xff] %vm926, %v925
  %s929 = scalar_lea.vmem %s0, 1294
  %s930 = smov 3
  %v931 = vld [vmem:[%s929] ss:$16 sm:%s930]
  %s932 = scalar_lea.vmem %s0, 1294
  %s933 = smov 12
  %v934 = vld [vmem:[%s932] ss:$16 sm:%s933]
  %vm935 = vcmask 1043458
  %v936 = vsel %vm935, %v934, %v931
  %s937 = scalar_lea.vmem %s0, 1294
  %s938 = smov 48
  %v939 = vld [vmem:[%s937] ss:$16 sm:%s938]
  %vm940 = vcmask 1045508
  %v941 = vsel %vm940, %v939, %v936
  %s942 = scalar_lea.vmem %s0, 1294
  %s943 = smov 192
  %v944 = vld [vmem:[%s942] ss:$16 sm:%s943]
  %vm945 = vcmask 1047558
  %v946 = vsel %vm945, %v944, %v941
  %947 = vrot.lane.b32.xlu0 %v946, 112
  %v948 = vpop.permute.xlu0 %947
  %vm949 = vcmask 982912
  %s950 = scalar_lea.vmem %s1, 80
  %951 = vst.msk [vmem:[%s950] sm:$0xff] %vm949, %v948
  %s952 = scalar_lea.vmem %s0, 1806
  %s953 = smov 3
  %v954 = vld [vmem:[%s952] ss:$16 sm:%s953]
  %s955 = scalar_lea.vmem %s0, 1806
  %s956 = smov 12
  %v957 = vld [vmem:[%s955] ss:$16 sm:%s956]
  %vm958 = vcmask 1043458
  %v959 = vsel %vm958, %v957, %v954
  %s960 = scalar_lea.vmem %s0, 1806
  %s961 = smov 48
  %v962 = vld [vmem:[%s960] ss:$16 sm:%s961]
  %vm963 = vcmask 1045508
  %v964 = vsel %vm963, %v962, %v959
  %s965 = scalar_lea.vmem %s0, 1806
  %s966 = smov 192
  %v967 = vld [vmem:[%s965] ss:$16 sm:%s966]
  %vm968 = vcmask 1047558
  %v969 = vsel %vm968, %v967, %v964
  %970 = vrot.lane.b32.xlu0 %v969, 112
  %v971 = vpop.permute.xlu0 %970
  %vm972 = vcmask 982912
  %s973 = scalar_lea.vmem %s1, 112
  %974 = vst.msk [vmem:[%s973] sm:$0xff] %vm972, %v971
  %s975 = scalar_lea.vmem %s0, 398
  %s976 = smov 3
  %v977 = vld [vmem:[%s975] ss:$16 sm:%s976]
  %s978 = scalar_lea.vmem %s0, 398
  %s979 = smov 12
  %v980 = vld [vmem:[%s978] ss:$16 sm:%s979]
  %vm981 = vcmask 1043458
  %v982 = vsel %vm981, %v980, %v977
  %s983 = scalar_lea.vmem %s0, 398
  %s984 = smov 48
  %v985 = vld [vmem:[%s983] ss:$16 sm:%s984]
  %vm986 = vcmask 1045508
  %v987 = vsel %vm986, %v985, %v982
  %s988 = scalar_lea.vmem %s0, 398
  %s989 = smov 192
  %v990 = vld [vmem:[%s988] ss:$16 sm:%s989]
  %vm991 = vcmask 1047558
  %v992 = vsel %vm991, %v990, %v987
  %993 = vrot.lane.b32.xlu0 %v992, 112
  %v994 = vpop.permute.xlu0 %993
  %vm995 = vcmask 982912
  %s996 = scalar_lea.vmem %s1, 24
  %997 = vst.msk [vmem:[%s996] sm:$0xff] %vm995, %v994
  %s998 = scalar_lea.vmem %s0, 910
  %s999 = smov 3
  %v1000 = vld [vmem:[%s998] ss:$16 sm:%s999]
  %s1001 = scalar_lea.vmem %s0, 910
  %s1002 = smov 12
  %v1003 = vld [vmem:[%s1001] ss:$16 sm:%s1002]
  %vm1004 = vcmask 1043458
  %v1005 = vsel %vm1004, %v1003, %v1000
  %s1006 = scalar_lea.vmem %s0, 910
  %s1007 = smov 48
  %v1008 = vld [vmem:[%s1006] ss:$16 sm:%s1007]
  %vm1009 = vcmask 1045508
  %v1010 = vsel %vm1009, %v1008, %v1005
  %s1011 = scalar_lea.vmem %s0, 910
  %s1012 = smov 192
  %v1013 = vld [vmem:[%s1011] ss:$16 sm:%s1012]
  %vm1014 = vcmask 1047558
  %v1015 = vsel %vm1014, %v1013, %v1010
  %1016 = vrot.lane.b32.xlu0 %v1015, 112
  %v1017 = vpop.permute.xlu0 %1016
  %vm1018 = vcmask 982912
  %s1019 = scalar_lea.vmem %s1, 56
  %1020 = vst.msk [vmem:[%s1019] sm:$0xff] %vm1018, %v1017
  %s1021 = scalar_lea.vmem %s0, 1422
  %s1022 = smov 3
  %v1023 = vld [vmem:[%s1021] ss:$16 sm:%s1022]
  %s1024 = scalar_lea.vmem %s0, 1422
  %s1025 = smov 12
  %v1026 = vld [vmem:[%s1024] ss:$16 sm:%s1025]
  %vm1027 = vcmask 1043458
  %v1028 = vsel %vm1027, %v1026, %v1023
  %s1029 = scalar_lea.vmem %s0, 1422
  %s1030 = smov 48
  %v1031 = vld [vmem:[%s1029] ss:$16 sm:%s1030]
  %vm1032 = vcmask 1045508
  %v1033 = vsel %vm1032, %v1031, %v1028
  %s1034 = scalar_lea.vmem %s0, 1422
  %s1035 = smov 192
  %v1036 = vld [vmem:[%s1034] ss:$16 sm:%s1035]
  %vm1037 = vcmask 1047558
  %v1038 = vsel %vm1037, %v1036, %v1033
  %1039 = vrot.lane.b32.xlu0 %v1038, 112
  %v1040 = vpop.permute.xlu0 %1039
  %vm1041 = vcmask 982912
  %s1042 = scalar_lea.vmem %s1, 88
  %1043 = vst.msk [vmem:[%s1042] sm:$0xff] %vm1041, %v1040
  %s1044 = scalar_lea.vmem %s0, 1934
  %s1045 = smov 3
  %v1046 = vld [vmem:[%s1044] ss:$16 sm:%s1045]
  %s1047 = scalar_lea.vmem %s0, 1934
  %s1048 = smov 12
  %v1049 = vld [vmem:[%s1047] ss:$16 sm:%s1048]
  %vm1050 = vcmask 1043458
  %v1051 = vsel %vm1050, %v1049, %v1046
  %s1052 = scalar_lea.vmem %s0, 1934
  %s1053 = smov 48
  %v1054 = vld [vmem:[%s1052] ss:$16 sm:%s1053]
  %vm1055 = vcmask 1045508
  %v1056 = vsel %vm1055, %v1054, %v1051
  %s1057 = scalar_lea.vmem %s0, 1934
  %s1058 = smov 192
  %v1059 = vld [vmem:[%s1057] ss:$16 sm:%s1058]
  %vm1060 = vcmask 1047558
  %v1061 = vsel %vm1060, %v1059, %v1056
  %1062 = vrot.lane.b32.xlu0 %v1061, 112
  %v1063 = vpop.permute.xlu0 %1062
  %vm1064 = vcmask 982912
  %s1065 = scalar_lea.vmem %s1, 120
  %1066 = vst.msk [vmem:[%s1065] sm:$0xff] %vm1064, %v1063
  %s1067 = scalar_lea.vmem %s0, 13
  %s1068 = smov 3
  %v1069 = vld [vmem:[%s1067] ss:$16 sm:%s1068]
  %s1070 = scalar_lea.vmem %s0, 13
  %s1071 = smov 12
  %v1072 = vld [vmem:[%s1070] ss:$16 sm:%s1071]
  %vm1073 = vcmask 1043458
  %v1074 = vsel %vm1073, %v1072, %v1069
  %s1075 = scalar_lea.vmem %s0, 13
  %s1076 = smov 48
  %v1077 = vld [vmem:[%s1075] ss:$16 sm:%s1076]
  %vm1078 = vcmask 1045508
  %v1079 = vsel %vm1078, %v1077, %v1074
  %s1080 = scalar_lea.vmem %s0, 13
  %s1081 = smov 192
  %v1082 = vld [vmem:[%s1080] ss:$16 sm:%s1081]
  %vm1083 = vcmask 1047558
  %v1084 = vsel %vm1083, %v1082, %v1079
  %1085 = vrot.lane.b32.xlu0 %v1084, 104
  %v1086 = vpop.permute.xlu0 %1085
  %vm1087 = vcmask 917312
  %1088 = vst.msk [vmem:[%s1] sm:$0xff] %vm1087, %v1086
  %s1089 = scalar_lea.vmem %s0, 525
  %s1090 = smov 3
  %v1091 = vld [vmem:[%s1089] ss:$16 sm:%s1090]
  %s1092 = scalar_lea.vmem %s0, 525
  %s1093 = smov 12
  %v1094 = vld [vmem:[%s1092] ss:$16 sm:%s1093]
  %vm1095 = vcmask 1043458
  %v1096 = vsel %vm1095, %v1094, %v1091
  %s1097 = scalar_lea.vmem %s0, 525
  %s1098 = smov 48
  %v1099 = vld [vmem:[%s1097] ss:$16 sm:%s1098]
  %vm1100 = vcmask 1045508
  %v1101 = vsel %vm1100, %v1099, %v1096
  %s1102 = scalar_lea.vmem %s0, 525
  %s1103 = smov 192
  %v1104 = vld [vmem:[%s1102] ss:$16 sm:%s1103]
  %vm1105 = vcmask 1047558
  %v1106 = vsel %vm1105, %v1104, %v1101
  %1107 = vrot.lane.b32.xlu0 %v1106, 104
  %v1108 = vpop.permute.xlu0 %1107
  %vm1109 = vcmask 917312
  %s1110 = scalar_lea.vmem %s1, 32
  %1111 = vst.msk [vmem:[%s1110] sm:$0xff] %vm1109, %v1108
  %s1112 = scalar_lea.vmem %s0, 1037
  %s1113 = smov 3
  %v1114 = vld [vmem:[%s1112] ss:$16 sm:%s1113]
  %s1115 = scalar_lea.vmem %s0, 1037
  %s1116 = smov 12
  %v1117 = vld [vmem:[%s1115] ss:$16 sm:%s1116]
  %vm1118 = vcmask 1043458
  %v1119 = vsel %vm1118, %v1117, %v1114
  %s1120 = scalar_lea.vmem %s0, 1037
  %s1121 = smov 48
  %v1122 = vld [vmem:[%s1120] ss:$16 sm:%s1121]
  %vm1123 = vcmask 1045508
  %v1124 = vsel %vm1123, %v1122, %v1119
  %s1125 = scalar_lea.vmem %s0, 1037
  %s1126 = smov 192
  %v1127 = vld [vmem:[%s1125] ss:$16 sm:%s1126]
  %vm1128 = vcmask 1047558
  %v1129 = vsel %vm1128, %v1127, %v1124
  %1130 = vrot.lane.b32.xlu0 %v1129, 104
  %v1131 = vpop.permute.xlu0 %1130
  %vm1132 = vcmask 917312
  %s1133 = scalar_lea.vmem %s1, 64
  %1134 = vst.msk [vmem:[%s1133] sm:$0xff] %vm1132, %v1131
  %s1135 = scalar_lea.vmem %s0, 1549
  %s1136 = smov 3
  %v1137 = vld [vmem:[%s1135] ss:$16 sm:%s1136]
  %s1138 = scalar_lea.vmem %s0, 1549
  %s1139 = smov 12
  %v1140 = vld [vmem:[%s1138] ss:$16 sm:%s1139]
  %vm1141 = vcmask 1043458
  %v1142 = vsel %vm1141, %v1140, %v1137
  %s1143 = scalar_lea.vmem %s0, 1549
  %s1144 = smov 48
  %v1145 = vld [vmem:[%s1143] ss:$16 sm:%s1144]
  %vm1146 = vcmask 1045508
  %v1147 = vsel %vm1146, %v1145, %v1142
  %s1148 = scalar_lea.vmem %s0, 1549
  %s1149 = smov 192
  %v1150 = vld [vmem:[%s1148] ss:$16 sm:%s1149]
  %vm1151 = vcmask 1047558
  %v1152 = vsel %vm1151, %v1150, %v1147
  %1153 = vrot.lane.b32.xlu0 %v1152, 104
  %v1154 = vpop.permute.xlu0 %1153
  %vm1155 = vcmask 917312
  %s1156 = scalar_lea.vmem %s1, 96
  %1157 = vst.msk [vmem:[%s1156] sm:$0xff] %vm1155, %v1154
  %s1158 = scalar_lea.vmem %s0, 141
  %s1159 = smov 3
  %v1160 = vld [vmem:[%s1158] ss:$16 sm:%s1159]
  %s1161 = scalar_lea.vmem %s0, 141
  %s1162 = smov 12
  %v1163 = vld [vmem:[%s1161] ss:$16 sm:%s1162]
  %vm1164 = vcmask 1043458
  %v1165 = vsel %vm1164, %v1163, %v1160
  %s1166 = scalar_lea.vmem %s0, 141
  %s1167 = smov 48
  %v1168 = vld [vmem:[%s1166] ss:$16 sm:%s1167]
  %vm1169 = vcmask 1045508
  %v1170 = vsel %vm1169, %v1168, %v1165
  %s1171 = scalar_lea.vmem %s0, 141
  %s1172 = smov 192
  %v1173 = vld [vmem:[%s1171] ss:$16 sm:%s1172]
  %vm1174 = vcmask 1047558
  %v1175 = vsel %vm1174, %v1173, %v1170
  %1176 = vrot.lane.b32.xlu0 %v1175, 104
  %v1177 = vpop.permute.xlu0 %1176
  %vm1178 = vcmask 917312
  %s1179 = scalar_lea.vmem %s1, 8
  %1180 = vst.msk [vmem:[%s1179] sm:$0xff] %vm1178, %v1177
  %s1181 = scalar_lea.vmem %s0, 653
  %s1182 = smov 3
  %v1183 = vld [vmem:[%s1181] ss:$16 sm:%s1182]
  %s1184 = scalar_lea.vmem %s0, 653
  %s1185 = smov 12
  %v1186 = vld [vmem:[%s1184] ss:$16 sm:%s1185]
  %vm1187 = vcmask 1043458
  %v1188 = vsel %vm1187, %v1186, %v1183
  %s1189 = scalar_lea.vmem %s0, 653
  %s1190 = smov 48
  %v1191 = vld [vmem:[%s1189] ss:$16 sm:%s1190]
  %vm1192 = vcmask 1045508
  %v1193 = vsel %vm1192, %v1191, %v1188
  %s1194 = scalar_lea.vmem %s0, 653
  %s1195 = smov 192
  %v1196 = vld [vmem:[%s1194] ss:$16 sm:%s1195]
  %vm1197 = vcmask 1047558
  %v1198 = vsel %vm1197, %v1196, %v1193
  %1199 = vrot.lane.b32.xlu0 %v1198, 104
  %v1200 = vpop.permute.xlu0 %1199
  %vm1201 = vcmask 917312
  %s1202 = scalar_lea.vmem %s1, 40
  %1203 = vst.msk [vmem:[%s1202] sm:$0xff] %vm1201, %v1200
  %s1204 = scalar_lea.vmem %s0, 1165
  %s1205 = smov 3
  %v1206 = vld [vmem:[%s1204] ss:$16 sm:%s1205]
  %s1207 = scalar_lea.vmem %s0, 1165
  %s1208 = smov 12
  %v1209 = vld [vmem:[%s1207] ss:$16 sm:%s1208]
  %vm1210 = vcmask 1043458
  %v1211 = vsel %vm1210, %v1209, %v1206
  %s1212 = scalar_lea.vmem %s0, 1165
  %s1213 = smov 48
  %v1214 = vld [vmem:[%s1212] ss:$16 sm:%s1213]
  %vm1215 = vcmask 1045508
  %v1216 = vsel %vm1215, %v1214, %v1211
  %s1217 = scalar_lea.vmem %s0, 1165
  %s1218 = smov 192
  %v1219 = vld [vmem:[%s1217] ss:$16 sm:%s1218]
  %vm1220 = vcmask 1047558
  %v1221 = vsel %vm1220, %v1219, %v1216
  %1222 = vrot.lane.b32.xlu0 %v1221, 104
  %v1223 = vpop.permute.xlu0 %1222
  %vm1224 = vcmask 917312
  %s1225 = scalar_lea.vmem %s1, 72
  %1226 = vst.msk [vmem:[%s1225] sm:$0xff] %vm1224, %v1223
  %s1227 = scalar_lea.vmem %s0, 1677
  %s1228 = smov 3
  %v1229 = vld [vmem:[%s1227] ss:$16 sm:%s1228]
  %s1230 = scalar_lea.vmem %s0, 1677
  %s1231 = smov 12
  %v1232 = vld [vmem:[%s1230] ss:$16 sm:%s1231]
  %vm1233 = vcmask 1043458
  %v1234 = vsel %vm1233, %v1232, %v1229
  %s1235 = scalar_lea.vmem %s0, 1677
  %s1236 = smov 48
  %v1237 = vld [vmem:[%s1235] ss:$16 sm:%s1236]
  %vm1238 = vcmask 1045508
  %v1239 = vsel %vm1238, %v1237, %v1234
  %s1240 = scalar_lea.vmem %s0, 1677
  %s1241 = smov 192
  %v1242 = vld [vmem:[%s1240] ss:$16 sm:%s1241]
  %vm1243 = vcmask 1047558
  %v1244 = vsel %vm1243, %v1242, %v1239
  %1245 = vrot.lane.b32.xlu0 %v1244, 104
  %v1246 = vpop.permute.xlu0 %1245
  %vm1247 = vcmask 917312
  %s1248 = scalar_lea.vmem %s1, 104
  %1249 = vst.msk [vmem:[%s1248] sm:$0xff] %vm1247, %v1246
  %s1250 = scalar_lea.vmem %s0, 269
  %s1251 = smov 3
  %v1252 = vld [vmem:[%s1250] ss:$16 sm:%s1251]
  %s1253 = scalar_lea.vmem %s0, 269
  %s1254 = smov 12
  %v1255 = vld [vmem:[%s1253] ss:$16 sm:%s1254]
  %vm1256 = vcmask 1043458
  %v1257 = vsel %vm1256, %v1255, %v1252
  %s1258 = scalar_lea.vmem %s0, 269
  %s1259 = smov 48
  %v1260 = vld [vmem:[%s1258] ss:$16 sm:%s1259]
  %vm1261 = vcmask 1045508
  %v1262 = vsel %vm1261, %v1260, %v1257
  %s1263 = scalar_lea.vmem %s0, 269
  %s1264 = smov 192
  %v1265 = vld [vmem:[%s1263] ss:$16 sm:%s1264]
  %vm1266 = vcmask 1047558
  %v1267 = vsel %vm1266, %v1265, %v1262
  %1268 = vrot.lane.b32.xlu0 %v1267, 104
  %v1269 = vpop.permute.xlu0 %1268
  %vm1270 = vcmask 917312
  %s1271 = scalar_lea.vmem %s1, 16
  %1272 = vst.msk [vmem:[%s1271] sm:$0xff] %vm1270, %v1269
  %s1273 = scalar_lea.vmem %s0, 781
  %s1274 = smov 3
  %v1275 = vld [vmem:[%s1273] ss:$16 sm:%s1274]
  %s1276 = scalar_lea.vmem %s0, 781
  %s1277 = smov 12
  %v1278 = vld [vmem:[%s1276] ss:$16 sm:%s1277]
  %vm1279 = vcmask 1043458
  %v1280 = vsel %vm1279, %v1278, %v1275
  %s1281 = scalar_lea.vmem %s0, 781
  %s1282 = smov 48
  %v1283 = vld [vmem:[%s1281] ss:$16 sm:%s1282]
  %vm1284 = vcmask 1045508
  %v1285 = vsel %vm1284, %v1283, %v1280
  %s1286 = scalar_lea.vmem %s0, 781
  %s1287 = smov 192
  %v1288 = vld [vmem:[%s1286] ss:$16 sm:%s1287]
  %vm1289 = vcmask 1047558
  %v1290 = vsel %vm1289, %v1288, %v1285
  %1291 = vrot.lane.b32.xlu0 %v1290, 104
  %v1292 = vpop.permute.xlu0 %1291
  %vm1293 = vcmask 917312
  %s1294 = scalar_lea.vmem %s1, 48
  %1295 = vst.msk [vmem:[%s1294] sm:$0xff] %vm1293, %v1292
  %s1296 = scalar_lea.vmem %s0, 1293
  %s1297 = smov 3
  %v1298 = vld [vmem:[%s1296] ss:$16 sm:%s1297]
  %s1299 = scalar_lea.vmem %s0, 1293
  %s1300 = smov 12
  %v1301 = vld [vmem:[%s1299] ss:$16 sm:%s1300]
  %vm1302 = vcmask 1043458
  %v1303 = vsel %vm1302, %v1301, %v1298
  %s1304 = scalar_lea.vmem %s0, 1293
  %s1305 = smov 48
  %v1306 = vld [vmem:[%s1304] ss:$16 sm:%s1305]
  %vm1307 = vcmask 1045508
  %v1308 = vsel %vm1307, %v1306, %v1303
  %s1309 = scalar_lea.vmem %s0, 1293
  %s1310 = smov 192
  %v1311 = vld [vmem:[%s1309] ss:$16 sm:%s1310]
  %vm1312 = vcmask 1047558
  %v1313 = vsel %vm1312, %v1311, %v1308
  %1314 = vrot.lane.b32.xlu0 %v1313, 104
  %v1315 = vpop.permute.xlu0 %1314
  %vm1316 = vcmask 917312
  %s1317 = scalar_lea.vmem %s1, 80
  %1318 = vst.msk [vmem:[%s1317] sm:$0xff] %vm1316, %v1315
  %s1319 = scalar_lea.vmem %s0, 1805
  %s1320 = smov 3
  %v1321 = vld [vmem:[%s1319] ss:$16 sm:%s1320]
  %s1322 = scalar_lea.vmem %s0, 1805
  %s1323 = smov 12
  %v1324 = vld [vmem:[%s1322] ss:$16 sm:%s1323]
  %vm1325 = vcmask 1043458
  %v1326 = vsel %vm1325, %v1324, %v1321
  %s1327 = scalar_lea.vmem %s0, 1805
  %s1328 = smov 48
  %v1329 = vld [vmem:[%s1327] ss:$16 sm:%s1328]
  %vm1330 = vcmask 1045508
  %v1331 = vsel %vm1330, %v1329, %v1326
  %s1332 = scalar_lea.vmem %s0, 1805
  %s1333 = smov 192
  %v1334 = vld [vmem:[%s1332] ss:$16 sm:%s1333]
  %vm1335 = vcmask 1047558
  %v1336 = vsel %vm1335, %v1334, %v1331
  %1337 = vrot.lane.b32.xlu0 %v1336, 104
  %v1338 = vpop.permute.xlu0 %1337
  %vm1339 = vcmask 917312
  %s1340 = scalar_lea.vmem %s1, 112
  %1341 = vst.msk [vmem:[%s1340] sm:$0xff] %vm1339, %v1338
  %s1342 = scalar_lea.vmem %s0, 397
  %s1343 = smov 3
  %v1344 = vld [vmem:[%s1342] ss:$16 sm:%s1343]
  %s1345 = scalar_lea.vmem %s0, 397
  %s1346 = smov 12
  %v1347 = vld [vmem:[%s1345] ss:$16 sm:%s1346]
  %vm1348 = vcmask 1043458
  %v1349 = vsel %vm1348, %v1347, %v1344
  %s1350 = scalar_lea.vmem %s0, 397
  %s1351 = smov 48
  %v1352 = vld [vmem:[%s1350] ss:$16 sm:%s1351]
  %vm1353 = vcmask 1045508
  %v1354 = vsel %vm1353, %v1352, %v1349
  %s1355 = scalar_lea.vmem %s0, 397
  %s1356 = smov 192
  %v1357 = vld [vmem:[%s1355] ss:$16 sm:%s1356]
  %vm1358 = vcmask 1047558
  %v1359 = vsel %vm1358, %v1357, %v1354
  %1360 = vrot.lane.b32.xlu0 %v1359, 104
  %v1361 = vpop.permute.xlu0 %1360
  %vm1362 = vcmask 917312
  %s1363 = scalar_lea.vmem %s1, 24
  %1364 = vst.msk [vmem:[%s1363] sm:$0xff] %vm1362, %v1361
  %s1365 = scalar_lea.vmem %s0, 909
  %s1366 = smov 3
  %v1367 = vld [vmem:[%s1365] ss:$16 sm:%s1366]
  %s1368 = scalar_lea.vmem %s0, 909
  %s1369 = smov 12
  %v1370 = vld [vmem:[%s1368] ss:$16 sm:%s1369]
  %vm1371 = vcmask 1043458
  %v1372 = vsel %vm1371, %v1370, %v1367
  %s1373 = scalar_lea.vmem %s0, 909
  %s1374 = smov 48
  %v1375 = vld [vmem:[%s1373] ss:$16 sm:%s1374]
  %vm1376 = vcmask 1045508
  %v1377 = vsel %vm1376, %v1375, %v1372
  %s1378 = scalar_lea.vmem %s0, 909
  %s1379 = smov 192
  %v1380 = vld [vmem:[%s1378] ss:$16 sm:%s1379]
  %vm1381 = vcmask 1047558
  %v1382 = vsel %vm1381, %v1380, %v1377
  %1383 = vrot.lane.b32.xlu0 %v1382, 104
  %v1384 = vpop.permute.xlu0 %1383
  %vm1385 = vcmask 917312
  %s1386 = scalar_lea.vmem %s1, 56
  %1387 = vst.msk [vmem:[%s1386] sm:$0xff] %vm1385, %v1384
  %s1388 = scalar_lea.vmem %s0, 1421
  %s1389 = smov 3
  %v1390 = vld [vmem:[%s1388] ss:$16 sm:%s1389]
  %s1391 = scalar_lea.vmem %s0, 1421
  %s1392 = smov 12
  %v1393 = vld [vmem:[%s1391] ss:$16 sm:%s1392]
  %vm1394 = vcmask 1043458
  %v1395 = vsel %vm1394, %v1393, %v1390
  %s1396 = scalar_lea.vmem %s0, 1421
  %s1397 = smov 48
  %v1398 = vld [vmem:[%s1396] ss:$16 sm:%s1397]
  %vm1399 = vcmask 1045508
  %v1400 = vsel %vm1399, %v1398, %v1395
  %s1401 = scalar_lea.vmem %s0, 1421
  %s1402 = smov 192
  %v1403 = vld [vmem:[%s1401] ss:$16 sm:%s1402]
  %vm1404 = vcmask 1047558
  %v1405 = vsel %vm1404, %v1403, %v1400
  %1406 = vrot.lane.b32.xlu0 %v1405, 104
  %v1407 = vpop.permute.xlu0 %1406
  %vm1408 = vcmask 917312
  %s1409 = scalar_lea.vmem %s1, 88
  %1410 = vst.msk [vmem:[%s1409] sm:$0xff] %vm1408, %v1407
  %s1411 = scalar_lea.vmem %s0, 1933
  %s1412 = smov 3
  %v1413 = vld [vmem:[%s1411] ss:$16 sm:%s1412]
  %s1414 = scalar_lea.vmem %s0, 1933
  %s1415 = smov 12
  %v1416 = vld [vmem:[%s1414] ss:$16 sm:%s1415]
  %vm1417 = vcmask 1043458
  %v1418 = vsel %vm1417, %v1416, %v1413
  %s1419 = scalar_lea.vmem %s0, 1933
  %s1420 = smov 48
  %v1421 = vld [vmem:[%s1419] ss:$16 sm:%s1420]
  %vm1422 = vcmask 1045508
  %v1423 = vsel %vm1422, %v1421, %v1418
  %s1424 = scalar_lea.vmem %s0, 1933
  %s1425 = smov 192
  %v1426 = vld [vmem:[%s1424] ss:$16 sm:%s1425]
  %vm1427 = vcmask 1047558
  %v1428 = vsel %vm1427, %v1426, %v1423
  %1429 = vrot.lane.b32.xlu0 %v1428, 104
  %v1430 = vpop.permute.xlu0 %1429
  %vm1431 = vcmask 917312
  %s1432 = scalar_lea.vmem %s1, 120
  %1433 = vst.msk [vmem:[%s1432] sm:$0xff] %vm1431, %v1430
  %s1434 = scalar_lea.vmem %s0, 12
  %s1435 = smov 3
  %v1436 = vld [vmem:[%s1434] ss:$16 sm:%s1435]
  %s1437 = scalar_lea.vmem %s0, 12
  %s1438 = smov 12
  %v1439 = vld [vmem:[%s1437] ss:$16 sm:%s1438]
  %vm1440 = vcmask 1043458
  %v1441 = vsel %vm1440, %v1439, %v1436
  %s1442 = scalar_lea.vmem %s0, 12
  %s1443 = smov 48
  %v1444 = vld [vmem:[%s1442] ss:$16 sm:%s1443]
  %vm1445 = vcmask 1045508
  %v1446 = vsel %vm1445, %v1444, %v1441
  %s1447 = scalar_lea.vmem %s0, 12
  %s1448 = smov 192
  %v1449 = vld [vmem:[%s1447] ss:$16 sm:%s1448]
  %vm1450 = vcmask 1047558
  %v1451 = vsel %vm1450, %v1449, %v1446
  %1452 = vrot.lane.b32.xlu0 %v1451, 96
  %v1453 = vpop.permute.xlu0 %1452
  %vm1454 = vcmask 851712
  %1455 = vst.msk [vmem:[%s1] sm:$0xff] %vm1454, %v1453
  %s1456 = scalar_lea.vmem %s0, 524
  %s1457 = smov 3
  %v1458 = vld [vmem:[%s1456] ss:$16 sm:%s1457]
  %s1459 = scalar_lea.vmem %s0, 524
  %s1460 = smov 12
  %v1461 = vld [vmem:[%s1459] ss:$16 sm:%s1460]
  %vm1462 = vcmask 1043458
  %v1463 = vsel %vm1462, %v1461, %v1458
  %s1464 = scalar_lea.vmem %s0, 524
  %s1465 = smov 48
  %v1466 = vld [vmem:[%s1464] ss:$16 sm:%s1465]
  %vm1467 = vcmask 1045508
  %v1468 = vsel %vm1467, %v1466, %v1463
  %s1469 = scalar_lea.vmem %s0, 524
  %s1470 = smov 192
  %v1471 = vld [vmem:[%s1469] ss:$16 sm:%s1470]
  %vm1472 = vcmask 1047558
  %v1473 = vsel %vm1472, %v1471, %v1468
  %1474 = vrot.lane.b32.xlu0 %v1473, 96
  %v1475 = vpop.permute.xlu0 %1474
  %vm1476 = vcmask 851712
  %s1477 = scalar_lea.vmem %s1, 32
  %1478 = vst.msk [vmem:[%s1477] sm:$0xff] %vm1476, %v1475
  %s1479 = scalar_lea.vmem %s0, 1036
  %s1480 = smov 3
  %v1481 = vld [vmem:[%s1479] ss:$16 sm:%s1480]
  %s1482 = scalar_lea.vmem %s0, 1036
  %s1483 = smov 12
  %v1484 = vld [vmem:[%s1482] ss:$16 sm:%s1483]
  %vm1485 = vcmask 1043458
  %v1486 = vsel %vm1485, %v1484, %v1481
  %s1487 = scalar_lea.vmem %s0, 1036
  %s1488 = smov 48
  %v1489 = vld [vmem:[%s1487] ss:$16 sm:%s1488]
  %vm1490 = vcmask 1045508
  %v1491 = vsel %vm1490, %v1489, %v1486
  %s1492 = scalar_lea.vmem %s0, 1036
  %s1493 = smov 192
  %v1494 = vld [vmem:[%s1492] ss:$16 sm:%s1493]
  %vm1495 = vcmask 1047558
  %v1496 = vsel %vm1495, %v1494, %v1491
  %1497 = vrot.lane.b32.xlu0 %v1496, 96
  %v1498 = vpop.permute.xlu0 %1497
  %vm1499 = vcmask 851712
  %s1500 = scalar_lea.vmem %s1, 64
  %1501 = vst.msk [vmem:[%s1500] sm:$0xff] %vm1499, %v1498
  %s1502 = scalar_lea.vmem %s0, 1548
  %s1503 = smov 3
  %v1504 = vld [vmem:[%s1502] ss:$16 sm:%s1503]
  %s1505 = scalar_lea.vmem %s0, 1548
  %s1506 = smov 12
  %v1507 = vld [vmem:[%s1505] ss:$16 sm:%s1506]
  %vm1508 = vcmask 1043458
  %v1509 = vsel %vm1508, %v1507, %v1504
  %s1510 = scalar_lea.vmem %s0, 1548
  %s1511 = smov 48
  %v1512 = vld [vmem:[%s1510] ss:$16 sm:%s1511]
  %vm1513 = vcmask 1045508
  %v1514 = vsel %vm1513, %v1512, %v1509
  %s1515 = scalar_lea.vmem %s0, 1548
  %s1516 = smov 192
  %v1517 = vld [vmem:[%s1515] ss:$16 sm:%s1516]
  %vm1518 = vcmask 1047558
  %v1519 = vsel %vm1518, %v1517, %v1514
  %1520 = vrot.lane.b32.xlu0 %v1519, 96
  %v1521 = vpop.permute.xlu0 %1520
  %vm1522 = vcmask 851712
  %s1523 = scalar_lea.vmem %s1, 96
  %1524 = vst.msk [vmem:[%s1523] sm:$0xff] %vm1522, %v1521
  %s1525 = scalar_lea.vmem %s0, 140
  %s1526 = smov 3
  %v1527 = vld [vmem:[%s1525] ss:$16 sm:%s1526]
  %s1528 = scalar_lea.vmem %s0, 140
  %s1529 = smov 12
  %v1530 = vld [vmem:[%s1528] ss:$16 sm:%s1529]
  %vm1531 = vcmask 1043458
  %v1532 = vsel %vm1531, %v1530, %v1527
  %s1533 = scalar_lea.vmem %s0, 140
  %s1534 = smov 48
  %v1535 = vld [vmem:[%s1533] ss:$16 sm:%s1534]
  %vm1536 = vcmask 1045508
  %v1537 = vsel %vm1536, %v1535, %v1532
  %s1538 = scalar_lea.vmem %s0, 140
  %s1539 = smov 192
  %v1540 = vld [vmem:[%s1538] ss:$16 sm:%s1539]
  %vm1541 = vcmask 1047558
  %v1542 = vsel %vm1541, %v1540, %v1537
  %1543 = vrot.lane.b32.xlu0 %v1542, 96
  %v1544 = vpop.permute.xlu0 %1543
  %vm1545 = vcmask 851712
  %s1546 = scalar_lea.vmem %s1, 8
  %1547 = vst.msk [vmem:[%s1546] sm:$0xff] %vm1545, %v1544
  %s1548 = scalar_lea.vmem %s0, 652
  %s1549 = smov 3
  %v1550 = vld [vmem:[%s1548] ss:$16 sm:%s1549]
  %s1551 = scalar_lea.vmem %s0, 652
  %s1552 = smov 12
  %v1553 = vld [vmem:[%s1551] ss:$16 sm:%s1552]
  %vm1554 = vcmask 1043458
  %v1555 = vsel %vm1554, %v1553, %v1550
  %s1556 = scalar_lea.vmem %s0, 652
  %s1557 = smov 48
  %v1558 = vld [vmem:[%s1556] ss:$16 sm:%s1557]
  %vm1559 = vcmask 1045508
  %v1560 = vsel %vm1559, %v1558, %v1555
  %s1561 = scalar_lea.vmem %s0, 652
  %s1562 = smov 192
  %v1563 = vld [vmem:[%s1561] ss:$16 sm:%s1562]
  %vm1564 = vcmask 1047558
  %v1565 = vsel %vm1564, %v1563, %v1560
  %1566 = vrot.lane.b32.xlu0 %v1565, 96
  %v1567 = vpop.permute.xlu0 %1566
  %vm1568 = vcmask 851712
  %s1569 = scalar_lea.vmem %s1, 40
  %1570 = vst.msk [vmem:[%s1569] sm:$0xff] %vm1568, %v1567
  %s1571 = scalar_lea.vmem %s0, 1164
  %s1572 = smov 3
  %v1573 = vld [vmem:[%s1571] ss:$16 sm:%s1572]
  %s1574 = scalar_lea.vmem %s0, 1164
  %s1575 = smov 12
  %v1576 = vld [vmem:[%s1574] ss:$16 sm:%s1575]
  %vm1577 = vcmask 1043458
  %v1578 = vsel %vm1577, %v1576, %v1573
  %s1579 = scalar_lea.vmem %s0, 1164
  %s1580 = smov 48
  %v1581 = vld [vmem:[%s1579] ss:$16 sm:%s1580]
  %vm1582 = vcmask 1045508
  %v1583 = vsel %vm1582, %v1581, %v1578
  %s1584 = scalar_lea.vmem %s0, 1164
  %s1585 = smov 192
  %v1586 = vld [vmem:[%s1584] ss:$16 sm:%s1585]
  %vm1587 = vcmask 1047558
  %v1588 = vsel %vm1587, %v1586, %v1583
  %1589 = vrot.lane.b32.xlu0 %v1588, 96
  %v1590 = vpop.permute.xlu0 %1589
  %vm1591 = vcmask 851712
  %s1592 = scalar_lea.vmem %s1, 72
  %1593 = vst.msk [vmem:[%s1592] sm:$0xff] %vm1591, %v1590
  %s1594 = scalar_lea.vmem %s0, 1676
  %s1595 = smov 3
  %v1596 = vld [vmem:[%s1594] ss:$16 sm:%s1595]
  %s1597 = scalar_lea.vmem %s0, 1676
  %s1598 = smov 12
  %v1599 = vld [vmem:[%s1597] ss:$16 sm:%s1598]
  %vm1600 = vcmask 1043458
  %v1601 = vsel %vm1600, %v1599, %v1596
  %s1602 = scalar_lea.vmem %s0, 1676
  %s1603 = smov 48
  %v1604 = vld [vmem:[%s1602] ss:$16 sm:%s1603]
  %vm1605 = vcmask 1045508
  %v1606 = vsel %vm1605, %v1604, %v1601
  %s1607 = scalar_lea.vmem %s0, 1676
  %s1608 = smov 192
  %v1609 = vld [vmem:[%s1607] ss:$16 sm:%s1608]
  %vm1610 = vcmask 1047558
  %v1611 = vsel %vm1610, %v1609, %v1606
  %1612 = vrot.lane.b32.xlu0 %v1611, 96
  %v1613 = vpop.permute.xlu0 %1612
  %vm1614 = vcmask 851712
  %s1615 = scalar_lea.vmem %s1, 104
  %1616 = vst.msk [vmem:[%s1615] sm:$0xff] %vm1614, %v1613
  %s1617 = scalar_lea.vmem %s0, 268
  %s1618 = smov 3
  %v1619 = vld [vmem:[%s1617] ss:$16 sm:%s1618]
  %s1620 = scalar_lea.vmem %s0, 268
  %s1621 = smov 12
  %v1622 = vld [vmem:[%s1620] ss:$16 sm:%s1621]
  %vm1623 = vcmask 1043458
  %v1624 = vsel %vm1623, %v1622, %v1619
  %s1625 = scalar_lea.vmem %s0, 268
  %s1626 = smov 48
  %v1627 = vld [vmem:[%s1625] ss:$16 sm:%s1626]
  %vm1628 = vcmask 1045508
  %v1629 = vsel %vm1628, %v1627, %v1624
  %s1630 = scalar_lea.vmem %s0, 268
  %s1631 = smov 192
  %v1632 = vld [vmem:[%s1630] ss:$16 sm:%s1631]
  %vm1633 = vcmask 1047558
  %v1634 = vsel %vm1633, %v1632, %v1629
  %1635 = vrot.lane.b32.xlu0 %v1634, 96
  %v1636 = vpop.permute.xlu0 %1635
  %vm1637 = vcmask 851712
  %s1638 = scalar_lea.vmem %s1, 16
  %1639 = vst.msk [vmem:[%s1638] sm:$0xff] %vm1637, %v1636
  %s1640 = scalar_lea.vmem %s0, 780
  %s1641 = smov 3
  %v1642 = vld [vmem:[%s1640] ss:$16 sm:%s1641]
  %s1643 = scalar_lea.vmem %s0, 780
  %s1644 = smov 12
  %v1645 = vld [vmem:[%s1643] ss:$16 sm:%s1644]
  %vm1646 = vcmask 1043458
  %v1647 = vsel %vm1646, %v1645, %v1642
  %s1648 = scalar_lea.vmem %s0, 780
  %s1649 = smov 48
  %v1650 = vld [vmem:[%s1648] ss:$16 sm:%s1649]
  %vm1651 = vcmask 1045508
  %v1652 = vsel %vm1651, %v1650, %v1647
  %s1653 = scalar_lea.vmem %s0, 780
  %s1654 = smov 192
  %v1655 = vld [vmem:[%s1653] ss:$16 sm:%s1654]
  %vm1656 = vcmask 1047558
  %v1657 = vsel %vm1656, %v1655, %v1652
  %1658 = vrot.lane.b32.xlu0 %v1657, 96
  %v1659 = vpop.permute.xlu0 %1658
  %vm1660 = vcmask 851712
  %s1661 = scalar_lea.vmem %s1, 48
  %1662 = vst.msk [vmem:[%s1661] sm:$0xff] %vm1660, %v1659
  %s1663 = scalar_lea.vmem %s0, 1292
  %s1664 = smov 3
  %v1665 = vld [vmem:[%s1663] ss:$16 sm:%s1664]
  %s1666 = scalar_lea.vmem %s0, 1292
  %s1667 = smov 12
  %v1668 = vld [vmem:[%s1666] ss:$16 sm:%s1667]
  %vm1669 = vcmask 1043458
  %v1670 = vsel %vm1669, %v1668, %v1665
  %s1671 = scalar_lea.vmem %s0, 1292
  %s1672 = smov 48
  %v1673 = vld [vmem:[%s1671] ss:$16 sm:%s1672]
  %vm1674 = vcmask 1045508
  %v1675 = vsel %vm1674, %v1673, %v1670
  %s1676 = scalar_lea.vmem %s0, 1292
  %s1677 = smov 192
  %v1678 = vld [vmem:[%s1676] ss:$16 sm:%s1677]
  %vm1679 = vcmask 1047558
  %v1680 = vsel %vm1679, %v1678, %v1675
  %1681 = vrot.lane.b32.xlu0 %v1680, 96
  %v1682 = vpop.permute.xlu0 %1681
  %vm1683 = vcmask 851712
  %s1684 = scalar_lea.vmem %s1, 80
  %1685 = vst.msk [vmem:[%s1684] sm:$0xff] %vm1683, %v1682
  %s1686 = scalar_lea.vmem %s0, 1804
  %s1687 = smov 3
  %v1688 = vld [vmem:[%s1686] ss:$16 sm:%s1687]
  %s1689 = scalar_lea.vmem %s0, 1804
  %s1690 = smov 12
  %v1691 = vld [vmem:[%s1689] ss:$16 sm:%s1690]
  %vm1692 = vcmask 1043458
  %v1693 = vsel %vm1692, %v1691, %v1688
  %s1694 = scalar_lea.vmem %s0, 1804
  %s1695 = smov 48
  %v1696 = vld [vmem:[%s1694] ss:$16 sm:%s1695]
  %vm1697 = vcmask 1045508
  %v1698 = vsel %vm1697, %v1696, %v1693
  %s1699 = scalar_lea.vmem %s0, 1804
  %s1700 = smov 192
  %v1701 = vld [vmem:[%s1699] ss:$16 sm:%s1700]
  %vm1702 = vcmask 1047558
  %v1703 = vsel %vm1702, %v1701, %v1698
  %1704 = vrot.lane.b32.xlu0 %v1703, 96
  %v1705 = vpop.permute.xlu0 %1704
  %vm1706 = vcmask 851712
  %s1707 = scalar_lea.vmem %s1, 112
  %1708 = vst.msk [vmem:[%s1707] sm:$0xff] %vm1706, %v1705
  %s1709 = scalar_lea.vmem %s0, 396
  %s1710 = smov 3
  %v1711 = vld [vmem:[%s1709] ss:$16 sm:%s1710]
  %s1712 = scalar_lea.vmem %s0, 396
  %s1713 = smov 12
  %v1714 = vld [vmem:[%s1712] ss:$16 sm:%s1713]
  %vm1715 = vcmask 1043458
  %v1716 = vsel %vm1715, %v1714, %v1711
  %s1717 = scalar_lea.vmem %s0, 396
  %s1718 = smov 48
  %v1719 = vld [vmem:[%s1717] ss:$16 sm:%s1718]
  %vm1720 = vcmask 1045508
  %v1721 = vsel %vm1720, %v1719, %v1716
  %s1722 = scalar_lea.vmem %s0, 396
  %s1723 = smov 192
  %v1724 = vld [vmem:[%s1722] ss:$16 sm:%s1723]
  %vm1725 = vcmask 1047558
  %v1726 = vsel %vm1725, %v1724, %v1721
  %1727 = vrot.lane.b32.xlu0 %v1726, 96
  %v1728 = vpop.permute.xlu0 %1727
  %vm1729 = vcmask 851712
  %s1730 = scalar_lea.vmem %s1, 24
  %1731 = vst.msk [vmem:[%s1730] sm:$0xff] %vm1729, %v1728
  %s1732 = scalar_lea.vmem %s0, 908
  %s1733 = smov 3
  %v1734 = vld [vmem:[%s1732] ss:$16 sm:%s1733]
  %s1735 = scalar_lea.vmem %s0, 908
  %s1736 = smov 12
  %v1737 = vld [vmem:[%s1735] ss:$16 sm:%s1736]
  %vm1738 = vcmask 1043458
  %v1739 = vsel %vm1738, %v1737, %v1734
  %s1740 = scalar_lea.vmem %s0, 908
  %s1741 = smov 48
  %v1742 = vld [vmem:[%s1740] ss:$16 sm:%s1741]
  %vm1743 = vcmask 1045508
  %v1744 = vsel %vm1743, %v1742, %v1739
  %s1745 = scalar_lea.vmem %s0, 908
  %s1746 = smov 192
  %v1747 = vld [vmem:[%s1745] ss:$16 sm:%s1746]
  %vm1748 = vcmask 1047558
  %v1749 = vsel %vm1748, %v1747, %v1744
  %1750 = vrot.lane.b32.xlu0 %v1749, 96
  %v1751 = vpop.permute.xlu0 %1750
  %vm1752 = vcmask 851712
  %s1753 = scalar_lea.vmem %s1, 56
  %1754 = vst.msk [vmem:[%s1753] sm:$0xff] %vm1752, %v1751
  %s1755 = scalar_lea.vmem %s0, 1420
  %s1756 = smov 3
  %v1757 = vld [vmem:[%s1755] ss:$16 sm:%s1756]
  %s1758 = scalar_lea.vmem %s0, 1420
  %s1759 = smov 12
  %v1760 = vld [vmem:[%s1758] ss:$16 sm:%s1759]
  %vm1761 = vcmask 1043458
  %v1762 = vsel %vm1761, %v1760, %v1757
  %s1763 = scalar_lea.vmem %s0, 1420
  %s1764 = smov 48
  %v1765 = vld [vmem:[%s1763] ss:$16 sm:%s1764]
  %vm1766 = vcmask 1045508
  %v1767 = vsel %vm1766, %v1765, %v1762
  %s1768 = scalar_lea.vmem %s0, 1420
  %s1769 = smov 192
  %v1770 = vld [vmem:[%s1768] ss:$16 sm:%s1769]
  %vm1771 = vcmask 1047558
  %v1772 = vsel %vm1771, %v1770, %v1767
  %1773 = vrot.lane.b32.xlu0 %v1772, 96
  %v1774 = vpop.permute.xlu0 %1773
  %vm1775 = vcmask 851712
  %s1776 = scalar_lea.vmem %s1, 88
  %1777 = vst.msk [vmem:[%s1776] sm:$0xff] %vm1775, %v1774
  %s1778 = scalar_lea.vmem %s0, 1932
  %s1779 = smov 3
  %v1780 = vld [vmem:[%s1778] ss:$16 sm:%s1779]
  %s1781 = scalar_lea.vmem %s0, 1932
  %s1782 = smov 12
  %v1783 = vld [vmem:[%s1781] ss:$16 sm:%s1782]
  %vm1784 = vcmask 1043458
  %v1785 = vsel %vm1784, %v1783, %v1780
  %s1786 = scalar_lea.vmem %s0, 1932
  %s1787 = smov 48
  %v1788 = vld [vmem:[%s1786] ss:$16 sm:%s1787]
  %vm1789 = vcmask 1045508
  %v1790 = vsel %vm1789, %v1788, %v1785
  %s1791 = scalar_lea.vmem %s0, 1932
  %s1792 = smov 192
  %v1793 = vld [vmem:[%s1791] ss:$16 sm:%s1792]
  %vm1794 = vcmask 1047558
  %v1795 = vsel %vm1794, %v1793, %v1790
  %1796 = vrot.lane.b32.xlu0 %v1795, 96
  %v1797 = vpop.permute.xlu0 %1796
  %vm1798 = vcmask 851712
  %s1799 = scalar_lea.vmem %s1, 120
  %1800 = vst.msk [vmem:[%s1799] sm:$0xff] %vm1798, %v1797
  %s1801 = scalar_lea.vmem %s0, 11
  %s1802 = smov 3
  %v1803 = vld [vmem:[%s1801] ss:$16 sm:%s1802]
  %s1804 = scalar_lea.vmem %s0, 11
  %s1805 = smov 12
  %v1806 = vld [vmem:[%s1804] ss:$16 sm:%s1805]
  %vm1807 = vcmask 1043458
  %v1808 = vsel %vm1807, %v1806, %v1803
  %s1809 = scalar_lea.vmem %s0, 11
  %s1810 = smov 48
  %v1811 = vld [vmem:[%s1809] ss:$16 sm:%s1810]
  %vm1812 = vcmask 1045508
  %v1813 = vsel %vm1812, %v1811, %v1808
  %s1814 = scalar_lea.vmem %s0, 11
  %s1815 = smov 192
  %v1816 = vld [vmem:[%s1814] ss:$16 sm:%s1815]
  %vm1817 = vcmask 1047558
  %v1818 = vsel %vm1817, %v1816, %v1813
  %1819 = vrot.lane.b32.xlu0 %v1818, 88
  %v1820 = vpop.permute.xlu0 %1819
  %vm1821 = vcmask 786112
  %1822 = vst.msk [vmem:[%s1] sm:$0xff] %vm1821, %v1820
  %s1823 = scalar_lea.vmem %s0, 523
  %s1824 = smov 3
  %v1825 = vld [vmem:[%s1823] ss:$16 sm:%s1824]
  %s1826 = scalar_lea.vmem %s0, 523
  %s1827 = smov 12
  %v1828 = vld [vmem:[%s1826] ss:$16 sm:%s1827]
  %vm1829 = vcmask 1043458
  %v1830 = vsel %vm1829, %v1828, %v1825
  %s1831 = scalar_lea.vmem %s0, 523
  %s1832 = smov 48
  %v1833 = vld [vmem:[%s1831] ss:$16 sm:%s1832]
  %vm1834 = vcmask 1045508
  %v1835 = vsel %vm1834, %v1833, %v1830
  %s1836 = scalar_lea.vmem %s0, 523
  %s1837 = smov 192
  %v1838 = vld [vmem:[%s1836] ss:$16 sm:%s1837]
  %vm1839 = vcmask 1047558
  %v1840 = vsel %vm1839, %v1838, %v1835
  %1841 = vrot.lane.b32.xlu0 %v1840, 88
  %v1842 = vpop.permute.xlu0 %1841
  %vm1843 = vcmask 786112
  %s1844 = scalar_lea.vmem %s1, 32
  %1845 = vst.msk [vmem:[%s1844] sm:$0xff] %vm1843, %v1842
  %s1846 = scalar_lea.vmem %s0, 1035
  %s1847 = smov 3
  %v1848 = vld [vmem:[%s1846] ss:$16 sm:%s1847]
  %s1849 = scalar_lea.vmem %s0, 1035
  %s1850 = smov 12
  %v1851 = vld [vmem:[%s1849] ss:$16 sm:%s1850]
  %vm1852 = vcmask 1043458
  %v1853 = vsel %vm1852, %v1851, %v1848
  %s1854 = scalar_lea.vmem %s0, 1035
  %s1855 = smov 48
  %v1856 = vld [vmem:[%s1854] ss:$16 sm:%s1855]
  %vm1857 = vcmask 1045508
  %v1858 = vsel %vm1857, %v1856, %v1853
  %s1859 = scalar_lea.vmem %s0, 1035
  %s1860 = smov 192
  %v1861 = vld [vmem:[%s1859] ss:$16 sm:%s1860]
  %vm1862 = vcmask 1047558
  %v1863 = vsel %vm1862, %v1861, %v1858
  %1864 = vrot.lane.b32.xlu0 %v1863, 88
  %v1865 = vpop.permute.xlu0 %1864
  %vm1866 = vcmask 786112
  %s1867 = scalar_lea.vmem %s1, 64
  %1868 = vst.msk [vmem:[%s1867] sm:$0xff] %vm1866, %v1865
  %s1869 = scalar_lea.vmem %s0, 1547
  %s1870 = smov 3
  %v1871 = vld [vmem:[%s1869] ss:$16 sm:%s1870]
  %s1872 = scalar_lea.vmem %s0, 1547
  %s1873 = smov 12
  %v1874 = vld [vmem:[%s1872] ss:$16 sm:%s1873]
  %vm1875 = vcmask 1043458
  %v1876 = vsel %vm1875, %v1874, %v1871
  %s1877 = scalar_lea.vmem %s0, 1547
  %s1878 = smov 48
  %v1879 = vld [vmem:[%s1877] ss:$16 sm:%s1878]
  %vm1880 = vcmask 1045508
  %v1881 = vsel %vm1880, %v1879, %v1876
  %s1882 = scalar_lea.vmem %s0, 1547
  %s1883 = smov 192
  %v1884 = vld [vmem:[%s1882] ss:$16 sm:%s1883]
  %vm1885 = vcmask 1047558
  %v1886 = vsel %vm1885, %v1884, %v1881
  %1887 = vrot.lane.b32.xlu0 %v1886, 88
  %v1888 = vpop.permute.xlu0 %1887
  %vm1889 = vcmask 786112
  %s1890 = scalar_lea.vmem %s1, 96
  %1891 = vst.msk [vmem:[%s1890] sm:$0xff] %vm1889, %v1888
  %s1892 = scalar_lea.vmem %s0, 139
  %s1893 = smov 3
  %v1894 = vld [vmem:[%s1892] ss:$16 sm:%s1893]
  %s1895 = scalar_lea.vmem %s0, 139
  %s1896 = smov 12
  %v1897 = vld [vmem:[%s1895] ss:$16 sm:%s1896]
  %vm1898 = vcmask 1043458
  %v1899 = vsel %vm1898, %v1897, %v1894
  %s1900 = scalar_lea.vmem %s0, 139
  %s1901 = smov 48
  %v1902 = vld [vmem:[%s1900] ss:$16 sm:%s1901]
  %vm1903 = vcmask 1045508
  %v1904 = vsel %vm1903, %v1902, %v1899
  %s1905 = scalar_lea.vmem %s0, 139
  %s1906 = smov 192
  %v1907 = vld [vmem:[%s1905] ss:$16 sm:%s1906]
  %vm1908 = vcmask 1047558
  %v1909 = vsel %vm1908, %v1907, %v1904
  %1910 = vrot.lane.b32.xlu0 %v1909, 88
  %v1911 = vpop.permute.xlu0 %1910
  %vm1912 = vcmask 786112
  %s1913 = scalar_lea.vmem %s1, 8
  %1914 = vst.msk [vmem:[%s1913] sm:$0xff] %vm1912, %v1911
  %s1915 = scalar_lea.vmem %s0, 651
  %s1916 = smov 3
  %v1917 = vld [vmem:[%s1915] ss:$16 sm:%s1916]
  %s1918 = scalar_lea.vmem %s0, 651
  %s1919 = smov 12
  %v1920 = vld [vmem:[%s1918] ss:$16 sm:%s1919]
  %vm1921 = vcmask 1043458
  %v1922 = vsel %vm1921, %v1920, %v1917
  %s1923 = scalar_lea.vmem %s0, 651
  %s1924 = smov 48
  %v1925 = vld [vmem:[%s1923] ss:$16 sm:%s1924]
  %vm1926 = vcmask 1045508
  %v1927 = vsel %vm1926, %v1925, %v1922
  %s1928 = scalar_lea.vmem %s0, 651
  %s1929 = smov 192
  %v1930 = vld [vmem:[%s1928] ss:$16 sm:%s1929]
  %vm1931 = vcmask 1047558
  %v1932 = vsel %vm1931, %v1930, %v1927
  %1933 = vrot.lane.b32.xlu0 %v1932, 88
  %v1934 = vpop.permute.xlu0 %1933
  %vm1935 = vcmask 786112
  %s1936 = scalar_lea.vmem %s1, 40
  %1937 = vst.msk [vmem:[%s1936] sm:$0xff] %vm1935, %v1934
  %s1938 = scalar_lea.vmem %s0, 1163
  %s1939 = smov 3
  %v1940 = vld [vmem:[%s1938] ss:$16 sm:%s1939]
  %s1941 = scalar_lea.vmem %s0, 1163
  %s1942 = smov 12
  %v1943 = vld [vmem:[%s1941] ss:$16 sm:%s1942]
  %vm1944 = vcmask 1043458
  %v1945 = vsel %vm1944, %v1943, %v1940
  %s1946 = scalar_lea.vmem %s0, 1163
  %s1947 = smov 48
  %v1948 = vld [vmem:[%s1946] ss:$16 sm:%s1947]
  %vm1949 = vcmask 1045508
  %v1950 = vsel %vm1949, %v1948, %v1945
  %s1951 = scalar_lea.vmem %s0, 1163
  %s1952 = smov 192
  %v1953 = vld [vmem:[%s1951] ss:$16 sm:%s1952]
  %vm1954 = vcmask 1047558
  %v1955 = vsel %vm1954, %v1953, %v1950
  %1956 = vrot.lane.b32.xlu0 %v1955, 88
  %v1957 = vpop.permute.xlu0 %1956
  %vm1958 = vcmask 786112
  %s1959 = scalar_lea.vmem %s1, 72
  %1960 = vst.msk [vmem:[%s1959] sm:$0xff] %vm1958, %v1957
  %s1961 = scalar_lea.vmem %s0, 1675
  %s1962 = smov 3
  %v1963 = vld [vmem:[%s1961] ss:$16 sm:%s1962]
  %s1964 = scalar_lea.vmem %s0, 1675
  %s1965 = smov 12
  %v1966 = vld [vmem:[%s1964] ss:$16 sm:%s1965]
  %vm1967 = vcmask 1043458
  %v1968 = vsel %vm1967, %v1966, %v1963
  %s1969 = scalar_lea.vmem %s0, 1675
  %s1970 = smov 48
  %v1971 = vld [vmem:[%s1969] ss:$16 sm:%s1970]
  %vm1972 = vcmask 1045508
  %v1973 = vsel %vm1972, %v1971, %v1968
  %s1974 = scalar_lea.vmem %s0, 1675
  %s1975 = smov 192
  %v1976 = vld [vmem:[%s1974] ss:$16 sm:%s1975]
  %vm1977 = vcmask 1047558
  %v1978 = vsel %vm1977, %v1976, %v1973
  %1979 = vrot.lane.b32.xlu0 %v1978, 88
  %v1980 = vpop.permute.xlu0 %1979
  %vm1981 = vcmask 786112
  %s1982 = scalar_lea.vmem %s1, 104
  %1983 = vst.msk [vmem:[%s1982] sm:$0xff] %vm1981, %v1980
  %s1984 = scalar_lea.vmem %s0, 267
  %s1985 = smov 3
  %v1986 = vld [vmem:[%s1984] ss:$16 sm:%s1985]
  %s1987 = scalar_lea.vmem %s0, 267
  %s1988 = smov 12
  %v1989 = vld [vmem:[%s1987] ss:$16 sm:%s1988]
  %vm1990 = vcmask 1043458
  %v1991 = vsel %vm1990, %v1989, %v1986
  %s1992 = scalar_lea.vmem %s0, 267
  %s1993 = smov 48
  %v1994 = vld [vmem:[%s1992] ss:$16 sm:%s1993]
  %vm1995 = vcmask 1045508
  %v1996 = vsel %vm1995, %v1994, %v1991
  %s1997 = scalar_lea.vmem %s0, 267
  %s1998 = smov 192
  %v1999 = vld [vmem:[%s1997] ss:$16 sm:%s1998]
  %vm2000 = vcmask 1047558
  %v2001 = vsel %vm2000, %v1999, %v1996
  %2002 = vrot.lane.b32.xlu0 %v2001, 88
  %v2003 = vpop.permute.xlu0 %2002
  %vm2004 = vcmask 786112
  %s2005 = scalar_lea.vmem %s1, 16
  %2006 = vst.msk [vmem:[%s2005] sm:$0xff] %vm2004, %v2003
  %s2007 = scalar_lea.vmem %s0, 779
  %s2008 = smov 3
  %v2009 = vld [vmem:[%s2007] ss:$16 sm:%s2008]
  %s2010 = scalar_lea.vmem %s0, 779
  %s2011 = smov 12
  %v2012 = vld [vmem:[%s2010] ss:$16 sm:%s2011]
  %vm2013 = vcmask 1043458
  %v2014 = vsel %vm2013, %v2012, %v2009
  %s2015 = scalar_lea.vmem %s0, 779
  %s2016 = smov 48
  %v2017 = vld [vmem:[%s2015] ss:$16 sm:%s2016]
  %vm2018 = vcmask 1045508
  %v2019 = vsel %vm2018, %v2017, %v2014
  %s2020 = scalar_lea.vmem %s0, 779
  %s2021 = smov 192
  %v2022 = vld [vmem:[%s2020] ss:$16 sm:%s2021]
  %vm2023 = vcmask 1047558
  %v2024 = vsel %vm2023, %v2022, %v2019
  %2025 = vrot.lane.b32.xlu0 %v2024, 88
  %v2026 = vpop.permute.xlu0 %2025
  %vm2027 = vcmask 786112
  %s2028 = scalar_lea.vmem %s1, 48
  %2029 = vst.msk [vmem:[%s2028] sm:$0xff] %vm2027, %v2026
  %s2030 = scalar_lea.vmem %s0, 1291
  %s2031 = smov 3
  %v2032 = vld [vmem:[%s2030] ss:$16 sm:%s2031]
  %s2033 = scalar_lea.vmem %s0, 1291
  %s2034 = smov 12
  %v2035 = vld [vmem:[%s2033] ss:$16 sm:%s2034]
  %vm2036 = vcmask 1043458
  %v2037 = vsel %vm2036, %v2035, %v2032
  %s2038 = scalar_lea.vmem %s0, 1291
  %s2039 = smov 48
  %v2040 = vld [vmem:[%s2038] ss:$16 sm:%s2039]
  %vm2041 = vcmask 1045508
  %v2042 = vsel %vm2041, %v2040, %v2037
  %s2043 = scalar_lea.vmem %s0, 1291
  %s2044 = smov 192
  %v2045 = vld [vmem:[%s2043] ss:$16 sm:%s2044]
  %vm2046 = vcmask 1047558
  %v2047 = vsel %vm2046, %v2045, %v2042
  %2048 = vrot.lane.b32.xlu0 %v2047, 88
  %v2049 = vpop.permute.xlu0 %2048
  %vm2050 = vcmask 786112
  %s2051 = scalar_lea.vmem %s1, 80
  %2052 = vst.msk [vmem:[%s2051] sm:$0xff] %vm2050, %v2049
  %s2053 = scalar_lea.vmem %s0, 1803
  %s2054 = smov 3
  %v2055 = vld [vmem:[%s2053] ss:$16 sm:%s2054]
  %s2056 = scalar_lea.vmem %s0, 1803
  %s2057 = smov 12
  %v2058 = vld [vmem:[%s2056] ss:$16 sm:%s2057]
  %vm2059 = vcmask 1043458
  %v2060 = vsel %vm2059, %v2058, %v2055
  %s2061 = scalar_lea.vmem %s0, 1803
  %s2062 = smov 48
  %v2063 = vld [vmem:[%s2061] ss:$16 sm:%s2062]
  %vm2064 = vcmask 1045508
  %v2065 = vsel %vm2064, %v2063, %v2060
  %s2066 = scalar_lea.vmem %s0, 1803
  %s2067 = smov 192
  %v2068 = vld [vmem:[%s2066] ss:$16 sm:%s2067]
  %vm2069 = vcmask 1047558
  %v2070 = vsel %vm2069, %v2068, %v2065
  %2071 = vrot.lane.b32.xlu0 %v2070, 88
  %v2072 = vpop.permute.xlu0 %2071
  %vm2073 = vcmask 786112
  %s2074 = scalar_lea.vmem %s1, 112
  %2075 = vst.msk [vmem:[%s2074] sm:$0xff] %vm2073, %v2072
  %s2076 = scalar_lea.vmem %s0, 395
  %s2077 = smov 3
  %v2078 = vld [vmem:[%s2076] ss:$16 sm:%s2077]
  %s2079 = scalar_lea.vmem %s0, 395
  %s2080 = smov 12
  %v2081 = vld [vmem:[%s2079] ss:$16 sm:%s2080]
  %vm2082 = vcmask 1043458
  %v2083 = vsel %vm2082, %v2081, %v2078
  %s2084 = scalar_lea.vmem %s0, 395
  %s2085 = smov 48
  %v2086 = vld [vmem:[%s2084] ss:$16 sm:%s2085]
  %vm2087 = vcmask 1045508
  %v2088 = vsel %vm2087, %v2086, %v2083
  %s2089 = scalar_lea.vmem %s0, 395
  %s2090 = smov 192
  %v2091 = vld [vmem:[%s2089] ss:$16 sm:%s2090]
  %vm2092 = vcmask 1047558
  %v2093 = vsel %vm2092, %v2091, %v2088
  %2094 = vrot.lane.b32.xlu0 %v2093, 88
  %v2095 = vpop.permute.xlu0 %2094
  %vm2096 = vcmask 786112
  %s2097 = scalar_lea.vmem %s1, 24
  %2098 = vst.msk [vmem:[%s2097] sm:$0xff] %vm2096, %v2095
  %s2099 = scalar_lea.vmem %s0, 907
  %s2100 = smov 3
  %v2101 = vld [vmem:[%s2099] ss:$16 sm:%s2100]
  %s2102 = scalar_lea.vmem %s0, 907
  %s2103 = smov 12
  %v2104 = vld [vmem:[%s2102] ss:$16 sm:%s2103]
  %vm2105 = vcmask 1043458
  %v2106 = vsel %vm2105, %v2104, %v2101
  %s2107 = scalar_lea.vmem %s0, 907
  %s2108 = smov 48
  %v2109 = vld [vmem:[%s2107] ss:$16 sm:%s2108]
  %vm2110 = vcmask 1045508
  %v2111 = vsel %vm2110, %v2109, %v2106
  %s2112 = scalar_lea.vmem %s0, 907
  %s2113 = smov 192
  %v2114 = vld [vmem:[%s2112] ss:$16 sm:%s2113]
  %vm2115 = vcmask 1047558
  %v2116 = vsel %vm2115, %v2114, %v2111
  %2117 = vrot.lane.b32.xlu0 %v2116, 88
  %v2118 = vpop.permute.xlu0 %2117
  %vm2119 = vcmask 786112
  %s2120 = scalar_lea.vmem %s1, 56
  %2121 = vst.msk [vmem:[%s2120] sm:$0xff] %vm2119, %v2118
  %s2122 = scalar_lea.vmem %s0, 1419
  %s2123 = smov 3
  %v2124 = vld [vmem:[%s2122] ss:$16 sm:%s2123]
  %s2125 = scalar_lea.vmem %s0, 1419
  %s2126 = smov 12
  %v2127 = vld [vmem:[%s2125] ss:$16 sm:%s2126]
  %vm2128 = vcmask 1043458
  %v2129 = vsel %vm2128, %v2127, %v2124
  %s2130 = scalar_lea.vmem %s0, 1419
  %s2131 = smov 48
  %v2132 = vld [vmem:[%s2130] ss:$16 sm:%s2131]
  %vm2133 = vcmask 1045508
  %v2134 = vsel %vm2133, %v2132, %v2129
  %s2135 = scalar_lea.vmem %s0, 1419
  %s2136 = smov 192
  %v2137 = vld [vmem:[%s2135] ss:$16 sm:%s2136]
  %vm2138 = vcmask 1047558
  %v2139 = vsel %vm2138, %v2137, %v2134
  %2140 = vrot.lane.b32.xlu0 %v2139, 88
  %v2141 = vpop.permute.xlu0 %2140
  %vm2142 = vcmask 786112
  %s2143 = scalar_lea.vmem %s1, 88
  %2144 = vst.msk [vmem:[%s2143] sm:$0xff] %vm2142, %v2141
  %s2145 = scalar_lea.vmem %s0, 1931
  %s2146 = smov 3
  %v2147 = vld [vmem:[%s2145] ss:$16 sm:%s2146]
  %s2148 = scalar_lea.vmem %s0, 1931
  %s2149 = smov 12
  %v2150 = vld [vmem:[%s2148] ss:$16 sm:%s2149]
  %vm2151 = vcmask 1043458
  %v2152 = vsel %vm2151, %v2150, %v2147
  %s2153 = scalar_lea.vmem %s0, 1931
  %s2154 = smov 48
  %v2155 = vld [vmem:[%s2153] ss:$16 sm:%s2154]
  %vm2156 = vcmask 1045508
  %v2157 = vsel %vm2156, %v2155, %v2152
  %s2158 = scalar_lea.vmem %s0, 1931
  %s2159 = smov 192
  %v2160 = vld [vmem:[%s2158] ss:$16 sm:%s2159]
  %vm2161 = vcmask 1047558
  %v2162 = vsel %vm2161, %v2160, %v2157
  %2163 = vrot.lane.b32.xlu0 %v2162, 88
  %v2164 = vpop.permute.xlu0 %2163
  %vm2165 = vcmask 786112
  %s2166 = scalar_lea.vmem %s1, 120
  %2167 = vst.msk [vmem:[%s2166] sm:$0xff] %vm2165, %v2164
  %s2168 = scalar_lea.vmem %s0, 10
  %s2169 = smov 3
  %v2170 = vld [vmem:[%s2168] ss:$16 sm:%s2169]
  %s2171 = scalar_lea.vmem %s0, 10
  %s2172 = smov 12
  %v2173 = vld [vmem:[%s2171] ss:$16 sm:%s2172]
  %vm2174 = vcmask 1043458
  %v2175 = vsel %vm2174, %v2173, %v2170
  %s2176 = scalar_lea.vmem %s0, 10
  %s2177 = smov 48
  %v2178 = vld [vmem:[%s2176] ss:$16 sm:%s2177]
  %vm2179 = vcmask 1045508
  %v2180 = vsel %vm2179, %v2178, %v2175
  %s2181 = scalar_lea.vmem %s0, 10
  %s2182 = smov 192
  %v2183 = vld [vmem:[%s2181] ss:$16 sm:%s2182]
  %vm2184 = vcmask 1047558
  %v2185 = vsel %vm2184, %v2183, %v2180
  %2186 = vrot.lane.b32.xlu0 %v2185, 80
  %v2187 = vpop.permute.xlu0 %2186
  %vm2188 = vcmask 720512
  %2189 = vst.msk [vmem:[%s1] sm:$0xff] %vm2188, %v2187
  %s2190 = scalar_lea.vmem %s0, 522
  %s2191 = smov 3
  %v2192 = vld [vmem:[%s2190] ss:$16 sm:%s2191]
  %s2193 = scalar_lea.vmem %s0, 522
  %s2194 = smov 12
  %v2195 = vld [vmem:[%s2193] ss:$16 sm:%s2194]
  %vm2196 = vcmask 1043458
  %v2197 = vsel %vm2196, %v2195, %v2192
  %s2198 = scalar_lea.vmem %s0, 522
  %s2199 = smov 48
  %v2200 = vld [vmem:[%s2198] ss:$16 sm:%s2199]
  %vm2201 = vcmask 1045508
  %v2202 = vsel %vm2201, %v2200, %v2197
  %s2203 = scalar_lea.vmem %s0, 522
  %s2204 = smov 192
  %v2205 = vld [vmem:[%s2203] ss:$16 sm:%s2204]
  %vm2206 = vcmask 1047558
  %v2207 = vsel %vm2206, %v2205, %v2202
  %2208 = vrot.lane.b32.xlu0 %v2207, 80
  %v2209 = vpop.permute.xlu0 %2208
  %vm2210 = vcmask 720512
  %s2211 = scalar_lea.vmem %s1, 32
  %2212 = vst.msk [vmem:[%s2211] sm:$0xff] %vm2210, %v2209
  %s2213 = scalar_lea.vmem %s0, 1034
  %s2214 = smov 3
  %v2215 = vld [vmem:[%s2213] ss:$16 sm:%s2214]
  %s2216 = scalar_lea.vmem %s0, 1034
  %s2217 = smov 12
  %v2218 = vld [vmem:[%s2216] ss:$16 sm:%s2217]
  %vm2219 = vcmask 1043458
  %v2220 = vsel %vm2219, %v2218, %v2215
  %s2221 = scalar_lea.vmem %s0, 1034
  %s2222 = smov 48
  %v2223 = vld [vmem:[%s2221] ss:$16 sm:%s2222]
  %vm2224 = vcmask 1045508
  %v2225 = vsel %vm2224, %v2223, %v2220
  %s2226 = scalar_lea.vmem %s0, 1034
  %s2227 = smov 192
  %v2228 = vld [vmem:[%s2226] ss:$16 sm:%s2227]
  %vm2229 = vcmask 1047558
  %v2230 = vsel %vm2229, %v2228, %v2225
  %2231 = vrot.lane.b32.xlu0 %v2230, 80
  %v2232 = vpop.permute.xlu0 %2231
  %vm2233 = vcmask 720512
  %s2234 = scalar_lea.vmem %s1, 64
  %2235 = vst.msk [vmem:[%s2234] sm:$0xff] %vm2233, %v2232
  %s2236 = scalar_lea.vmem %s0, 1546
  %s2237 = smov 3
  %v2238 = vld [vmem:[%s2236] ss:$16 sm:%s2237]
  %s2239 = scalar_lea.vmem %s0, 1546
  %s2240 = smov 12
  %v2241 = vld [vmem:[%s2239] ss:$16 sm:%s2240]
  %vm2242 = vcmask 1043458
  %v2243 = vsel %vm2242, %v2241, %v2238
  %s2244 = scalar_lea.vmem %s0, 1546
  %s2245 = smov 48
  %v2246 = vld [vmem:[%s2244] ss:$16 sm:%s2245]
  %vm2247 = vcmask 1045508
  %v2248 = vsel %vm2247, %v2246, %v2243
  %s2249 = scalar_lea.vmem %s0, 1546
  %s2250 = smov 192
  %v2251 = vld [vmem:[%s2249] ss:$16 sm:%s2250]
  %vm2252 = vcmask 1047558
  %v2253 = vsel %vm2252, %v2251, %v2248
  %2254 = vrot.lane.b32.xlu0 %v2253, 80
  %v2255 = vpop.permute.xlu0 %2254
  %vm2256 = vcmask 720512
  %s2257 = scalar_lea.vmem %s1, 96
  %2258 = vst.msk [vmem:[%s2257] sm:$0xff] %vm2256, %v2255
  %s2259 = scalar_lea.vmem %s0, 138
  %s2260 = smov 3
  %v2261 = vld [vmem:[%s2259] ss:$16 sm:%s2260]
  %s2262 = scalar_lea.vmem %s0, 138
  %s2263 = smov 12
  %v2264 = vld [vmem:[%s2262] ss:$16 sm:%s2263]
  %vm2265 = vcmask 1043458
  %v2266 = vsel %vm2265, %v2264, %v2261
  %s2267 = scalar_lea.vmem %s0, 138
  %s2268 = smov 48
  %v2269 = vld [vmem:[%s2267] ss:$16 sm:%s2268]
  %vm2270 = vcmask 1045508
  %v2271 = vsel %vm2270, %v2269, %v2266
  %s2272 = scalar_lea.vmem %s0, 138
  %s2273 = smov 192
  %v2274 = vld [vmem:[%s2272] ss:$16 sm:%s2273]
  %vm2275 = vcmask 1047558
  %v2276 = vsel %vm2275, %v2274, %v2271
  %2277 = vrot.lane.b32.xlu0 %v2276, 80
  %v2278 = vpop.permute.xlu0 %2277
  %vm2279 = vcmask 720512
  %s2280 = scalar_lea.vmem %s1, 8
  %2281 = vst.msk [vmem:[%s2280] sm:$0xff] %vm2279, %v2278
  %s2282 = scalar_lea.vmem %s0, 650
  %s2283 = smov 3
  %v2284 = vld [vmem:[%s2282] ss:$16 sm:%s2283]
  %s2285 = scalar_lea.vmem %s0, 650
  %s2286 = smov 12
  %v2287 = vld [vmem:[%s2285] ss:$16 sm:%s2286]
  %vm2288 = vcmask 1043458
  %v2289 = vsel %vm2288, %v2287, %v2284
  %s2290 = scalar_lea.vmem %s0, 650
  %s2291 = smov 48
  %v2292 = vld [vmem:[%s2290] ss:$16 sm:%s2291]
  %vm2293 = vcmask 1045508
  %v2294 = vsel %vm2293, %v2292, %v2289
  %s2295 = scalar_lea.vmem %s0, 650
  %s2296 = smov 192
  %v2297 = vld [vmem:[%s2295] ss:$16 sm:%s2296]
  %vm2298 = vcmask 1047558
  %v2299 = vsel %vm2298, %v2297, %v2294
  %2300 = vrot.lane.b32.xlu0 %v2299, 80
  %v2301 = vpop.permute.xlu0 %2300
  %vm2302 = vcmask 720512
  %s2303 = scalar_lea.vmem %s1, 40
  %2304 = vst.msk [vmem:[%s2303] sm:$0xff] %vm2302, %v2301
  %s2305 = scalar_lea.vmem %s0, 1162
  %s2306 = smov 3
  %v2307 = vld [vmem:[%s2305] ss:$16 sm:%s2306]
  %s2308 = scalar_lea.vmem %s0, 1162
  %s2309 = smov 12
  %v2310 = vld [vmem:[%s2308] ss:$16 sm:%s2309]
  %vm2311 = vcmask 1043458
  %v2312 = vsel %vm2311, %v2310, %v2307
  %s2313 = scalar_lea.vmem %s0, 1162
  %s2314 = smov 48
  %v2315 = vld [vmem:[%s2313] ss:$16 sm:%s2314]
  %vm2316 = vcmask 1045508
  %v2317 = vsel %vm2316, %v2315, %v2312
  %s2318 = scalar_lea.vmem %s0, 1162
  %s2319 = smov 192
  %v2320 = vld [vmem:[%s2318] ss:$16 sm:%s2319]
  %vm2321 = vcmask 1047558
  %v2322 = vsel %vm2321, %v2320, %v2317
  %2323 = vrot.lane.b32.xlu0 %v2322, 80
  %v2324 = vpop.permute.xlu0 %2323
  %vm2325 = vcmask 720512
  %s2326 = scalar_lea.vmem %s1, 72
  %2327 = vst.msk [vmem:[%s2326] sm:$0xff] %vm2325, %v2324
  %s2328 = scalar_lea.vmem %s0, 1674
  %s2329 = smov 3
  %v2330 = vld [vmem:[%s2328] ss:$16 sm:%s2329]
  %s2331 = scalar_lea.vmem %s0, 1674
  %s2332 = smov 12
  %v2333 = vld [vmem:[%s2331] ss:$16 sm:%s2332]
  %vm2334 = vcmask 1043458
  %v2335 = vsel %vm2334, %v2333, %v2330
  %s2336 = scalar_lea.vmem %s0, 1674
  %s2337 = smov 48
  %v2338 = vld [vmem:[%s2336] ss:$16 sm:%s2337]
  %vm2339 = vcmask 1045508
  %v2340 = vsel %vm2339, %v2338, %v2335
  %s2341 = scalar_lea.vmem %s0, 1674
  %s2342 = smov 192
  %v2343 = vld [vmem:[%s2341] ss:$16 sm:%s2342]
  %vm2344 = vcmask 1047558
  %v2345 = vsel %vm2344, %v2343, %v2340
  %2346 = vrot.lane.b32.xlu0 %v2345, 80
  %v2347 = vpop.permute.xlu0 %2346
  %vm2348 = vcmask 720512
  %s2349 = scalar_lea.vmem %s1, 104
  %2350 = vst.msk [vmem:[%s2349] sm:$0xff] %vm2348, %v2347
  %s2351 = scalar_lea.vmem %s0, 266
  %s2352 = smov 3
  %v2353 = vld [vmem:[%s2351] ss:$16 sm:%s2352]
  %s2354 = scalar_lea.vmem %s0, 266
  %s2355 = smov 12
  %v2356 = vld [vmem:[%s2354] ss:$16 sm:%s2355]
  %vm2357 = vcmask 1043458
  %v2358 = vsel %vm2357, %v2356, %v2353
  %s2359 = scalar_lea.vmem %s0, 266
  %s2360 = smov 48
  %v2361 = vld [vmem:[%s2359] ss:$16 sm:%s2360]
  %vm2362 = vcmask 1045508
  %v2363 = vsel %vm2362, %v2361, %v2358
  %s2364 = scalar_lea.vmem %s0, 266
  %s2365 = smov 192
  %v2366 = vld [vmem:[%s2364] ss:$16 sm:%s2365]
  %vm2367 = vcmask 1047558
  %v2368 = vsel %vm2367, %v2366, %v2363
  %2369 = vrot.lane.b32.xlu0 %v2368, 80
  %v2370 = vpop.permute.xlu0 %2369
  %vm2371 = vcmask 720512
  %s2372 = scalar_lea.vmem %s1, 16
  %2373 = vst.msk [vmem:[%s2372] sm:$0xff] %vm2371, %v2370
  %s2374 = scalar_lea.vmem %s0, 778
  %s2375 = smov 3
  %v2376 = vld [vmem:[%s2374] ss:$16 sm:%s2375]
  %s2377 = scalar_lea.vmem %s0, 778
  %s2378 = smov 12
  %v2379 = vld [vmem:[%s2377] ss:$16 sm:%s2378]
  %vm2380 = vcmask 1043458
  %v2381 = vsel %vm2380, %v2379, %v2376
  %s2382 = scalar_lea.vmem %s0, 778
  %s2383 = smov 48
  %v2384 = vld [vmem:[%s2382] ss:$16 sm:%s2383]
  %vm2385 = vcmask 1045508
  %v2386 = vsel %vm2385, %v2384, %v2381
  %s2387 = scalar_lea.vmem %s0, 778
  %s2388 = smov 192
  %v2389 = vld [vmem:[%s2387] ss:$16 sm:%s2388]
  %vm2390 = vcmask 1047558
  %v2391 = vsel %vm2390, %v2389, %v2386
  %2392 = vrot.lane.b32.xlu0 %v2391, 80
  %v2393 = vpop.permute.xlu0 %2392
  %vm2394 = vcmask 720512
  %s2395 = scalar_lea.vmem %s1, 48
  %2396 = vst.msk [vmem:[%s2395] sm:$0xff] %vm2394, %v2393
  %s2397 = scalar_lea.vmem %s0, 1290
  %s2398 = smov 3
  %v2399 = vld [vmem:[%s2397] ss:$16 sm:%s2398]
  %s2400 = scalar_lea.vmem %s0, 1290
  %s2401 = smov 12
  %v2402 = vld [vmem:[%s2400] ss:$16 sm:%s2401]
  %vm2403 = vcmask 1043458
  %v2404 = vsel %vm2403, %v2402, %v2399
  %s2405 = scalar_lea.vmem %s0, 1290
  %s2406 = smov 48
  %v2407 = vld [vmem:[%s2405] ss:$16 sm:%s2406]
  %vm2408 = vcmask 1045508
  %v2409 = vsel %vm2408, %v2407, %v2404
  %s2410 = scalar_lea.vmem %s0, 1290
  %s2411 = smov 192
  %v2412 = vld [vmem:[%s2410] ss:$16 sm:%s2411]
  %vm2413 = vcmask 1047558
  %v2414 = vsel %vm2413, %v2412, %v2409
  %2415 = vrot.lane.b32.xlu0 %v2414, 80
  %v2416 = vpop.permute.xlu0 %2415
  %vm2417 = vcmask 720512
  %s2418 = scalar_lea.vmem %s1, 80
  %2419 = vst.msk [vmem:[%s2418] sm:$0xff] %vm2417, %v2416
  %s2420 = scalar_lea.vmem %s0, 1802
  %s2421 = smov 3
  %v2422 = vld [vmem:[%s2420] ss:$16 sm:%s2421]
  %s2423 = scalar_lea.vmem %s0, 1802
  %s2424 = smov 12
  %v2425 = vld [vmem:[%s2423] ss:$16 sm:%s2424]
  %vm2426 = vcmask 1043458
  %v2427 = vsel %vm2426, %v2425, %v2422
  %s2428 = scalar_lea.vmem %s0, 1802
  %s2429 = smov 48
  %v2430 = vld [vmem:[%s2428] ss:$16 sm:%s2429]
  %vm2431 = vcmask 1045508
  %v2432 = vsel %vm2431, %v2430, %v2427
  %s2433 = scalar_lea.vmem %s0, 1802
  %s2434 = smov 192
  %v2435 = vld [vmem:[%s2433] ss:$16 sm:%s2434]
  %vm2436 = vcmask 1047558
  %v2437 = vsel %vm2436, %v2435, %v2432
  %2438 = vrot.lane.b32.xlu0 %v2437, 80
  %v2439 = vpop.permute.xlu0 %2438
  %vm2440 = vcmask 720512
  %s2441 = scalar_lea.vmem %s1, 112
  %2442 = vst.msk [vmem:[%s2441] sm:$0xff] %vm2440, %v2439
  %s2443 = scalar_lea.vmem %s0, 394
  %s2444 = smov 3
  %v2445 = vld [vmem:[%s2443] ss:$16 sm:%s2444]
  %s2446 = scalar_lea.vmem %s0, 394
  %s2447 = smov 12
  %v2448 = vld [vmem:[%s2446] ss:$16 sm:%s2447]
  %vm2449 = vcmask 1043458
  %v2450 = vsel %vm2449, %v2448, %v2445
  %s2451 = scalar_lea.vmem %s0, 394
  %s2452 = smov 48
  %v2453 = vld [vmem:[%s2451] ss:$16 sm:%s2452]
  %vm2454 = vcmask 1045508
  %v2455 = vsel %vm2454, %v2453, %v2450
  %s2456 = scalar_lea.vmem %s0, 394
  %s2457 = smov 192
  %v2458 = vld [vmem:[%s2456] ss:$16 sm:%s2457]
  %vm2459 = vcmask 1047558
  %v2460 = vsel %vm2459, %v2458, %v2455
  %2461 = vrot.lane.b32.xlu0 %v2460, 80
  %v2462 = vpop.permute.xlu0 %2461
  %vm2463 = vcmask 720512
  %s2464 = scalar_lea.vmem %s1, 24
  %2465 = vst.msk [vmem:[%s2464] sm:$0xff] %vm2463, %v2462
  %s2466 = scalar_lea.vmem %s0, 906
  %s2467 = smov 3
  %v2468 = vld [vmem:[%s2466] ss:$16 sm:%s2467]
  %s2469 = scalar_lea.vmem %s0, 906
  %s2470 = smov 12
  %v2471 = vld [vmem:[%s2469] ss:$16 sm:%s2470]
  %vm2472 = vcmask 1043458
  %v2473 = vsel %vm2472, %v2471, %v2468
  %s2474 = scalar_lea.vmem %s0, 906
  %s2475 = smov 48
  %v2476 = vld [vmem:[%s2474] ss:$16 sm:%s2475]
  %vm2477 = vcmask 1045508
  %v2478 = vsel %vm2477, %v2476, %v2473
  %s2479 = scalar_lea.vmem %s0, 906
  %s2480 = smov 192
  %v2481 = vld [vmem:[%s2479] ss:$16 sm:%s2480]
  %vm2482 = vcmask 1047558
  %v2483 = vsel %vm2482, %v2481, %v2478
  %2484 = vrot.lane.b32.xlu0 %v2483, 80
  %v2485 = vpop.permute.xlu0 %2484
  %vm2486 = vcmask 720512
  %s2487 = scalar_lea.vmem %s1, 56
  %2488 = vst.msk [vmem:[%s2487] sm:$0xff] %vm2486, %v2485
  %s2489 = scalar_lea.vmem %s0, 1418
  %s2490 = smov 3
  %v2491 = vld [vmem:[%s2489] ss:$16 sm:%s2490]
  %s2492 = scalar_lea.vmem %s0, 1418
  %s2493 = smov 12
  %v2494 = vld [vmem:[%s2492] ss:$16 sm:%s2493]
  %vm2495 = vcmask 1043458
  %v2496 = vsel %vm2495, %v2494, %v2491
  %s2497 = scalar_lea.vmem %s0, 1418
  %s2498 = smov 48
  %v2499 = vld [vmem:[%s2497] ss:$16 sm:%s2498]
  %vm2500 = vcmask 1045508
  %v2501 = vsel %vm2500, %v2499, %v2496
  %s2502 = scalar_lea.vmem %s0, 1418
  %s2503 = smov 192
  %v2504 = vld [vmem:[%s2502] ss:$16 sm:%s2503]
  %vm2505 = vcmask 1047558
  %v2506 = vsel %vm2505, %v2504, %v2501
  %2507 = vrot.lane.b32.xlu0 %v2506, 80
  %v2508 = vpop.permute.xlu0 %2507
  %vm2509 = vcmask 720512
  %s2510 = scalar_lea.vmem %s1, 88
  %2511 = vst.msk [vmem:[%s2510] sm:$0xff] %vm2509, %v2508
  %s2512 = scalar_lea.vmem %s0, 1930
  %s2513 = smov 3
  %v2514 = vld [vmem:[%s2512] ss:$16 sm:%s2513]
  %s2515 = scalar_lea.vmem %s0, 1930
  %s2516 = smov 12
  %v2517 = vld [vmem:[%s2515] ss:$16 sm:%s2516]
  %vm2518 = vcmask 1043458
  %v2519 = vsel %vm2518, %v2517, %v2514
  %s2520 = scalar_lea.vmem %s0, 1930
  %s2521 = smov 48
  %v2522 = vld [vmem:[%s2520] ss:$16 sm:%s2521]
  %vm2523 = vcmask 1045508
  %v2524 = vsel %vm2523, %v2522, %v2519
  %s2525 = scalar_lea.vmem %s0, 1930
  %s2526 = smov 192
  %v2527 = vld [vmem:[%s2525] ss:$16 sm:%s2526]
  %vm2528 = vcmask 1047558
  %v2529 = vsel %vm2528, %v2527, %v2524
  %2530 = vrot.lane.b32.xlu0 %v2529, 80
  %v2531 = vpop.permute.xlu0 %2530
  %vm2532 = vcmask 720512
  %s2533 = scalar_lea.vmem %s1, 120
  %2534 = vst.msk [vmem:[%s2533] sm:$0xff] %vm2532, %v2531
  %s2535 = scalar_lea.vmem %s0, 9
  %s2536 = smov 3
  %v2537 = vld [vmem:[%s2535] ss:$16 sm:%s2536]
  %s2538 = scalar_lea.vmem %s0, 9
  %s2539 = smov 12
  %v2540 = vld [vmem:[%s2538] ss:$16 sm:%s2539]
  %vm2541 = vcmask 1043458
  %v2542 = vsel %vm2541, %v2540, %v2537
  %s2543 = scalar_lea.vmem %s0, 9
  %s2544 = smov 48
  %v2545 = vld [vmem:[%s2543] ss:$16 sm:%s2544]
  %vm2546 = vcmask 1045508
  %v2547 = vsel %vm2546, %v2545, %v2542
  %s2548 = scalar_lea.vmem %s0, 9
  %s2549 = smov 192
  %v2550 = vld [vmem:[%s2548] ss:$16 sm:%s2549]
  %vm2551 = vcmask 1047558
  %v2552 = vsel %vm2551, %v2550, %v2547
  %2553 = vrot.lane.b32.xlu0 %v2552, 72
  %v2554 = vpop.permute.xlu0 %2553
  %vm2555 = vcmask 654912
  %2556 = vst.msk [vmem:[%s1] sm:$0xff] %vm2555, %v2554
  %s2557 = scalar_lea.vmem %s0, 521
  %s2558 = smov 3
  %v2559 = vld [vmem:[%s2557] ss:$16 sm:%s2558]
  %s2560 = scalar_lea.vmem %s0, 521
  %s2561 = smov 12
  %v2562 = vld [vmem:[%s2560] ss:$16 sm:%s2561]
  %vm2563 = vcmask 1043458
  %v2564 = vsel %vm2563, %v2562, %v2559
  %s2565 = scalar_lea.vmem %s0, 521
  %s2566 = smov 48
  %v2567 = vld [vmem:[%s2565] ss:$16 sm:%s2566]
  %vm2568 = vcmask 1045508
  %v2569 = vsel %vm2568, %v2567, %v2564
  %s2570 = scalar_lea.vmem %s0, 521
  %s2571 = smov 192
  %v2572 = vld [vmem:[%s2570] ss:$16 sm:%s2571]
  %vm2573 = vcmask 1047558
  %v2574 = vsel %vm2573, %v2572, %v2569
  %2575 = vrot.lane.b32.xlu0 %v2574, 72
  %v2576 = vpop.permute.xlu0 %2575
  %vm2577 = vcmask 654912
  %s2578 = scalar_lea.vmem %s1, 32
  %2579 = vst.msk [vmem:[%s2578] sm:$0xff] %vm2577, %v2576
  %s2580 = scalar_lea.vmem %s0, 1033
  %s2581 = smov 3
  %v2582 = vld [vmem:[%s2580] ss:$16 sm:%s2581]
  %s2583 = scalar_lea.vmem %s0, 1033
  %s2584 = smov 12
  %v2585 = vld [vmem:[%s2583] ss:$16 sm:%s2584]
  %vm2586 = vcmask 1043458
  %v2587 = vsel %vm2586, %v2585, %v2582
  %s2588 = scalar_lea.vmem %s0, 1033
  %s2589 = smov 48
  %v2590 = vld [vmem:[%s2588] ss:$16 sm:%s2589]
  %vm2591 = vcmask 1045508
  %v2592 = vsel %vm2591, %v2590, %v2587
  %s2593 = scalar_lea.vmem %s0, 1033
  %s2594 = smov 192
  %v2595 = vld [vmem:[%s2593] ss:$16 sm:%s2594]
  %vm2596 = vcmask 1047558
  %v2597 = vsel %vm2596, %v2595, %v2592
  %2598 = vrot.lane.b32.xlu0 %v2597, 72
  %v2599 = vpop.permute.xlu0 %2598
  %vm2600 = vcmask 654912
  %s2601 = scalar_lea.vmem %s1, 64
  %2602 = vst.msk [vmem:[%s2601] sm:$0xff] %vm2600, %v2599
  %s2603 = scalar_lea.vmem %s0, 1545
  %s2604 = smov 3
  %v2605 = vld [vmem:[%s2603] ss:$16 sm:%s2604]
  %s2606 = scalar_lea.vmem %s0, 1545
  %s2607 = smov 12
  %v2608 = vld [vmem:[%s2606] ss:$16 sm:%s2607]
  %vm2609 = vcmask 1043458
  %v2610 = vsel %vm2609, %v2608, %v2605
  %s2611 = scalar_lea.vmem %s0, 1545
  %s2612 = smov 48
  %v2613 = vld [vmem:[%s2611] ss:$16 sm:%s2612]
  %vm2614 = vcmask 1045508
  %v2615 = vsel %vm2614, %v2613, %v2610
  %s2616 = scalar_lea.vmem %s0, 1545
  %s2617 = smov 192
  %v2618 = vld [vmem:[%s2616] ss:$16 sm:%s2617]
  %vm2619 = vcmask 1047558
  %v2620 = vsel %vm2619, %v2618, %v2615
  %2621 = vrot.lane.b32.xlu0 %v2620, 72
  %v2622 = vpop.permute.xlu0 %2621
  %vm2623 = vcmask 654912
  %s2624 = scalar_lea.vmem %s1, 96
  %2625 = vst.msk [vmem:[%s2624] sm:$0xff] %vm2623, %v2622
  %s2626 = scalar_lea.vmem %s0, 137
  %s2627 = smov 3
  %v2628 = vld [vmem:[%s2626] ss:$16 sm:%s2627]
  %s2629 = scalar_lea.vmem %s0, 137
  %s2630 = smov 12
  %v2631 = vld [vmem:[%s2629] ss:$16 sm:%s2630]
  %vm2632 = vcmask 1043458
  %v2633 = vsel %vm2632, %v2631, %v2628
  %s2634 = scalar_lea.vmem %s0, 137
  %s2635 = smov 48
  %v2636 = vld [vmem:[%s2634] ss:$16 sm:%s2635]
  %vm2637 = vcmask 1045508
  %v2638 = vsel %vm2637, %v2636, %v2633
  %s2639 = scalar_lea.vmem %s0, 137
  %s2640 = smov 192
  %v2641 = vld [vmem:[%s2639] ss:$16 sm:%s2640]
  %vm2642 = vcmask 1047558
  %v2643 = vsel %vm2642, %v2641, %v2638
  %2644 = vrot.lane.b32.xlu0 %v2643, 72
  %v2645 = vpop.permute.xlu0 %2644
  %vm2646 = vcmask 654912
  %s2647 = scalar_lea.vmem %s1, 8
  %2648 = vst.msk [vmem:[%s2647] sm:$0xff] %vm2646, %v2645
  %s2649 = scalar_lea.vmem %s0, 649
  %s2650 = smov 3
  %v2651 = vld [vmem:[%s2649] ss:$16 sm:%s2650]
  %s2652 = scalar_lea.vmem %s0, 649
  %s2653 = smov 12
  %v2654 = vld [vmem:[%s2652] ss:$16 sm:%s2653]
  %vm2655 = vcmask 1043458
  %v2656 = vsel %vm2655, %v2654, %v2651
  %s2657 = scalar_lea.vmem %s0, 649
  %s2658 = smov 48
  %v2659 = vld [vmem:[%s2657] ss:$16 sm:%s2658]
  %vm2660 = vcmask 1045508
  %v2661 = vsel %vm2660, %v2659, %v2656
  %s2662 = scalar_lea.vmem %s0, 649
  %s2663 = smov 192
  %v2664 = vld [vmem:[%s2662] ss:$16 sm:%s2663]
  %vm2665 = vcmask 1047558
  %v2666 = vsel %vm2665, %v2664, %v2661
  %2667 = vrot.lane.b32.xlu0 %v2666, 72
  %v2668 = vpop.permute.xlu0 %2667
  %vm2669 = vcmask 654912
  %s2670 = scalar_lea.vmem %s1, 40
  %2671 = vst.msk [vmem:[%s2670] sm:$0xff] %vm2669, %v2668
  %s2672 = scalar_lea.vmem %s0, 1161
  %s2673 = smov 3
  %v2674 = vld [vmem:[%s2672] ss:$16 sm:%s2673]
  %s2675 = scalar_lea.vmem %s0, 1161
  %s2676 = smov 12
  %v2677 = vld [vmem:[%s2675] ss:$16 sm:%s2676]
  %vm2678 = vcmask 1043458
  %v2679 = vsel %vm2678, %v2677, %v2674
  %s2680 = scalar_lea.vmem %s0, 1161
  %s2681 = smov 48
  %v2682 = vld [vmem:[%s2680] ss:$16 sm:%s2681]
  %vm2683 = vcmask 1045508
  %v2684 = vsel %vm2683, %v2682, %v2679
  %s2685 = scalar_lea.vmem %s0, 1161
  %s2686 = smov 192
  %v2687 = vld [vmem:[%s2685] ss:$16 sm:%s2686]
  %vm2688 = vcmask 1047558
  %v2689 = vsel %vm2688, %v2687, %v2684
  %2690 = vrot.lane.b32.xlu0 %v2689, 72
  %v2691 = vpop.permute.xlu0 %2690
  %vm2692 = vcmask 654912
  %s2693 = scalar_lea.vmem %s1, 72
  %2694 = vst.msk [vmem:[%s2693] sm:$0xff] %vm2692, %v2691
  %s2695 = scalar_lea.vmem %s0, 1673
  %s2696 = smov 3
  %v2697 = vld [vmem:[%s2695] ss:$16 sm:%s2696]
  %s2698 = scalar_lea.vmem %s0, 1673
  %s2699 = smov 12
  %v2700 = vld [vmem:[%s2698] ss:$16 sm:%s2699]
  %vm2701 = vcmask 1043458
  %v2702 = vsel %vm2701, %v2700, %v2697
  %s2703 = scalar_lea.vmem %s0, 1673
  %s2704 = smov 48
  %v2705 = vld [vmem:[%s2703] ss:$16 sm:%s2704]
  %vm2706 = vcmask 1045508
  %v2707 = vsel %vm2706, %v2705, %v2702
  %s2708 = scalar_lea.vmem %s0, 1673
  %s2709 = smov 192
  %v2710 = vld [vmem:[%s2708] ss:$16 sm:%s2709]
  %vm2711 = vcmask 1047558
  %v2712 = vsel %vm2711, %v2710, %v2707
  %2713 = vrot.lane.b32.xlu0 %v2712, 72
  %v2714 = vpop.permute.xlu0 %2713
  %vm2715 = vcmask 654912
  %s2716 = scalar_lea.vmem %s1, 104
  %2717 = vst.msk [vmem:[%s2716] sm:$0xff] %vm2715, %v2714
  %s2718 = scalar_lea.vmem %s0, 265
  %s2719 = smov 3
  %v2720 = vld [vmem:[%s2718] ss:$16 sm:%s2719]
  %s2721 = scalar_lea.vmem %s0, 265
  %s2722 = smov 12
  %v2723 = vld [vmem:[%s2721] ss:$16 sm:%s2722]
  %vm2724 = vcmask 1043458
  %v2725 = vsel %vm2724, %v2723, %v2720
  %s2726 = scalar_lea.vmem %s0, 265
  %s2727 = smov 48
  %v2728 = vld [vmem:[%s2726] ss:$16 sm:%s2727]
  %vm2729 = vcmask 1045508
  %v2730 = vsel %vm2729, %v2728, %v2725
  %s2731 = scalar_lea.vmem %s0, 265
  %s2732 = smov 192
  %v2733 = vld [vmem:[%s2731] ss:$16 sm:%s2732]
  %vm2734 = vcmask 1047558
  %v2735 = vsel %vm2734, %v2733, %v2730
  %2736 = vrot.lane.b32.xlu0 %v2735, 72
  %v2737 = vpop.permute.xlu0 %2736
  %vm2738 = vcmask 654912
  %s2739 = scalar_lea.vmem %s1, 16
  %2740 = vst.msk [vmem:[%s2739] sm:$0xff] %vm2738, %v2737
  %s2741 = scalar_lea.vmem %s0, 777
  %s2742 = smov 3
  %v2743 = vld [vmem:[%s2741] ss:$16 sm:%s2742]
  %s2744 = scalar_lea.vmem %s0, 777
  %s2745 = smov 12
  %v2746 = vld [vmem:[%s2744] ss:$16 sm:%s2745]
  %vm2747 = vcmask 1043458
  %v2748 = vsel %vm2747, %v2746, %v2743
  %s2749 = scalar_lea.vmem %s0, 777
  %s2750 = smov 48
  %v2751 = vld [vmem:[%s2749] ss:$16 sm:%s2750]
  %vm2752 = vcmask 1045508
  %v2753 = vsel %vm2752, %v2751, %v2748
  %s2754 = scalar_lea.vmem %s0, 777
  %s2755 = smov 192
  %v2756 = vld [vmem:[%s2754] ss:$16 sm:%s2755]
  %vm2757 = vcmask 1047558
  %v2758 = vsel %vm2757, %v2756, %v2753
  %2759 = vrot.lane.b32.xlu0 %v2758, 72
  %v2760 = vpop.permute.xlu0 %2759
  %vm2761 = vcmask 654912
  %s2762 = scalar_lea.vmem %s1, 48
  %2763 = vst.msk [vmem:[%s2762] sm:$0xff] %vm2761, %v2760
  %s2764 = scalar_lea.vmem %s0, 1289
  %s2765 = smov 3
  %v2766 = vld [vmem:[%s2764] ss:$16 sm:%s2765]
  %s2767 = scalar_lea.vmem %s0, 1289
  %s2768 = smov 12
  %v2769 = vld [vmem:[%s2767] ss:$16 sm:%s2768]
  %vm2770 = vcmask 1043458
  %v2771 = vsel %vm2770, %v2769, %v2766
  %s2772 = scalar_lea.vmem %s0, 1289
  %s2773 = smov 48
  %v2774 = vld [vmem:[%s2772] ss:$16 sm:%s2773]
  %vm2775 = vcmask 1045508
  %v2776 = vsel %vm2775, %v2774, %v2771
  %s2777 = scalar_lea.vmem %s0, 1289
  %s2778 = smov 192
  %v2779 = vld [vmem:[%s2777] ss:$16 sm:%s2778]
  %vm2780 = vcmask 1047558
  %v2781 = vsel %vm2780, %v2779, %v2776
  %2782 = vrot.lane.b32.xlu0 %v2781, 72
  %v2783 = vpop.permute.xlu0 %2782
  %vm2784 = vcmask 654912
  %s2785 = scalar_lea.vmem %s1, 80
  %2786 = vst.msk [vmem:[%s2785] sm:$0xff] %vm2784, %v2783
  %s2787 = scalar_lea.vmem %s0, 1801
  %s2788 = smov 3
  %v2789 = vld [vmem:[%s2787] ss:$16 sm:%s2788]
  %s2790 = scalar_lea.vmem %s0, 1801
  %s2791 = smov 12
  %v2792 = vld [vmem:[%s2790] ss:$16 sm:%s2791]
  %vm2793 = vcmask 1043458
  %v2794 = vsel %vm2793, %v2792, %v2789
  %s2795 = scalar_lea.vmem %s0, 1801
  %s2796 = smov 48
  %v2797 = vld [vmem:[%s2795] ss:$16 sm:%s2796]
  %vm2798 = vcmask 1045508
  %v2799 = vsel %vm2798, %v2797, %v2794
  %s2800 = scalar_lea.vmem %s0, 1801
  %s2801 = smov 192
  %v2802 = vld [vmem:[%s2800] ss:$16 sm:%s2801]
  %vm2803 = vcmask 1047558
  %v2804 = vsel %vm2803, %v2802, %v2799
  %2805 = vrot.lane.b32.xlu0 %v2804, 72
  %v2806 = vpop.permute.xlu0 %2805
  %vm2807 = vcmask 654912
  %s2808 = scalar_lea.vmem %s1, 112
  %2809 = vst.msk [vmem:[%s2808] sm:$0xff] %vm2807, %v2806
  %s2810 = scalar_lea.vmem %s0, 393
  %s2811 = smov 3
  %v2812 = vld [vmem:[%s2810] ss:$16 sm:%s2811]
  %s2813 = scalar_lea.vmem %s0, 393
  %s2814 = smov 12
  %v2815 = vld [vmem:[%s2813] ss:$16 sm:%s2814]
  %vm2816 = vcmask 1043458
  %v2817 = vsel %vm2816, %v2815, %v2812
  %s2818 = scalar_lea.vmem %s0, 393
  %s2819 = smov 48
  %v2820 = vld [vmem:[%s2818] ss:$16 sm:%s2819]
  %vm2821 = vcmask 1045508
  %v2822 = vsel %vm2821, %v2820, %v2817
  %s2823 = scalar_lea.vmem %s0, 393
  %s2824 = smov 192
  %v2825 = vld [vmem:[%s2823] ss:$16 sm:%s2824]
  %vm2826 = vcmask 1047558
  %v2827 = vsel %vm2826, %v2825, %v2822
  %2828 = vrot.lane.b32.xlu0 %v2827, 72
  %v2829 = vpop.permute.xlu0 %2828
  %vm2830 = vcmask 654912
  %s2831 = scalar_lea.vmem %s1, 24
  %2832 = vst.msk [vmem:[%s2831] sm:$0xff] %vm2830, %v2829
  %s2833 = scalar_lea.vmem %s0, 905
  %s2834 = smov 3
  %v2835 = vld [vmem:[%s2833] ss:$16 sm:%s2834]
  %s2836 = scalar_lea.vmem %s0, 905
  %s2837 = smov 12
  %v2838 = vld [vmem:[%s2836] ss:$16 sm:%s2837]
  %vm2839 = vcmask 1043458
  %v2840 = vsel %vm2839, %v2838, %v2835
  %s2841 = scalar_lea.vmem %s0, 905
  %s2842 = smov 48
  %v2843 = vld [vmem:[%s2841] ss:$16 sm:%s2842]
  %vm2844 = vcmask 1045508
  %v2845 = vsel %vm2844, %v2843, %v2840
  %s2846 = scalar_lea.vmem %s0, 905
  %s2847 = smov 192
  %v2848 = vld [vmem:[%s2846] ss:$16 sm:%s2847]
  %vm2849 = vcmask 1047558
  %v2850 = vsel %vm2849, %v2848, %v2845
  %2851 = vrot.lane.b32.xlu0 %v2850, 72
  %v2852 = vpop.permute.xlu0 %2851
  %vm2853 = vcmask 654912
  %s2854 = scalar_lea.vmem %s1, 56
  %2855 = vst.msk [vmem:[%s2854] sm:$0xff] %vm2853, %v2852
  %s2856 = scalar_lea.vmem %s0, 1417
  %s2857 = smov 3
  %v2858 = vld [vmem:[%s2856] ss:$16 sm:%s2857]
  %s2859 = scalar_lea.vmem %s0, 1417
  %s2860 = smov 12
  %v2861 = vld [vmem:[%s2859] ss:$16 sm:%s2860]
  %vm2862 = vcmask 1043458
  %v2863 = vsel %vm2862, %v2861, %v2858
  %s2864 = scalar_lea.vmem %s0, 1417
  %s2865 = smov 48
  %v2866 = vld [vmem:[%s2864] ss:$16 sm:%s2865]
  %vm2867 = vcmask 1045508
  %v2868 = vsel %vm2867, %v2866, %v2863
  %s2869 = scalar_lea.vmem %s0, 1417
  %s2870 = smov 192
  %v2871 = vld [vmem:[%s2869] ss:$16 sm:%s2870]
  %vm2872 = vcmask 1047558
  %v2873 = vsel %vm2872, %v2871, %v2868
  %2874 = vrot.lane.b32.xlu0 %v2873, 72
  %v2875 = vpop.permute.xlu0 %2874
  %vm2876 = vcmask 654912
  %s2877 = scalar_lea.vmem %s1, 88
  %2878 = vst.msk [vmem:[%s2877] sm:$0xff] %vm2876, %v2875
  %s2879 = scalar_lea.vmem %s0, 1929
  %s2880 = smov 3
  %v2881 = vld [vmem:[%s2879] ss:$16 sm:%s2880]
  %s2882 = scalar_lea.vmem %s0, 1929
  %s2883 = smov 12
  %v2884 = vld [vmem:[%s2882] ss:$16 sm:%s2883]
  %vm2885 = vcmask 1043458
  %v2886 = vsel %vm2885, %v2884, %v2881
  %s2887 = scalar_lea.vmem %s0, 1929
  %s2888 = smov 48
  %v2889 = vld [vmem:[%s2887] ss:$16 sm:%s2888]
  %vm2890 = vcmask 1045508
  %v2891 = vsel %vm2890, %v2889, %v2886
  %s2892 = scalar_lea.vmem %s0, 1929
  %s2893 = smov 192
  %v2894 = vld [vmem:[%s2892] ss:$16 sm:%s2893]
  %vm2895 = vcmask 1047558
  %v2896 = vsel %vm2895, %v2894, %v2891
  %2897 = vrot.lane.b32.xlu0 %v2896, 72
  %v2898 = vpop.permute.xlu0 %2897
  %vm2899 = vcmask 654912
  %s2900 = scalar_lea.vmem %s1, 120
  %2901 = vst.msk [vmem:[%s2900] sm:$0xff] %vm2899, %v2898
  %s2902 = scalar_lea.vmem %s0, 8
  %s2903 = smov 3
  %v2904 = vld [vmem:[%s2902] ss:$16 sm:%s2903]
  %s2905 = scalar_lea.vmem %s0, 8
  %s2906 = smov 12
  %v2907 = vld [vmem:[%s2905] ss:$16 sm:%s2906]
  %vm2908 = vcmask 1043458
  %v2909 = vsel %vm2908, %v2907, %v2904
  %s2910 = scalar_lea.vmem %s0, 8
  %s2911 = smov 48
  %v2912 = vld [vmem:[%s2910] ss:$16 sm:%s2911]
  %vm2913 = vcmask 1045508
  %v2914 = vsel %vm2913, %v2912, %v2909
  %s2915 = scalar_lea.vmem %s0, 8
  %s2916 = smov 192
  %v2917 = vld [vmem:[%s2915] ss:$16 sm:%s2916]
  %vm2918 = vcmask 1047558
  %v2919 = vsel %vm2918, %v2917, %v2914
  %2920 = vrot.lane.b32.xlu0 %v2919, 64
  %v2921 = vpop.permute.xlu0 %2920
  %vm2922 = vcmask 589312
  %2923 = vst.msk [vmem:[%s1] sm:$0xff] %vm2922, %v2921
  %s2924 = scalar_lea.vmem %s0, 520
  %s2925 = smov 3
  %v2926 = vld [vmem:[%s2924] ss:$16 sm:%s2925]
  %s2927 = scalar_lea.vmem %s0, 520
  %s2928 = smov 12
  %v2929 = vld [vmem:[%s2927] ss:$16 sm:%s2928]
  %vm2930 = vcmask 1043458
  %v2931 = vsel %vm2930, %v2929, %v2926
  %s2932 = scalar_lea.vmem %s0, 520
  %s2933 = smov 48
  %v2934 = vld [vmem:[%s2932] ss:$16 sm:%s2933]
  %vm2935 = vcmask 1045508
  %v2936 = vsel %vm2935, %v2934, %v2931
  %s2937 = scalar_lea.vmem %s0, 520
  %s2938 = smov 192
  %v2939 = vld [vmem:[%s2937] ss:$16 sm:%s2938]
  %vm2940 = vcmask 1047558
  %v2941 = vsel %vm2940, %v2939, %v2936
  %2942 = vrot.lane.b32.xlu0 %v2941, 64
  %v2943 = vpop.permute.xlu0 %2942
  %vm2944 = vcmask 589312
  %s2945 = scalar_lea.vmem %s1, 32
  %2946 = vst.msk [vmem:[%s2945] sm:$0xff] %vm2944, %v2943
  %s2947 = scalar_lea.vmem %s0, 1032
  %s2948 = smov 3
  %v2949 = vld [vmem:[%s2947] ss:$16 sm:%s2948]
  %s2950 = scalar_lea.vmem %s0, 1032
  %s2951 = smov 12
  %v2952 = vld [vmem:[%s2950] ss:$16 sm:%s2951]
  %vm2953 = vcmask 1043458
  %v2954 = vsel %vm2953, %v2952, %v2949
  %s2955 = scalar_lea.vmem %s0, 1032
  %s2956 = smov 48
  %v2957 = vld [vmem:[%s2955] ss:$16 sm:%s2956]
  %vm2958 = vcmask 1045508
  %v2959 = vsel %vm2958, %v2957, %v2954
  %s2960 = scalar_lea.vmem %s0, 1032
  %s2961 = smov 192
  %v2962 = vld [vmem:[%s2960] ss:$16 sm:%s2961]
  %vm2963 = vcmask 1047558
  %v2964 = vsel %vm2963, %v2962, %v2959
  %2965 = vrot.lane.b32.xlu0 %v2964, 64
  %v2966 = vpop.permute.xlu0 %2965
  %vm2967 = vcmask 589312
  %s2968 = scalar_lea.vmem %s1, 64
  %2969 = vst.msk [vmem:[%s2968] sm:$0xff] %vm2967, %v2966
  %s2970 = scalar_lea.vmem %s0, 1544
  %s2971 = smov 3
  %v2972 = vld [vmem:[%s2970] ss:$16 sm:%s2971]
  %s2973 = scalar_lea.vmem %s0, 1544
  %s2974 = smov 12
  %v2975 = vld [vmem:[%s2973] ss:$16 sm:%s2974]
  %vm2976 = vcmask 1043458
  %v2977 = vsel %vm2976, %v2975, %v2972
  %s2978 = scalar_lea.vmem %s0, 1544
  %s2979 = smov 48
  %v2980 = vld [vmem:[%s2978] ss:$16 sm:%s2979]
  %vm2981 = vcmask 1045508
  %v2982 = vsel %vm2981, %v2980, %v2977
  %s2983 = scalar_lea.vmem %s0, 1544
  %s2984 = smov 192
  %v2985 = vld [vmem:[%s2983] ss:$16 sm:%s2984]
  %vm2986 = vcmask 1047558
  %v2987 = vsel %vm2986, %v2985, %v2982
  %2988 = vrot.lane.b32.xlu0 %v2987, 64
  %v2989 = vpop.permute.xlu0 %2988
  %vm2990 = vcmask 589312
  %s2991 = scalar_lea.vmem %s1, 96
  %2992 = vst.msk [vmem:[%s2991] sm:$0xff] %vm2990, %v2989
  %s2993 = scalar_lea.vmem %s0, 136
  %s2994 = smov 3
  %v2995 = vld [vmem:[%s2993] ss:$16 sm:%s2994]
  %s2996 = scalar_lea.vmem %s0, 136
  %s2997 = smov 12
  %v2998 = vld [vmem:[%s2996] ss:$16 sm:%s2997]
  %vm2999 = vcmask 1043458
  %v3000 = vsel %vm2999, %v2998, %v2995
  %s3001 = scalar_lea.vmem %s0, 136
  %s3002 = smov 48
  %v3003 = vld [vmem:[%s3001] ss:$16 sm:%s3002]
  %vm3004 = vcmask 1045508
  %v3005 = vsel %vm3004, %v3003, %v3000
  %s3006 = scalar_lea.vmem %s0, 136
  %s3007 = smov 192
  %v3008 = vld [vmem:[%s3006] ss:$16 sm:%s3007]
  %vm3009 = vcmask 1047558
  %v3010 = vsel %vm3009, %v3008, %v3005
  %3011 = vrot.lane.b32.xlu0 %v3010, 64
  %v3012 = vpop.permute.xlu0 %3011
  %vm3013 = vcmask 589312
  %s3014 = scalar_lea.vmem %s1, 8
  %3015 = vst.msk [vmem:[%s3014] sm:$0xff] %vm3013, %v3012
  %s3016 = scalar_lea.vmem %s0, 648
  %s3017 = smov 3
  %v3018 = vld [vmem:[%s3016] ss:$16 sm:%s3017]
  %s3019 = scalar_lea.vmem %s0, 648
  %s3020 = smov 12
  %v3021 = vld [vmem:[%s3019] ss:$16 sm:%s3020]
  %vm3022 = vcmask 1043458
  %v3023 = vsel %vm3022, %v3021, %v3018
  %s3024 = scalar_lea.vmem %s0, 648
  %s3025 = smov 48
  %v3026 = vld [vmem:[%s3024] ss:$16 sm:%s3025]
  %vm3027 = vcmask 1045508
  %v3028 = vsel %vm3027, %v3026, %v3023
  %s3029 = scalar_lea.vmem %s0, 648
  %s3030 = smov 192
  %v3031 = vld [vmem:[%s3029] ss:$16 sm:%s3030]
  %vm3032 = vcmask 1047558
  %v3033 = vsel %vm3032, %v3031, %v3028
  %3034 = vrot.lane.b32.xlu0 %v3033, 64
  %v3035 = vpop.permute.xlu0 %3034
  %vm3036 = vcmask 589312
  %s3037 = scalar_lea.vmem %s1, 40
  %3038 = vst.msk [vmem:[%s3037] sm:$0xff] %vm3036, %v3035
  %s3039 = scalar_lea.vmem %s0, 1160
  %s3040 = smov 3
  %v3041 = vld [vmem:[%s3039] ss:$16 sm:%s3040]
  %s3042 = scalar_lea.vmem %s0, 1160
  %s3043 = smov 12
  %v3044 = vld [vmem:[%s3042] ss:$16 sm:%s3043]
  %vm3045 = vcmask 1043458
  %v3046 = vsel %vm3045, %v3044, %v3041
  %s3047 = scalar_lea.vmem %s0, 1160
  %s3048 = smov 48
  %v3049 = vld [vmem:[%s3047] ss:$16 sm:%s3048]
  %vm3050 = vcmask 1045508
  %v3051 = vsel %vm3050, %v3049, %v3046
  %s3052 = scalar_lea.vmem %s0, 1160
  %s3053 = smov 192
  %v3054 = vld [vmem:[%s3052] ss:$16 sm:%s3053]
  %vm3055 = vcmask 1047558
  %v3056 = vsel %vm3055, %v3054, %v3051
  %3057 = vrot.lane.b32.xlu0 %v3056, 64
  %v3058 = vpop.permute.xlu0 %3057
  %vm3059 = vcmask 589312
  %s3060 = scalar_lea.vmem %s1, 72
  %3061 = vst.msk [vmem:[%s3060] sm:$0xff] %vm3059, %v3058
  %s3062 = scalar_lea.vmem %s0, 1672
  %s3063 = smov 3
  %v3064 = vld [vmem:[%s3062] ss:$16 sm:%s3063]
  %s3065 = scalar_lea.vmem %s0, 1672
  %s3066 = smov 12
  %v3067 = vld [vmem:[%s3065] ss:$16 sm:%s3066]
  %vm3068 = vcmask 1043458
  %v3069 = vsel %vm3068, %v3067, %v3064
  %s3070 = scalar_lea.vmem %s0, 1672
  %s3071 = smov 48
  %v3072 = vld [vmem:[%s3070] ss:$16 sm:%s3071]
  %vm3073 = vcmask 1045508
  %v3074 = vsel %vm3073, %v3072, %v3069
  %s3075 = scalar_lea.vmem %s0, 1672
  %s3076 = smov 192
  %v3077 = vld [vmem:[%s3075] ss:$16 sm:%s3076]
  %vm3078 = vcmask 1047558
  %v3079 = vsel %vm3078, %v3077, %v3074
  %3080 = vrot.lane.b32.xlu0 %v3079, 64
  %v3081 = vpop.permute.xlu0 %3080
  %vm3082 = vcmask 589312
  %s3083 = scalar_lea.vmem %s1, 104
  %3084 = vst.msk [vmem:[%s3083] sm:$0xff] %vm3082, %v3081
  %s3085 = scalar_lea.vmem %s0, 264
  %s3086 = smov 3
  %v3087 = vld [vmem:[%s3085] ss:$16 sm:%s3086]
  %s3088 = scalar_lea.vmem %s0, 264
  %s3089 = smov 12
  %v3090 = vld [vmem:[%s3088] ss:$16 sm:%s3089]
  %vm3091 = vcmask 1043458
  %v3092 = vsel %vm3091, %v3090, %v3087
  %s3093 = scalar_lea.vmem %s0, 264
  %s3094 = smov 48
  %v3095 = vld [vmem:[%s3093] ss:$16 sm:%s3094]
  %vm3096 = vcmask 1045508
  %v3097 = vsel %vm3096, %v3095, %v3092
  %s3098 = scalar_lea.vmem %s0, 264
  %s3099 = smov 192
  %v3100 = vld [vmem:[%s3098] ss:$16 sm:%s3099]
  %vm3101 = vcmask 1047558
  %v3102 = vsel %vm3101, %v3100, %v3097
  %3103 = vrot.lane.b32.xlu0 %v3102, 64
  %v3104 = vpop.permute.xlu0 %3103
  %vm3105 = vcmask 589312
  %s3106 = scalar_lea.vmem %s1, 16
  %3107 = vst.msk [vmem:[%s3106] sm:$0xff] %vm3105, %v3104
  %s3108 = scalar_lea.vmem %s0, 776
  %s3109 = smov 3
  %v3110 = vld [vmem:[%s3108] ss:$16 sm:%s3109]
  %s3111 = scalar_lea.vmem %s0, 776
  %s3112 = smov 12
  %v3113 = vld [vmem:[%s3111] ss:$16 sm:%s3112]
  %vm3114 = vcmask 1043458
  %v3115 = vsel %vm3114, %v3113, %v3110
  %s3116 = scalar_lea.vmem %s0, 776
  %s3117 = smov 48
  %v3118 = vld [vmem:[%s3116] ss:$16 sm:%s3117]
  %vm3119 = vcmask 1045508
  %v3120 = vsel %vm3119, %v3118, %v3115
  %s3121 = scalar_lea.vmem %s0, 776
  %s3122 = smov 192
  %v3123 = vld [vmem:[%s3121] ss:$16 sm:%s3122]
  %vm3124 = vcmask 1047558
  %v3125 = vsel %vm3124, %v3123, %v3120
  %3126 = vrot.lane.b32.xlu0 %v3125, 64
  %v3127 = vpop.permute.xlu0 %3126
  %vm3128 = vcmask 589312
  %s3129 = scalar_lea.vmem %s1, 48
  %3130 = vst.msk [vmem:[%s3129] sm:$0xff] %vm3128, %v3127
  %s3131 = scalar_lea.vmem %s0, 1288
  %s3132 = smov 3
  %v3133 = vld [vmem:[%s3131] ss:$16 sm:%s3132]
  %s3134 = scalar_lea.vmem %s0, 1288
  %s3135 = smov 12
  %v3136 = vld [vmem:[%s3134] ss:$16 sm:%s3135]
  %vm3137 = vcmask 1043458
  %v3138 = vsel %vm3137, %v3136, %v3133
  %s3139 = scalar_lea.vmem %s0, 1288
  %s3140 = smov 48
  %v3141 = vld [vmem:[%s3139] ss:$16 sm:%s3140]
  %vm3142 = vcmask 1045508
  %v3143 = vsel %vm3142, %v3141, %v3138
  %s3144 = scalar_lea.vmem %s0, 1288
  %s3145 = smov 192
  %v3146 = vld [vmem:[%s3144] ss:$16 sm:%s3145]
  %vm3147 = vcmask 1047558
  %v3148 = vsel %vm3147, %v3146, %v3143
  %3149 = vrot.lane.b32.xlu0 %v3148, 64
  %v3150 = vpop.permute.xlu0 %3149
  %vm3151 = vcmask 589312
  %s3152 = scalar_lea.vmem %s1, 80
  %3153 = vst.msk [vmem:[%s3152] sm:$0xff] %vm3151, %v3150
  %s3154 = scalar_lea.vmem %s0, 1800
  %s3155 = smov 3
  %v3156 = vld [vmem:[%s3154] ss:$16 sm:%s3155]
  %s3157 = scalar_lea.vmem %s0, 1800
  %s3158 = smov 12
  %v3159 = vld [vmem:[%s3157] ss:$16 sm:%s3158]
  %vm3160 = vcmask 1043458
  %v3161 = vsel %vm3160, %v3159, %v3156
  %s3162 = scalar_lea.vmem %s0, 1800
  %s3163 = smov 48
  %v3164 = vld [vmem:[%s3162] ss:$16 sm:%s3163]
  %vm3165 = vcmask 1045508
  %v3166 = vsel %vm3165, %v3164, %v3161
  %s3167 = scalar_lea.vmem %s0, 1800
  %s3168 = smov 192
  %v3169 = vld [vmem:[%s3167] ss:$16 sm:%s3168]
  %vm3170 = vcmask 1047558
  %v3171 = vsel %vm3170, %v3169, %v3166
  %3172 = vrot.lane.b32.xlu0 %v3171, 64
  %v3173 = vpop.permute.xlu0 %3172
  %vm3174 = vcmask 589312
  %s3175 = scalar_lea.vmem %s1, 112
  %3176 = vst.msk [vmem:[%s3175] sm:$0xff] %vm3174, %v3173
  %s3177 = scalar_lea.vmem %s0, 392
  %s3178 = smov 3
  %v3179 = vld [vmem:[%s3177] ss:$16 sm:%s3178]
  %s3180 = scalar_lea.vmem %s0, 392
  %s3181 = smov 12
  %v3182 = vld [vmem:[%s3180] ss:$16 sm:%s3181]
  %vm3183 = vcmask 1043458
  %v3184 = vsel %vm3183, %v3182, %v3179
  %s3185 = scalar_lea.vmem %s0, 392
  %s3186 = smov 48
  %v3187 = vld [vmem:[%s3185] ss:$16 sm:%s3186]
  %vm3188 = vcmask 1045508
  %v3189 = vsel %vm3188, %v3187, %v3184
  %s3190 = scalar_lea.vmem %s0, 392
  %s3191 = smov 192
  %v3192 = vld [vmem:[%s3190] ss:$16 sm:%s3191]
  %vm3193 = vcmask 1047558
  %v3194 = vsel %vm3193, %v3192, %v3189
  %3195 = vrot.lane.b32.xlu0 %v3194, 64
  %v3196 = vpop.permute.xlu0 %3195
  %vm3197 = vcmask 589312
  %s3198 = scalar_lea.vmem %s1, 24
  %3199 = vst.msk [vmem:[%s3198] sm:$0xff] %vm3197, %v3196
  %s3200 = scalar_lea.vmem %s0, 904
  %s3201 = smov 3
  %v3202 = vld [vmem:[%s3200] ss:$16 sm:%s3201]
  %s3203 = scalar_lea.vmem %s0, 904
  %s3204 = smov 12
  %v3205 = vld [vmem:[%s3203] ss:$16 sm:%s3204]
  %vm3206 = vcmask 1043458
  %v3207 = vsel %vm3206, %v3205, %v3202
  %s3208 = scalar_lea.vmem %s0, 904
  %s3209 = smov 48
  %v3210 = vld [vmem:[%s3208] ss:$16 sm:%s3209]
  %vm3211 = vcmask 1045508
  %v3212 = vsel %vm3211, %v3210, %v3207
  %s3213 = scalar_lea.vmem %s0, 904
  %s3214 = smov 192
  %v3215 = vld [vmem:[%s3213] ss:$16 sm:%s3214]
  %vm3216 = vcmask 1047558
  %v3217 = vsel %vm3216, %v3215, %v3212
  %3218 = vrot.lane.b32.xlu0 %v3217, 64
  %v3219 = vpop.permute.xlu0 %3218
  %vm3220 = vcmask 589312
  %s3221 = scalar_lea.vmem %s1, 56
  %3222 = vst.msk [vmem:[%s3221] sm:$0xff] %vm3220, %v3219
  %s3223 = scalar_lea.vmem %s0, 1416
  %s3224 = smov 3
  %v3225 = vld [vmem:[%s3223] ss:$16 sm:%s3224]
  %s3226 = scalar_lea.vmem %s0, 1416
  %s3227 = smov 12
  %v3228 = vld [vmem:[%s3226] ss:$16 sm:%s3227]
  %vm3229 = vcmask 1043458
  %v3230 = vsel %vm3229, %v3228, %v3225
  %s3231 = scalar_lea.vmem %s0, 1416
  %s3232 = smov 48
  %v3233 = vld [vmem:[%s3231] ss:$16 sm:%s3232]
  %vm3234 = vcmask 1045508
  %v3235 = vsel %vm3234, %v3233, %v3230
  %s3236 = scalar_lea.vmem %s0, 1416
  %s3237 = smov 192
  %v3238 = vld [vmem:[%s3236] ss:$16 sm:%s3237]
  %vm3239 = vcmask 1047558
  %v3240 = vsel %vm3239, %v3238, %v3235
  %3241 = vrot.lane.b32.xlu0 %v3240, 64
  %v3242 = vpop.permute.xlu0 %3241
  %vm3243 = vcmask 589312
  %s3244 = scalar_lea.vmem %s1, 88
  %3245 = vst.msk [vmem:[%s3244] sm:$0xff] %vm3243, %v3242
  %s3246 = scalar_lea.vmem %s0, 1928
  %s3247 = smov 3
  %v3248 = vld [vmem:[%s3246] ss:$16 sm:%s3247]
  %s3249 = scalar_lea.vmem %s0, 1928
  %s3250 = smov 12
  %v3251 = vld [vmem:[%s3249] ss:$16 sm:%s3250]
  %vm3252 = vcmask 1043458
  %v3253 = vsel %vm3252, %v3251, %v3248
  %s3254 = scalar_lea.vmem %s0, 1928
  %s3255 = smov 48
  %v3256 = vld [vmem:[%s3254] ss:$16 sm:%s3255]
  %vm3257 = vcmask 1045508
  %v3258 = vsel %vm3257, %v3256, %v3253
  %s3259 = scalar_lea.vmem %s0, 1928
  %s3260 = smov 192
  %v3261 = vld [vmem:[%s3259] ss:$16 sm:%s3260]
  %vm3262 = vcmask 1047558
  %v3263 = vsel %vm3262, %v3261, %v3258
  %3264 = vrot.lane.b32.xlu0 %v3263, 64
  %v3265 = vpop.permute.xlu0 %3264
  %vm3266 = vcmask 589312
  %s3267 = scalar_lea.vmem %s1, 120
  %3268 = vst.msk [vmem:[%s3267] sm:$0xff] %vm3266, %v3265
  %s3269 = scalar_lea.vmem %s0, 7
  %s3270 = smov 3
  %v3271 = vld [vmem:[%s3269] ss:$16 sm:%s3270]
  %s3272 = scalar_lea.vmem %s0, 7
  %s3273 = smov 12
  %v3274 = vld [vmem:[%s3272] ss:$16 sm:%s3273]
  %vm3275 = vcmask 1043458
  %v3276 = vsel %vm3275, %v3274, %v3271
  %s3277 = scalar_lea.vmem %s0, 7
  %s3278 = smov 48
  %v3279 = vld [vmem:[%s3277] ss:$16 sm:%s3278]
  %vm3280 = vcmask 1045508
  %v3281 = vsel %vm3280, %v3279, %v3276
  %s3282 = scalar_lea.vmem %s0, 7
  %s3283 = smov 192
  %v3284 = vld [vmem:[%s3282] ss:$16 sm:%s3283]
  %vm3285 = vcmask 1047558
  %v3286 = vsel %vm3285, %v3284, %v3281
  %3287 = vrot.lane.b32.xlu0 %v3286, 56
  %v3288 = vpop.permute.xlu0 %3287
  %vm3289 = vcmask 523712
  %3290 = vst.msk [vmem:[%s1] sm:$0xff] %vm3289, %v3288
  %s3291 = scalar_lea.vmem %s0, 519
  %s3292 = smov 3
  %v3293 = vld [vmem:[%s3291] ss:$16 sm:%s3292]
  %s3294 = scalar_lea.vmem %s0, 519
  %s3295 = smov 12
  %v3296 = vld [vmem:[%s3294] ss:$16 sm:%s3295]
  %vm3297 = vcmask 1043458
  %v3298 = vsel %vm3297, %v3296, %v3293
  %s3299 = scalar_lea.vmem %s0, 519
  %s3300 = smov 48
  %v3301 = vld [vmem:[%s3299] ss:$16 sm:%s3300]
  %vm3302 = vcmask 1045508
  %v3303 = vsel %vm3302, %v3301, %v3298
  %s3304 = scalar_lea.vmem %s0, 519
  %s3305 = smov 192
  %v3306 = vld [vmem:[%s3304] ss:$16 sm:%s3305]
  %vm3307 = vcmask 1047558
  %v3308 = vsel %vm3307, %v3306, %v3303
  %3309 = vrot.lane.b32.xlu0 %v3308, 56
  %v3310 = vpop.permute.xlu0 %3309
  %vm3311 = vcmask 523712
  %s3312 = scalar_lea.vmem %s1, 32
  %3313 = vst.msk [vmem:[%s3312] sm:$0xff] %vm3311, %v3310
  %s3314 = scalar_lea.vmem %s0, 1031
  %s3315 = smov 3
  %v3316 = vld [vmem:[%s3314] ss:$16 sm:%s3315]
  %s3317 = scalar_lea.vmem %s0, 1031
  %s3318 = smov 12
  %v3319 = vld [vmem:[%s3317] ss:$16 sm:%s3318]
  %vm3320 = vcmask 1043458
  %v3321 = vsel %vm3320, %v3319, %v3316
  %s3322 = scalar_lea.vmem %s0, 1031
  %s3323 = smov 48
  %v3324 = vld [vmem:[%s3322] ss:$16 sm:%s3323]
  %vm3325 = vcmask 1045508
  %v3326 = vsel %vm3325, %v3324, %v3321
  %s3327 = scalar_lea.vmem %s0, 1031
  %s3328 = smov 192
  %v3329 = vld [vmem:[%s3327] ss:$16 sm:%s3328]
  %vm3330 = vcmask 1047558
  %v3331 = vsel %vm3330, %v3329, %v3326
  %3332 = vrot.lane.b32.xlu0 %v3331, 56
  %v3333 = vpop.permute.xlu0 %3332
  %vm3334 = vcmask 523712
  %s3335 = scalar_lea.vmem %s1, 64
  %3336 = vst.msk [vmem:[%s3335] sm:$0xff] %vm3334, %v3333
  %s3337 = scalar_lea.vmem %s0, 1543
  %s3338 = smov 3
  %v3339 = vld [vmem:[%s3337] ss:$16 sm:%s3338]
  %s3340 = scalar_lea.vmem %s0, 1543
  %s3341 = smov 12
  %v3342 = vld [vmem:[%s3340] ss:$16 sm:%s3341]
  %vm3343 = vcmask 1043458
  %v3344 = vsel %vm3343, %v3342, %v3339
  %s3345 = scalar_lea.vmem %s0, 1543
  %s3346 = smov 48
  %v3347 = vld [vmem:[%s3345] ss:$16 sm:%s3346]
  %vm3348 = vcmask 1045508
  %v3349 = vsel %vm3348, %v3347, %v3344
  %s3350 = scalar_lea.vmem %s0, 1543
  %s3351 = smov 192
  %v3352 = vld [vmem:[%s3350] ss:$16 sm:%s3351]
  %vm3353 = vcmask 1047558
  %v3354 = vsel %vm3353, %v3352, %v3349
  %3355 = vrot.lane.b32.xlu0 %v3354, 56
  %v3356 = vpop.permute.xlu0 %3355
  %vm3357 = vcmask 523712
  %s3358 = scalar_lea.vmem %s1, 96
  %3359 = vst.msk [vmem:[%s3358] sm:$0xff] %vm3357, %v3356
  %s3360 = scalar_lea.vmem %s0, 135
  %s3361 = smov 3
  %v3362 = vld [vmem:[%s3360] ss:$16 sm:%s3361]
  %s3363 = scalar_lea.vmem %s0, 135
  %s3364 = smov 12
  %v3365 = vld [vmem:[%s3363] ss:$16 sm:%s3364]
  %vm3366 = vcmask 1043458
  %v3367 = vsel %vm3366, %v3365, %v3362
  %s3368 = scalar_lea.vmem %s0, 135
  %s3369 = smov 48
  %v3370 = vld [vmem:[%s3368] ss:$16 sm:%s3369]
  %vm3371 = vcmask 1045508
  %v3372 = vsel %vm3371, %v3370, %v3367
  %s3373 = scalar_lea.vmem %s0, 135
  %s3374 = smov 192
  %v3375 = vld [vmem:[%s3373] ss:$16 sm:%s3374]
  %vm3376 = vcmask 1047558
  %v3377 = vsel %vm3376, %v3375, %v3372
  %3378 = vrot.lane.b32.xlu0 %v3377, 56
  %v3379 = vpop.permute.xlu0 %3378
  %vm3380 = vcmask 523712
  %s3381 = scalar_lea.vmem %s1, 8
  %3382 = vst.msk [vmem:[%s3381] sm:$0xff] %vm3380, %v3379
  %s3383 = scalar_lea.vmem %s0, 647
  %s3384 = smov 3
  %v3385 = vld [vmem:[%s3383] ss:$16 sm:%s3384]
  %s3386 = scalar_lea.vmem %s0, 647
  %s3387 = smov 12
  %v3388 = vld [vmem:[%s3386] ss:$16 sm:%s3387]
  %vm3389 = vcmask 1043458
  %v3390 = vsel %vm3389, %v3388, %v3385
  %s3391 = scalar_lea.vmem %s0, 647
  %s3392 = smov 48
  %v3393 = vld [vmem:[%s3391] ss:$16 sm:%s3392]
  %vm3394 = vcmask 1045508
  %v3395 = vsel %vm3394, %v3393, %v3390
  %s3396 = scalar_lea.vmem %s0, 647
  %s3397 = smov 192
  %v3398 = vld [vmem:[%s3396] ss:$16 sm:%s3397]
  %vm3399 = vcmask 1047558
  %v3400 = vsel %vm3399, %v3398, %v3395
  %3401 = vrot.lane.b32.xlu0 %v3400, 56
  %v3402 = vpop.permute.xlu0 %3401
  %vm3403 = vcmask 523712
  %s3404 = scalar_lea.vmem %s1, 40
  %3405 = vst.msk [vmem:[%s3404] sm:$0xff] %vm3403, %v3402
  %s3406 = scalar_lea.vmem %s0, 1159
  %s3407 = smov 3
  %v3408 = vld [vmem:[%s3406] ss:$16 sm:%s3407]
  %s3409 = scalar_lea.vmem %s0, 1159
  %s3410 = smov 12
  %v3411 = vld [vmem:[%s3409] ss:$16 sm:%s3410]
  %vm3412 = vcmask 1043458
  %v3413 = vsel %vm3412, %v3411, %v3408
  %s3414 = scalar_lea.vmem %s0, 1159
  %s3415 = smov 48
  %v3416 = vld [vmem:[%s3414] ss:$16 sm:%s3415]
  %vm3417 = vcmask 1045508
  %v3418 = vsel %vm3417, %v3416, %v3413
  %s3419 = scalar_lea.vmem %s0, 1159
  %s3420 = smov 192
  %v3421 = vld [vmem:[%s3419] ss:$16 sm:%s3420]
  %vm3422 = vcmask 1047558
  %v3423 = vsel %vm3422, %v3421, %v3418
  %3424 = vrot.lane.b32.xlu0 %v3423, 56
  %v3425 = vpop.permute.xlu0 %3424
  %vm3426 = vcmask 523712
  %s3427 = scalar_lea.vmem %s1, 72
  %3428 = vst.msk [vmem:[%s3427] sm:$0xff] %vm3426, %v3425
  %s3429 = scalar_lea.vmem %s0, 1671
  %s3430 = smov 3
  %v3431 = vld [vmem:[%s3429] ss:$16 sm:%s3430]
  %s3432 = scalar_lea.vmem %s0, 1671
  %s3433 = smov 12
  %v3434 = vld [vmem:[%s3432] ss:$16 sm:%s3433]
  %vm3435 = vcmask 1043458
  %v3436 = vsel %vm3435, %v3434, %v3431
  %s3437 = scalar_lea.vmem %s0, 1671
  %s3438 = smov 48
  %v3439 = vld [vmem:[%s3437] ss:$16 sm:%s3438]
  %vm3440 = vcmask 1045508
  %v3441 = vsel %vm3440, %v3439, %v3436
  %s3442 = scalar_lea.vmem %s0, 1671
  %s3443 = smov 192
  %v3444 = vld [vmem:[%s3442] ss:$16 sm:%s3443]
  %vm3445 = vcmask 1047558
  %v3446 = vsel %vm3445, %v3444, %v3441
  %3447 = vrot.lane.b32.xlu0 %v3446, 56
  %v3448 = vpop.permute.xlu0 %3447
  %vm3449 = vcmask 523712
  %s3450 = scalar_lea.vmem %s1, 104
  %3451 = vst.msk [vmem:[%s3450] sm:$0xff] %vm3449, %v3448
  %s3452 = scalar_lea.vmem %s0, 263
  %s3453 = smov 3
  %v3454 = vld [vmem:[%s3452] ss:$16 sm:%s3453]
  %s3455 = scalar_lea.vmem %s0, 263
  %s3456 = smov 12
  %v3457 = vld [vmem:[%s3455] ss:$16 sm:%s3456]
  %vm3458 = vcmask 1043458
  %v3459 = vsel %vm3458, %v3457, %v3454
  %s3460 = scalar_lea.vmem %s0, 263
  %s3461 = smov 48
  %v3462 = vld [vmem:[%s3460] ss:$16 sm:%s3461]
  %vm3463 = vcmask 1045508
  %v3464 = vsel %vm3463, %v3462, %v3459
  %s3465 = scalar_lea.vmem %s0, 263
  %s3466 = smov 192
  %v3467 = vld [vmem:[%s3465] ss:$16 sm:%s3466]
  %vm3468 = vcmask 1047558
  %v3469 = vsel %vm3468, %v3467, %v3464
  %3470 = vrot.lane.b32.xlu0 %v3469, 56
  %v3471 = vpop.permute.xlu0 %3470
  %vm3472 = vcmask 523712
  %s3473 = scalar_lea.vmem %s1, 16
  %3474 = vst.msk [vmem:[%s3473] sm:$0xff] %vm3472, %v3471
  %s3475 = scalar_lea.vmem %s0, 775
  %s3476 = smov 3
  %v3477 = vld [vmem:[%s3475] ss:$16 sm:%s3476]
  %s3478 = scalar_lea.vmem %s0, 775
  %s3479 = smov 12
  %v3480 = vld [vmem:[%s3478] ss:$16 sm:%s3479]
  %vm3481 = vcmask 1043458
  %v3482 = vsel %vm3481, %v3480, %v3477
  %s3483 = scalar_lea.vmem %s0, 775
  %s3484 = smov 48
  %v3485 = vld [vmem:[%s3483] ss:$16 sm:%s3484]
  %vm3486 = vcmask 1045508
  %v3487 = vsel %vm3486, %v3485, %v3482
  %s3488 = scalar_lea.vmem %s0, 775
  %s3489 = smov 192
  %v3490 = vld [vmem:[%s3488] ss:$16 sm:%s3489]
  %vm3491 = vcmask 1047558
  %v3492 = vsel %vm3491, %v3490, %v3487
  %3493 = vrot.lane.b32.xlu0 %v3492, 56
  %v3494 = vpop.permute.xlu0 %3493
  %vm3495 = vcmask 523712
  %s3496 = scalar_lea.vmem %s1, 48
  %3497 = vst.msk [vmem:[%s3496] sm:$0xff] %vm3495, %v3494
  %s3498 = scalar_lea.vmem %s0, 1287
  %s3499 = smov 3
  %v3500 = vld [vmem:[%s3498] ss:$16 sm:%s3499]
  %s3501 = scalar_lea.vmem %s0, 1287
  %s3502 = smov 12
  %v3503 = vld [vmem:[%s3501] ss:$16 sm:%s3502]
  %vm3504 = vcmask 1043458
  %v3505 = vsel %vm3504, %v3503, %v3500
  %s3506 = scalar_lea.vmem %s0, 1287
  %s3507 = smov 48
  %v3508 = vld [vmem:[%s3506] ss:$16 sm:%s3507]
  %vm3509 = vcmask 1045508
  %v3510 = vsel %vm3509, %v3508, %v3505
  %s3511 = scalar_lea.vmem %s0, 1287
  %s3512 = smov 192
  %v3513 = vld [vmem:[%s3511] ss:$16 sm:%s3512]
  %vm3514 = vcmask 1047558
  %v3515 = vsel %vm3514, %v3513, %v3510
  %3516 = vrot.lane.b32.xlu0 %v3515, 56
  %v3517 = vpop.permute.xlu0 %3516
  %vm3518 = vcmask 523712
  %s3519 = scalar_lea.vmem %s1, 80
  %3520 = vst.msk [vmem:[%s3519] sm:$0xff] %vm3518, %v3517
  %s3521 = scalar_lea.vmem %s0, 1799
  %s3522 = smov 3
  %v3523 = vld [vmem:[%s3521] ss:$16 sm:%s3522]
  %s3524 = scalar_lea.vmem %s0, 1799
  %s3525 = smov 12
  %v3526 = vld [vmem:[%s3524] ss:$16 sm:%s3525]
  %vm3527 = vcmask 1043458
  %v3528 = vsel %vm3527, %v3526, %v3523
  %s3529 = scalar_lea.vmem %s0, 1799
  %s3530 = smov 48
  %v3531 = vld [vmem:[%s3529] ss:$16 sm:%s3530]
  %vm3532 = vcmask 1045508
  %v3533 = vsel %vm3532, %v3531, %v3528
  %s3534 = scalar_lea.vmem %s0, 1799
  %s3535 = smov 192
  %v3536 = vld [vmem:[%s3534] ss:$16 sm:%s3535]
  %vm3537 = vcmask 1047558
  %v3538 = vsel %vm3537, %v3536, %v3533
  %3539 = vrot.lane.b32.xlu0 %v3538, 56
  %v3540 = vpop.permute.xlu0 %3539
  %vm3541 = vcmask 523712
  %s3542 = scalar_lea.vmem %s1, 112
  %3543 = vst.msk [vmem:[%s3542] sm:$0xff] %vm3541, %v3540
  %s3544 = scalar_lea.vmem %s0, 391
  %s3545 = smov 3
  %v3546 = vld [vmem:[%s3544] ss:$16 sm:%s3545]
  %s3547 = scalar_lea.vmem %s0, 391
  %s3548 = smov 12
  %v3549 = vld [vmem:[%s3547] ss:$16 sm:%s3548]
  %vm3550 = vcmask 1043458
  %v3551 = vsel %vm3550, %v3549, %v3546
  %s3552 = scalar_lea.vmem %s0, 391
  %s3553 = smov 48
  %v3554 = vld [vmem:[%s3552] ss:$16 sm:%s3553]
  %vm3555 = vcmask 1045508
  %v3556 = vsel %vm3555, %v3554, %v3551
  %s3557 = scalar_lea.vmem %s0, 391
  %s3558 = smov 192
  %v3559 = vld [vmem:[%s3557] ss:$16 sm:%s3558]
  %vm3560 = vcmask 1047558
  %v3561 = vsel %vm3560, %v3559, %v3556
  %3562 = vrot.lane.b32.xlu0 %v3561, 56
  %v3563 = vpop.permute.xlu0 %3562
  %vm3564 = vcmask 523712
  %s3565 = scalar_lea.vmem %s1, 24
  %3566 = vst.msk [vmem:[%s3565] sm:$0xff] %vm3564, %v3563
  %s3567 = scalar_lea.vmem %s0, 903
  %s3568 = smov 3
  %v3569 = vld [vmem:[%s3567] ss:$16 sm:%s3568]
  %s3570 = scalar_lea.vmem %s0, 903
  %s3571 = smov 12
  %v3572 = vld [vmem:[%s3570] ss:$16 sm:%s3571]
  %vm3573 = vcmask 1043458
  %v3574 = vsel %vm3573, %v3572, %v3569
  %s3575 = scalar_lea.vmem %s0, 903
  %s3576 = smov 48
  %v3577 = vld [vmem:[%s3575] ss:$16 sm:%s3576]
  %vm3578 = vcmask 1045508
  %v3579 = vsel %vm3578, %v3577, %v3574
  %s3580 = scalar_lea.vmem %s0, 903
  %s3581 = smov 192
  %v3582 = vld [vmem:[%s3580] ss:$16 sm:%s3581]
  %vm3583 = vcmask 1047558
  %v3584 = vsel %vm3583, %v3582, %v3579
  %3585 = vrot.lane.b32.xlu0 %v3584, 56
  %v3586 = vpop.permute.xlu0 %3585
  %vm3587 = vcmask 523712
  %s3588 = scalar_lea.vmem %s1, 56
  %3589 = vst.msk [vmem:[%s3588] sm:$0xff] %vm3587, %v3586
  %s3590 = scalar_lea.vmem %s0, 1415
  %s3591 = smov 3
  %v3592 = vld [vmem:[%s3590] ss:$16 sm:%s3591]
  %s3593 = scalar_lea.vmem %s0, 1415
  %s3594 = smov 12
  %v3595 = vld [vmem:[%s3593] ss:$16 sm:%s3594]
  %vm3596 = vcmask 1043458
  %v3597 = vsel %vm3596, %v3595, %v3592
  %s3598 = scalar_lea.vmem %s0, 1415
  %s3599 = smov 48
  %v3600 = vld [vmem:[%s3598] ss:$16 sm:%s3599]
  %vm3601 = vcmask 1045508
  %v3602 = vsel %vm3601, %v3600, %v3597
  %s3603 = scalar_lea.vmem %s0, 1415
  %s3604 = smov 192
  %v3605 = vld [vmem:[%s3603] ss:$16 sm:%s3604]
  %vm3606 = vcmask 1047558
  %v3607 = vsel %vm3606, %v3605, %v3602
  %3608 = vrot.lane.b32.xlu0 %v3607, 56
  %v3609 = vpop.permute.xlu0 %3608
  %vm3610 = vcmask 523712
  %s3611 = scalar_lea.vmem %s1, 88
  %3612 = vst.msk [vmem:[%s3611] sm:$0xff] %vm3610, %v3609
  %s3613 = scalar_lea.vmem %s0, 1927
  %s3614 = smov 3
  %v3615 = vld [vmem:[%s3613] ss:$16 sm:%s3614]
  %s3616 = scalar_lea.vmem %s0, 1927
  %s3617 = smov 12
  %v3618 = vld [vmem:[%s3616] ss:$16 sm:%s3617]
  %vm3619 = vcmask 1043458
  %v3620 = vsel %vm3619, %v3618, %v3615
  %s3621 = scalar_lea.vmem %s0, 1927
  %s3622 = smov 48
  %v3623 = vld [vmem:[%s3621] ss:$16 sm:%s3622]
  %vm3624 = vcmask 1045508
  %v3625 = vsel %vm3624, %v3623, %v3620
  %s3626 = scalar_lea.vmem %s0, 1927
  %s3627 = smov 192
  %v3628 = vld [vmem:[%s3626] ss:$16 sm:%s3627]
  %vm3629 = vcmask 1047558
  %v3630 = vsel %vm3629, %v3628, %v3625
  %3631 = vrot.lane.b32.xlu0 %v3630, 56
  %v3632 = vpop.permute.xlu0 %3631
  %vm3633 = vcmask 523712
  %s3634 = scalar_lea.vmem %s1, 120
  %3635 = vst.msk [vmem:[%s3634] sm:$0xff] %vm3633, %v3632
  %s3636 = scalar_lea.vmem %s0, 6
  %s3637 = smov 3
  %v3638 = vld [vmem:[%s3636] ss:$16 sm:%s3637]
  %s3639 = scalar_lea.vmem %s0, 6
  %s3640 = smov 12
  %v3641 = vld [vmem:[%s3639] ss:$16 sm:%s3640]
  %vm3642 = vcmask 1043458
  %v3643 = vsel %vm3642, %v3641, %v3638
  %s3644 = scalar_lea.vmem %s0, 6
  %s3645 = smov 48
  %v3646 = vld [vmem:[%s3644] ss:$16 sm:%s3645]
  %vm3647 = vcmask 1045508
  %v3648 = vsel %vm3647, %v3646, %v3643
  %s3649 = scalar_lea.vmem %s0, 6
  %s3650 = smov 192
  %v3651 = vld [vmem:[%s3649] ss:$16 sm:%s3650]
  %vm3652 = vcmask 1047558
  %v3653 = vsel %vm3652, %v3651, %v3648
  %3654 = vrot.lane.b32.xlu0 %v3653, 48
  %v3655 = vpop.permute.xlu0 %3654
  %vm3656 = vcmask 458112
  %3657 = vst.msk [vmem:[%s1] sm:$0xff] %vm3656, %v3655
  %s3658 = scalar_lea.vmem %s0, 518
  %s3659 = smov 3
  %v3660 = vld [vmem:[%s3658] ss:$16 sm:%s3659]
  %s3661 = scalar_lea.vmem %s0, 518
  %s3662 = smov 12
  %v3663 = vld [vmem:[%s3661] ss:$16 sm:%s3662]
  %vm3664 = vcmask 1043458
  %v3665 = vsel %vm3664, %v3663, %v3660
  %s3666 = scalar_lea.vmem %s0, 518
  %s3667 = smov 48
  %v3668 = vld [vmem:[%s3666] ss:$16 sm:%s3667]
  %vm3669 = vcmask 1045508
  %v3670 = vsel %vm3669, %v3668, %v3665
  %s3671 = scalar_lea.vmem %s0, 518
  %s3672 = smov 192
  %v3673 = vld [vmem:[%s3671] ss:$16 sm:%s3672]
  %vm3674 = vcmask 1047558
  %v3675 = vsel %vm3674, %v3673, %v3670
  %3676 = vrot.lane.b32.xlu0 %v3675, 48
  %v3677 = vpop.permute.xlu0 %3676
  %vm3678 = vcmask 458112
  %s3679 = scalar_lea.vmem %s1, 32
  %3680 = vst.msk [vmem:[%s3679] sm:$0xff] %vm3678, %v3677
  %s3681 = scalar_lea.vmem %s0, 1030
  %s3682 = smov 3
  %v3683 = vld [vmem:[%s3681] ss:$16 sm:%s3682]
  %s3684 = scalar_lea.vmem %s0, 1030
  %s3685 = smov 12
  %v3686 = vld [vmem:[%s3684] ss:$16 sm:%s3685]
  %vm3687 = vcmask 1043458
  %v3688 = vsel %vm3687, %v3686, %v3683
  %s3689 = scalar_lea.vmem %s0, 1030
  %s3690 = smov 48
  %v3691 = vld [vmem:[%s3689] ss:$16 sm:%s3690]
  %vm3692 = vcmask 1045508
  %v3693 = vsel %vm3692, %v3691, %v3688
  %s3694 = scalar_lea.vmem %s0, 1030
  %s3695 = smov 192
  %v3696 = vld [vmem:[%s3694] ss:$16 sm:%s3695]
  %vm3697 = vcmask 1047558
  %v3698 = vsel %vm3697, %v3696, %v3693
  %3699 = vrot.lane.b32.xlu0 %v3698, 48
  %v3700 = vpop.permute.xlu0 %3699
  %vm3701 = vcmask 458112
  %s3702 = scalar_lea.vmem %s1, 64
  %3703 = vst.msk [vmem:[%s3702] sm:$0xff] %vm3701, %v3700
  %s3704 = scalar_lea.vmem %s0, 1542
  %s3705 = smov 3
  %v3706 = vld [vmem:[%s3704] ss:$16 sm:%s3705]
  %s3707 = scalar_lea.vmem %s0, 1542
  %s3708 = smov 12
  %v3709 = vld [vmem:[%s3707] ss:$16 sm:%s3708]
  %vm3710 = vcmask 1043458
  %v3711 = vsel %vm3710, %v3709, %v3706
  %s3712 = scalar_lea.vmem %s0, 1542
  %s3713 = smov 48
  %v3714 = vld [vmem:[%s3712] ss:$16 sm:%s3713]
  %vm3715 = vcmask 1045508
  %v3716 = vsel %vm3715, %v3714, %v3711
  %s3717 = scalar_lea.vmem %s0, 1542
  %s3718 = smov 192
  %v3719 = vld [vmem:[%s3717] ss:$16 sm:%s3718]
  %vm3720 = vcmask 1047558
  %v3721 = vsel %vm3720, %v3719, %v3716
  %3722 = vrot.lane.b32.xlu0 %v3721, 48
  %v3723 = vpop.permute.xlu0 %3722
  %vm3724 = vcmask 458112
  %s3725 = scalar_lea.vmem %s1, 96
  %3726 = vst.msk [vmem:[%s3725] sm:$0xff] %vm3724, %v3723
  %s3727 = scalar_lea.vmem %s0, 134
  %s3728 = smov 3
  %v3729 = vld [vmem:[%s3727] ss:$16 sm:%s3728]
  %s3730 = scalar_lea.vmem %s0, 134
  %s3731 = smov 12
  %v3732 = vld [vmem:[%s3730] ss:$16 sm:%s3731]
  %vm3733 = vcmask 1043458
  %v3734 = vsel %vm3733, %v3732, %v3729
  %s3735 = scalar_lea.vmem %s0, 134
  %s3736 = smov 48
  %v3737 = vld [vmem:[%s3735] ss:$16 sm:%s3736]
  %vm3738 = vcmask 1045508
  %v3739 = vsel %vm3738, %v3737, %v3734
  %s3740 = scalar_lea.vmem %s0, 134
  %s3741 = smov 192
  %v3742 = vld [vmem:[%s3740] ss:$16 sm:%s3741]
  %vm3743 = vcmask 1047558
  %v3744 = vsel %vm3743, %v3742, %v3739
  %3745 = vrot.lane.b32.xlu0 %v3744, 48
  %v3746 = vpop.permute.xlu0 %3745
  %vm3747 = vcmask 458112
  %s3748 = scalar_lea.vmem %s1, 8
  %3749 = vst.msk [vmem:[%s3748] sm:$0xff] %vm3747, %v3746
  %s3750 = scalar_lea.vmem %s0, 646
  %s3751 = smov 3
  %v3752 = vld [vmem:[%s3750] ss:$16 sm:%s3751]
  %s3753 = scalar_lea.vmem %s0, 646
  %s3754 = smov 12
  %v3755 = vld [vmem:[%s3753] ss:$16 sm:%s3754]
  %vm3756 = vcmask 1043458
  %v3757 = vsel %vm3756, %v3755, %v3752
  %s3758 = scalar_lea.vmem %s0, 646
  %s3759 = smov 48
  %v3760 = vld [vmem:[%s3758] ss:$16 sm:%s3759]
  %vm3761 = vcmask 1045508
  %v3762 = vsel %vm3761, %v3760, %v3757
  %s3763 = scalar_lea.vmem %s0, 646
  %s3764 = smov 192
  %v3765 = vld [vmem:[%s3763] ss:$16 sm:%s3764]
  %vm3766 = vcmask 1047558
  %v3767 = vsel %vm3766, %v3765, %v3762
  %3768 = vrot.lane.b32.xlu0 %v3767, 48
  %v3769 = vpop.permute.xlu0 %3768
  %vm3770 = vcmask 458112
  %s3771 = scalar_lea.vmem %s1, 40
  %3772 = vst.msk [vmem:[%s3771] sm:$0xff] %vm3770, %v3769
  %s3773 = scalar_lea.vmem %s0, 1158
  %s3774 = smov 3
  %v3775 = vld [vmem:[%s3773] ss:$16 sm:%s3774]
  %s3776 = scalar_lea.vmem %s0, 1158
  %s3777 = smov 12
  %v3778 = vld [vmem:[%s3776] ss:$16 sm:%s3777]
  %vm3779 = vcmask 1043458
  %v3780 = vsel %vm3779, %v3778, %v3775
  %s3781 = scalar_lea.vmem %s0, 1158
  %s3782 = smov 48
  %v3783 = vld [vmem:[%s3781] ss:$16 sm:%s3782]
  %vm3784 = vcmask 1045508
  %v3785 = vsel %vm3784, %v3783, %v3780
  %s3786 = scalar_lea.vmem %s0, 1158
  %s3787 = smov 192
  %v3788 = vld [vmem:[%s3786] ss:$16 sm:%s3787]
  %vm3789 = vcmask 1047558
  %v3790 = vsel %vm3789, %v3788, %v3785
  %3791 = vrot.lane.b32.xlu0 %v3790, 48
  %v3792 = vpop.permute.xlu0 %3791
  %vm3793 = vcmask 458112
  %s3794 = scalar_lea.vmem %s1, 72
  %3795 = vst.msk [vmem:[%s3794] sm:$0xff] %vm3793, %v3792
  %s3796 = scalar_lea.vmem %s0, 1670
  %s3797 = smov 3
  %v3798 = vld [vmem:[%s3796] ss:$16 sm:%s3797]
  %s3799 = scalar_lea.vmem %s0, 1670
  %s3800 = smov 12
  %v3801 = vld [vmem:[%s3799] ss:$16 sm:%s3800]
  %vm3802 = vcmask 1043458
  %v3803 = vsel %vm3802, %v3801, %v3798
  %s3804 = scalar_lea.vmem %s0, 1670
  %s3805 = smov 48
  %v3806 = vld [vmem:[%s3804] ss:$16 sm:%s3805]
  %vm3807 = vcmask 1045508
  %v3808 = vsel %vm3807, %v3806, %v3803
  %s3809 = scalar_lea.vmem %s0, 1670
  %s3810 = smov 192
  %v3811 = vld [vmem:[%s3809] ss:$16 sm:%s3810]
  %vm3812 = vcmask 1047558
  %v3813 = vsel %vm3812, %v3811, %v3808
  %3814 = vrot.lane.b32.xlu0 %v3813, 48
  %v3815 = vpop.permute.xlu0 %3814
  %vm3816 = vcmask 458112
  %s3817 = scalar_lea.vmem %s1, 104
  %3818 = vst.msk [vmem:[%s3817] sm:$0xff] %vm3816, %v3815
  %s3819 = scalar_lea.vmem %s0, 262
  %s3820 = smov 3
  %v3821 = vld [vmem:[%s3819] ss:$16 sm:%s3820]
  %s3822 = scalar_lea.vmem %s0, 262
  %s3823 = smov 12
  %v3824 = vld [vmem:[%s3822] ss:$16 sm:%s3823]
  %vm3825 = vcmask 1043458
  %v3826 = vsel %vm3825, %v3824, %v3821
  %s3827 = scalar_lea.vmem %s0, 262
  %s3828 = smov 48
  %v3829 = vld [vmem:[%s3827] ss:$16 sm:%s3828]
  %vm3830 = vcmask 1045508
  %v3831 = vsel %vm3830, %v3829, %v3826
  %s3832 = scalar_lea.vmem %s0, 262
  %s3833 = smov 192
  %v3834 = vld [vmem:[%s3832] ss:$16 sm:%s3833]
  %vm3835 = vcmask 1047558
  %v3836 = vsel %vm3835, %v3834, %v3831
  %3837 = vrot.lane.b32.xlu0 %v3836, 48
  %v3838 = vpop.permute.xlu0 %3837
  %vm3839 = vcmask 458112
  %s3840 = scalar_lea.vmem %s1, 16
  %3841 = vst.msk [vmem:[%s3840] sm:$0xff] %vm3839, %v3838
  %s3842 = scalar_lea.vmem %s0, 774
  %s3843 = smov 3
  %v3844 = vld [vmem:[%s3842] ss:$16 sm:%s3843]
  %s3845 = scalar_lea.vmem %s0, 774
  %s3846 = smov 12
  %v3847 = vld [vmem:[%s3845] ss:$16 sm:%s3846]
  %vm3848 = vcmask 1043458
  %v3849 = vsel %vm3848, %v3847, %v3844
  %s3850 = scalar_lea.vmem %s0, 774
  %s3851 = smov 48
  %v3852 = vld [vmem:[%s3850] ss:$16 sm:%s3851]
  %vm3853 = vcmask 1045508
  %v3854 = vsel %vm3853, %v3852, %v3849
  %s3855 = scalar_lea.vmem %s0, 774
  %s3856 = smov 192
  %v3857 = vld [vmem:[%s3855] ss:$16 sm:%s3856]
  %vm3858 = vcmask 1047558
  %v3859 = vsel %vm3858, %v3857, %v3854
  %3860 = vrot.lane.b32.xlu0 %v3859, 48
  %v3861 = vpop.permute.xlu0 %3860
  %vm3862 = vcmask 458112
  %s3863 = scalar_lea.vmem %s1, 48
  %3864 = vst.msk [vmem:[%s3863] sm:$0xff] %vm3862, %v3861
  %s3865 = scalar_lea.vmem %s0, 1286
  %s3866 = smov 3
  %v3867 = vld [vmem:[%s3865] ss:$16 sm:%s3866]
  %s3868 = scalar_lea.vmem %s0, 1286
  %s3869 = smov 12
  %v3870 = vld [vmem:[%s3868] ss:$16 sm:%s3869]
  %vm3871 = vcmask 1043458
  %v3872 = vsel %vm3871, %v3870, %v3867
  %s3873 = scalar_lea.vmem %s0, 1286
  %s3874 = smov 48
  %v3875 = vld [vmem:[%s3873] ss:$16 sm:%s3874]
  %vm3876 = vcmask 1045508
  %v3877 = vsel %vm3876, %v3875, %v3872
  %s3878 = scalar_lea.vmem %s0, 1286
  %s3879 = smov 192
  %v3880 = vld [vmem:[%s3878] ss:$16 sm:%s3879]
  %vm3881 = vcmask 1047558
  %v3882 = vsel %vm3881, %v3880, %v3877
  %3883 = vrot.lane.b32.xlu0 %v3882, 48
  %v3884 = vpop.permute.xlu0 %3883
  %vm3885 = vcmask 458112
  %s3886 = scalar_lea.vmem %s1, 80
  %3887 = vst.msk [vmem:[%s3886] sm:$0xff] %vm3885, %v3884
  %s3888 = scalar_lea.vmem %s0, 1798
  %s3889 = smov 3
  %v3890 = vld [vmem:[%s3888] ss:$16 sm:%s3889]
  %s3891 = scalar_lea.vmem %s0, 1798
  %s3892 = smov 12
  %v3893 = vld [vmem:[%s3891] ss:$16 sm:%s3892]
  %vm3894 = vcmask 1043458
  %v3895 = vsel %vm3894, %v3893, %v3890
  %s3896 = scalar_lea.vmem %s0, 1798
  %s3897 = smov 48
  %v3898 = vld [vmem:[%s3896] ss:$16 sm:%s3897]
  %vm3899 = vcmask 1045508
  %v3900 = vsel %vm3899, %v3898, %v3895
  %s3901 = scalar_lea.vmem %s0, 1798
  %s3902 = smov 192
  %v3903 = vld [vmem:[%s3901] ss:$16 sm:%s3902]
  %vm3904 = vcmask 1047558
  %v3905 = vsel %vm3904, %v3903, %v3900
  %3906 = vrot.lane.b32.xlu0 %v3905, 48
  %v3907 = vpop.permute.xlu0 %3906
  %vm3908 = vcmask 458112
  %s3909 = scalar_lea.vmem %s1, 112
  %3910 = vst.msk [vmem:[%s3909] sm:$0xff] %vm3908, %v3907
  %s3911 = scalar_lea.vmem %s0, 390
  %s3912 = smov 3
  %v3913 = vld [vmem:[%s3911] ss:$16 sm:%s3912]
  %s3914 = scalar_lea.vmem %s0, 390
  %s3915 = smov 12
  %v3916 = vld [vmem:[%s3914] ss:$16 sm:%s3915]
  %vm3917 = vcmask 1043458
  %v3918 = vsel %vm3917, %v3916, %v3913
  %s3919 = scalar_lea.vmem %s0, 390
  %s3920 = smov 48
  %v3921 = vld [vmem:[%s3919] ss:$16 sm:%s3920]
  %vm3922 = vcmask 1045508
  %v3923 = vsel %vm3922, %v3921, %v3918
  %s3924 = scalar_lea.vmem %s0, 390
  %s3925 = smov 192
  %v3926 = vld [vmem:[%s3924] ss:$16 sm:%s3925]
  %vm3927 = vcmask 1047558
  %v3928 = vsel %vm3927, %v3926, %v3923
  %3929 = vrot.lane.b32.xlu0 %v3928, 48
  %v3930 = vpop.permute.xlu0 %3929
  %vm3931 = vcmask 458112
  %s3932 = scalar_lea.vmem %s1, 24
  %3933 = vst.msk [vmem:[%s3932] sm:$0xff] %vm3931, %v3930
  %s3934 = scalar_lea.vmem %s0, 902
  %s3935 = smov 3
  %v3936 = vld [vmem:[%s3934] ss:$16 sm:%s3935]
  %s3937 = scalar_lea.vmem %s0, 902
  %s3938 = smov 12
  %v3939 = vld [vmem:[%s3937] ss:$16 sm:%s3938]
  %vm3940 = vcmask 1043458
  %v3941 = vsel %vm3940, %v3939, %v3936
  %s3942 = scalar_lea.vmem %s0, 902
  %s3943 = smov 48
  %v3944 = vld [vmem:[%s3942] ss:$16 sm:%s3943]
  %vm3945 = vcmask 1045508
  %v3946 = vsel %vm3945, %v3944, %v3941
  %s3947 = scalar_lea.vmem %s0, 902
  %s3948 = smov 192
  %v3949 = vld [vmem:[%s3947] ss:$16 sm:%s3948]
  %vm3950 = vcmask 1047558
  %v3951 = vsel %vm3950, %v3949, %v3946
  %3952 = vrot.lane.b32.xlu0 %v3951, 48
  %v3953 = vpop.permute.xlu0 %3952
  %vm3954 = vcmask 458112
  %s3955 = scalar_lea.vmem %s1, 56
  %3956 = vst.msk [vmem:[%s3955] sm:$0xff] %vm3954, %v3953
  %s3957 = scalar_lea.vmem %s0, 1414
  %s3958 = smov 3
  %v3959 = vld [vmem:[%s3957] ss:$16 sm:%s3958]
  %s3960 = scalar_lea.vmem %s0, 1414
  %s3961 = smov 12
  %v3962 = vld [vmem:[%s3960] ss:$16 sm:%s3961]
  %vm3963 = vcmask 1043458
  %v3964 = vsel %vm3963, %v3962, %v3959
  %s3965 = scalar_lea.vmem %s0, 1414
  %s3966 = smov 48
  %v3967 = vld [vmem:[%s3965] ss:$16 sm:%s3966]
  %vm3968 = vcmask 1045508
  %v3969 = vsel %vm3968, %v3967, %v3964
  %s3970 = scalar_lea.vmem %s0, 1414
  %s3971 = smov 192
  %v3972 = vld [vmem:[%s3970] ss:$16 sm:%s3971]
  %vm3973 = vcmask 1047558
  %v3974 = vsel %vm3973, %v3972, %v3969
  %3975 = vrot.lane.b32.xlu0 %v3974, 48
  %v3976 = vpop.permute.xlu0 %3975
  %vm3977 = vcmask 458112
  %s3978 = scalar_lea.vmem %s1, 88
  %3979 = vst.msk [vmem:[%s3978] sm:$0xff] %vm3977, %v3976
  %s3980 = scalar_lea.vmem %s0, 1926
  %s3981 = smov 3
  %v3982 = vld [vmem:[%s3980] ss:$16 sm:%s3981]
  %s3983 = scalar_lea.vmem %s0, 1926
  %s3984 = smov 12
  %v3985 = vld [vmem:[%s3983] ss:$16 sm:%s3984]
  %vm3986 = vcmask 1043458
  %v3987 = vsel %vm3986, %v3985, %v3982
  %s3988 = scalar_lea.vmem %s0, 1926
  %s3989 = smov 48
  %v3990 = vld [vmem:[%s3988] ss:$16 sm:%s3989]
  %vm3991 = vcmask 1045508
  %v3992 = vsel %vm3991, %v3990, %v3987
  %s3993 = scalar_lea.vmem %s0, 1926
  %s3994 = smov 192
  %v3995 = vld [vmem:[%s3993] ss:$16 sm:%s3994]
  %vm3996 = vcmask 1047558
  %v3997 = vsel %vm3996, %v3995, %v3992
  %3998 = vrot.lane.b32.xlu0 %v3997, 48
  %v3999 = vpop.permute.xlu0 %3998
  %vm4000 = vcmask 458112
  %s4001 = scalar_lea.vmem %s1, 120
  %4002 = vst.msk [vmem:[%s4001] sm:$0xff] %vm4000, %v3999
  %s4003 = scalar_lea.vmem %s0, 5
  %s4004 = smov 3
  %v4005 = vld [vmem:[%s4003] ss:$16 sm:%s4004]
  %s4006 = scalar_lea.vmem %s0, 5
  %s4007 = smov 12
  %v4008 = vld [vmem:[%s4006] ss:$16 sm:%s4007]
  %vm4009 = vcmask 1043458
  %v4010 = vsel %vm4009, %v4008, %v4005
  %s4011 = scalar_lea.vmem %s0, 5
  %s4012 = smov 48
  %v4013 = vld [vmem:[%s4011] ss:$16 sm:%s4012]
  %vm4014 = vcmask 1045508
  %v4015 = vsel %vm4014, %v4013, %v4010
  %s4016 = scalar_lea.vmem %s0, 5
  %s4017 = smov 192
  %v4018 = vld [vmem:[%s4016] ss:$16 sm:%s4017]
  %vm4019 = vcmask 1047558
  %v4020 = vsel %vm4019, %v4018, %v4015
  %4021 = vrot.lane.b32.xlu0 %v4020, 40
  %v4022 = vpop.permute.xlu0 %4021
  %vm4023 = vcmask 392512
  %4024 = vst.msk [vmem:[%s1] sm:$0xff] %vm4023, %v4022
  %s4025 = scalar_lea.vmem %s0, 517
  %s4026 = smov 3
  %v4027 = vld [vmem:[%s4025] ss:$16 sm:%s4026]
  %s4028 = scalar_lea.vmem %s0, 517
  %s4029 = smov 12
  %v4030 = vld [vmem:[%s4028] ss:$16 sm:%s4029]
  %vm4031 = vcmask 1043458
  %v4032 = vsel %vm4031, %v4030, %v4027
  %s4033 = scalar_lea.vmem %s0, 517
  %s4034 = smov 48
  %v4035 = vld [vmem:[%s4033] ss:$16 sm:%s4034]
  %vm4036 = vcmask 1045508
  %v4037 = vsel %vm4036, %v4035, %v4032
  %s4038 = scalar_lea.vmem %s0, 517
  %s4039 = smov 192
  %v4040 = vld [vmem:[%s4038] ss:$16 sm:%s4039]
  %vm4041 = vcmask 1047558
  %v4042 = vsel %vm4041, %v4040, %v4037
  %4043 = vrot.lane.b32.xlu0 %v4042, 40
  %v4044 = vpop.permute.xlu0 %4043
  %vm4045 = vcmask 392512
  %s4046 = scalar_lea.vmem %s1, 32
  %4047 = vst.msk [vmem:[%s4046] sm:$0xff] %vm4045, %v4044
  %s4048 = scalar_lea.vmem %s0, 1029
  %s4049 = smov 3
  %v4050 = vld [vmem:[%s4048] ss:$16 sm:%s4049]
  %s4051 = scalar_lea.vmem %s0, 1029
  %s4052 = smov 12
  %v4053 = vld [vmem:[%s4051] ss:$16 sm:%s4052]
  %vm4054 = vcmask 1043458
  %v4055 = vsel %vm4054, %v4053, %v4050
  %s4056 = scalar_lea.vmem %s0, 1029
  %s4057 = smov 48
  %v4058 = vld [vmem:[%s4056] ss:$16 sm:%s4057]
  %vm4059 = vcmask 1045508
  %v4060 = vsel %vm4059, %v4058, %v4055
  %s4061 = scalar_lea.vmem %s0, 1029
  %s4062 = smov 192
  %v4063 = vld [vmem:[%s4061] ss:$16 sm:%s4062]
  %vm4064 = vcmask 1047558
  %v4065 = vsel %vm4064, %v4063, %v4060
  %4066 = vrot.lane.b32.xlu0 %v4065, 40
  %v4067 = vpop.permute.xlu0 %4066
  %vm4068 = vcmask 392512
  %s4069 = scalar_lea.vmem %s1, 64
  %4070 = vst.msk [vmem:[%s4069] sm:$0xff] %vm4068, %v4067
  %s4071 = scalar_lea.vmem %s0, 1541
  %s4072 = smov 3
  %v4073 = vld [vmem:[%s4071] ss:$16 sm:%s4072]
  %s4074 = scalar_lea.vmem %s0, 1541
  %s4075 = smov 12
  %v4076 = vld [vmem:[%s4074] ss:$16 sm:%s4075]
  %vm4077 = vcmask 1043458
  %v4078 = vsel %vm4077, %v4076, %v4073
  %s4079 = scalar_lea.vmem %s0, 1541
  %s4080 = smov 48
  %v4081 = vld [vmem:[%s4079] ss:$16 sm:%s4080]
  %vm4082 = vcmask 1045508
  %v4083 = vsel %vm4082, %v4081, %v4078
  %s4084 = scalar_lea.vmem %s0, 1541
  %s4085 = smov 192
  %v4086 = vld [vmem:[%s4084] ss:$16 sm:%s4085]
  %vm4087 = vcmask 1047558
  %v4088 = vsel %vm4087, %v4086, %v4083
  %4089 = vrot.lane.b32.xlu0 %v4088, 40
  %v4090 = vpop.permute.xlu0 %4089
  %vm4091 = vcmask 392512
  %s4092 = scalar_lea.vmem %s1, 96
  %4093 = vst.msk [vmem:[%s4092] sm:$0xff] %vm4091, %v4090
  %s4094 = scalar_lea.vmem %s0, 133
  %s4095 = smov 3
  %v4096 = vld [vmem:[%s4094] ss:$16 sm:%s4095]
  %s4097 = scalar_lea.vmem %s0, 133
  %s4098 = smov 12
  %v4099 = vld [vmem:[%s4097] ss:$16 sm:%s4098]
  %vm4100 = vcmask 1043458
  %v4101 = vsel %vm4100, %v4099, %v4096
  %s4102 = scalar_lea.vmem %s0, 133
  %s4103 = smov 48
  %v4104 = vld [vmem:[%s4102] ss:$16 sm:%s4103]
  %vm4105 = vcmask 1045508
  %v4106 = vsel %vm4105, %v4104, %v4101
  %s4107 = scalar_lea.vmem %s0, 133
  %s4108 = smov 192
  %v4109 = vld [vmem:[%s4107] ss:$16 sm:%s4108]
  %vm4110 = vcmask 1047558
  %v4111 = vsel %vm4110, %v4109, %v4106
  %4112 = vrot.lane.b32.xlu0 %v4111, 40
  %v4113 = vpop.permute.xlu0 %4112
  %vm4114 = vcmask 392512
  %s4115 = scalar_lea.vmem %s1, 8
  %4116 = vst.msk [vmem:[%s4115] sm:$0xff] %vm4114, %v4113
  %s4117 = scalar_lea.vmem %s0, 645
  %s4118 = smov 3
  %v4119 = vld [vmem:[%s4117] ss:$16 sm:%s4118]
  %s4120 = scalar_lea.vmem %s0, 645
  %s4121 = smov 12
  %v4122 = vld [vmem:[%s4120] ss:$16 sm:%s4121]
  %vm4123 = vcmask 1043458
  %v4124 = vsel %vm4123, %v4122, %v4119
  %s4125 = scalar_lea.vmem %s0, 645
  %s4126 = smov 48
  %v4127 = vld [vmem:[%s4125] ss:$16 sm:%s4126]
  %vm4128 = vcmask 1045508
  %v4129 = vsel %vm4128, %v4127, %v4124
  %s4130 = scalar_lea.vmem %s0, 645
  %s4131 = smov 192
  %v4132 = vld [vmem:[%s4130] ss:$16 sm:%s4131]
  %vm4133 = vcmask 1047558
  %v4134 = vsel %vm4133, %v4132, %v4129
  %4135 = vrot.lane.b32.xlu0 %v4134, 40
  %v4136 = vpop.permute.xlu0 %4135
  %vm4137 = vcmask 392512
  %s4138 = scalar_lea.vmem %s1, 40
  %4139 = vst.msk [vmem:[%s4138] sm:$0xff] %vm4137, %v4136
  %s4140 = scalar_lea.vmem %s0, 1157
  %s4141 = smov 3
  %v4142 = vld [vmem:[%s4140] ss:$16 sm:%s4141]
  %s4143 = scalar_lea.vmem %s0, 1157
  %s4144 = smov 12
  %v4145 = vld [vmem:[%s4143] ss:$16 sm:%s4144]
  %vm4146 = vcmask 1043458
  %v4147 = vsel %vm4146, %v4145, %v4142
  %s4148 = scalar_lea.vmem %s0, 1157
  %s4149 = smov 48
  %v4150 = vld [vmem:[%s4148] ss:$16 sm:%s4149]
  %vm4151 = vcmask 1045508
  %v4152 = vsel %vm4151, %v4150, %v4147
  %s4153 = scalar_lea.vmem %s0, 1157
  %s4154 = smov 192
  %v4155 = vld [vmem:[%s4153] ss:$16 sm:%s4154]
  %vm4156 = vcmask 1047558
  %v4157 = vsel %vm4156, %v4155, %v4152
  %4158 = vrot.lane.b32.xlu0 %v4157, 40
  %v4159 = vpop.permute.xlu0 %4158
  %vm4160 = vcmask 392512
  %s4161 = scalar_lea.vmem %s1, 72
  %4162 = vst.msk [vmem:[%s4161] sm:$0xff] %vm4160, %v4159
  %s4163 = scalar_lea.vmem %s0, 1669
  %s4164 = smov 3
  %v4165 = vld [vmem:[%s4163] ss:$16 sm:%s4164]
  %s4166 = scalar_lea.vmem %s0, 1669
  %s4167 = smov 12
  %v4168 = vld [vmem:[%s4166] ss:$16 sm:%s4167]
  %vm4169 = vcmask 1043458
  %v4170 = vsel %vm4169, %v4168, %v4165
  %s4171 = scalar_lea.vmem %s0, 1669
  %s4172 = smov 48
  %v4173 = vld [vmem:[%s4171] ss:$16 sm:%s4172]
  %vm4174 = vcmask 1045508
  %v4175 = vsel %vm4174, %v4173, %v4170
  %s4176 = scalar_lea.vmem %s0, 1669
  %s4177 = smov 192
  %v4178 = vld [vmem:[%s4176] ss:$16 sm:%s4177]
  %vm4179 = vcmask 1047558
  %v4180 = vsel %vm4179, %v4178, %v4175
  %4181 = vrot.lane.b32.xlu0 %v4180, 40
  %v4182 = vpop.permute.xlu0 %4181
  %vm4183 = vcmask 392512
  %s4184 = scalar_lea.vmem %s1, 104
  %4185 = vst.msk [vmem:[%s4184] sm:$0xff] %vm4183, %v4182
  %s4186 = scalar_lea.vmem %s0, 261
  %s4187 = smov 3
  %v4188 = vld [vmem:[%s4186] ss:$16 sm:%s4187]
  %s4189 = scalar_lea.vmem %s0, 261
  %s4190 = smov 12
  %v4191 = vld [vmem:[%s4189] ss:$16 sm:%s4190]
  %vm4192 = vcmask 1043458
  %v4193 = vsel %vm4192, %v4191, %v4188
  %s4194 = scalar_lea.vmem %s0, 261
  %s4195 = smov 48
  %v4196 = vld [vmem:[%s4194] ss:$16 sm:%s4195]
  %vm4197 = vcmask 1045508
  %v4198 = vsel %vm4197, %v4196, %v4193
  %s4199 = scalar_lea.vmem %s0, 261
  %s4200 = smov 192
  %v4201 = vld [vmem:[%s4199] ss:$16 sm:%s4200]
  %vm4202 = vcmask 1047558
  %v4203 = vsel %vm4202, %v4201, %v4198
  %4204 = vrot.lane.b32.xlu0 %v4203, 40
  %v4205 = vpop.permute.xlu0 %4204
  %vm4206 = vcmask 392512
  %s4207 = scalar_lea.vmem %s1, 16
  %4208 = vst.msk [vmem:[%s4207] sm:$0xff] %vm4206, %v4205
  %s4209 = scalar_lea.vmem %s0, 773
  %s4210 = smov 3
  %v4211 = vld [vmem:[%s4209] ss:$16 sm:%s4210]
  %s4212 = scalar_lea.vmem %s0, 773
  %s4213 = smov 12
  %v4214 = vld [vmem:[%s4212] ss:$16 sm:%s4213]
  %vm4215 = vcmask 1043458
  %v4216 = vsel %vm4215, %v4214, %v4211
  %s4217 = scalar_lea.vmem %s0, 773
  %s4218 = smov 48
  %v4219 = vld [vmem:[%s4217] ss:$16 sm:%s4218]
  %vm4220 = vcmask 1045508
  %v4221 = vsel %vm4220, %v4219, %v4216
  %s4222 = scalar_lea.vmem %s0, 773
  %s4223 = smov 192
  %v4224 = vld [vmem:[%s4222] ss:$16 sm:%s4223]
  %vm4225 = vcmask 1047558
  %v4226 = vsel %vm4225, %v4224, %v4221
  %4227 = vrot.lane.b32.xlu0 %v4226, 40
  %v4228 = vpop.permute.xlu0 %4227
  %vm4229 = vcmask 392512
  %s4230 = scalar_lea.vmem %s1, 48
  %4231 = vst.msk [vmem:[%s4230] sm:$0xff] %vm4229, %v4228
  %s4232 = scalar_lea.vmem %s0, 1285
  %s4233 = smov 3
  %v4234 = vld [vmem:[%s4232] ss:$16 sm:%s4233]
  %s4235 = scalar_lea.vmem %s0, 1285
  %s4236 = smov 12
  %v4237 = vld [vmem:[%s4235] ss:$16 sm:%s4236]
  %vm4238 = vcmask 1043458
  %v4239 = vsel %vm4238, %v4237, %v4234
  %s4240 = scalar_lea.vmem %s0, 1285
  %s4241 = smov 48
  %v4242 = vld [vmem:[%s4240] ss:$16 sm:%s4241]
  %vm4243 = vcmask 1045508
  %v4244 = vsel %vm4243, %v4242, %v4239
  %s4245 = scalar_lea.vmem %s0, 1285
  %s4246 = smov 192
  %v4247 = vld [vmem:[%s4245] ss:$16 sm:%s4246]
  %vm4248 = vcmask 1047558
  %v4249 = vsel %vm4248, %v4247, %v4244
  %4250 = vrot.lane.b32.xlu0 %v4249, 40
  %v4251 = vpop.permute.xlu0 %4250
  %vm4252 = vcmask 392512
  %s4253 = scalar_lea.vmem %s1, 80
  %4254 = vst.msk [vmem:[%s4253] sm:$0xff] %vm4252, %v4251
  %s4255 = scalar_lea.vmem %s0, 1797
  %s4256 = smov 3
  %v4257 = vld [vmem:[%s4255] ss:$16 sm:%s4256]
  %s4258 = scalar_lea.vmem %s0, 1797
  %s4259 = smov 12
  %v4260 = vld [vmem:[%s4258] ss:$16 sm:%s4259]
  %vm4261 = vcmask 1043458
  %v4262 = vsel %vm4261, %v4260, %v4257
  %s4263 = scalar_lea.vmem %s0, 1797
  %s4264 = smov 48
  %v4265 = vld [vmem:[%s4263] ss:$16 sm:%s4264]
  %vm4266 = vcmask 1045508
  %v4267 = vsel %vm4266, %v4265, %v4262
  %s4268 = scalar_lea.vmem %s0, 1797
  %s4269 = smov 192
  %v4270 = vld [vmem:[%s4268] ss:$16 sm:%s4269]
  %vm4271 = vcmask 1047558
  %v4272 = vsel %vm4271, %v4270, %v4267
  %4273 = vrot.lane.b32.xlu0 %v4272, 40
  %v4274 = vpop.permute.xlu0 %4273
  %vm4275 = vcmask 392512
  %s4276 = scalar_lea.vmem %s1, 112
  %4277 = vst.msk [vmem:[%s4276] sm:$0xff] %vm4275, %v4274
  %s4278 = scalar_lea.vmem %s0, 389
  %s4279 = smov 3
  %v4280 = vld [vmem:[%s4278] ss:$16 sm:%s4279]
  %s4281 = scalar_lea.vmem %s0, 389
  %s4282 = smov 12
  %v4283 = vld [vmem:[%s4281] ss:$16 sm:%s4282]
  %vm4284 = vcmask 1043458
  %v4285 = vsel %vm4284, %v4283, %v4280
  %s4286 = scalar_lea.vmem %s0, 389
  %s4287 = smov 48
  %v4288 = vld [vmem:[%s4286] ss:$16 sm:%s4287]
  %vm4289 = vcmask 1045508
  %v4290 = vsel %vm4289, %v4288, %v4285
  %s4291 = scalar_lea.vmem %s0, 389
  %s4292 = smov 192
  %v4293 = vld [vmem:[%s4291] ss:$16 sm:%s4292]
  %vm4294 = vcmask 1047558
  %v4295 = vsel %vm4294, %v4293, %v4290
  %4296 = vrot.lane.b32.xlu0 %v4295, 40
  %v4297 = vpop.permute.xlu0 %4296
  %vm4298 = vcmask 392512
  %s4299 = scalar_lea.vmem %s1, 24
  %4300 = vst.msk [vmem:[%s4299] sm:$0xff] %vm4298, %v4297
  %s4301 = scalar_lea.vmem %s0, 901
  %s4302 = smov 3
  %v4303 = vld [vmem:[%s4301] ss:$16 sm:%s4302]
  %s4304 = scalar_lea.vmem %s0, 901
  %s4305 = smov 12
  %v4306 = vld [vmem:[%s4304] ss:$16 sm:%s4305]
  %vm4307 = vcmask 1043458
  %v4308 = vsel %vm4307, %v4306, %v4303
  %s4309 = scalar_lea.vmem %s0, 901
  %s4310 = smov 48
  %v4311 = vld [vmem:[%s4309] ss:$16 sm:%s4310]
  %vm4312 = vcmask 1045508
  %v4313 = vsel %vm4312, %v4311, %v4308
  %s4314 = scalar_lea.vmem %s0, 901
  %s4315 = smov 192
  %v4316 = vld [vmem:[%s4314] ss:$16 sm:%s4315]
  %vm4317 = vcmask 1047558
  %v4318 = vsel %vm4317, %v4316, %v4313
  %4319 = vrot.lane.b32.xlu0 %v4318, 40
  %v4320 = vpop.permute.xlu0 %4319
  %vm4321 = vcmask 392512
  %s4322 = scalar_lea.vmem %s1, 56
  %4323 = vst.msk [vmem:[%s4322] sm:$0xff] %vm4321, %v4320
  %s4324 = scalar_lea.vmem %s0, 1413
  %s4325 = smov 3
  %v4326 = vld [vmem:[%s4324] ss:$16 sm:%s4325]
  %s4327 = scalar_lea.vmem %s0, 1413
  %s4328 = smov 12
  %v4329 = vld [vmem:[%s4327] ss:$16 sm:%s4328]
  %vm4330 = vcmask 1043458
  %v4331 = vsel %vm4330, %v4329, %v4326
  %s4332 = scalar_lea.vmem %s0, 1413
  %s4333 = smov 48
  %v4334 = vld [vmem:[%s4332] ss:$16 sm:%s4333]
  %vm4335 = vcmask 1045508
  %v4336 = vsel %vm4335, %v4334, %v4331
  %s4337 = scalar_lea.vmem %s0, 1413
  %s4338 = smov 192
  %v4339 = vld [vmem:[%s4337] ss:$16 sm:%s4338]
  %vm4340 = vcmask 1047558
  %v4341 = vsel %vm4340, %v4339, %v4336
  %4342 = vrot.lane.b32.xlu0 %v4341, 40
  %v4343 = vpop.permute.xlu0 %4342
  %vm4344 = vcmask 392512
  %s4345 = scalar_lea.vmem %s1, 88
  %4346 = vst.msk [vmem:[%s4345] sm:$0xff] %vm4344, %v4343
  %s4347 = scalar_lea.vmem %s0, 1925
  %s4348 = smov 3
  %v4349 = vld [vmem:[%s4347] ss:$16 sm:%s4348]
  %s4350 = scalar_lea.vmem %s0, 1925
  %s4351 = smov 12
  %v4352 = vld [vmem:[%s4350] ss:$16 sm:%s4351]
  %vm4353 = vcmask 1043458
  %v4354 = vsel %vm4353, %v4352, %v4349
  %s4355 = scalar_lea.vmem %s0, 1925
  %s4356 = smov 48
  %v4357 = vld [vmem:[%s4355] ss:$16 sm:%s4356]
  %vm4358 = vcmask 1045508
  %v4359 = vsel %vm4358, %v4357, %v4354
  %s4360 = scalar_lea.vmem %s0, 1925
  %s4361 = smov 192
  %v4362 = vld [vmem:[%s4360] ss:$16 sm:%s4361]
  %vm4363 = vcmask 1047558
  %v4364 = vsel %vm4363, %v4362, %v4359
  %4365 = vrot.lane.b32.xlu0 %v4364, 40
  %v4366 = vpop.permute.xlu0 %4365
  %vm4367 = vcmask 392512
  %s4368 = scalar_lea.vmem %s1, 120
  %4369 = vst.msk [vmem:[%s4368] sm:$0xff] %vm4367, %v4366
  %s4370 = scalar_lea.vmem %s0, 4
  %s4371 = smov 3
  %v4372 = vld [vmem:[%s4370] ss:$16 sm:%s4371]
  %s4373 = scalar_lea.vmem %s0, 4
  %s4374 = smov 12
  %v4375 = vld [vmem:[%s4373] ss:$16 sm:%s4374]
  %vm4376 = vcmask 1043458
  %v4377 = vsel %vm4376, %v4375, %v4372
  %s4378 = scalar_lea.vmem %s0, 4
  %s4379 = smov 48
  %v4380 = vld [vmem:[%s4378] ss:$16 sm:%s4379]
  %vm4381 = vcmask 1045508
  %v4382 = vsel %vm4381, %v4380, %v4377
  %s4383 = scalar_lea.vmem %s0, 4
  %s4384 = smov 192
  %v4385 = vld [vmem:[%s4383] ss:$16 sm:%s4384]
  %vm4386 = vcmask 1047558
  %v4387 = vsel %vm4386, %v4385, %v4382
  %4388 = vrot.lane.b32.xlu0 %v4387, 32
  %v4389 = vpop.permute.xlu0 %4388
  %vm4390 = vcmask 326912
  %4391 = vst.msk [vmem:[%s1] sm:$0xff] %vm4390, %v4389
  %s4392 = scalar_lea.vmem %s0, 516
  %s4393 = smov 3
  %v4394 = vld [vmem:[%s4392] ss:$16 sm:%s4393]
  %s4395 = scalar_lea.vmem %s0, 516
  %s4396 = smov 12
  %v4397 = vld [vmem:[%s4395] ss:$16 sm:%s4396]
  %vm4398 = vcmask 1043458
  %v4399 = vsel %vm4398, %v4397, %v4394
  %s4400 = scalar_lea.vmem %s0, 516
  %s4401 = smov 48
  %v4402 = vld [vmem:[%s4400] ss:$16 sm:%s4401]
  %vm4403 = vcmask 1045508
  %v4404 = vsel %vm4403, %v4402, %v4399
  %s4405 = scalar_lea.vmem %s0, 516
  %s4406 = smov 192
  %v4407 = vld [vmem:[%s4405] ss:$16 sm:%s4406]
  %vm4408 = vcmask 1047558
  %v4409 = vsel %vm4408, %v4407, %v4404
  %4410 = vrot.lane.b32.xlu0 %v4409, 32
  %v4411 = vpop.permute.xlu0 %4410
  %vm4412 = vcmask 326912
  %s4413 = scalar_lea.vmem %s1, 32
  %4414 = vst.msk [vmem:[%s4413] sm:$0xff] %vm4412, %v4411
  %s4415 = scalar_lea.vmem %s0, 1028
  %s4416 = smov 3
  %v4417 = vld [vmem:[%s4415] ss:$16 sm:%s4416]
  %s4418 = scalar_lea.vmem %s0, 1028
  %s4419 = smov 12
  %v4420 = vld [vmem:[%s4418] ss:$16 sm:%s4419]
  %vm4421 = vcmask 1043458
  %v4422 = vsel %vm4421, %v4420, %v4417
  %s4423 = scalar_lea.vmem %s0, 1028
  %s4424 = smov 48
  %v4425 = vld [vmem:[%s4423] ss:$16 sm:%s4424]
  %vm4426 = vcmask 1045508
  %v4427 = vsel %vm4426, %v4425, %v4422
  %s4428 = scalar_lea.vmem %s0, 1028
  %s4429 = smov 192
  %v4430 = vld [vmem:[%s4428] ss:$16 sm:%s4429]
  %vm4431 = vcmask 1047558
  %v4432 = vsel %vm4431, %v4430, %v4427
  %4433 = vrot.lane.b32.xlu0 %v4432, 32
  %v4434 = vpop.permute.xlu0 %4433
  %vm4435 = vcmask 326912
  %s4436 = scalar_lea.vmem %s1, 64
  %4437 = vst.msk [vmem:[%s4436] sm:$0xff] %vm4435, %v4434
  %s4438 = scalar_lea.vmem %s0, 1540
  %s4439 = smov 3
  %v4440 = vld [vmem:[%s4438] ss:$16 sm:%s4439]
  %s4441 = scalar_lea.vmem %s0, 1540
  %s4442 = smov 12
  %v4443 = vld [vmem:[%s4441] ss:$16 sm:%s4442]
  %vm4444 = vcmask 1043458
  %v4445 = vsel %vm4444, %v4443, %v4440
  %s4446 = scalar_lea.vmem %s0, 1540
  %s4447 = smov 48
  %v4448 = vld [vmem:[%s4446] ss:$16 sm:%s4447]
  %vm4449 = vcmask 1045508
  %v4450 = vsel %vm4449, %v4448, %v4445
  %s4451 = scalar_lea.vmem %s0, 1540
  %s4452 = smov 192
  %v4453 = vld [vmem:[%s4451] ss:$16 sm:%s4452]
  %vm4454 = vcmask 1047558
  %v4455 = vsel %vm4454, %v4453, %v4450
  %4456 = vrot.lane.b32.xlu0 %v4455, 32
  %v4457 = vpop.permute.xlu0 %4456
  %vm4458 = vcmask 326912
  %s4459 = scalar_lea.vmem %s1, 96
  %4460 = vst.msk [vmem:[%s4459] sm:$0xff] %vm4458, %v4457
  %s4461 = scalar_lea.vmem %s0, 132
  %s4462 = smov 3
  %v4463 = vld [vmem:[%s4461] ss:$16 sm:%s4462]
  %s4464 = scalar_lea.vmem %s0, 132
  %s4465 = smov 12
  %v4466 = vld [vmem:[%s4464] ss:$16 sm:%s4465]
  %vm4467 = vcmask 1043458
  %v4468 = vsel %vm4467, %v4466, %v4463
  %s4469 = scalar_lea.vmem %s0, 132
  %s4470 = smov 48
  %v4471 = vld [vmem:[%s4469] ss:$16 sm:%s4470]
  %vm4472 = vcmask 1045508
  %v4473 = vsel %vm4472, %v4471, %v4468
  %s4474 = scalar_lea.vmem %s0, 132
  %s4475 = smov 192
  %v4476 = vld [vmem:[%s4474] ss:$16 sm:%s4475]
  %vm4477 = vcmask 1047558
  %v4478 = vsel %vm4477, %v4476, %v4473
  %4479 = vrot.lane.b32.xlu0 %v4478, 32
  %v4480 = vpop.permute.xlu0 %4479
  %vm4481 = vcmask 326912
  %s4482 = scalar_lea.vmem %s1, 8
  %4483 = vst.msk [vmem:[%s4482] sm:$0xff] %vm4481, %v4480
  %s4484 = scalar_lea.vmem %s0, 644
  %s4485 = smov 3
  %v4486 = vld [vmem:[%s4484] ss:$16 sm:%s4485]
  %s4487 = scalar_lea.vmem %s0, 644
  %s4488 = smov 12
  %v4489 = vld [vmem:[%s4487] ss:$16 sm:%s4488]
  %vm4490 = vcmask 1043458
  %v4491 = vsel %vm4490, %v4489, %v4486
  %s4492 = scalar_lea.vmem %s0, 644
  %s4493 = smov 48
  %v4494 = vld [vmem:[%s4492] ss:$16 sm:%s4493]
  %vm4495 = vcmask 1045508
  %v4496 = vsel %vm4495, %v4494, %v4491
  %s4497 = scalar_lea.vmem %s0, 644
  %s4498 = smov 192
  %v4499 = vld [vmem:[%s4497] ss:$16 sm:%s4498]
  %vm4500 = vcmask 1047558
  %v4501 = vsel %vm4500, %v4499, %v4496
  %4502 = vrot.lane.b32.xlu0 %v4501, 32
  %v4503 = vpop.permute.xlu0 %4502
  %vm4504 = vcmask 326912
  %s4505 = scalar_lea.vmem %s1, 40
  %4506 = vst.msk [vmem:[%s4505] sm:$0xff] %vm4504, %v4503
  %s4507 = scalar_lea.vmem %s0, 1156
  %s4508 = smov 3
  %v4509 = vld [vmem:[%s4507] ss:$16 sm:%s4508]
  %s4510 = scalar_lea.vmem %s0, 1156
  %s4511 = smov 12
  %v4512 = vld [vmem:[%s4510] ss:$16 sm:%s4511]
  %vm4513 = vcmask 1043458
  %v4514 = vsel %vm4513, %v4512, %v4509
  %s4515 = scalar_lea.vmem %s0, 1156
  %s4516 = smov 48
  %v4517 = vld [vmem:[%s4515] ss:$16 sm:%s4516]
  %vm4518 = vcmask 1045508
  %v4519 = vsel %vm4518, %v4517, %v4514
  %s4520 = scalar_lea.vmem %s0, 1156
  %s4521 = smov 192
  %v4522 = vld [vmem:[%s4520] ss:$16 sm:%s4521]
  %vm4523 = vcmask 1047558
  %v4524 = vsel %vm4523, %v4522, %v4519
  %4525 = vrot.lane.b32.xlu0 %v4524, 32
  %v4526 = vpop.permute.xlu0 %4525
  %vm4527 = vcmask 326912
  %s4528 = scalar_lea.vmem %s1, 72
  %4529 = vst.msk [vmem:[%s4528] sm:$0xff] %vm4527, %v4526
  %s4530 = scalar_lea.vmem %s0, 1668
  %s4531 = smov 3
  %v4532 = vld [vmem:[%s4530] ss:$16 sm:%s4531]
  %s4533 = scalar_lea.vmem %s0, 1668
  %s4534 = smov 12
  %v4535 = vld [vmem:[%s4533] ss:$16 sm:%s4534]
  %vm4536 = vcmask 1043458
  %v4537 = vsel %vm4536, %v4535, %v4532
  %s4538 = scalar_lea.vmem %s0, 1668
  %s4539 = smov 48
  %v4540 = vld [vmem:[%s4538] ss:$16 sm:%s4539]
  %vm4541 = vcmask 1045508
  %v4542 = vsel %vm4541, %v4540, %v4537
  %s4543 = scalar_lea.vmem %s0, 1668
  %s4544 = smov 192
  %v4545 = vld [vmem:[%s4543] ss:$16 sm:%s4544]
  %vm4546 = vcmask 1047558
  %v4547 = vsel %vm4546, %v4545, %v4542
  %4548 = vrot.lane.b32.xlu0 %v4547, 32
  %v4549 = vpop.permute.xlu0 %4548
  %vm4550 = vcmask 326912
  %s4551 = scalar_lea.vmem %s1, 104
  %4552 = vst.msk [vmem:[%s4551] sm:$0xff] %vm4550, %v4549
  %s4553 = scalar_lea.vmem %s0, 260
  %s4554 = smov 3
  %v4555 = vld [vmem:[%s4553] ss:$16 sm:%s4554]
  %s4556 = scalar_lea.vmem %s0, 260
  %s4557 = smov 12
  %v4558 = vld [vmem:[%s4556] ss:$16 sm:%s4557]
  %vm4559 = vcmask 1043458
  %v4560 = vsel %vm4559, %v4558, %v4555
  %s4561 = scalar_lea.vmem %s0, 260
  %s4562 = smov 48
  %v4563 = vld [vmem:[%s4561] ss:$16 sm:%s4562]
  %vm4564 = vcmask 1045508
  %v4565 = vsel %vm4564, %v4563, %v4560
  %s4566 = scalar_lea.vmem %s0, 260
  %s4567 = smov 192
  %v4568 = vld [vmem:[%s4566] ss:$16 sm:%s4567]
  %vm4569 = vcmask 1047558
  %v4570 = vsel %vm4569, %v4568, %v4565
  %4571 = vrot.lane.b32.xlu0 %v4570, 32
  %v4572 = vpop.permute.xlu0 %4571
  %vm4573 = vcmask 326912
  %s4574 = scalar_lea.vmem %s1, 16
  %4575 = vst.msk [vmem:[%s4574] sm:$0xff] %vm4573, %v4572
  %s4576 = scalar_lea.vmem %s0, 772
  %s4577 = smov 3
  %v4578 = vld [vmem:[%s4576] ss:$16 sm:%s4577]
  %s4579 = scalar_lea.vmem %s0, 772
  %s4580 = smov 12
  %v4581 = vld [vmem:[%s4579] ss:$16 sm:%s4580]
  %vm4582 = vcmask 1043458
  %v4583 = vsel %vm4582, %v4581, %v4578
  %s4584 = scalar_lea.vmem %s0, 772
  %s4585 = smov 48
  %v4586 = vld [vmem:[%s4584] ss:$16 sm:%s4585]
  %vm4587 = vcmask 1045508
  %v4588 = vsel %vm4587, %v4586, %v4583
  %s4589 = scalar_lea.vmem %s0, 772
  %s4590 = smov 192
  %v4591 = vld [vmem:[%s4589] ss:$16 sm:%s4590]
  %vm4592 = vcmask 1047558
  %v4593 = vsel %vm4592, %v4591, %v4588
  %4594 = vrot.lane.b32.xlu0 %v4593, 32
  %v4595 = vpop.permute.xlu0 %4594
  %vm4596 = vcmask 326912
  %s4597 = scalar_lea.vmem %s1, 48
  %4598 = vst.msk [vmem:[%s4597] sm:$0xff] %vm4596, %v4595
  %s4599 = scalar_lea.vmem %s0, 1284
  %s4600 = smov 3
  %v4601 = vld [vmem:[%s4599] ss:$16 sm:%s4600]
  %s4602 = scalar_lea.vmem %s0, 1284
  %s4603 = smov 12
  %v4604 = vld [vmem:[%s4602] ss:$16 sm:%s4603]
  %vm4605 = vcmask 1043458
  %v4606 = vsel %vm4605, %v4604, %v4601
  %s4607 = scalar_lea.vmem %s0, 1284
  %s4608 = smov 48
  %v4609 = vld [vmem:[%s4607] ss:$16 sm:%s4608]
  %vm4610 = vcmask 1045508
  %v4611 = vsel %vm4610, %v4609, %v4606
  %s4612 = scalar_lea.vmem %s0, 1284
  %s4613 = smov 192
  %v4614 = vld [vmem:[%s4612] ss:$16 sm:%s4613]
  %vm4615 = vcmask 1047558
  %v4616 = vsel %vm4615, %v4614, %v4611
  %4617 = vrot.lane.b32.xlu0 %v4616, 32
  %v4618 = vpop.permute.xlu0 %4617
  %vm4619 = vcmask 326912
  %s4620 = scalar_lea.vmem %s1, 80
  %4621 = vst.msk [vmem:[%s4620] sm:$0xff] %vm4619, %v4618
  %s4622 = scalar_lea.vmem %s0, 1796
  %s4623 = smov 3
  %v4624 = vld [vmem:[%s4622] ss:$16 sm:%s4623]
  %s4625 = scalar_lea.vmem %s0, 1796
  %s4626 = smov 12
  %v4627 = vld [vmem:[%s4625] ss:$16 sm:%s4626]
  %vm4628 = vcmask 1043458
  %v4629 = vsel %vm4628, %v4627, %v4624
  %s4630 = scalar_lea.vmem %s0, 1796
  %s4631 = smov 48
  %v4632 = vld [vmem:[%s4630] ss:$16 sm:%s4631]
  %vm4633 = vcmask 1045508
  %v4634 = vsel %vm4633, %v4632, %v4629
  %s4635 = scalar_lea.vmem %s0, 1796
  %s4636 = smov 192
  %v4637 = vld [vmem:[%s4635] ss:$16 sm:%s4636]
  %vm4638 = vcmask 1047558
  %v4639 = vsel %vm4638, %v4637, %v4634
  %4640 = vrot.lane.b32.xlu0 %v4639, 32
  %v4641 = vpop.permute.xlu0 %4640
  %vm4642 = vcmask 326912
  %s4643 = scalar_lea.vmem %s1, 112
  %4644 = vst.msk [vmem:[%s4643] sm:$0xff] %vm4642, %v4641
  %s4645 = scalar_lea.vmem %s0, 388
  %s4646 = smov 3
  %v4647 = vld [vmem:[%s4645] ss:$16 sm:%s4646]
  %s4648 = scalar_lea.vmem %s0, 388
  %s4649 = smov 12
  %v4650 = vld [vmem:[%s4648] ss:$16 sm:%s4649]
  %vm4651 = vcmask 1043458
  %v4652 = vsel %vm4651, %v4650, %v4647
  %s4653 = scalar_lea.vmem %s0, 388
  %s4654 = smov 48
  %v4655 = vld [vmem:[%s4653] ss:$16 sm:%s4654]
  %vm4656 = vcmask 1045508
  %v4657 = vsel %vm4656, %v4655, %v4652
  %s4658 = scalar_lea.vmem %s0, 388
  %s4659 = smov 192
  %v4660 = vld [vmem:[%s4658] ss:$16 sm:%s4659]
  %vm4661 = vcmask 1047558
  %v4662 = vsel %vm4661, %v4660, %v4657
  %4663 = vrot.lane.b32.xlu0 %v4662, 32
  %v4664 = vpop.permute.xlu0 %4663
  %vm4665 = vcmask 326912
  %s4666 = scalar_lea.vmem %s1, 24
  %4667 = vst.msk [vmem:[%s4666] sm:$0xff] %vm4665, %v4664
  %s4668 = scalar_lea.vmem %s0, 900
  %s4669 = smov 3
  %v4670 = vld [vmem:[%s4668] ss:$16 sm:%s4669]
  %s4671 = scalar_lea.vmem %s0, 900
  %s4672 = smov 12
  %v4673 = vld [vmem:[%s4671] ss:$16 sm:%s4672]
  %vm4674 = vcmask 1043458
  %v4675 = vsel %vm4674, %v4673, %v4670
  %s4676 = scalar_lea.vmem %s0, 900
  %s4677 = smov 48
  %v4678 = vld [vmem:[%s4676] ss:$16 sm:%s4677]
  %vm4679 = vcmask 1045508
  %v4680 = vsel %vm4679, %v4678, %v4675
  %s4681 = scalar_lea.vmem %s0, 900
  %s4682 = smov 192
  %v4683 = vld [vmem:[%s4681] ss:$16 sm:%s4682]
  %vm4684 = vcmask 1047558
  %v4685 = vsel %vm4684, %v4683, %v4680
  %4686 = vrot.lane.b32.xlu0 %v4685, 32
  %v4687 = vpop.permute.xlu0 %4686
  %vm4688 = vcmask 326912
  %s4689 = scalar_lea.vmem %s1, 56
  %4690 = vst.msk [vmem:[%s4689] sm:$0xff] %vm4688, %v4687
  %s4691 = scalar_lea.vmem %s0, 1412
  %s4692 = smov 3
  %v4693 = vld [vmem:[%s4691] ss:$16 sm:%s4692]
  %s4694 = scalar_lea.vmem %s0, 1412
  %s4695 = smov 12
  %v4696 = vld [vmem:[%s4694] ss:$16 sm:%s4695]
  %vm4697 = vcmask 1043458
  %v4698 = vsel %vm4697, %v4696, %v4693
  %s4699 = scalar_lea.vmem %s0, 1412
  %s4700 = smov 48
  %v4701 = vld [vmem:[%s4699] ss:$16 sm:%s4700]
  %vm4702 = vcmask 1045508
  %v4703 = vsel %vm4702, %v4701, %v4698
  %s4704 = scalar_lea.vmem %s0, 1412
  %s4705 = smov 192
  %v4706 = vld [vmem:[%s4704] ss:$16 sm:%s4705]
  %vm4707 = vcmask 1047558
  %v4708 = vsel %vm4707, %v4706, %v4703
  %4709 = vrot.lane.b32.xlu0 %v4708, 32
  %v4710 = vpop.permute.xlu0 %4709
  %vm4711 = vcmask 326912
  %s4712 = scalar_lea.vmem %s1, 88
  %4713 = vst.msk [vmem:[%s4712] sm:$0xff] %vm4711, %v4710
  %s4714 = scalar_lea.vmem %s0, 1924
  %s4715 = smov 3
  %v4716 = vld [vmem:[%s4714] ss:$16 sm:%s4715]
  %s4717 = scalar_lea.vmem %s0, 1924
  %s4718 = smov 12
  %v4719 = vld [vmem:[%s4717] ss:$16 sm:%s4718]
  %vm4720 = vcmask 1043458
  %v4721 = vsel %vm4720, %v4719, %v4716
  %s4722 = scalar_lea.vmem %s0, 1924
  %s4723 = smov 48
  %v4724 = vld [vmem:[%s4722] ss:$16 sm:%s4723]
  %vm4725 = vcmask 1045508
  %v4726 = vsel %vm4725, %v4724, %v4721
  %s4727 = scalar_lea.vmem %s0, 1924
  %s4728 = smov 192
  %v4729 = vld [vmem:[%s4727] ss:$16 sm:%s4728]
  %vm4730 = vcmask 1047558
  %v4731 = vsel %vm4730, %v4729, %v4726
  %4732 = vrot.lane.b32.xlu0 %v4731, 32
  %v4733 = vpop.permute.xlu0 %4732
  %vm4734 = vcmask 326912
  %s4735 = scalar_lea.vmem %s1, 120
  %4736 = vst.msk [vmem:[%s4735] sm:$0xff] %vm4734, %v4733
  %s4737 = scalar_lea.vmem %s0, 3
  %s4738 = smov 3
  %v4739 = vld [vmem:[%s4737] ss:$16 sm:%s4738]
  %s4740 = scalar_lea.vmem %s0, 3
  %s4741 = smov 12
  %v4742 = vld [vmem:[%s4740] ss:$16 sm:%s4741]
  %vm4743 = vcmask 1043458
  %v4744 = vsel %vm4743, %v4742, %v4739
  %s4745 = scalar_lea.vmem %s0, 3
  %s4746 = smov 48
  %v4747 = vld [vmem:[%s4745] ss:$16 sm:%s4746]
  %vm4748 = vcmask 1045508
  %v4749 = vsel %vm4748, %v4747, %v4744
  %s4750 = scalar_lea.vmem %s0, 3
  %s4751 = smov 192
  %v4752 = vld [vmem:[%s4750] ss:$16 sm:%s4751]
  %vm4753 = vcmask 1047558
  %v4754 = vsel %vm4753, %v4752, %v4749
  %4755 = vrot.lane.b32.xlu0 %v4754, 24
  %v4756 = vpop.permute.xlu0 %4755
  %vm4757 = vcmask 261312
  %4758 = vst.msk [vmem:[%s1] sm:$0xff] %vm4757, %v4756
  %s4759 = scalar_lea.vmem %s0, 515
  %s4760 = smov 3
  %v4761 = vld [vmem:[%s4759] ss:$16 sm:%s4760]
  %s4762 = scalar_lea.vmem %s0, 515
  %s4763 = smov 12
  %v4764 = vld [vmem:[%s4762] ss:$16 sm:%s4763]
  %vm4765 = vcmask 1043458
  %v4766 = vsel %vm4765, %v4764, %v4761
  %s4767 = scalar_lea.vmem %s0, 515
  %s4768 = smov 48
  %v4769 = vld [vmem:[%s4767] ss:$16 sm:%s4768]
  %vm4770 = vcmask 1045508
  %v4771 = vsel %vm4770, %v4769, %v4766
  %s4772 = scalar_lea.vmem %s0, 515
  %s4773 = smov 192
  %v4774 = vld [vmem:[%s4772] ss:$16 sm:%s4773]
  %vm4775 = vcmask 1047558
  %v4776 = vsel %vm4775, %v4774, %v4771
  %4777 = vrot.lane.b32.xlu0 %v4776, 24
  %v4778 = vpop.permute.xlu0 %4777
  %vm4779 = vcmask 261312
  %s4780 = scalar_lea.vmem %s1, 32
  %4781 = vst.msk [vmem:[%s4780] sm:$0xff] %vm4779, %v4778
  %s4782 = scalar_lea.vmem %s0, 1027
  %s4783 = smov 3
  %v4784 = vld [vmem:[%s4782] ss:$16 sm:%s4783]
  %s4785 = scalar_lea.vmem %s0, 1027
  %s4786 = smov 12
  %v4787 = vld [vmem:[%s4785] ss:$16 sm:%s4786]
  %vm4788 = vcmask 1043458
  %v4789 = vsel %vm4788, %v4787, %v4784
  %s4790 = scalar_lea.vmem %s0, 1027
  %s4791 = smov 48
  %v4792 = vld [vmem:[%s4790] ss:$16 sm:%s4791]
  %vm4793 = vcmask 1045508
  %v4794 = vsel %vm4793, %v4792, %v4789
  %s4795 = scalar_lea.vmem %s0, 1027
  %s4796 = smov 192
  %v4797 = vld [vmem:[%s4795] ss:$16 sm:%s4796]
  %vm4798 = vcmask 1047558
  %v4799 = vsel %vm4798, %v4797, %v4794
  %4800 = vrot.lane.b32.xlu0 %v4799, 24
  %v4801 = vpop.permute.xlu0 %4800
  %vm4802 = vcmask 261312
  %s4803 = scalar_lea.vmem %s1, 64
  %4804 = vst.msk [vmem:[%s4803] sm:$0xff] %vm4802, %v4801
  %s4805 = scalar_lea.vmem %s0, 1539
  %s4806 = smov 3
  %v4807 = vld [vmem:[%s4805] ss:$16 sm:%s4806]
  %s4808 = scalar_lea.vmem %s0, 1539
  %s4809 = smov 12
  %v4810 = vld [vmem:[%s4808] ss:$16 sm:%s4809]
  %vm4811 = vcmask 1043458
  %v4812 = vsel %vm4811, %v4810, %v4807
  %s4813 = scalar_lea.vmem %s0, 1539
  %s4814 = smov 48
  %v4815 = vld [vmem:[%s4813] ss:$16 sm:%s4814]
  %vm4816 = vcmask 1045508
  %v4817 = vsel %vm4816, %v4815, %v4812
  %s4818 = scalar_lea.vmem %s0, 1539
  %s4819 = smov 192
  %v4820 = vld [vmem:[%s4818] ss:$16 sm:%s4819]
  %vm4821 = vcmask 1047558
  %v4822 = vsel %vm4821, %v4820, %v4817
  %4823 = vrot.lane.b32.xlu0 %v4822, 24
  %v4824 = vpop.permute.xlu0 %4823
  %vm4825 = vcmask 261312
  %s4826 = scalar_lea.vmem %s1, 96
  %4827 = vst.msk [vmem:[%s4826] sm:$0xff] %vm4825, %v4824
  %s4828 = scalar_lea.vmem %s0, 131
  %s4829 = smov 3
  %v4830 = vld [vmem:[%s4828] ss:$16 sm:%s4829]
  %s4831 = scalar_lea.vmem %s0, 131
  %s4832 = smov 12
  %v4833 = vld [vmem:[%s4831] ss:$16 sm:%s4832]
  %vm4834 = vcmask 1043458
  %v4835 = vsel %vm4834, %v4833, %v4830
  %s4836 = scalar_lea.vmem %s0, 131
  %s4837 = smov 48
  %v4838 = vld [vmem:[%s4836] ss:$16 sm:%s4837]
  %vm4839 = vcmask 1045508
  %v4840 = vsel %vm4839, %v4838, %v4835
  %s4841 = scalar_lea.vmem %s0, 131
  %s4842 = smov 192
  %v4843 = vld [vmem:[%s4841] ss:$16 sm:%s4842]
  %vm4844 = vcmask 1047558
  %v4845 = vsel %vm4844, %v4843, %v4840
  %4846 = vrot.lane.b32.xlu0 %v4845, 24
  %v4847 = vpop.permute.xlu0 %4846
  %vm4848 = vcmask 261312
  %s4849 = scalar_lea.vmem %s1, 8
  %4850 = vst.msk [vmem:[%s4849] sm:$0xff] %vm4848, %v4847
  %s4851 = scalar_lea.vmem %s0, 643
  %s4852 = smov 3
  %v4853 = vld [vmem:[%s4851] ss:$16 sm:%s4852]
  %s4854 = scalar_lea.vmem %s0, 643
  %s4855 = smov 12
  %v4856 = vld [vmem:[%s4854] ss:$16 sm:%s4855]
  %vm4857 = vcmask 1043458
  %v4858 = vsel %vm4857, %v4856, %v4853
  %s4859 = scalar_lea.vmem %s0, 643
  %s4860 = smov 48
  %v4861 = vld [vmem:[%s4859] ss:$16 sm:%s4860]
  %vm4862 = vcmask 1045508
  %v4863 = vsel %vm4862, %v4861, %v4858
  %s4864 = scalar_lea.vmem %s0, 643
  %s4865 = smov 192
  %v4866 = vld [vmem:[%s4864] ss:$16 sm:%s4865]
  %vm4867 = vcmask 1047558
  %v4868 = vsel %vm4867, %v4866, %v4863
  %4869 = vrot.lane.b32.xlu0 %v4868, 24
  %v4870 = vpop.permute.xlu0 %4869
  %vm4871 = vcmask 261312
  %s4872 = scalar_lea.vmem %s1, 40
  %4873 = vst.msk [vmem:[%s4872] sm:$0xff] %vm4871, %v4870
  %s4874 = scalar_lea.vmem %s0, 1155
  %s4875 = smov 3
  %v4876 = vld [vmem:[%s4874] ss:$16 sm:%s4875]
  %s4877 = scalar_lea.vmem %s0, 1155
  %s4878 = smov 12
  %v4879 = vld [vmem:[%s4877] ss:$16 sm:%s4878]
  %vm4880 = vcmask 1043458
  %v4881 = vsel %vm4880, %v4879, %v4876
  %s4882 = scalar_lea.vmem %s0, 1155
  %s4883 = smov 48
  %v4884 = vld [vmem:[%s4882] ss:$16 sm:%s4883]
  %vm4885 = vcmask 1045508
  %v4886 = vsel %vm4885, %v4884, %v4881
  %s4887 = scalar_lea.vmem %s0, 1155
  %s4888 = smov 192
  %v4889 = vld [vmem:[%s4887] ss:$16 sm:%s4888]
  %vm4890 = vcmask 1047558
  %v4891 = vsel %vm4890, %v4889, %v4886
  %4892 = vrot.lane.b32.xlu0 %v4891, 24
  %v4893 = vpop.permute.xlu0 %4892
  %vm4894 = vcmask 261312
  %s4895 = scalar_lea.vmem %s1, 72
  %4896 = vst.msk [vmem:[%s4895] sm:$0xff] %vm4894, %v4893
  %s4897 = scalar_lea.vmem %s0, 1667
  %s4898 = smov 3
  %v4899 = vld [vmem:[%s4897] ss:$16 sm:%s4898]
  %s4900 = scalar_lea.vmem %s0, 1667
  %s4901 = smov 12
  %v4902 = vld [vmem:[%s4900] ss:$16 sm:%s4901]
  %vm4903 = vcmask 1043458
  %v4904 = vsel %vm4903, %v4902, %v4899
  %s4905 = scalar_lea.vmem %s0, 1667
  %s4906 = smov 48
  %v4907 = vld [vmem:[%s4905] ss:$16 sm:%s4906]
  %vm4908 = vcmask 1045508
  %v4909 = vsel %vm4908, %v4907, %v4904
  %s4910 = scalar_lea.vmem %s0, 1667
  %s4911 = smov 192
  %v4912 = vld [vmem:[%s4910] ss:$16 sm:%s4911]
  %vm4913 = vcmask 1047558
  %v4914 = vsel %vm4913, %v4912, %v4909
  %4915 = vrot.lane.b32.xlu0 %v4914, 24
  %v4916 = vpop.permute.xlu0 %4915
  %vm4917 = vcmask 261312
  %s4918 = scalar_lea.vmem %s1, 104
  %4919 = vst.msk [vmem:[%s4918] sm:$0xff] %vm4917, %v4916
  %s4920 = scalar_lea.vmem %s0, 259
  %s4921 = smov 3
  %v4922 = vld [vmem:[%s4920] ss:$16 sm:%s4921]
  %s4923 = scalar_lea.vmem %s0, 259
  %s4924 = smov 12
  %v4925 = vld [vmem:[%s4923] ss:$16 sm:%s4924]
  %vm4926 = vcmask 1043458
  %v4927 = vsel %vm4926, %v4925, %v4922
  %s4928 = scalar_lea.vmem %s0, 259
  %s4929 = smov 48
  %v4930 = vld [vmem:[%s4928] ss:$16 sm:%s4929]
  %vm4931 = vcmask 1045508
  %v4932 = vsel %vm4931, %v4930, %v4927
  %s4933 = scalar_lea.vmem %s0, 259
  %s4934 = smov 192
  %v4935 = vld [vmem:[%s4933] ss:$16 sm:%s4934]
  %vm4936 = vcmask 1047558
  %v4937 = vsel %vm4936, %v4935, %v4932
  %4938 = vrot.lane.b32.xlu0 %v4937, 24
  %v4939 = vpop.permute.xlu0 %4938
  %vm4940 = vcmask 261312
  %s4941 = scalar_lea.vmem %s1, 16
  %4942 = vst.msk [vmem:[%s4941] sm:$0xff] %vm4940, %v4939
  %s4943 = scalar_lea.vmem %s0, 771
  %s4944 = smov 3
  %v4945 = vld [vmem:[%s4943] ss:$16 sm:%s4944]
  %s4946 = scalar_lea.vmem %s0, 771
  %s4947 = smov 12
  %v4948 = vld [vmem:[%s4946] ss:$16 sm:%s4947]
  %vm4949 = vcmask 1043458
  %v4950 = vsel %vm4949, %v4948, %v4945
  %s4951 = scalar_lea.vmem %s0, 771
  %s4952 = smov 48
  %v4953 = vld [vmem:[%s4951] ss:$16 sm:%s4952]
  %vm4954 = vcmask 1045508
  %v4955 = vsel %vm4954, %v4953, %v4950
  %s4956 = scalar_lea.vmem %s0, 771
  %s4957 = smov 192
  %v4958 = vld [vmem:[%s4956] ss:$16 sm:%s4957]
  %vm4959 = vcmask 1047558
  %v4960 = vsel %vm4959, %v4958, %v4955
  %4961 = vrot.lane.b32.xlu0 %v4960, 24
  %v4962 = vpop.permute.xlu0 %4961
  %vm4963 = vcmask 261312
  %s4964 = scalar_lea.vmem %s1, 48
  %4965 = vst.msk [vmem:[%s4964] sm:$0xff] %vm4963, %v4962
  %s4966 = scalar_lea.vmem %s0, 1283
  %s4967 = smov 3
  %v4968 = vld [vmem:[%s4966] ss:$16 sm:%s4967]
  %s4969 = scalar_lea.vmem %s0, 1283
  %s4970 = smov 12
  %v4971 = vld [vmem:[%s4969] ss:$16 sm:%s4970]
  %vm4972 = vcmask 1043458
  %v4973 = vsel %vm4972, %v4971, %v4968
  %s4974 = scalar_lea.vmem %s0, 1283
  %s4975 = smov 48
  %v4976 = vld [vmem:[%s4974] ss:$16 sm:%s4975]
  %vm4977 = vcmask 1045508
  %v4978 = vsel %vm4977, %v4976, %v4973
  %s4979 = scalar_lea.vmem %s0, 1283
  %s4980 = smov 192
  %v4981 = vld [vmem:[%s4979] ss:$16 sm:%s4980]
  %vm4982 = vcmask 1047558
  %v4983 = vsel %vm4982, %v4981, %v4978
  %4984 = vrot.lane.b32.xlu0 %v4983, 24
  %v4985 = vpop.permute.xlu0 %4984
  %vm4986 = vcmask 261312
  %s4987 = scalar_lea.vmem %s1, 80
  %4988 = vst.msk [vmem:[%s4987] sm:$0xff] %vm4986, %v4985
  %s4989 = scalar_lea.vmem %s0, 1795
  %s4990 = smov 3
  %v4991 = vld [vmem:[%s4989] ss:$16 sm:%s4990]
  %s4992 = scalar_lea.vmem %s0, 1795
  %s4993 = smov 12
  %v4994 = vld [vmem:[%s4992] ss:$16 sm:%s4993]
  %vm4995 = vcmask 1043458
  %v4996 = vsel %vm4995, %v4994, %v4991
  %s4997 = scalar_lea.vmem %s0, 1795
  %s4998 = smov 48
  %v4999 = vld [vmem:[%s4997] ss:$16 sm:%s4998]
  %vm5000 = vcmask 1045508
  %v5001 = vsel %vm5000, %v4999, %v4996
  %s5002 = scalar_lea.vmem %s0, 1795
  %s5003 = smov 192
  %v5004 = vld [vmem:[%s5002] ss:$16 sm:%s5003]
  %vm5005 = vcmask 1047558
  %v5006 = vsel %vm5005, %v5004, %v5001
  %5007 = vrot.lane.b32.xlu0 %v5006, 24
  %v5008 = vpop.permute.xlu0 %5007
  %vm5009 = vcmask 261312
  %s5010 = scalar_lea.vmem %s1, 112
  %5011 = vst.msk [vmem:[%s5010] sm:$0xff] %vm5009, %v5008
  %s5012 = scalar_lea.vmem %s0, 387
  %s5013 = smov 3
  %v5014 = vld [vmem:[%s5012] ss:$16 sm:%s5013]
  %s5015 = scalar_lea.vmem %s0, 387
  %s5016 = smov 12
  %v5017 = vld [vmem:[%s5015] ss:$16 sm:%s5016]
  %vm5018 = vcmask 1043458
  %v5019 = vsel %vm5018, %v5017, %v5014
  %s5020 = scalar_lea.vmem %s0, 387
  %s5021 = smov 48
  %v5022 = vld [vmem:[%s5020] ss:$16 sm:%s5021]
  %vm5023 = vcmask 1045508
  %v5024 = vsel %vm5023, %v5022, %v5019
  %s5025 = scalar_lea.vmem %s0, 387
  %s5026 = smov 192
  %v5027 = vld [vmem:[%s5025] ss:$16 sm:%s5026]
  %vm5028 = vcmask 1047558
  %v5029 = vsel %vm5028, %v5027, %v5024
  %5030 = vrot.lane.b32.xlu0 %v5029, 24
  %v5031 = vpop.permute.xlu0 %5030
  %vm5032 = vcmask 261312
  %s5033 = scalar_lea.vmem %s1, 24
  %5034 = vst.msk [vmem:[%s5033] sm:$0xff] %vm5032, %v5031
  %s5035 = scalar_lea.vmem %s0, 899
  %s5036 = smov 3
  %v5037 = vld [vmem:[%s5035] ss:$16 sm:%s5036]
  %s5038 = scalar_lea.vmem %s0, 899
  %s5039 = smov 12
  %v5040 = vld [vmem:[%s5038] ss:$16 sm:%s5039]
  %vm5041 = vcmask 1043458
  %v5042 = vsel %vm5041, %v5040, %v5037
  %s5043 = scalar_lea.vmem %s0, 899
  %s5044 = smov 48
  %v5045 = vld [vmem:[%s5043] ss:$16 sm:%s5044]
  %vm5046 = vcmask 1045508
  %v5047 = vsel %vm5046, %v5045, %v5042
  %s5048 = scalar_lea.vmem %s0, 899
  %s5049 = smov 192
  %v5050 = vld [vmem:[%s5048] ss:$16 sm:%s5049]
  %vm5051 = vcmask 1047558
  %v5052 = vsel %vm5051, %v5050, %v5047
  %5053 = vrot.lane.b32.xlu0 %v5052, 24
  %v5054 = vpop.permute.xlu0 %5053
  %vm5055 = vcmask 261312
  %s5056 = scalar_lea.vmem %s1, 56
  %5057 = vst.msk [vmem:[%s5056] sm:$0xff] %vm5055, %v5054
  %s5058 = scalar_lea.vmem %s0, 1411
  %s5059 = smov 3
  %v5060 = vld [vmem:[%s5058] ss:$16 sm:%s5059]
  %s5061 = scalar_lea.vmem %s0, 1411
  %s5062 = smov 12
  %v5063 = vld [vmem:[%s5061] ss:$16 sm:%s5062]
  %vm5064 = vcmask 1043458
  %v5065 = vsel %vm5064, %v5063, %v5060
  %s5066 = scalar_lea.vmem %s0, 1411
  %s5067 = smov 48
  %v5068 = vld [vmem:[%s5066] ss:$16 sm:%s5067]
  %vm5069 = vcmask 1045508
  %v5070 = vsel %vm5069, %v5068, %v5065
  %s5071 = scalar_lea.vmem %s0, 1411
  %s5072 = smov 192
  %v5073 = vld [vmem:[%s5071] ss:$16 sm:%s5072]
  %vm5074 = vcmask 1047558
  %v5075 = vsel %vm5074, %v5073, %v5070
  %5076 = vrot.lane.b32.xlu0 %v5075, 24
  %v5077 = vpop.permute.xlu0 %5076
  %vm5078 = vcmask 261312
  %s5079 = scalar_lea.vmem %s1, 88
  %5080 = vst.msk [vmem:[%s5079] sm:$0xff] %vm5078, %v5077
  %s5081 = scalar_lea.vmem %s0, 1923
  %s5082 = smov 3
  %v5083 = vld [vmem:[%s5081] ss:$16 sm:%s5082]
  %s5084 = scalar_lea.vmem %s0, 1923
  %s5085 = smov 12
  %v5086 = vld [vmem:[%s5084] ss:$16 sm:%s5085]
  %vm5087 = vcmask 1043458
  %v5088 = vsel %vm5087, %v5086, %v5083
  %s5089 = scalar_lea.vmem %s0, 1923
  %s5090 = smov 48
  %v5091 = vld [vmem:[%s5089] ss:$16 sm:%s5090]
  %vm5092 = vcmask 1045508
  %v5093 = vsel %vm5092, %v5091, %v5088
  %s5094 = scalar_lea.vmem %s0, 1923
  %s5095 = smov 192
  %v5096 = vld [vmem:[%s5094] ss:$16 sm:%s5095]
  %vm5097 = vcmask 1047558
  %v5098 = vsel %vm5097, %v5096, %v5093
  %5099 = vrot.lane.b32.xlu0 %v5098, 24
  %v5100 = vpop.permute.xlu0 %5099
  %vm5101 = vcmask 261312
  %s5102 = scalar_lea.vmem %s1, 120
  %5103 = vst.msk [vmem:[%s5102] sm:$0xff] %vm5101, %v5100
  %s5104 = scalar_lea.vmem %s0, 2
  %s5105 = smov 3
  %v5106 = vld [vmem:[%s5104] ss:$16 sm:%s5105]
  %s5107 = scalar_lea.vmem %s0, 2
  %s5108 = smov 12
  %v5109 = vld [vmem:[%s5107] ss:$16 sm:%s5108]
  %vm5110 = vcmask 1043458
  %v5111 = vsel %vm5110, %v5109, %v5106
  %s5112 = scalar_lea.vmem %s0, 2
  %s5113 = smov 48
  %v5114 = vld [vmem:[%s5112] ss:$16 sm:%s5113]
  %vm5115 = vcmask 1045508
  %v5116 = vsel %vm5115, %v5114, %v5111
  %s5117 = scalar_lea.vmem %s0, 2
  %s5118 = smov 192
  %v5119 = vld [vmem:[%s5117] ss:$16 sm:%s5118]
  %vm5120 = vcmask 1047558
  %v5121 = vsel %vm5120, %v5119, %v5116
  %5122 = vrot.lane.b32.xlu0 %v5121, 16
  %v5123 = vpop.permute.xlu0 %5122
  %vm5124 = vcmask 195712
  %5125 = vst.msk [vmem:[%s1] sm:$0xff] %vm5124, %v5123
  %s5126 = scalar_lea.vmem %s0, 514
  %s5127 = smov 3
  %v5128 = vld [vmem:[%s5126] ss:$16 sm:%s5127]
  %s5129 = scalar_lea.vmem %s0, 514
  %s5130 = smov 12
  %v5131 = vld [vmem:[%s5129] ss:$16 sm:%s5130]
  %vm5132 = vcmask 1043458
  %v5133 = vsel %vm5132, %v5131, %v5128
  %s5134 = scalar_lea.vmem %s0, 514
  %s5135 = smov 48
  %v5136 = vld [vmem:[%s5134] ss:$16 sm:%s5135]
  %vm5137 = vcmask 1045508
  %v5138 = vsel %vm5137, %v5136, %v5133
  %s5139 = scalar_lea.vmem %s0, 514
  %s5140 = smov 192
  %v5141 = vld [vmem:[%s5139] ss:$16 sm:%s5140]
  %vm5142 = vcmask 1047558
  %v5143 = vsel %vm5142, %v5141, %v5138
  %5144 = vrot.lane.b32.xlu0 %v5143, 16
  %v5145 = vpop.permute.xlu0 %5144
  %vm5146 = vcmask 195712
  %s5147 = scalar_lea.vmem %s1, 32
  %5148 = vst.msk [vmem:[%s5147] sm:$0xff] %vm5146, %v5145
  %s5149 = scalar_lea.vmem %s0, 1026
  %s5150 = smov 3
  %v5151 = vld [vmem:[%s5149] ss:$16 sm:%s5150]
  %s5152 = scalar_lea.vmem %s0, 1026
  %s5153 = smov 12
  %v5154 = vld [vmem:[%s5152] ss:$16 sm:%s5153]
  %vm5155 = vcmask 1043458
  %v5156 = vsel %vm5155, %v5154, %v5151
  %s5157 = scalar_lea.vmem %s0, 1026
  %s5158 = smov 48
  %v5159 = vld [vmem:[%s5157] ss:$16 sm:%s5158]
  %vm5160 = vcmask 1045508
  %v5161 = vsel %vm5160, %v5159, %v5156
  %s5162 = scalar_lea.vmem %s0, 1026
  %s5163 = smov 192
  %v5164 = vld [vmem:[%s5162] ss:$16 sm:%s5163]
  %vm5165 = vcmask 1047558
  %v5166 = vsel %vm5165, %v5164, %v5161
  %5167 = vrot.lane.b32.xlu0 %v5166, 16
  %v5168 = vpop.permute.xlu0 %5167
  %vm5169 = vcmask 195712
  %s5170 = scalar_lea.vmem %s1, 64
  %5171 = vst.msk [vmem:[%s5170] sm:$0xff] %vm5169, %v5168
  %s5172 = scalar_lea.vmem %s0, 1538
  %s5173 = smov 3
  %v5174 = vld [vmem:[%s5172] ss:$16 sm:%s5173]
  %s5175 = scalar_lea.vmem %s0, 1538
  %s5176 = smov 12
  %v5177 = vld [vmem:[%s5175] ss:$16 sm:%s5176]
  %vm5178 = vcmask 1043458
  %v5179 = vsel %vm5178, %v5177, %v5174
  %s5180 = scalar_lea.vmem %s0, 1538
  %s5181 = smov 48
  %v5182 = vld [vmem:[%s5180] ss:$16 sm:%s5181]
  %vm5183 = vcmask 1045508
  %v5184 = vsel %vm5183, %v5182, %v5179
  %s5185 = scalar_lea.vmem %s0, 1538
  %s5186 = smov 192
  %v5187 = vld [vmem:[%s5185] ss:$16 sm:%s5186]
  %vm5188 = vcmask 1047558
  %v5189 = vsel %vm5188, %v5187, %v5184
  %5190 = vrot.lane.b32.xlu0 %v5189, 16
  %v5191 = vpop.permute.xlu0 %5190
  %vm5192 = vcmask 195712
  %s5193 = scalar_lea.vmem %s1, 96
  %5194 = vst.msk [vmem:[%s5193] sm:$0xff] %vm5192, %v5191
  %s5195 = scalar_lea.vmem %s0, 130
  %s5196 = smov 3
  %v5197 = vld [vmem:[%s5195] ss:$16 sm:%s5196]
  %s5198 = scalar_lea.vmem %s0, 130
  %s5199 = smov 12
  %v5200 = vld [vmem:[%s5198] ss:$16 sm:%s5199]
  %vm5201 = vcmask 1043458
  %v5202 = vsel %vm5201, %v5200, %v5197
  %s5203 = scalar_lea.vmem %s0, 130
  %s5204 = smov 48
  %v5205 = vld [vmem:[%s5203] ss:$16 sm:%s5204]
  %vm5206 = vcmask 1045508
  %v5207 = vsel %vm5206, %v5205, %v5202
  %s5208 = scalar_lea.vmem %s0, 130
  %s5209 = smov 192
  %v5210 = vld [vmem:[%s5208] ss:$16 sm:%s5209]
  %vm5211 = vcmask 1047558
  %v5212 = vsel %vm5211, %v5210, %v5207
  %5213 = vrot.lane.b32.xlu0 %v5212, 16
  %v5214 = vpop.permute.xlu0 %5213
  %vm5215 = vcmask 195712
  %s5216 = scalar_lea.vmem %s1, 8
  %5217 = vst.msk [vmem:[%s5216] sm:$0xff] %vm5215, %v5214
  %s5218 = scalar_lea.vmem %s0, 642
  %s5219 = smov 3
  %v5220 = vld [vmem:[%s5218] ss:$16 sm:%s5219]
  %s5221 = scalar_lea.vmem %s0, 642
  %s5222 = smov 12
  %v5223 = vld [vmem:[%s5221] ss:$16 sm:%s5222]
  %vm5224 = vcmask 1043458
  %v5225 = vsel %vm5224, %v5223, %v5220
  %s5226 = scalar_lea.vmem %s0, 642
  %s5227 = smov 48
  %v5228 = vld [vmem:[%s5226] ss:$16 sm:%s5227]
  %vm5229 = vcmask 1045508
  %v5230 = vsel %vm5229, %v5228, %v5225
  %s5231 = scalar_lea.vmem %s0, 642
  %s5232 = smov 192
  %v5233 = vld [vmem:[%s5231] ss:$16 sm:%s5232]
  %vm5234 = vcmask 1047558
  %v5235 = vsel %vm5234, %v5233, %v5230
  %5236 = vrot.lane.b32.xlu0 %v5235, 16
  %v5237 = vpop.permute.xlu0 %5236
  %vm5238 = vcmask 195712
  %s5239 = scalar_lea.vmem %s1, 40
  %5240 = vst.msk [vmem:[%s5239] sm:$0xff] %vm5238, %v5237
  %s5241 = scalar_lea.vmem %s0, 1154
  %s5242 = smov 3
  %v5243 = vld [vmem:[%s5241] ss:$16 sm:%s5242]
  %s5244 = scalar_lea.vmem %s0, 1154
  %s5245 = smov 12
  %v5246 = vld [vmem:[%s5244] ss:$16 sm:%s5245]
  %vm5247 = vcmask 1043458
  %v5248 = vsel %vm5247, %v5246, %v5243
  %s5249 = scalar_lea.vmem %s0, 1154
  %s5250 = smov 48
  %v5251 = vld [vmem:[%s5249] ss:$16 sm:%s5250]
  %vm5252 = vcmask 1045508
  %v5253 = vsel %vm5252, %v5251, %v5248
  %s5254 = scalar_lea.vmem %s0, 1154
  %s5255 = smov 192
  %v5256 = vld [vmem:[%s5254] ss:$16 sm:%s5255]
  %vm5257 = vcmask 1047558
  %v5258 = vsel %vm5257, %v5256, %v5253
  %5259 = vrot.lane.b32.xlu0 %v5258, 16
  %v5260 = vpop.permute.xlu0 %5259
  %vm5261 = vcmask 195712
  %s5262 = scalar_lea.vmem %s1, 72
  %5263 = vst.msk [vmem:[%s5262] sm:$0xff] %vm5261, %v5260
  %s5264 = scalar_lea.vmem %s0, 1666
  %s5265 = smov 3
  %v5266 = vld [vmem:[%s5264] ss:$16 sm:%s5265]
  %s5267 = scalar_lea.vmem %s0, 1666
  %s5268 = smov 12
  %v5269 = vld [vmem:[%s5267] ss:$16 sm:%s5268]
  %vm5270 = vcmask 1043458
  %v5271 = vsel %vm5270, %v5269, %v5266
  %s5272 = scalar_lea.vmem %s0, 1666
  %s5273 = smov 48
  %v5274 = vld [vmem:[%s5272] ss:$16 sm:%s5273]
  %vm5275 = vcmask 1045508
  %v5276 = vsel %vm5275, %v5274, %v5271
  %s5277 = scalar_lea.vmem %s0, 1666
  %s5278 = smov 192
  %v5279 = vld [vmem:[%s5277] ss:$16 sm:%s5278]
  %vm5280 = vcmask 1047558
  %v5281 = vsel %vm5280, %v5279, %v5276
  %5282 = vrot.lane.b32.xlu0 %v5281, 16
  %v5283 = vpop.permute.xlu0 %5282
  %vm5284 = vcmask 195712
  %s5285 = scalar_lea.vmem %s1, 104
  %5286 = vst.msk [vmem:[%s5285] sm:$0xff] %vm5284, %v5283
  %s5287 = scalar_lea.vmem %s0, 258
  %s5288 = smov 3
  %v5289 = vld [vmem:[%s5287] ss:$16 sm:%s5288]
  %s5290 = scalar_lea.vmem %s0, 258
  %s5291 = smov 12
  %v5292 = vld [vmem:[%s5290] ss:$16 sm:%s5291]
  %vm5293 = vcmask 1043458
  %v5294 = vsel %vm5293, %v5292, %v5289
  %s5295 = scalar_lea.vmem %s0, 258
  %s5296 = smov 48
  %v5297 = vld [vmem:[%s5295] ss:$16 sm:%s5296]
  %vm5298 = vcmask 1045508
  %v5299 = vsel %vm5298, %v5297, %v5294
  %s5300 = scalar_lea.vmem %s0, 258
  %s5301 = smov 192
  %v5302 = vld [vmem:[%s5300] ss:$16 sm:%s5301]
  %vm5303 = vcmask 1047558
  %v5304 = vsel %vm5303, %v5302, %v5299
  %5305 = vrot.lane.b32.xlu0 %v5304, 16
  %v5306 = vpop.permute.xlu0 %5305
  %vm5307 = vcmask 195712
  %s5308 = scalar_lea.vmem %s1, 16
  %5309 = vst.msk [vmem:[%s5308] sm:$0xff] %vm5307, %v5306
  %s5310 = scalar_lea.vmem %s0, 770
  %s5311 = smov 3
  %v5312 = vld [vmem:[%s5310] ss:$16 sm:%s5311]
  %s5313 = scalar_lea.vmem %s0, 770
  %s5314 = smov 12
  %v5315 = vld [vmem:[%s5313] ss:$16 sm:%s5314]
  %vm5316 = vcmask 1043458
  %v5317 = vsel %vm5316, %v5315, %v5312
  %s5318 = scalar_lea.vmem %s0, 770
  %s5319 = smov 48
  %v5320 = vld [vmem:[%s5318] ss:$16 sm:%s5319]
  %vm5321 = vcmask 1045508
  %v5322 = vsel %vm5321, %v5320, %v5317
  %s5323 = scalar_lea.vmem %s0, 770
  %s5324 = smov 192
  %v5325 = vld [vmem:[%s5323] ss:$16 sm:%s5324]
  %vm5326 = vcmask 1047558
  %v5327 = vsel %vm5326, %v5325, %v5322
  %5328 = vrot.lane.b32.xlu0 %v5327, 16
  %v5329 = vpop.permute.xlu0 %5328
  %vm5330 = vcmask 195712
  %s5331 = scalar_lea.vmem %s1, 48
  %5332 = vst.msk [vmem:[%s5331] sm:$0xff] %vm5330, %v5329
  %s5333 = scalar_lea.vmem %s0, 1282
  %s5334 = smov 3
  %v5335 = vld [vmem:[%s5333] ss:$16 sm:%s5334]
  %s5336 = scalar_lea.vmem %s0, 1282
  %s5337 = smov 12
  %v5338 = vld [vmem:[%s5336] ss:$16 sm:%s5337]
  %vm5339 = vcmask 1043458
  %v5340 = vsel %vm5339, %v5338, %v5335
  %s5341 = scalar_lea.vmem %s0, 1282
  %s5342 = smov 48
  %v5343 = vld [vmem:[%s5341] ss:$16 sm:%s5342]
  %vm5344 = vcmask 1045508
  %v5345 = vsel %vm5344, %v5343, %v5340
  %s5346 = scalar_lea.vmem %s0, 1282
  %s5347 = smov 192
  %v5348 = vld [vmem:[%s5346] ss:$16 sm:%s5347]
  %vm5349 = vcmask 1047558
  %v5350 = vsel %vm5349, %v5348, %v5345
  %5351 = vrot.lane.b32.xlu0 %v5350, 16
  %v5352 = vpop.permute.xlu0 %5351
  %vm5353 = vcmask 195712
  %s5354 = scalar_lea.vmem %s1, 80
  %5355 = vst.msk [vmem:[%s5354] sm:$0xff] %vm5353, %v5352
  %s5356 = scalar_lea.vmem %s0, 1794
  %s5357 = smov 3
  %v5358 = vld [vmem:[%s5356] ss:$16 sm:%s5357]
  %s5359 = scalar_lea.vmem %s0, 1794
  %s5360 = smov 12
  %v5361 = vld [vmem:[%s5359] ss:$16 sm:%s5360]
  %vm5362 = vcmask 1043458
  %v5363 = vsel %vm5362, %v5361, %v5358
  %s5364 = scalar_lea.vmem %s0, 1794
  %s5365 = smov 48
  %v5366 = vld [vmem:[%s5364] ss:$16 sm:%s5365]
  %vm5367 = vcmask 1045508
  %v5368 = vsel %vm5367, %v5366, %v5363
  %s5369 = scalar_lea.vmem %s0, 1794
  %s5370 = smov 192
  %v5371 = vld [vmem:[%s5369] ss:$16 sm:%s5370]
  %vm5372 = vcmask 1047558
  %v5373 = vsel %vm5372, %v5371, %v5368
  %5374 = vrot.lane.b32.xlu0 %v5373, 16
  %v5375 = vpop.permute.xlu0 %5374
  %vm5376 = vcmask 195712
  %s5377 = scalar_lea.vmem %s1, 112
  %5378 = vst.msk [vmem:[%s5377] sm:$0xff] %vm5376, %v5375
  %s5379 = scalar_lea.vmem %s0, 386
  %s5380 = smov 3
  %v5381 = vld [vmem:[%s5379] ss:$16 sm:%s5380]
  %s5382 = scalar_lea.vmem %s0, 386
  %s5383 = smov 12
  %v5384 = vld [vmem:[%s5382] ss:$16 sm:%s5383]
  %vm5385 = vcmask 1043458
  %v5386 = vsel %vm5385, %v5384, %v5381
  %s5387 = scalar_lea.vmem %s0, 386
  %s5388 = smov 48
  %v5389 = vld [vmem:[%s5387] ss:$16 sm:%s5388]
  %vm5390 = vcmask 1045508
  %v5391 = vsel %vm5390, %v5389, %v5386
  %s5392 = scalar_lea.vmem %s0, 386
  %s5393 = smov 192
  %v5394 = vld [vmem:[%s5392] ss:$16 sm:%s5393]
  %vm5395 = vcmask 1047558
  %v5396 = vsel %vm5395, %v5394, %v5391
  %5397 = vrot.lane.b32.xlu0 %v5396, 16
  %v5398 = vpop.permute.xlu0 %5397
  %vm5399 = vcmask 195712
  %s5400 = scalar_lea.vmem %s1, 24
  %5401 = vst.msk [vmem:[%s5400] sm:$0xff] %vm5399, %v5398
  %s5402 = scalar_lea.vmem %s0, 898
  %s5403 = smov 3
  %v5404 = vld [vmem:[%s5402] ss:$16 sm:%s5403]
  %s5405 = scalar_lea.vmem %s0, 898
  %s5406 = smov 12
  %v5407 = vld [vmem:[%s5405] ss:$16 sm:%s5406]
  %vm5408 = vcmask 1043458
  %v5409 = vsel %vm5408, %v5407, %v5404
  %s5410 = scalar_lea.vmem %s0, 898
  %s5411 = smov 48
  %v5412 = vld [vmem:[%s5410] ss:$16 sm:%s5411]
  %vm5413 = vcmask 1045508
  %v5414 = vsel %vm5413, %v5412, %v5409
  %s5415 = scalar_lea.vmem %s0, 898
  %s5416 = smov 192
  %v5417 = vld [vmem:[%s5415] ss:$16 sm:%s5416]
  %vm5418 = vcmask 1047558
  %v5419 = vsel %vm5418, %v5417, %v5414
  %5420 = vrot.lane.b32.xlu0 %v5419, 16
  %v5421 = vpop.permute.xlu0 %5420
  %vm5422 = vcmask 195712
  %s5423 = scalar_lea.vmem %s1, 56
  %5424 = vst.msk [vmem:[%s5423] sm:$0xff] %vm5422, %v5421
  %s5425 = scalar_lea.vmem %s0, 1410
  %s5426 = smov 3
  %v5427 = vld [vmem:[%s5425] ss:$16 sm:%s5426]
  %s5428 = scalar_lea.vmem %s0, 1410
  %s5429 = smov 12
  %v5430 = vld [vmem:[%s5428] ss:$16 sm:%s5429]
  %vm5431 = vcmask 1043458
  %v5432 = vsel %vm5431, %v5430, %v5427
  %s5433 = scalar_lea.vmem %s0, 1410
  %s5434 = smov 48
  %v5435 = vld [vmem:[%s5433] ss:$16 sm:%s5434]
  %vm5436 = vcmask 1045508
  %v5437 = vsel %vm5436, %v5435, %v5432
  %s5438 = scalar_lea.vmem %s0, 1410
  %s5439 = smov 192
  %v5440 = vld [vmem:[%s5438] ss:$16 sm:%s5439]
  %vm5441 = vcmask 1047558
  %v5442 = vsel %vm5441, %v5440, %v5437
  %5443 = vrot.lane.b32.xlu0 %v5442, 16
  %v5444 = vpop.permute.xlu0 %5443
  %vm5445 = vcmask 195712
  %s5446 = scalar_lea.vmem %s1, 88
  %5447 = vst.msk [vmem:[%s5446] sm:$0xff] %vm5445, %v5444
  %s5448 = scalar_lea.vmem %s0, 1922
  %s5449 = smov 3
  %v5450 = vld [vmem:[%s5448] ss:$16 sm:%s5449]
  %s5451 = scalar_lea.vmem %s0, 1922
  %s5452 = smov 12
  %v5453 = vld [vmem:[%s5451] ss:$16 sm:%s5452]
  %vm5454 = vcmask 1043458
  %v5455 = vsel %vm5454, %v5453, %v5450
  %s5456 = scalar_lea.vmem %s0, 1922
  %s5457 = smov 48
  %v5458 = vld [vmem:[%s5456] ss:$16 sm:%s5457]
  %vm5459 = vcmask 1045508
  %v5460 = vsel %vm5459, %v5458, %v5455
  %s5461 = scalar_lea.vmem %s0, 1922
  %s5462 = smov 192
  %v5463 = vld [vmem:[%s5461] ss:$16 sm:%s5462]
  %vm5464 = vcmask 1047558
  %v5465 = vsel %vm5464, %v5463, %v5460
  %5466 = vrot.lane.b32.xlu0 %v5465, 16
  %v5467 = vpop.permute.xlu0 %5466
  %vm5468 = vcmask 195712
  %s5469 = scalar_lea.vmem %s1, 120
  %5470 = vst.msk [vmem:[%s5469] sm:$0xff] %vm5468, %v5467
  %s5471 = scalar_lea.vmem %s0, 1
  %s5472 = smov 3
  %v5473 = vld [vmem:[%s5471] ss:$16 sm:%s5472]
  %s5474 = scalar_lea.vmem %s0, 1
  %s5475 = smov 12
  %v5476 = vld [vmem:[%s5474] ss:$16 sm:%s5475]
  %vm5477 = vcmask 1043458
  %v5478 = vsel %vm5477, %v5476, %v5473
  %s5479 = scalar_lea.vmem %s0, 1
  %s5480 = smov 48
  %v5481 = vld [vmem:[%s5479] ss:$16 sm:%s5480]
  %vm5482 = vcmask 1045508
  %v5483 = vsel %vm5482, %v5481, %v5478
  %s5484 = scalar_lea.vmem %s0, 1
  %s5485 = smov 192
  %v5486 = vld [vmem:[%s5484] ss:$16 sm:%s5485]
  %vm5487 = vcmask 1047558
  %v5488 = vsel %vm5487, %v5486, %v5483
  %5489 = vrot.lane.b32.xlu0 %v5488, 8
  %v5490 = vpop.permute.xlu0 %5489
  %vm5491 = vcmask 130112
  %5492 = vst.msk [vmem:[%s1] sm:$0xff] %vm5491, %v5490
  %s5493 = scalar_lea.vmem %s0, 513
  %s5494 = smov 3
  %v5495 = vld [vmem:[%s5493] ss:$16 sm:%s5494]
  %s5496 = scalar_lea.vmem %s0, 513
  %s5497 = smov 12
  %v5498 = vld [vmem:[%s5496] ss:$16 sm:%s5497]
  %vm5499 = vcmask 1043458
  %v5500 = vsel %vm5499, %v5498, %v5495
  %s5501 = scalar_lea.vmem %s0, 513
  %s5502 = smov 48
  %v5503 = vld [vmem:[%s5501] ss:$16 sm:%s5502]
  %vm5504 = vcmask 1045508
  %v5505 = vsel %vm5504, %v5503, %v5500
  %s5506 = scalar_lea.vmem %s0, 513
  %s5507 = smov 192
  %v5508 = vld [vmem:[%s5506] ss:$16 sm:%s5507]
  %vm5509 = vcmask 1047558
  %v5510 = vsel %vm5509, %v5508, %v5505
  %5511 = vrot.lane.b32.xlu0 %v5510, 8
  %v5512 = vpop.permute.xlu0 %5511
  %vm5513 = vcmask 130112
  %s5514 = scalar_lea.vmem %s1, 32
  %5515 = vst.msk [vmem:[%s5514] sm:$0xff] %vm5513, %v5512
  %s5516 = scalar_lea.vmem %s0, 1025
  %s5517 = smov 3
  %v5518 = vld [vmem:[%s5516] ss:$16 sm:%s5517]
  %s5519 = scalar_lea.vmem %s0, 1025
  %s5520 = smov 12
  %v5521 = vld [vmem:[%s5519] ss:$16 sm:%s5520]
  %vm5522 = vcmask 1043458
  %v5523 = vsel %vm5522, %v5521, %v5518
  %s5524 = scalar_lea.vmem %s0, 1025
  %s5525 = smov 48
  %v5526 = vld [vmem:[%s5524] ss:$16 sm:%s5525]
  %vm5527 = vcmask 1045508
  %v5528 = vsel %vm5527, %v5526, %v5523
  %s5529 = scalar_lea.vmem %s0, 1025
  %s5530 = smov 192
  %v5531 = vld [vmem:[%s5529] ss:$16 sm:%s5530]
  %vm5532 = vcmask 1047558
  %v5533 = vsel %vm5532, %v5531, %v5528
  %5534 = vrot.lane.b32.xlu0 %v5533, 8
  %v5535 = vpop.permute.xlu0 %5534
  %vm5536 = vcmask 130112
  %s5537 = scalar_lea.vmem %s1, 64
  %5538 = vst.msk [vmem:[%s5537] sm:$0xff] %vm5536, %v5535
  %s5539 = scalar_lea.vmem %s0, 1537
  %s5540 = smov 3
  %v5541 = vld [vmem:[%s5539] ss:$16 sm:%s5540]
  %s5542 = scalar_lea.vmem %s0, 1537
  %s5543 = smov 12
  %v5544 = vld [vmem:[%s5542] ss:$16 sm:%s5543]
  %vm5545 = vcmask 1043458
  %v5546 = vsel %vm5545, %v5544, %v5541
  %s5547 = scalar_lea.vmem %s0, 1537
  %s5548 = smov 48
  %v5549 = vld [vmem:[%s5547] ss:$16 sm:%s5548]
  %vm5550 = vcmask 1045508
  %v5551 = vsel %vm5550, %v5549, %v5546
  %s5552 = scalar_lea.vmem %s0, 1537
  %s5553 = smov 192
  %v5554 = vld [vmem:[%s5552] ss:$16 sm:%s5553]
  %vm5555 = vcmask 1047558
  %v5556 = vsel %vm5555, %v5554, %v5551
  %5557 = vrot.lane.b32.xlu0 %v5556, 8
  %v5558 = vpop.permute.xlu0 %5557
  %vm5559 = vcmask 130112
  %s5560 = scalar_lea.vmem %s1, 96
  %5561 = vst.msk [vmem:[%s5560] sm:$0xff] %vm5559, %v5558
  %s5562 = scalar_lea.vmem %s0, 129
  %s5563 = smov 3
  %v5564 = vld [vmem:[%s5562] ss:$16 sm:%s5563]
  %s5565 = scalar_lea.vmem %s0, 129
  %s5566 = smov 12
  %v5567 = vld [vmem:[%s5565] ss:$16 sm:%s5566]
  %vm5568 = vcmask 1043458
  %v5569 = vsel %vm5568, %v5567, %v5564
  %s5570 = scalar_lea.vmem %s0, 129
  %s5571 = smov 48
  %v5572 = vld [vmem:[%s5570] ss:$16 sm:%s5571]
  %vm5573 = vcmask 1045508
  %v5574 = vsel %vm5573, %v5572, %v5569
  %s5575 = scalar_lea.vmem %s0, 129
  %s5576 = smov 192
  %v5577 = vld [vmem:[%s5575] ss:$16 sm:%s5576]
  %vm5578 = vcmask 1047558
  %v5579 = vsel %vm5578, %v5577, %v5574
  %5580 = vrot.lane.b32.xlu0 %v5579, 8
  %v5581 = vpop.permute.xlu0 %5580
  %vm5582 = vcmask 130112
  %s5583 = scalar_lea.vmem %s1, 8
  %5584 = vst.msk [vmem:[%s5583] sm:$0xff] %vm5582, %v5581
  %s5585 = scalar_lea.vmem %s0, 641
  %s5586 = smov 3
  %v5587 = vld [vmem:[%s5585] ss:$16 sm:%s5586]
  %s5588 = scalar_lea.vmem %s0, 641
  %s5589 = smov 12
  %v5590 = vld [vmem:[%s5588] ss:$16 sm:%s5589]
  %vm5591 = vcmask 1043458
  %v5592 = vsel %vm5591, %v5590, %v5587
  %s5593 = scalar_lea.vmem %s0, 641
  %s5594 = smov 48
  %v5595 = vld [vmem:[%s5593] ss:$16 sm:%s5594]
  %vm5596 = vcmask 1045508
  %v5597 = vsel %vm5596, %v5595, %v5592
  %s5598 = scalar_lea.vmem %s0, 641
  %s5599 = smov 192
  %v5600 = vld [vmem:[%s5598] ss:$16 sm:%s5599]
  %vm5601 = vcmask 1047558
  %v5602 = vsel %vm5601, %v5600, %v5597
  %5603 = vrot.lane.b32.xlu0 %v5602, 8
  %v5604 = vpop.permute.xlu0 %5603
  %vm5605 = vcmask 130112
  %s5606 = scalar_lea.vmem %s1, 40
  %5607 = vst.msk [vmem:[%s5606] sm:$0xff] %vm5605, %v5604
  %s5608 = scalar_lea.vmem %s0, 1153
  %s5609 = smov 3
  %v5610 = vld [vmem:[%s5608] ss:$16 sm:%s5609]
  %s5611 = scalar_lea.vmem %s0, 1153
  %s5612 = smov 12
  %v5613 = vld [vmem:[%s5611] ss:$16 sm:%s5612]
  %vm5614 = vcmask 1043458
  %v5615 = vsel %vm5614, %v5613, %v5610
  %s5616 = scalar_lea.vmem %s0, 1153
  %s5617 = smov 48
  %v5618 = vld [vmem:[%s5616] ss:$16 sm:%s5617]
  %vm5619 = vcmask 1045508
  %v5620 = vsel %vm5619, %v5618, %v5615
  %s5621 = scalar_lea.vmem %s0, 1153
  %s5622 = smov 192
  %v5623 = vld [vmem:[%s5621] ss:$16 sm:%s5622]
  %vm5624 = vcmask 1047558
  %v5625 = vsel %vm5624, %v5623, %v5620
  %5626 = vrot.lane.b32.xlu0 %v5625, 8
  %v5627 = vpop.permute.xlu0 %5626
  %vm5628 = vcmask 130112
  %s5629 = scalar_lea.vmem %s1, 72
  %5630 = vst.msk [vmem:[%s5629] sm:$0xff] %vm5628, %v5627
  %s5631 = scalar_lea.vmem %s0, 1665
  %s5632 = smov 3
  %v5633 = vld [vmem:[%s5631] ss:$16 sm:%s5632]
  %s5634 = scalar_lea.vmem %s0, 1665
  %s5635 = smov 12
  %v5636 = vld [vmem:[%s5634] ss:$16 sm:%s5635]
  %vm5637 = vcmask 1043458
  %v5638 = vsel %vm5637, %v5636, %v5633
  %s5639 = scalar_lea.vmem %s0, 1665
  %s5640 = smov 48
  %v5641 = vld [vmem:[%s5639] ss:$16 sm:%s5640]
  %vm5642 = vcmask 1045508
  %v5643 = vsel %vm5642, %v5641, %v5638
  %s5644 = scalar_lea.vmem %s0, 1665
  %s5645 = smov 192
  %v5646 = vld [vmem:[%s5644] ss:$16 sm:%s5645]
  %vm5647 = vcmask 1047558
  %v5648 = vsel %vm5647, %v5646, %v5643
  %5649 = vrot.lane.b32.xlu0 %v5648, 8
  %v5650 = vpop.permute.xlu0 %5649
  %vm5651 = vcmask 130112
  %s5652 = scalar_lea.vmem %s1, 104
  %5653 = vst.msk [vmem:[%s5652] sm:$0xff] %vm5651, %v5650
  %s5654 = scalar_lea.vmem %s0, 257
  %s5655 = smov 3
  %v5656 = vld [vmem:[%s5654] ss:$16 sm:%s5655]
  %s5657 = scalar_lea.vmem %s0, 257
  %s5658 = smov 12
  %v5659 = vld [vmem:[%s5657] ss:$16 sm:%s5658]
  %vm5660 = vcmask 1043458
  %v5661 = vsel %vm5660, %v5659, %v5656
  %s5662 = scalar_lea.vmem %s0, 257
  %s5663 = smov 48
  %v5664 = vld [vmem:[%s5662] ss:$16 sm:%s5663]
  %vm5665 = vcmask 1045508
  %v5666 = vsel %vm5665, %v5664, %v5661
  %s5667 = scalar_lea.vmem %s0, 257
  %s5668 = smov 192
  %v5669 = vld [vmem:[%s5667] ss:$16 sm:%s5668]
  %vm5670 = vcmask 1047558
  %v5671 = vsel %vm5670, %v5669, %v5666
  %5672 = vrot.lane.b32.xlu0 %v5671, 8
  %v5673 = vpop.permute.xlu0 %5672
  %vm5674 = vcmask 130112
  %s5675 = scalar_lea.vmem %s1, 16
  %5676 = vst.msk [vmem:[%s5675] sm:$0xff] %vm5674, %v5673
  %s5677 = scalar_lea.vmem %s0, 769
  %s5678 = smov 3
  %v5679 = vld [vmem:[%s5677] ss:$16 sm:%s5678]
  %s5680 = scalar_lea.vmem %s0, 769
  %s5681 = smov 12
  %v5682 = vld [vmem:[%s5680] ss:$16 sm:%s5681]
  %vm5683 = vcmask 1043458
  %v5684 = vsel %vm5683, %v5682, %v5679
  %s5685 = scalar_lea.vmem %s0, 769
  %s5686 = smov 48
  %v5687 = vld [vmem:[%s5685] ss:$16 sm:%s5686]
  %vm5688 = vcmask 1045508
  %v5689 = vsel %vm5688, %v5687, %v5684
  %s5690 = scalar_lea.vmem %s0, 769
  %s5691 = smov 192
  %v5692 = vld [vmem:[%s5690] ss:$16 sm:%s5691]
  %vm5693 = vcmask 1047558
  %v5694 = vsel %vm5693, %v5692, %v5689
  %5695 = vrot.lane.b32.xlu0 %v5694, 8
  %v5696 = vpop.permute.xlu0 %5695
  %vm5697 = vcmask 130112
  %s5698 = scalar_lea.vmem %s1, 48
  %5699 = vst.msk [vmem:[%s5698] sm:$0xff] %vm5697, %v5696
  %s5700 = scalar_lea.vmem %s0, 1281
  %s5701 = smov 3
  %v5702 = vld [vmem:[%s5700] ss:$16 sm:%s5701]
  %s5703 = scalar_lea.vmem %s0, 1281
  %s5704 = smov 12
  %v5705 = vld [vmem:[%s5703] ss:$16 sm:%s5704]
  %vm5706 = vcmask 1043458
  %v5707 = vsel %vm5706, %v5705, %v5702
  %s5708 = scalar_lea.vmem %s0, 1281
  %s5709 = smov 48
  %v5710 = vld [vmem:[%s5708] ss:$16 sm:%s5709]
  %vm5711 = vcmask 1045508
  %v5712 = vsel %vm5711, %v5710, %v5707
  %s5713 = scalar_lea.vmem %s0, 1281
  %s5714 = smov 192
  %v5715 = vld [vmem:[%s5713] ss:$16 sm:%s5714]
  %vm5716 = vcmask 1047558
  %v5717 = vsel %vm5716, %v5715, %v5712
  %5718 = vrot.lane.b32.xlu0 %v5717, 8
  %v5719 = vpop.permute.xlu0 %5718
  %vm5720 = vcmask 130112
  %s5721 = scalar_lea.vmem %s1, 80
  %5722 = vst.msk [vmem:[%s5721] sm:$0xff] %vm5720, %v5719
  %s5723 = scalar_lea.vmem %s0, 1793
  %s5724 = smov 3
  %v5725 = vld [vmem:[%s5723] ss:$16 sm:%s5724]
  %s5726 = scalar_lea.vmem %s0, 1793
  %s5727 = smov 12
  %v5728 = vld [vmem:[%s5726] ss:$16 sm:%s5727]
  %vm5729 = vcmask 1043458
  %v5730 = vsel %vm5729, %v5728, %v5725
  %s5731 = scalar_lea.vmem %s0, 1793
  %s5732 = smov 48
  %v5733 = vld [vmem:[%s5731] ss:$16 sm:%s5732]
  %vm5734 = vcmask 1045508
  %v5735 = vsel %vm5734, %v5733, %v5730
  %s5736 = scalar_lea.vmem %s0, 1793
  %s5737 = smov 192
  %v5738 = vld [vmem:[%s5736] ss:$16 sm:%s5737]
  %vm5739 = vcmask 1047558
  %v5740 = vsel %vm5739, %v5738, %v5735
  %5741 = vrot.lane.b32.xlu0 %v5740, 8
  %v5742 = vpop.permute.xlu0 %5741
  %vm5743 = vcmask 130112
  %s5744 = scalar_lea.vmem %s1, 112
  %5745 = vst.msk [vmem:[%s5744] sm:$0xff] %vm5743, %v5742
  %s5746 = scalar_lea.vmem %s0, 385
  %s5747 = smov 3
  %v5748 = vld [vmem:[%s5746] ss:$16 sm:%s5747]
  %s5749 = scalar_lea.vmem %s0, 385
  %s5750 = smov 12
  %v5751 = vld [vmem:[%s5749] ss:$16 sm:%s5750]
  %vm5752 = vcmask 1043458
  %v5753 = vsel %vm5752, %v5751, %v5748
  %s5754 = scalar_lea.vmem %s0, 385
  %s5755 = smov 48
  %v5756 = vld [vmem:[%s5754] ss:$16 sm:%s5755]
  %vm5757 = vcmask 1045508
  %v5758 = vsel %vm5757, %v5756, %v5753
  %s5759 = scalar_lea.vmem %s0, 385
  %s5760 = smov 192
  %v5761 = vld [vmem:[%s5759] ss:$16 sm:%s5760]
  %vm5762 = vcmask 1047558
  %v5763 = vsel %vm5762, %v5761, %v5758
  %5764 = vrot.lane.b32.xlu0 %v5763, 8
  %v5765 = vpop.permute.xlu0 %5764
  %vm5766 = vcmask 130112
  %s5767 = scalar_lea.vmem %s1, 24
  %5768 = vst.msk [vmem:[%s5767] sm:$0xff] %vm5766, %v5765
  %s5769 = scalar_lea.vmem %s0, 897
  %s5770 = smov 3
  %v5771 = vld [vmem:[%s5769] ss:$16 sm:%s5770]
  %s5772 = scalar_lea.vmem %s0, 897
  %s5773 = smov 12
  %v5774 = vld [vmem:[%s5772] ss:$16 sm:%s5773]
  %vm5775 = vcmask 1043458
  %v5776 = vsel %vm5775, %v5774, %v5771
  %s5777 = scalar_lea.vmem %s0, 897
  %s5778 = smov 48
  %v5779 = vld [vmem:[%s5777] ss:$16 sm:%s5778]
  %vm5780 = vcmask 1045508
  %v5781 = vsel %vm5780, %v5779, %v5776
  %s5782 = scalar_lea.vmem %s0, 897
  %s5783 = smov 192
  %v5784 = vld [vmem:[%s5782] ss:$16 sm:%s5783]
  %vm5785 = vcmask 1047558
  %v5786 = vsel %vm5785, %v5784, %v5781
  %5787 = vrot.lane.b32.xlu0 %v5786, 8
  %v5788 = vpop.permute.xlu0 %5787
  %vm5789 = vcmask 130112
  %s5790 = scalar_lea.vmem %s1, 56
  %5791 = vst.msk [vmem:[%s5790] sm:$0xff] %vm5789, %v5788
  %s5792 = scalar_lea.vmem %s0, 1409
  %s5793 = smov 3
  %v5794 = vld [vmem:[%s5792] ss:$16 sm:%s5793]
  %s5795 = scalar_lea.vmem %s0, 1409
  %s5796 = smov 12
  %v5797 = vld [vmem:[%s5795] ss:$16 sm:%s5796]
  %vm5798 = vcmask 1043458
  %v5799 = vsel %vm5798, %v5797, %v5794
  %s5800 = scalar_lea.vmem %s0, 1409
  %s5801 = smov 48
  %v5802 = vld [vmem:[%s5800] ss:$16 sm:%s5801]
  %vm5803 = vcmask 1045508
  %v5804 = vsel %vm5803, %v5802, %v5799
  %s5805 = scalar_lea.vmem %s0, 1409
  %s5806 = smov 192
  %v5807 = vld [vmem:[%s5805] ss:$16 sm:%s5806]
  %vm5808 = vcmask 1047558
  %v5809 = vsel %vm5808, %v5807, %v5804
  %5810 = vrot.lane.b32.xlu0 %v5809, 8
  %v5811 = vpop.permute.xlu0 %5810
  %vm5812 = vcmask 130112
  %s5813 = scalar_lea.vmem %s1, 88
  %5814 = vst.msk [vmem:[%s5813] sm:$0xff] %vm5812, %v5811
  %s5815 = scalar_lea.vmem %s0, 1921
  %s5816 = smov 3
  %v5817 = vld [vmem:[%s5815] ss:$16 sm:%s5816]
  %s5818 = scalar_lea.vmem %s0, 1921
  %s5819 = smov 12
  %v5820 = vld [vmem:[%s5818] ss:$16 sm:%s5819]
  %vm5821 = vcmask 1043458
  %v5822 = vsel %vm5821, %v5820, %v5817
  %s5823 = scalar_lea.vmem %s0, 1921
  %s5824 = smov 48
  %v5825 = vld [vmem:[%s5823] ss:$16 sm:%s5824]
  %vm5826 = vcmask 1045508
  %v5827 = vsel %vm5826, %v5825, %v5822
  %s5828 = scalar_lea.vmem %s0, 1921
  %s5829 = smov 192
  %v5830 = vld [vmem:[%s5828] ss:$16 sm:%s5829]
  %vm5831 = vcmask 1047558
  %v5832 = vsel %vm5831, %v5830, %v5827
  %5833 = vrot.lane.b32.xlu0 %v5832, 8
  %v5834 = vpop.permute.xlu0 %5833
  %vm5835 = vcmask 130112
  %s5836 = scalar_lea.vmem %s1, 120
  %5837 = vst.msk [vmem:[%s5836] sm:$0xff] %vm5835, %v5834

// kernel: double_conv_pallas.1
$region0: #{double_conv_pallas.1}
  #allocation0 [shape = 'u32[]', space=smem, size = 0x4, offset = 0x4, fixed_abs, tag = 'smem constant byte address 0x4 - core index']
  #allocation1 [shape = 'u32[72,128]{1,0:T(1,128)}', space=vmem, size = 0x9000, scoped, tag = 'internal scratch']
  #allocation2 [shape = 'f32[36,144]{1,0:T(8,128)}', space=vmem, size = 0xa000, scoped, tag = 'scratch operand']
  %s0 = inlined_call_operand.vmem [shape: f32[36,72], index: 0, kind: input, shape index: {}]
  %s1 = inlined_call_operand.vmem [shape: f32[216,128], index: 1, kind: input, shape index: {}]
  %s2 = inlined_call_operand.vmem [shape: f32[1,128], index: 2, kind: input, shape index: {}]
  %s3 = inlined_call_operand.vmem [shape: f32[1,128], index: 3, kind: input, shape index: {}]
  %s4 = inlined_call_operand.vmem [shape: f32[1,128], index: 4, kind: input, shape index: {}]
  %s5 = inlined_call_operand.vmem [shape: f32[432,128], index: 5, kind: input, shape index: {}]
  %s6 = inlined_call_operand.vmem [shape: f32[1,128], index: 6, kind: input, shape index: {}]
  %s7 = inlined_call_operand.vmem [shape: f32[1,128], index: 7, kind: input, shape index: {}]
  %s8 = inlined_call_operand.vmem [shape: f32[1,128], index: 8, kind: input, shape index: {}]
  %s9 = inlined_call_operand.vmem [shape: f32[128,128], index: 9, kind: input, shape index: {}]
  %s10 = inlined_call_operand.vmem [shape: f32[32,128], index: 10, kind: output, shape index: {}]
  %s11 = sld [smem:[#allocation0]]
  $region50: #{double_conv_pallas.1} parent=0
    _
  %s13 = ssub.s32 1, %s11
  %s14 = scalar_select 0, %s13, %s11
  // Predicated region
  $region2: #{double_conv_pallas.1} parent=0 // pred_check
    _
  $region3: #{double_conv_pallas.1} parent=0 // pred_check_branch
    %16 = sbr.rel (0) target = $region5
  $region4: #{double_conv_pallas.1} parent=0 // pred_region
    _
  $region5: #{double_conv_pallas.1} parent=0 // pred_fallthru
    _
  // Predicated region
  $region6: #{double_conv_pallas.1} parent=0 // pred_check
    _
  $region7: #{double_conv_pallas.1} parent=0 // pred_check_branch
    %18 = sbr.rel (0) target = $region9
  $region8: #{double_conv_pallas.1} parent=0 // pred_region
    _
  $region9: #{double_conv_pallas.1} parent=0 // pred_fallthru
    _
  // Predicated region
  $region10: #{double_conv_pallas.1} parent=0 // pred_check
    _
  $region11: #{double_conv_pallas.1} parent=0 // pred_check_branch
    %20 = sbr.rel (0) target = $region13
  $region12: #{double_conv_pallas.1} parent=0 // pred_region
    _
  $region13: #{double_conv_pallas.1} parent=0 // pred_fallthru
    _
  // Predicated region
  $region14: #{double_conv_pallas.1} parent=0 // pred_check
    _
  $region15: #{double_conv_pallas.1} parent=0 // pred_check_branch
    %22 = sbr.rel (0) target = $region17
  $region16: #{double_conv_pallas.1} parent=0 // pred_region
    _
  $region17: #{double_conv_pallas.1} parent=0 // pred_fallthru
    _
  // Predicated region
  $region18: #{double_conv_pallas.1} parent=0 // pred_check
    _
  $region19: #{double_conv_pallas.1} parent=0 // pred_check_branch
    %24 = sbr.rel (0) target = $region21
  $region20: #{double_conv_pallas.1} parent=0 // pred_region
    _
  $region21: #{double_conv_pallas.1} parent=0 // pred_fallthru
    _
  // Predicated region
  $region22: #{double_conv_pallas.1} parent=0 // pred_check
    _
  $region23: #{double_conv_pallas.1} parent=0 // pred_check_branch
    %26 = sbr.rel (0) target = $region25
  $region24: #{double_conv_pallas.1} parent=0 // pred_region
    _
  $region25: #{double_conv_pallas.1} parent=0 // pred_fallthru
    _
  // Predicated region
  $region26: #{double_conv_pallas.1} parent=0 // pred_check
    _
  $region27: #{double_conv_pallas.1} parent=0 // pred_check_branch
    %28 = sbr.rel (0) target = $region29
  $region28: #{double_conv_pallas.1} parent=0 // pred_region
    _
  $region29: #{double_conv_pallas.1} parent=0 // pred_fallthru
    _
  // Predicated region
  $region30: #{double_conv_pallas.1} parent=0 // pred_check
    _
  $region31: #{double_conv_pallas.1} parent=0 // pred_check_branch
    %30 = sbr.rel (0) target = $region33
  $region32: #{double_conv_pallas.1} parent=0 // pred_region
    _
  $region33: #{double_conv_pallas.1} parent=0 // pred_fallthru
    _
  // Predicated region
  $region34: #{double_conv_pallas.1} parent=0 // pred_check
    _
  $region35: #{double_conv_pallas.1} parent=0 // pred_check_branch
    %32 = sbr.rel (0) target = $region37
  $region36: #{double_conv_pallas.1} parent=0 // pred_region
    _
  $region37: #{double_conv_pallas.1} parent=0 // pred_fallthru
    _
  // Predicated region
  $region38: #{double_conv_pallas.1} parent=0 // pred_check
    _
  $region39: #{double_conv_pallas.1} parent=0 // pred_check_branch
    %34 = sbr.rel (0) target = $region41
  $region40: #{double_conv_pallas.1} parent=0 // pred_region
    _
  $region41: #{double_conv_pallas.1} parent=0 // pred_fallthru
    _
  %v35 = vld [vmem:[%s9] sm:$0xff]
  %v36 = vld [vmem:[%s9 + $0x8] sm:$0xff]
  %v37 = vld [vmem:[%s9 + $0x10] sm:$0xff]
  %v38 = vld [vmem:[%s9 + $0x18] sm:$0xff]
  %v39 = vld [vmem:[%s9 + $0x20] sm:$0xff]
  %v40 = vld [vmem:[%s9 + $0x28] sm:$0xff]
  %v41 = vld [vmem:[%s9 + $0x30] sm:$0xff]
  %v42 = vld [vmem:[%s9 + $0x38] sm:$0xff]
  %v43 = vld [vmem:[%s9 + $0x40] sm:$0xff]
  %v44 = vld [vmem:[%s9 + $0x48] sm:$0xff]
  %v45 = vld [vmem:[%s9 + $0x50] sm:$0xff]
  %v46 = vld [vmem:[%s9 + $0x58] sm:$0xff]
  %v47 = vld [vmem:[%s9 + $0x60] sm:$0xff]
  %v48 = vld [vmem:[%s9 + $0x68] sm:$0xff]
  %v49 = vld [vmem:[%s9 + $0x70] sm:$0xff]
  %v50 = vld [vmem:[%s9 + $0x78] sm:$0xff]
  %v51 = vld [vmem:[%s0] sm:$0xff]
  %v52 = vld [vmem:[%s0 + $0x8] sm:$0xff]
  %v53 = vld [vmem:[%s0 + $0x12] sm:$0xff]
  %v54 = vld [vmem:[%s0 + $0x1a] sm:$0xff]
  %v55 = vld [vmem:[%s1] sm:$0xff]
  %v56 = vld [vmem:[%s1 + $0x8] sm:$0xff]
  %v57 = vld [vmem:[%s1 + $0x10] sm:$0xff]
  %v58 = vld [vmem:[%s1 + $0x18] sm:$0xff]
  %v59 = vld [vmem:[%s1 + $0x20] sm:$0xff]
  %v60 = vld [vmem:[%s1 + $0x28] sm:$0xff]
  %v61 = vld [vmem:[%s1 + $0x30] sm:$0xff]
  %v62 = vld [vmem:[%s1 + $0x38] sm:$0xff]
  %v63 = vld [vmem:[%s1 + $0x40] sm:$0xff]
  %v64 = vld [vmem:[%s0 + $0x1] sm:$0xff]
  %v65 = vld [vmem:[%s0 + $0x9] sm:$0xff]
  %v66 = vld [vmem:[%s0 + $0x13] sm:$0xff]
  %v67 = vld [vmem:[%s0 + $0x1b] sm:$0xff]
  %v68 = vld [vmem:[%s1 + $0x48] sm:$0xff]
  %v69 = vld [vmem:[%s1 + $0x50] sm:$0xff]
  %v70 = vld [vmem:[%s1 + $0x58] sm:$0xff]
  %v71 = vld [vmem:[%s1 + $0x60] sm:$0xff]
  %v72 = vld [vmem:[%s1 + $0x68] sm:$0xff]
  %v73 = vld [vmem:[%s1 + $0x70] sm:$0xff]
  %v74 = vld [vmem:[%s1 + $0x78] sm:$0xff]
  %v75 = vld [vmem:[%s1 + $0x80] sm:$0xff]
  %v76 = vld [vmem:[%s1 + $0x88] sm:$0xff]
  %vm77 = vcmask 588800
  %v79 = vsel %vm77, %v64, 0
  %v82 = vsel %vm77, %v65, 0
  %v85 = vsel %vm77, %v66, 0
  %v88 = vsel %vm77, %v67, 0
  %90 = vmatpush.msra.mxu0 0.0
  %91 = vmatpush.msra.mxu0 0.0
  %92 = vmatpush.msra.mxu0 0.0
  %93 = vmatpush.msra.mxu0 0.0
  %94 = vmatpush.msra.mxu0 0.0
  %95 = vmatpush.msra.mxu0 0.0
  %96 = vmatpush.msra.mxu0 0.0
  %97 = vmatpush.msra.mxu0 %v76
  %98 = vmatpush.msra.mxu0 %v75
  %99 = vmatpush.msra.mxu0 %v74
  %100 = vmatpush.msra.mxu0 %v73
  %101 = vmatpush.msra.mxu0 %v72
  %102 = vmatpush.msra.mxu0 %v71
  %103 = vmatpush.msra.mxu0 %v70
  %104 = vmatpush.msra.mxu0 %v69
  %105 = vmatpush.msra.mxu0 %v68
  %106 = vmatmul.f32.gmra.mxu0 %v79
  %v107 = vpop.f32.mrf.mxu0
  %v108 = vadd.f32 0.0, %v107
  %109 = vmatmul.f32.gmra.mxu0 %v82
  %v110 = vpop.f32.mrf.mxu0
  %v111 = vadd.f32 0.0, %v110
  %112 = vmatmul.f32.gmra.mxu0 %v85
  %v113 = vpop.f32.mrf.mxu0
  %v114 = vadd.f32 0.0, %v113
  %115 = vmatmul.f32.gmra.mxu0 %v88
  %v116 = vpop.f32.mrf.mxu0
  %v117 = vadd.f32 0.0, %v116
  %118 = vdwg.mxu0
  %v120 = vsel %vm77, %v51, 0
  %v123 = vsel %vm77, %v52, 0
  %v126 = vsel %vm77, %v53, 0
  %v129 = vsel %vm77, %v54, 0
  %131 = vmatpush.msra.mxu0 0.0
  %132 = vmatpush.msra.mxu0 0.0
  %133 = vmatpush.msra.mxu0 0.0
  %134 = vmatpush.msra.mxu0 0.0
  %135 = vmatpush.msra.mxu0 0.0
  %136 = vmatpush.msra.mxu0 0.0
  %137 = vmatpush.msra.mxu0 0.0
  %138 = vmatpush.msra.mxu0 %v63
  %139 = vmatpush.msra.mxu0 %v62
  %140 = vmatpush.msra.mxu0 %v61
  %141 = vmatpush.msra.mxu0 %v60
  %142 = vmatpush.msra.mxu0 %v59
  %143 = vmatpush.msra.mxu0 %v58
  %144 = vmatpush.msra.mxu0 %v57
  %145 = vmatpush.msra.mxu0 %v56
  %146 = vmatpush.msra.mxu0 %v55
  %147 = vmatmul.f32.gmra.mxu0 %v120
  %v148 = vpop.f32.mrf.mxu0
  %v149 = vadd.f32 %v108, %v148
  %150 = vmatmul.f32.gmra.mxu0 %v123
  %v151 = vpop.f32.mrf.mxu0
  %v152 = vadd.f32 %v111, %v151
  %153 = vmatmul.f32.gmra.mxu0 %v126
  %v154 = vpop.f32.mrf.mxu0
  %v155 = vadd.f32 %v114, %v154
  %156 = vmatmul.f32.gmra.mxu0 %v129
  %v157 = vpop.f32.mrf.mxu0
  %v158 = vadd.f32 %v117, %v157
  %159 = vdwg.mxu0
  %v160 = vld [vmem:[%s0 + $0x2] sm:$0xff]
  %v161 = vld [vmem:[%s0 + $0xa] sm:$0xff]
  %v162 = vld [vmem:[%s0 + $0x14] sm:$0xff]
  %v163 = vld [vmem:[%s0 + $0x1c] sm:$0xff]
  %v164 = vld [vmem:[%s1 + $0x90] sm:$0xff]
  %v165 = vld [vmem:[%s1 + $0x98] sm:$0xff]
  %v166 = vld [vmem:[%s1 + $0xa0] sm:$0xff]
  %v167 = vld [vmem:[%s1 + $0xa8] sm:$0xff]
  %v168 = vld [vmem:[%s1 + $0xb0] sm:$0xff]
  %v169 = vld [vmem:[%s1 + $0xb8] sm:$0xff]
  %v170 = vld [vmem:[%s1 + $0xc0] sm:$0xff]
  %v171 = vld [vmem:[%s1 + $0xc8] sm:$0xff]
  %v172 = vld [vmem:[%s1 + $0xd0] sm:$0xff]
  %v174 = vsel %vm77, %v160, 0
  %v177 = vsel %vm77, %v161, 0
  %v180 = vsel %vm77, %v162, 0
  %v183 = vsel %vm77, %v163, 0
  %185 = vmatpush.msra.mxu0 0.0
  %186 = vmatpush.msra.mxu0 0.0
  %187 = vmatpush.msra.mxu0 0.0
  %188 = vmatpush.msra.mxu0 0.0
  %189 = vmatpush.msra.mxu0 0.0
  %190 = vmatpush.msra.mxu0 0.0
  %191 = vmatpush.msra.mxu0 0.0
  %192 = vmatpush.msra.mxu0 %v172
  %193 = vmatpush.msra.mxu0 %v171
  %194 = vmatpush.msra.mxu0 %v170
  %195 = vmatpush.msra.mxu0 %v169
  %196 = vmatpush.msra.mxu0 %v168
  %197 = vmatpush.msra.mxu0 %v167
  %198 = vmatpush.msra.mxu0 %v166
  %199 = vmatpush.msra.mxu0 %v165
  %200 = vmatpush.msra.mxu0 %v164
  %201 = vmatmul.f32.gmra.mxu0 %v174
  %v202 = vpop.f32.mrf.mxu0
  %v203 = vadd.f32 0.0, %v202
  %204 = vmatmul.f32.gmra.mxu0 %v177
  %v205 = vpop.f32.mrf.mxu0
  %v206 = vadd.f32 0.0, %v205
  %207 = vmatmul.f32.gmra.mxu0 %v180
  %v208 = vpop.f32.mrf.mxu0
  %v209 = vadd.f32 0.0, %v208
  %210 = vmatmul.f32.gmra.mxu0 %v183
  %v211 = vpop.f32.mrf.mxu0
  %v212 = vadd.f32 0.0, %v211
  %213 = vdwg.mxu0
  %v214 = vadd.f32 %v149, %v203
  %v215 = vadd.f32 %v152, %v206
  %v216 = vadd.f32 %v155, %v209
  %v217 = vadd.f32 %v158, %v212
  %v218 = vld [vmem:[%s2] sm:$0x1]
  %v220 = vperm.slane %v218, 0
  %v222 = vadd.f32 %v214, %v220
  %v223 = vadd.f32 %v215, %v220
  %v224 = vadd.f32 %v216, %v220
  %v225 = vadd.f32 %v217, %v220
  %v226 = vld [vmem:[%s3] sm:$0x1]
  %v227 = vld [vmem:[%s4] sm:$0x1]
  %v228 = vadd.f32 %v222, %v223
  %v229 = vadd.f32 %v228, %v224
  %v230 = vadd.f32 %v229, %v225
  %v231 = vrot.slane %v230, 4
  %v232 = vadd.f32 %v230, %v231
  %v233 = vrot.slane %v232, 2
  %v234 = vadd.f32 %v232, %v233
  %v235 = vrot.slane %v234, 1
  %v236 = vadd.f32 %v234, %v235
  %237 = vmatpush.msra.mxu0 %v50
  %238 = vmatpush.msra.mxu0 %v49
  %239 = vmatpush.msra.mxu0 %v48
  %240 = vmatpush.msra.mxu0 %v47
  %241 = vmatpush.msra.mxu0 %v46
  %242 = vmatpush.msra.mxu0 %v45
  %243 = vmatpush.msra.mxu0 %v44
  %244 = vmatpush.msra.mxu0 %v43
  %245 = vmatpush.msra.mxu0 %v42
  %246 = vmatpush.msra.mxu0 %v41
  %247 = vmatpush.msra.mxu0 %v40
  %248 = vmatpush.msra.mxu0 %v39
  %249 = vmatpush.msra.mxu0 %v38
  %250 = vmatpush.msra.mxu0 %v37
  %251 = vmatpush.msra.mxu0 %v36
  %252 = vmatpush.msra.mxu0 %v35
  %253 = vmatmul.f32.gmra.mxu0 %v236
  %v254 = vpop.f32.mrf.mxu0
  %v255 = vadd.f32 0.0, %v254
  %256 = vdwg.mxu0
  %v257 = vmul.f32 %v255, 0.001953125
  %v258 = vperm.slane %v257, 0
  %v259 = vsub.f32 %v222, %v258
  %v260 = vsub.f32 %v223, %v258
  %v261 = vsub.f32 %v224, %v258
  %v262 = vsub.f32 %v225, %v258
  %v263 = vmul.f32 %v259, %v259
  %v264 = vmul.f32 %v260, %v260
  %v265 = vmul.f32 %v261, %v261
  %v266 = vmul.f32 %v262, %v262
  %v267 = vadd.f32 %v263, %v264
  %v268 = vadd.f32 %v267, %v265
  %v269 = vadd.f32 %v268, %v266
  %v270 = vrot.slane %v269, 4
  %v271 = vadd.f32 %v269, %v270
  %v272 = vrot.slane %v271, 2
  %v273 = vadd.f32 %v271, %v272
  %v274 = vrot.slane %v273, 1
  %v275 = vadd.f32 %v273, %v274
  %276 = vmatpush.msra.mxu0 %v50
  %277 = vmatpush.msra.mxu0 %v49
  %278 = vmatpush.msra.mxu0 %v48
  %279 = vmatpush.msra.mxu0 %v47
  %280 = vmatpush.msra.mxu0 %v46
  %281 = vmatpush.msra.mxu0 %v45
  %282 = vmatpush.msra.mxu0 %v44
  %283 = vmatpush.msra.mxu0 %v43
  %284 = vmatpush.msra.mxu0 %v42
  %285 = vmatpush.msra.mxu0 %v41
  %286 = vmatpush.msra.mxu0 %v40
  %287 = vmatpush.msra.mxu0 %v39
  %288 = vmatpush.msra.mxu0 %v38
  %289 = vmatpush.msra.mxu0 %v37
  %290 = vmatpush.msra.mxu0 %v36
  %291 = vmatpush.msra.mxu0 %v35
  %292 = vmatmul.f32.gmra.mxu0 %v275
  %v293 = vpop.f32.mrf.mxu0
  %v294 = vadd.f32 0.0, %v293
  %295 = vdwg.mxu0
  %v296 = vmul.f32 %v294, 0.001953125
  %v297 = vadd.f32 %v296, 1e-05
  %v298 = vrsqrt.pop %v297
  %v299 = vmul.f32 %v298, %v297
  %v300 = vmul.f32 %v299, %v298
  %v301 = vmul.f32 0.5, %v300
  %v302 = vsub.f32 1.5, %v301
  %v303 = vmul.f32 %v298, %v302
  %vm304 = vweird.f32 %v297
  %vm305 = vweird.f32 %v298
  %vm306 = vmor %vm304, %vm305
  %v307 = vsel %vm306, %v298, %v303
  %v308 = vmul.f32 %v226, %v307
  %v310 = vperm.slane %v308, 0
  %v312 = vmul.f32 %v259, %v310
  %v313 = vmul.f32 %v260, %v310
  %v314 = vmul.f32 %v261, %v310
  %v315 = vmul.f32 %v262, %v310
  %v317 = vperm.slane %v227, 0
  %v319 = vadd.f32 %v312, %v317
  %v320 = vadd.f32 %v313, %v317
  %v321 = vadd.f32 %v314, %v317
  %v322 = vadd.f32 %v315, %v317
  %vm323 = vcmp.gt.f32.partialorder %v319, 0.0
  %vm324 = vcmp.gt.f32.partialorder %v320, 0.0
  %vm325 = vcmp.gt.f32.partialorder %v321, 0.0
  %vm326 = vcmp.gt.f32.partialorder %v322, 0.0
  %v327 = vmul.f32 %v319, 0.1
  %v328 = vmul.f32 %v320, 0.1
  %v329 = vmul.f32 %v321, 0.1
  %v330 = vmul.f32 %v322, 0.1
  %v331 = vsel %vm323, %v319, %v327
  %v332 = vsel %vm324, %v320, %v328
  %v333 = vsel %vm325, %v321, %v329
  %v334 = vsel %vm326, %v322, %v330
  %v335 = vlaneseq
  %vm336 = vcmp.ge.s32.totalorder %v335, 0
  %vm337 = vcmp.lt.s32.totalorder %v335, 144
  %vm338 = vmand %vm336, %vm337
  %339 = vst.msk [vmem:[#allocation2] ss:$8 sm:$0x3] %vm338, 0.0
  %340 = vst.msk [vmem:[#allocation2] ss:$8 sm:$0x0] %vm338, 0.0
  %s341 = scalar_lea.vmem [#allocation2], 33
  %342 = vst.msk [vmem:[%s341] ss:$8 sm:$0x3] %vm338, 0.0
  %343 = vst.msk [vmem:[%s341] ss:$8 sm:$0x0] %vm338, 0.0
  %vm344 = vcmask 64513
  %345 = vst.msk [vmem:[#allocation2] sm:$0xfe] %vm344, 0.0
  %vm346 = vcmask 64512
  %347 = vst.msk [vmem:[#allocation2 + $0x10] sm:$0xff] %vm346, 0.0
  %vm348 = vcmask 57344
  %349 = vst.msk [vmem:[#allocation2 + $0x20] sm:$0x1] %vm348, 0.0
  %vm350 = vcmask 130113
  %351 = vst.msk [vmem:[#allocation2 + $0x8] sm:$0xfe] %vm350, 0.0
  %vm352 = vcmask 130112
  %353 = vst.msk [vmem:[#allocation2 + $0x18] sm:$0xff] %vm352, 0.0
  %vm354 = vcmask 122944
  %355 = vst.msk [vmem:[#allocation2 + $0x28] sm:$0x1] %vm354, 0.0
  %vm358 = vcmask 1040384
  %v359 = vrot.slane %v331, 7
  %v360 = vrot.slane %v332, 7
  %v361 = vsel %vm358, %v359, %v360
  %362 = vrot.lane.b32.xlu0 %v359, 8
  %v363 = vpop.permute.xlu0 %362
  %364 = vrot.lane.b32.xlu0 %v361, 8
  %v365 = vpop.permute.xlu0 %364
  %366 = vrot.lane.b32.xlu0 %v360, 8
  %v367 = vpop.permute.xlu0 %366
  %vm371 = vcmask 1047617
  %372 = vst.msk [vmem:[#allocation2] sm:$0xfe] %vm371, %v363
  %373 = vst.msk [vmem:[#allocation2 + $0x8] sm:$0xfe] %vm344, %v363
  %vm374 = vcmask 1047616
  %375 = vst.msk [vmem:[#allocation2 + $0x10] sm:$0xff] %vm374, %v365
  %376 = vst.msk [vmem:[#allocation2 + $0x18] sm:$0xff] %vm346, %v365
  %vm377 = vcmask 1040448
  %378 = vst.msk [vmem:[#allocation2 + $0x20] sm:$0x1] %vm377, %v367
  %379 = vst.msk [vmem:[#allocation2 + $0x28] sm:$0x1] %vm348, %v367
  %s380 = scalar_lea.vmem [#allocation2], 34
  %381 = vst.msk [vmem:[%s380] ss:$8 sm:$0x3] %vm338, 0.0
  %382 = vst.msk [vmem:[%s380] ss:$8 sm:$0x0] %vm338, 0.0
  %s383 = scalar_lea.vmem [#allocation2], 67
  %384 = vst.msk [vmem:[%s383] ss:$8 sm:$0x3] %vm338, 0.0
  %385 = vst.msk [vmem:[%s383] ss:$8 sm:$0x0] %vm338, 0.0
  %vm386 = vcmask 64515
  %387 = vst.msk [vmem:[#allocation2 + $0x20] sm:$0xf8] %vm386, 0.0
  %388 = vst.msk [vmem:[#allocation2 + $0x30] sm:$0xff] %vm346, 0.0
  %vm389 = vcmask 59392
  %390 = vst.msk [vmem:[#allocation2 + $0x40] sm:$0x7] %vm389, 0.0
  %vm391 = vcmask 130115
  %392 = vst.msk [vmem:[#allocation2 + $0x28] sm:$0xf8] %vm391, 0.0
  %393 = vst.msk [vmem:[#allocation2 + $0x38] sm:$0xff] %vm352, 0.0
  %vm394 = vcmask 124992
  %395 = vst.msk [vmem:[#allocation2 + $0x48] sm:$0x7] %vm394, 0.0
  %vm398 = vcmask 1042432
  %v399 = vrot.slane %v333, 5
  %v400 = vrot.slane %v334, 5
  %v401 = vsel %vm398, %v399, %v400
  %402 = vrot.lane.b32.xlu0 %v399, 8
  %v403 = vpop.permute.xlu0 %402
  %404 = vrot.lane.b32.xlu0 %v401, 8
  %v405 = vpop.permute.xlu0 %404
  %406 = vrot.lane.b32.xlu0 %v400, 8
  %v407 = vpop.permute.xlu0 %406
  %vm411 = vcmask 1047619
  %412 = vst.msk [vmem:[#allocation2 + $0x20] sm:$0xf8] %vm411, %v403
  %413 = vst.msk [vmem:[#allocation2 + $0x28] sm:$0xf8] %vm386, %v403
  %414 = vst.msk [vmem:[#allocation2 + $0x30] sm:$0xff] %vm374, %v405
  %415 = vst.msk [vmem:[#allocation2 + $0x38] sm:$0xff] %vm346, %v405
  %vm416 = vcmask 1042496
  %417 = vst.msk [vmem:[#allocation2 + $0x40] sm:$0x7] %vm416, %v407
  %418 = vst.msk [vmem:[#allocation2 + $0x48] sm:$0x7] %vm389, %v407
  %v419 = vld [vmem:[#allocation2] sm:$0xff]
  %v420 = vld [vmem:[#allocation2 + $0x8] sm:$0xff]
  %v421 = vld [vmem:[#allocation2 + $0x10] sm:$0xff]
  %v422 = vld [vmem:[#allocation2 + $0x18] sm:$0xff]
  %v423 = vld [vmem:[#allocation2 + $0x20] sm:$0xfc]
  %v424 = vld [vmem:[#allocation2 + $0x28] sm:$0xfc]
  %v425 = vld [vmem:[#allocation2 + $0x30] sm:$0xff]
  %v426 = vld [vmem:[#allocation2 + $0x38] sm:$0xff]
  %v427 = vld [vmem:[#allocation2 + $0x40] sm:$0x3]
  %v428 = vld [vmem:[#allocation2 + $0x48] sm:$0x3]
  %vm435 = vcmask 1045504
  %v436 = vrot.slane %v423, 2
  %v437 = vrot.slane %v425, 2
  %v438 = vsel %vm435, %v436, %v437
  %v439 = vrot.slane %v424, 2
  %v440 = vrot.slane %v426, 2
  %v441 = vsel %vm435, %v439, %v440
  %v442 = vrot.slane %v427, 2
  %v443 = vsel %vm435, %v437, %v442
  %v444 = vrot.slane %v428, 2
  %v445 = vsel %vm435, %v440, %v444
  %v448 = vld [vmem:[%s5] sm:$0xff]
  %v449 = vld [vmem:[%s5 + $0x8] sm:$0xff]
  %v450 = vld [vmem:[%s5 + $0x10] sm:$0xff]
  %v451 = vld [vmem:[%s5 + $0x18] sm:$0xff]
  %v452 = vld [vmem:[%s5 + $0x20] sm:$0xff]
  %v453 = vld [vmem:[%s5 + $0x28] sm:$0xff]
  %v454 = vld [vmem:[%s5 + $0x30] sm:$0xff]
  %v455 = vld [vmem:[%s5 + $0x38] sm:$0xff]
  %v456 = vld [vmem:[%s5 + $0x40] sm:$0xff]
  %v457 = vld [vmem:[%s5 + $0x48] sm:$0xff]
  %v458 = vld [vmem:[%s5 + $0x50] sm:$0xff]
  %v459 = vld [vmem:[%s5 + $0x58] sm:$0xff]
  %v460 = vld [vmem:[%s5 + $0x60] sm:$0xff]
  %v461 = vld [vmem:[%s5 + $0x68] sm:$0xff]
  %v462 = vld [vmem:[%s5 + $0x70] sm:$0xff]
  %v463 = vld [vmem:[%s5 + $0x78] sm:$0xff]
  %v464 = vld [vmem:[%s5 + $0x80] sm:$0xff]
  %v465 = vld [vmem:[%s5 + $0x88] sm:$0xff]
  %v466 = vld [vmem:[#allocation2] sm:$0xfe]
  %v467 = vld [vmem:[#allocation2 + $0x8] sm:$0xfe]
  %v468 = vld [vmem:[#allocation2 + $0x20] sm:$0x1]
  %v469 = vld [vmem:[#allocation2 + $0x28] sm:$0x1]
  %v470 = vld [vmem:[#allocation2 + $0x20] sm:$0xf8]
  %v471 = vld [vmem:[#allocation2 + $0x28] sm:$0xf8]
  %v472 = vld [vmem:[#allocation2 + $0x40] sm:$0x7]
  %v473 = vld [vmem:[#allocation2 + $0x48] sm:$0x7]
  %vm480 = vcmask 1046528
  %v481 = vrot.slane %v466, 1
  %v482 = vrot.slane %v421, 1
  %v483 = vsel %vm480, %v481, %v482
  %v484 = vrot.slane %v467, 1
  %v485 = vrot.slane %v422, 1
  %v486 = vsel %vm480, %v484, %v485
  %v487 = vrot.slane %v468, 1
  %v488 = vsel %vm480, %v482, %v487
  %v489 = vrot.slane %v469, 1
  %v490 = vsel %vm480, %v485, %v489
  %vm497 = vcmask 1044480
  %v498 = vrot.slane %v470, 3
  %v499 = vrot.slane %v425, 3
  %v500 = vsel %vm497, %v498, %v499
  %v501 = vrot.slane %v471, 3
  %v502 = vrot.slane %v426, 3
  %v503 = vsel %vm497, %v501, %v502
  %v504 = vrot.slane %v472, 3
  %v505 = vsel %vm497, %v499, %v504
  %v506 = vrot.slane %v473, 3
  %v507 = vsel %vm497, %v502, %v506
  %v510 = vld [vmem:[%s5 + $0x90] sm:$0xff]
  %v511 = vld [vmem:[%s5 + $0x98] sm:$0xff]
  %v512 = vld [vmem:[%s5 + $0xa0] sm:$0xff]
  %v513 = vld [vmem:[%s5 + $0xa8] sm:$0xff]
  %v514 = vld [vmem:[%s5 + $0xb0] sm:$0xff]
  %v515 = vld [vmem:[%s5 + $0xb8] sm:$0xff]
  %v516 = vld [vmem:[%s5 + $0xc0] sm:$0xff]
  %v517 = vld [vmem:[%s5 + $0xc8] sm:$0xff]
  %v518 = vld [vmem:[%s5 + $0xd0] sm:$0xff]
  %v519 = vld [vmem:[%s5 + $0xd8] sm:$0xff]
  %v520 = vld [vmem:[%s5 + $0xe0] sm:$0xff]
  %v521 = vld [vmem:[%s5 + $0xe8] sm:$0xff]
  %v522 = vld [vmem:[%s5 + $0xf0] sm:$0xff]
  %v523 = vld [vmem:[%s5 + $0xf8] sm:$0xff]
  %v524 = vld [vmem:[%s5 + $0x100] sm:$0xff]
  %v525 = vld [vmem:[%s5 + $0x108] sm:$0xff]
  %v526 = vld [vmem:[%s5 + $0x110] sm:$0xff]
  %v527 = vld [vmem:[%s5 + $0x118] sm:$0xff]
  %vm528 = vcmask 130048
  %v529 = vsel %vm528, %v486, 0
  %v531 = vsel %vm528, %v490, 0
  %v533 = vsel %vm528, %v503, 0
  %v535 = vsel %vm528, %v507, 0
  %537 = vmatpush.msra.mxu0 %v525
  %538 = vmatpush.msra.mxu0 %v524
  %539 = vmatpush.msra.mxu0 %v523
  %540 = vmatpush.msra.mxu0 %v522
  %541 = vmatpush.msra.mxu0 %v521
  %542 = vmatpush.msra.mxu0 %v520
  %543 = vmatpush.msra.mxu0 %v519
  %544 = vmatpush.msra.mxu0 %v518
  %545 = vmatpush.msra.mxu0 %v517
  %546 = vmatpush.msra.mxu0 %v516
  %547 = vmatpush.msra.mxu0 %v515
  %548 = vmatpush.msra.mxu0 %v514
  %549 = vmatpush.msra.mxu0 %v513
  %550 = vmatpush.msra.mxu0 %v512
  %551 = vmatpush.msra.mxu0 %v511
  %552 = vmatpush.msra.mxu0 %v510
  %553 = vmatmul.f32.gmra.mxu0 %v483
  %v554 = vpop.f32.mrf.mxu0
  %v555 = vadd.f32 0.0, %v554
  %556 = vmatmul.f32.gmra.mxu0 %v488
  %v557 = vpop.f32.mrf.mxu0
  %v558 = vadd.f32 0.0, %v557
  %559 = vmatmul.f32.gmra.mxu0 %v500
  %v560 = vpop.f32.mrf.mxu0
  %v561 = vadd.f32 0.0, %v560
  %562 = vmatmul.f32.gmra.mxu0 %v505
  %v563 = vpop.f32.mrf.mxu0
  %v564 = vadd.f32 0.0, %v563
  %565 = vdwg.mxu0
  %566 = vmatpush.msra.mxu0 0.0
  %567 = vmatpush.msra.mxu0 0.0
  %568 = vmatpush.msra.mxu0 0.0
  %569 = vmatpush.msra.mxu0 0.0
  %570 = vmatpush.msra.mxu0 0.0
  %571 = vmatpush.msra.mxu0 0.0
  %572 = vmatpush.msra.mxu0 0.0
  %573 = vmatpush.msra.mxu0 0.0
  %574 = vmatpush.msra.mxu0 0.0
  %575 = vmatpush.msra.mxu0 0.0
  %576 = vmatpush.msra.mxu0 0.0
  %577 = vmatpush.msra.mxu0 0.0
  %578 = vmatpush.msra.mxu0 0.0
  %579 = vmatpush.msra.mxu0 0.0
  %580 = vmatpush.msra.mxu0 %v527
  %581 = vmatpush.msra.mxu0 %v526
  %582 = vmatmul.f32.gmra.mxu0 %v529
  %v583 = vpop.f32.mrf.mxu0
  %v584 = vadd.f32 %v555, %v583
  %585 = vmatmul.f32.gmra.mxu0 %v531
  %v586 = vpop.f32.mrf.mxu0
  %v587 = vadd.f32 %v558, %v586
  %588 = vmatmul.f32.gmra.mxu0 %v533
  %v589 = vpop.f32.mrf.mxu0
  %v590 = vadd.f32 %v561, %v589
  %591 = vmatmul.f32.gmra.mxu0 %v535
  %v592 = vpop.f32.mrf.mxu0
  %v593 = vadd.f32 %v564, %v592
  %594 = vdwg.mxu0
  %v596 = vsel %vm528, %v420, 0
  %v598 = vsel %vm528, %v422, 0
  %v600 = vsel %vm528, %v441, 0
  %v602 = vsel %vm528, %v445, 0
  %604 = vmatpush.msra.mxu0 %v463
  %605 = vmatpush.msra.mxu0 %v462
  %606 = vmatpush.msra.mxu0 %v461
  %607 = vmatpush.msra.mxu0 %v460
  %608 = vmatpush.msra.mxu0 %v459
  %609 = vmatpush.msra.mxu0 %v458
  %610 = vmatpush.msra.mxu0 %v457
  %611 = vmatpush.msra.mxu0 %v456
  %612 = vmatpush.msra.mxu0 %v455
  %613 = vmatpush.msra.mxu0 %v454
  %614 = vmatpush.msra.mxu0 %v453
  %615 = vmatpush.msra.mxu0 %v452
  %616 = vmatpush.msra.mxu0 %v451
  %617 = vmatpush.msra.mxu0 %v450
  %618 = vmatpush.msra.mxu0 %v449
  %619 = vmatpush.msra.mxu0 %v448
  %620 = vmatmul.f32.gmra.mxu0 %v419
  %v621 = vpop.f32.mrf.mxu0
  %v622 = vadd.f32 %v584, %v621
  %623 = vmatmul.f32.gmra.mxu0 %v421
  %v624 = vpop.f32.mrf.mxu0
  %v625 = vadd.f32 %v587, %v624
  %626 = vmatmul.f32.gmra.mxu0 %v438
  %v627 = vpop.f32.mrf.mxu0
  %v628 = vadd.f32 %v590, %v627
  %629 = vmatmul.f32.gmra.mxu0 %v443
  %v630 = vpop.f32.mrf.mxu0
  %v631 = vadd.f32 %v593, %v630
  %632 = vdwg.mxu0
  %633 = vmatpush.msra.mxu0 0.0
  %634 = vmatpush.msra.mxu0 0.0
  %635 = vmatpush.msra.mxu0 0.0
  %636 = vmatpush.msra.mxu0 0.0
  %637 = vmatpush.msra.mxu0 0.0
  %638 = vmatpush.msra.mxu0 0.0
  %639 = vmatpush.msra.mxu0 0.0
  %640 = vmatpush.msra.mxu0 0.0
  %641 = vmatpush.msra.mxu0 0.0
  %642 = vmatpush.msra.mxu0 0.0
  %643 = vmatpush.msra.mxu0 0.0
  %644 = vmatpush.msra.mxu0 0.0
  %645 = vmatpush.msra.mxu0 0.0
  %646 = vmatpush.msra.mxu0 0.0
  %647 = vmatpush.msra.mxu0 %v465
  %648 = vmatpush.msra.mxu0 %v464
  %649 = vmatmul.f32.gmra.mxu0 %v596
  %v650 = vpop.f32.mrf.mxu0
  %v651 = vadd.f32 %v622, %v650
  %652 = vmatmul.f32.gmra.mxu0 %v598
  %v653 = vpop.f32.mrf.mxu0
  %v654 = vadd.f32 %v625, %v653
  %655 = vmatmul.f32.gmra.mxu0 %v600
  %v656 = vpop.f32.mrf.mxu0
  %v657 = vadd.f32 %v628, %v656
  %658 = vmatmul.f32.gmra.mxu0 %v602
  %v659 = vpop.f32.mrf.mxu0
  %v660 = vadd.f32 %v631, %v659
  %661 = vdwg.mxu0
  %v662 = vld [vmem:[#allocation2] sm:$0xfc]
  %v663 = vld [vmem:[#allocation2 + $0x8] sm:$0xfc]
  %v664 = vld [vmem:[#allocation2 + $0x20] sm:$0x3]
  %v665 = vld [vmem:[#allocation2 + $0x28] sm:$0x3]
  %v666 = vld [vmem:[#allocation2 + $0x20] sm:$0xf0]
  %v667 = vld [vmem:[#allocation2 + $0x28] sm:$0xf0]
  %v668 = vld [vmem:[#allocation2 + $0x40] sm:$0xf]
  %v669 = vld [vmem:[#allocation2 + $0x48] sm:$0xf]
  %v674 = vrot.slane %v662, 2
  %v675 = vrot.slane %v421, 2
  %v676 = vsel %vm435, %v674, %v675
  %v677 = vrot.slane %v663, 2
  %v678 = vrot.slane %v422, 2
  %v679 = vsel %vm435, %v677, %v678
  %v680 = vrot.slane %v664, 2
  %v681 = vsel %vm435, %v675, %v680
  %v682 = vrot.slane %v665, 2
  %v683 = vsel %vm435, %v678, %v682
  %vm690 = vcmask 1043456
  %v691 = vrot.slane %v666, 4
  %v692 = vrot.slane %v425, 4
  %v693 = vsel %vm690, %v691, %v692
  %v694 = vrot.slane %v667, 4
  %v695 = vrot.slane %v426, 4
  %v696 = vsel %vm690, %v694, %v695
  %v697 = vrot.slane %v668, 4
  %v698 = vsel %vm690, %v692, %v697
  %v699 = vrot.slane %v669, 4
  %v700 = vsel %vm690, %v695, %v699
  %v703 = vld [vmem:[%s5 + $0x120] sm:$0xff]
  %v704 = vld [vmem:[%s5 + $0x128] sm:$0xff]
  %v705 = vld [vmem:[%s5 + $0x130] sm:$0xff]
  %v706 = vld [vmem:[%s5 + $0x138] sm:$0xff]
  %v707 = vld [vmem:[%s5 + $0x140] sm:$0xff]
  %v708 = vld [vmem:[%s5 + $0x148] sm:$0xff]
  %v709 = vld [vmem:[%s5 + $0x150] sm:$0xff]
  %v710 = vld [vmem:[%s5 + $0x158] sm:$0xff]
  %v711 = vld [vmem:[%s5 + $0x160] sm:$0xff]
  %v712 = vld [vmem:[%s5 + $0x168] sm:$0xff]
  %v713 = vld [vmem:[%s5 + $0x170] sm:$0xff]
  %v714 = vld [vmem:[%s5 + $0x178] sm:$0xff]
  %v715 = vld [vmem:[%s5 + $0x180] sm:$0xff]
  %v716 = vld [vmem:[%s5 + $0x188] sm:$0xff]
  %v717 = vld [vmem:[%s5 + $0x190] sm:$0xff]
  %v718 = vld [vmem:[%s5 + $0x198] sm:$0xff]
  %v719 = vld [vmem:[%s5 + $0x1a0] sm:$0xff]
  %v720 = vld [vmem:[%s5 + $0x1a8] sm:$0xff]
  %v721 = vsel %vm528, %v679, 0
  %v723 = vsel %vm528, %v683, 0
  %v725 = vsel %vm528, %v696, 0
  %v727 = vsel %vm528, %v700, 0
  %729 = vmatpush.msra.mxu0 %v718
  %730 = vmatpush.msra.mxu0 %v717
  %731 = vmatpush.msra.mxu0 %v716
  %732 = vmatpush.msra.mxu0 %v715
  %733 = vmatpush.msra.mxu0 %v714
  %734 = vmatpush.msra.mxu0 %v713
  %735 = vmatpush.msra.mxu0 %v712
  %736 = vmatpush.msra.mxu0 %v711
  %737 = vmatpush.msra.mxu0 %v710
  %738 = vmatpush.msra.mxu0 %v709
  %739 = vmatpush.msra.mxu0 %v708
  %740 = vmatpush.msra.mxu0 %v707
  %741 = vmatpush.msra.mxu0 %v706
  %742 = vmatpush.msra.mxu0 %v705
  %743 = vmatpush.msra.mxu0 %v704
  %744 = vmatpush.msra.mxu0 %v703
  %745 = vmatmul.f32.gmra.mxu0 %v676
  %v746 = vpop.f32.mrf.mxu0
  %v747 = vadd.f32 0.0, %v746
  %748 = vmatmul.f32.gmra.mxu0 %v681
  %v749 = vpop.f32.mrf.mxu0
  %v750 = vadd.f32 0.0, %v749
  %751 = vmatmul.f32.gmra.mxu0 %v693
  %v752 = vpop.f32.mrf.mxu0
  %v753 = vadd.f32 0.0, %v752
  %754 = vmatmul.f32.gmra.mxu0 %v698
  %v755 = vpop.f32.mrf.mxu0
  %v756 = vadd.f32 0.0, %v755
  %757 = vdwg.mxu0
  %758 = vmatpush.msra.mxu0 0.0
  %759 = vmatpush.msra.mxu0 0.0
  %760 = vmatpush.msra.mxu0 0.0
  %761 = vmatpush.msra.mxu0 0.0
  %762 = vmatpush.msra.mxu0 0.0
  %763 = vmatpush.msra.mxu0 0.0
  %764 = vmatpush.msra.mxu0 0.0
  %765 = vmatpush.msra.mxu0 0.0
  %766 = vmatpush.msra.mxu0 0.0
  %767 = vmatpush.msra.mxu0 0.0
  %768 = vmatpush.msra.mxu0 0.0
  %769 = vmatpush.msra.mxu0 0.0
  %770 = vmatpush.msra.mxu0 0.0
  %771 = vmatpush.msra.mxu0 0.0
  %772 = vmatpush.msra.mxu0 %v720
  %773 = vmatpush.msra.mxu0 %v719
  %774 = vmatmul.f32.gmra.mxu0 %v721
  %v775 = vpop.f32.mrf.mxu0
  %v776 = vadd.f32 %v747, %v775
  %777 = vmatmul.f32.gmra.mxu0 %v723
  %v778 = vpop.f32.mrf.mxu0
  %v779 = vadd.f32 %v750, %v778
  %780 = vmatmul.f32.gmra.mxu0 %v725
  %v781 = vpop.f32.mrf.mxu0
  %v782 = vadd.f32 %v753, %v781
  %783 = vmatmul.f32.gmra.mxu0 %v727
  %v784 = vpop.f32.mrf.mxu0
  %v785 = vadd.f32 %v756, %v784
  %786 = vdwg.mxu0
  %v787 = vadd.f32 %v651, %v776
  %v788 = vadd.f32 %v654, %v779
  %v789 = vadd.f32 %v657, %v782
  %v790 = vadd.f32 %v660, %v785
  %v791 = vld [vmem:[%s6] sm:$0x1]
  %v793 = vperm.slane %v791, 0
  %v795 = vadd.f32 %v787, %v793
  %v796 = vadd.f32 %v788, %v793
  %v797 = vadd.f32 %v789, %v793
  %v798 = vadd.f32 %v790, %v793
  %v799 = vld [vmem:[%s7] sm:$0x1]
  %v800 = vld [vmem:[%s8] sm:$0x1]
  %v801 = vadd.f32 %v795, %v796
  %v802 = vadd.f32 %v801, %v797
  %v803 = vadd.f32 %v802, %v798
  %v804 = vrot.slane %v803, 4
  %v805 = vadd.f32 %v803, %v804
  %v806 = vrot.slane %v805, 2
  %v807 = vadd.f32 %v805, %v806
  %v808 = vrot.slane %v807, 1
  %v809 = vadd.f32 %v807, %v808
  %810 = vmatpush.msra.mxu0 %v50
  %811 = vmatpush.msra.mxu0 %v49
  %812 = vmatpush.msra.mxu0 %v48
  %813 = vmatpush.msra.mxu0 %v47
  %814 = vmatpush.msra.mxu0 %v46
  %815 = vmatpush.msra.mxu0 %v45
  %816 = vmatpush.msra.mxu0 %v44
  %817 = vmatpush.msra.mxu0 %v43
  %818 = vmatpush.msra.mxu0 %v42
  %819 = vmatpush.msra.mxu0 %v41
  %820 = vmatpush.msra.mxu0 %v40
  %821 = vmatpush.msra.mxu0 %v39
  %822 = vmatpush.msra.mxu0 %v38
  %823 = vmatpush.msra.mxu0 %v37
  %824 = vmatpush.msra.mxu0 %v36
  %825 = vmatpush.msra.mxu0 %v35
  %826 = vmatmul.f32.gmra.mxu0 %v809
  %v827 = vpop.f32.mrf.mxu0
  %v828 = vadd.f32 0.0, %v827
  %829 = vdwg.mxu0
  %v830 = vmul.f32 %v828, 0.001953125
  %v831 = vperm.slane %v830, 0
  %v832 = vsub.f32 %v795, %v831
  %v833 = vsub.f32 %v796, %v831
  %v834 = vsub.f32 %v797, %v831
  %v835 = vsub.f32 %v798, %v831
  %v836 = vmul.f32 %v832, %v832
  %v837 = vmul.f32 %v833, %v833
  %v838 = vmul.f32 %v834, %v834
  %v839 = vmul.f32 %v835, %v835
  %v840 = vadd.f32 %v836, %v837
  %v841 = vadd.f32 %v840, %v838
  %v842 = vadd.f32 %v841, %v839
  %v843 = vrot.slane %v842, 4
  %v844 = vadd.f32 %v842, %v843
  %v845 = vrot.slane %v844, 2
  %v846 = vadd.f32 %v844, %v845
  %v847 = vrot.slane %v846, 1
  %v848 = vadd.f32 %v846, %v847
  %849 = vmatpush.msra.mxu0 %v50
  %850 = vmatpush.msra.mxu0 %v49
  %851 = vmatpush.msra.mxu0 %v48
  %852 = vmatpush.msra.mxu0 %v47
  %853 = vmatpush.msra.mxu0 %v46
  %854 = vmatpush.msra.mxu0 %v45
  %855 = vmatpush.msra.mxu0 %v44
  %856 = vmatpush.msra.mxu0 %v43
  %857 = vmatpush.msra.mxu0 %v42
  %858 = vmatpush.msra.mxu0 %v41
  %859 = vmatpush.msra.mxu0 %v40
  %860 = vmatpush.msra.mxu0 %v39
  %861 = vmatpush.msra.mxu0 %v38
  %862 = vmatpush.msra.mxu0 %v37
  %863 = vmatpush.msra.mxu0 %v36
  %864 = vmatpush.msra.mxu0 %v35
  %865 = vmatmul.f32.gmra.mxu0 %v848
  %v866 = vpop.f32.mrf.mxu0
  %v867 = vadd.f32 0.0, %v866
  %868 = vdwg.mxu0
  %v869 = vmul.f32 %v867, 0.001953125
  %v870 = vadd.f32 %v869, 1e-05
  %v871 = vrsqrt.pop %v870
  %v872 = vmul.f32 %v871, %v870
  %v873 = vmul.f32 %v872, %v871
  %v874 = vmul.f32 0.5, %v873
  %v875 = vsub.f32 1.5, %v874
  %v876 = vmul.f32 %v871, %v875
  %vm877 = vweird.f32 %v870
  %vm878 = vweird.f32 %v871
  %vm879 = vmor %vm877, %vm878
  %v880 = vsel %vm879, %v871, %v876
  %v881 = vmul.f32 %v799, %v880
  %v883 = vperm.slane %v881, 0
  %v885 = vmul.f32 %v832, %v883
  %v886 = vmul.f32 %v833, %v883
  %v887 = vmul.f32 %v834, %v883
  %v888 = vmul.f32 %v835, %v883
  %v890 = vperm.slane %v800, 0
  %v892 = vadd.f32 %v885, %v890
  %v893 = vadd.f32 %v886, %v890
  %v894 = vadd.f32 %v887, %v890
  %v895 = vadd.f32 %v888, %v890
  %vm896 = vcmp.gt.f32.partialorder %v892, 0.0
  %vm897 = vcmp.gt.f32.partialorder %v893, 0.0
  %vm898 = vcmp.gt.f32.partialorder %v894, 0.0
  %vm899 = vcmp.gt.f32.partialorder %v895, 0.0
  %v900 = vmul.f32 %v892, 0.1
  %v901 = vmul.f32 %v893, 0.1
  %v902 = vmul.f32 %v894, 0.1
  %v903 = vmul.f32 %v895, 0.1
  %v904 = vsel %vm896, %v892, %v900
  %v905 = vsel %vm897, %v893, %v901
  %v906 = vsel %vm898, %v894, %v902
  %v907 = vsel %vm899, %v895, %v903
  %908 = vst [vmem:[%s10] sm:$0xff] %v904
  %909 = vst [vmem:[%s10 + $0x8] sm:$0xff] %v905
  %910 = vst [vmem:[%s10 + $0x10] sm:$0xff] %v906
  %911 = vst [vmem:[%s10 + $0x18] sm:$0xff] %v907
  // Predicated region
  $region42: #{double_conv_pallas.1} parent=0 // pred_check
    _
  $region43: #{double_conv_pallas.1} parent=0 // pred_check_branch
    %913 = sbr.rel (0) target = $region45
  $region44: #{double_conv_pallas.1} parent=0 // pred_region
    _
  $region45: #{double_conv_pallas.1} parent=0 // pred_fallthru
    _
  // Predicated region
  $region46: #{double_conv_pallas.1} parent=0 // pred_check
    _
  $region47: #{double_conv_pallas.1} parent=0 // pred_check_branch
    %915 = sbr.rel (0) target = $region49
  $region48: #{double_conv_pallas.1} parent=0 // pred_region
    _
  $region49: #{double_conv_pallas.1} parent=0 // pred_fallthru
    _

</llo_original>
